<compile_context>
chip_gen: v7x
topology: tpu7x:2x2x1
jax: 0.10.0
libtpu: 0.0.40
codegen_flags: <defaults>
</compile_context>

<pallas_src>
import functools

import jax
import jax.numpy as jnp
from jax import lax
from jax.experimental import pallas as pl
from jax.experimental.pallas import tpu as pltpu

BN_EPS = 1e-5
# v5e/v6e have 128 MiB physical VMEM; TODO(synk): drop to ~48 MiB on v7x (64 MiB phys).
VMEM_LIMIT = 64 * 1024 * 1024


# ---------------------------------------------------------------------------
# Kernel 1: conv1 (dx-hoisted taps) + fused 1x1-conv shortcut + per-image BN1 stats
# grid = (N,), "parallel" -- no cross-step state.
# ---------------------------------------------------------------------------
def _conv1_shortcut_kernel(xpad_ref, w1_ref, ws_ref, bs_ref,
                           pre1_ref, sc_ref, s1_ref, ss1_ref, *, H, W):
    cin = xpad_ref.shape[-1]
    cout = s1_ref.shape[-1]

    # dx shifts move the sublane (W) axis -> hoist them: 3 relayouts, not 9.
    xdx = [xpad_ref[0, :, dx:dx + W, :] for dx in range(3)]      # (H+2, W, Cin)

    # 3x3 conv as 9 accumulated matmuls; dy slices are free leading-axis offsets.
    # TODO(synk): on v6e/v7x fold the 3 dx taps (or all 9 for small Cin) into the
    # matmul K dimension for better 256x256 MXU fill when the stage is compute-bound.
    acc = jnp.zeros((H * W, cout), jnp.float32)
    for dy in range(3):
        for dx in range(3):
            xs = xdx[dx][dy:dy + H].reshape(H * W, cin)
            acc = acc + jnp.dot(xs, w1_ref[dy * 3 + dx],
                                preferred_element_type=jnp.float32)

    # 1x1-conv shortcut + bias: reuse the centre (dy=1, dx=1) tap slice.
    xc = xdx[1][1:H + 1].reshape(H * W, cin)
    sc = jnp.dot(xc, ws_ref[...], preferred_element_type=jnp.float32) + bs_ref[...]
    sc_ref[0] = sc.astype(sc_ref.dtype)

    # Flat, lane-dense pre-BN conv1 output (no halo written to HBM).
    pre1_ref[0] = acc.astype(pre1_ref.dtype)

    # Per-image BN1 partial statistics (reduced in stage 2) -> grid stays "parallel".
    s1_ref[0] = jnp.sum(acc, axis=0, keepdims=True)
    ss1_ref[0] = jnp.sum(acc * acc, axis=0, keepdims=True)


# ---------------------------------------------------------------------------
# Kernel 2: BN1 apply + ReLU + conv2 (halo rebuilt in VMEM) + per-image BN2 stats
# grid = (N,), "parallel".
# ---------------------------------------------------------------------------
def _bn1_relu_conv2_kernel(pre1_ref, s1_ref, ss1_ref, g1_ref, b1_ref, w2_ref,
                           pre2_ref, s2_ref, ss2_ref, h1pad_ref, *, H, W, inv_count):
    cout = pre2_ref.shape[-1]

    # Reduce the tiny (N, 1, Coutp) per-image BN1 partial sums.
    mean1 = jnp.sum(s1_ref[...], axis=0) * inv_count                  # (1, Coutp)
    var1 = jnp.sum(ss1_ref[...], axis=0) * inv_count - mean1 * mean1
    scale1 = g1_ref[...] * lax.rsqrt(var1 + BN_EPS)
    shift1 = b1_ref[...] - mean1 * scale1

    h1 = jnp.maximum(pre1_ref[0].astype(jnp.float32) * scale1 + shift1, 0.0)

    # Rebuild the conv zero-padding halo in VMEM (no HBM round trip, no iota mask).
    h1pad_ref[...] = jnp.zeros_like(h1pad_ref)
    h1pad_ref[1:H + 1, 1:W + 1, :] = h1.reshape(H, W, cout).astype(h1pad_ref.dtype)

    hdx = [h1pad_ref[:, dx:dx + W, :] for dx in range(3)]             # (H+2, W, Coutp)
    acc = jnp.zeros((H * W, cout), jnp.float32)
    for dy in range(3):
        for dx in range(3):
            xs = hdx[dx][dy:dy + H].reshape(H * W, cout)
            acc = acc + jnp.dot(xs, w2_ref[dy * 3 + dx],
                                preferred_element_type=jnp.float32)
    pre2_ref[0] = acc.astype(pre2_ref.dtype)

    s2_ref[0] = jnp.sum(acc, axis=0, keepdims=True)
    ss2_ref[0] = jnp.sum(acc * acc, axis=0, keepdims=True)


# ---------------------------------------------------------------------------
# Kernel 3: BN2 apply + residual add + ReLU.  Row-tiled, lane-dense, "parallel".
# ---------------------------------------------------------------------------
def _bn2_add_relu_kernel(pre2_ref, sc_ref, s2_ref, ss2_ref, g2_ref, b2_ref,
                         out_ref, *, inv_count):
    mean2 = jnp.sum(s2_ref[...], axis=0) * inv_count
    var2 = jnp.sum(ss2_ref[...], axis=0) * inv_count - mean2 * mean2
    scale2 = g2_ref[...] * lax.rsqrt(var2 + BN_EPS)
    shift2 = b2_ref[...] - mean2 * scale2
    y = pre2_ref[...].astype(jnp.float32) * scale2 + shift2 \
        + sc_ref[...].astype(jnp.float32)
    out_ref[...] = jnp.maximum(y, 0.0).astype(out_ref.dtype)


# ---------------------------------------------------------------------------
# Glue
# ---------------------------------------------------------------------------
def _round_up(v, m):
    return ((v + m - 1) // m) * m


def _pick_row_block(rows, target):
    blk = (min(target, rows) // 8) * 8
    while blk >= 8:
        if rows % blk == 0:
            return blk
        blk -= 8
    return rows  # fallback: single block (block == full dim is always legal)


def simple_residual_block(x_nchw, params, *, compute_dtype=jnp.bfloat16,
                          row_block=1024):
    """Forward of SimpleResidualBlock(stride=1, Cin != Cout).  NCHW in / NCHW out."""
    w1, g1, b1, w2, g2, b2, ws, bs = params
    N, Cin, H, W = x_nchw.shape
    Cout = w1.shape[0]
    Coutp = _round_up(Cout, 128)       # lane-dense Cout for unmasked stores downstream
    R = N * H * W
    inv_count = 1.0 / float(R)

    # ---- layout glue: NCHW -> NHWC, cast once to compute dtype, one fused halo pad ----
    # TODO(synk): longer term, read unpadded x and build the halo in VMEM in stage 1.
    x_nhwc = jnp.transpose(x_nchw, (0, 2, 3, 1)).astype(compute_dtype)
    xpad = jnp.pad(x_nhwc, ((0, 0), (1, 1), (1, 1), (0, 0)))

    # Conv weights -> (tap, Cin, Coutp), tap index = dy*3 + dx (matches slice order).
    w1t = jnp.transpose(w1, (2, 3, 1, 0)).reshape(9, Cin, Cout)
    w1t = jnp.pad(w1t, ((0, 0), (0, 0), (0, Coutp - Cout))).astype(compute_dtype)
    w2t = jnp.transpose(w2, (2, 3, 1, 0)).reshape(9, Cout, Cout)
    w2t = jnp.pad(w2t, ((0, 0), (0, Coutp - Cout), (0, Coutp - Cout))).astype(compute_dtype)
    wsf = jnp.pad(jnp.transpose(ws[:, :, 0, 0], (1, 0)),
                  ((0, 0), (0, Coutp - Cout))).astype(compute_dtype)

    def _vec(v):
        return jnp.pad(v.reshape(1, Cout).astype(jnp.float32),
                       ((0, 0), (0, Coutp - Cout)))

    g1p, b1p, g2p, b2p, bsp = map(_vec, (g1, b1, g2, b2, bs))

    res2 = lambda n: (0, 0)
    res3 = lambda n: (0, 0, 0)
    cparams = pltpu.CompilerParams(dimension_semantics=("parallel",),
                                   vmem_limit_bytes=VMEM_LIMIT)

    # ---- stage 1: conv1 + fused 1x1 shortcut + per-image BN1 partial stats ----
    # TODO(synk): on v7x add an H-row tiling axis (1-row halo) and single-buffer the
    # constant-index weight specs to respect the 64 MiB VMEM budget at C=512 shapes.
    pre1, sc, s1, ss1 = pl.pallas_call(
        functools.partial(_conv1_shortcut_kernel, H=H, W=W),
        grid=(N,),
        in_specs=[
            pl.BlockSpec((1, H + 2, W + 2, Cin), lambda n: (n, 0, 0, 0)),
            pl.BlockSpec((9, Cin, Coutp), res3),
            pl.BlockSpec((Cin, Coutp), res2),
            pl.BlockSpec((1, Coutp), res2),
        ],
        out_specs=(
            pl.BlockSpec((1, H * W, Coutp), lambda n: (n, 0, 0)),
            pl.BlockSpec((1, H * W, Coutp), lambda n: (n, 0, 0)),
            pl.BlockSpec((1, 1, Coutp), lambda n: (n, 0, 0)),
            pl.BlockSpec((1, 1, Coutp), lambda n: (n, 0, 0)),
        ),
        out_shape=(
            jax.ShapeDtypeStruct((N, H * W, Coutp), compute_dtype),
            jax.ShapeDtypeStruct((N, H * W, Coutp), compute_dtype),
            jax.ShapeDtypeStruct((N, 1, Coutp), jnp.float32),
            jax.ShapeDtypeStruct((N, 1, Coutp), jnp.float32),
        ),
        compiler_params=cparams,
    )(xpad, w1t, wsf, bsp)

    # ---- stage 2: BN1 apply + ReLU + conv2 (VMEM halo) + per-image BN2 stats ----
    pre2, s2, ss2 = pl.pallas_call(
        functools.partial(_bn1_relu_conv2_kernel, H=H, W=W, inv_count=inv_count),
        grid=(N,),
        in_specs=[
            pl.BlockSpec((1, H * W, Coutp), lambda n: (n, 0, 0)),
            pl.BlockSpec((N, 1, Coutp), res3),
            pl.BlockSpec((N, 1, Coutp), res3),
            pl.BlockSpec((1, Coutp), res2),
            pl.BlockSpec((1, Coutp), res2),
            pl.BlockSpec((9, Coutp, Coutp), res3),
        ],
        out_specs=(
            pl.BlockSpec((1, H * W, Coutp), lambda n: (n, 0, 0)),
            pl.BlockSpec((1, 1, Coutp), lambda n: (n, 0, 0)),
            pl.BlockSpec((1, 1, Coutp), lambda n: (n, 0, 0)),
        ),
        out_shape=(
            jax.ShapeDtypeStruct((N, H * W, Coutp), compute_dtype),
            jax.ShapeDtypeStruct((N, 1, Coutp), jnp.float32),
            jax.ShapeDtypeStruct((N, 1, Coutp), jnp.float32),
        ),
        scratch_shapes=[pltpu.VMEM((H + 2, W + 2, Coutp), compute_dtype)],
        compiler_params=cparams,
    )(pre1, s1, ss1, g1p, b1p, w2t)

    # ---- stage 3: BN2 apply + residual add + ReLU (row-tiled, lane-dense) ----
    TR = _pick_row_block(R, row_block)
    out_flat = pl.pallas_call(
        functools.partial(_bn2_add_relu_kernel, inv_count=inv_count),
        grid=(R // TR,),
        in_specs=[
            pl.BlockSpec((TR, Coutp), lambda i: (i, 0)),
            pl.BlockSpec((TR, Coutp), lambda i: (i, 0)),
            pl.BlockSpec((N, 1, Coutp), res3),
            pl.BlockSpec((N, 1, Coutp), res3),
            pl.BlockSpec((1, Coutp), res2),
            pl.BlockSpec((1, Coutp), res2),
        ],
        out_specs=pl.BlockSpec((TR, Coutp), lambda i: (i, 0)),
        out_shape=jax.ShapeDtypeStruct((R, Coutp), compute_dtype),
        compiler_params=cparams,
    )(pre2.reshape(R, Coutp), sc.reshape(R, Coutp), s2, ss2, g2p, b2p)

    # TODO(synk): when chaining blocks, keep the padded NHWC (R, Coutp) layout and drop
    # this slice + transpose (one extra full read+write of the activation tensor).
    out_nhwc = out_flat[:, :Cout].astype(jnp.float32).reshape(N, H, W, Cout)
    return jnp.transpose(out_nhwc, (0, 3, 1, 2))


# ---------------------------------------------------------------------------
# Pure-JAX reference (mirrors PyTorch training-mode forward) for verification
# ---------------------------------------------------------------------------
def reference_forward(x_nchw, params):
    w1, g1, b1, w2, g2, b2, ws, bs = params
    dn = ("NCHW", "OIHW", "NCHW")

    def bn_train(y, g, b):
        mean = jnp.mean(y, axis=(0, 2, 3), keepdims=True)
        var = jnp.mean((y - mean) ** 2, axis=(0, 2, 3), keepdims=True)
        return (y - mean) * lax.rsqrt(var + BN_EPS) * g.reshape(1, -1, 1, 1) \
               + b.reshape(1, -1, 1, 1)

    out = lax.conv_general_dilated(x_nchw, w1, (1, 1), "SAME", dimension_numbers=dn)
    out = jnp.maximum(bn_train(out, g1, b1), 0.0)
    out = lax.conv_general_dilated(out, w2, (1, 1), "SAME", dimension_numbers=dn)
    out = bn_train(out, g2, b2)
    sc = lax.conv_general_dilated(x_nchw, ws, (1, 1), "SAME", dimension_numbers=dn)
    sc = sc + bs.reshape(1, -1, 1, 1)
    return jnp.maximum(out + sc, 0.0)


if __name__ == "__main__":
    N, Cin, Cout, H, W = 2, 4, 8, 16, 16

    key = jax.random.PRNGKey(0)
    keys = jax.random.split(key, 9)
    x = jax.random.normal(keys[0], (N, Cin, H, W), jnp.float32)

    # Deterministic synthetic parameters (PyTorch layouts).
    w1 = 0.1 * jax.random.normal(keys[1], (Cout, Cin, 3, 3), jnp.float32)   # conv1 weight
    g1 = 1.0 + 0.1 * jax.random.normal(keys[2], (Cout,), jnp.float32)       # bn1 gamma
    b1 = 0.1 * jax.random.normal(keys[3], (Cout,), jnp.float32)             # bn1 beta
    w2 = 0.1 * jax.random.normal(keys[4], (Cout, Cout, 3, 3), jnp.float32)  # conv2 weight
    g2 = 1.0 + 0.1 * jax.random.normal(keys[5], (Cout,), jnp.float32)       # bn2 gamma
    b2 = 0.1 * jax.random.normal(keys[6], (Cout,), jnp.float32)             # bn2 beta
    ws = 0.1 * jax.random.normal(keys[7], (Cout, Cin, 1, 1), jnp.float32)   # shortcut 1x1 conv
    bs = 0.1 * jax.random.normal(keys[8], (Cout,), jnp.float32)             # shortcut bias
    params = (w1, g1, b1, w2, g2, b2, ws, bs)

    ref = jax.block_until_ready(reference_forward(x, params))

    # Full-precision path: strict check (also exercises a multi-step stage-3 row grid).
    f32_fn = jax.jit(functools.partial(simple_residual_block,
                                       compute_dtype=jnp.float32, row_block=128))
    out_f32 = jax.block_until_ready(f32_fn(x, params))
    assert out_f32.shape == (N, Cout, H, W)
    err32 = float(jnp.max(jnp.abs(out_f32 - ref)))
    assert jnp.allclose(out_f32, ref, atol=5e-4, rtol=5e-4), err32

    # bf16 path (bf16 MXU operands AND bf16 inter-stage HBM tensors): loose tolerance.
    bf16_fn = jax.jit(functools.partial(simple_residual_block,
                                        compute_dtype=jnp.bfloat16))
    out_bf16 = jax.block_until_ready(bf16_fn(x, params))
    errbf = float(jnp.max(jnp.abs(out_bf16 - ref)))
    assert jnp.allclose(out_bf16, ref, atol=1e-1, rtol=1e-1), errbf

    print("KERNEL_OK")
</pallas_src>

<mosaic_0001>
module attributes {stable_mosaic.version = 11 : i64} {
  func.func @_conv1_shortcut_kernel(%arg0: i32, %arg1: memref<1x18x18x4xf32, #tpu.memory_space<vmem>>, %arg2: memref<9x4x128xf32, #tpu.memory_space<vmem>>, %arg3: memref<4x128xf32, #tpu.memory_space<vmem>>, %arg4: memref<1x128xf32, #tpu.memory_space<vmem>>, %arg5: memref<1x256x128xf32, #tpu.memory_space<vmem>>, %arg6: memref<1x256x128xf32, #tpu.memory_space<vmem>>, %arg7: memref<1x1x128xf32, #tpu.memory_space<vmem>>, %arg8: memref<1x1x128xf32, #tpu.memory_space<vmem>>) attributes {dimension_semantics = [#tpu.dimension_semantics<parallel>], iteration_bounds = array<i64: 2>, scalar_prefetch = 0 : i64, scratch_operands = 0 : i64, tpu.core_type = #tpu.core_type<tc>, window_params = [{transform_indices = @transform_0, window_bounds = array<i64: 1, 18, 18, 4>}, {pipeline_mode = #tpu.pipeline_mode<synchronous>, transform_indices = @transform_1, window_bounds = array<i64: 9, 4, 128>}, {pipeline_mode = #tpu.pipeline_mode<synchronous>, transform_indices = @transform_2, window_bounds = array<i64: 4, 128>}, {pipeline_mode = #tpu.pipeline_mode<synchronous>, transform_indices = @transform_3, window_bounds = array<i64: 1, 128>}, {transform_indices = @transform_4, window_bounds = array<i64: 1, 256, 128>}, {transform_indices = @transform_5, window_bounds = array<i64: 1, 256, 128>}, {transform_indices = @transform_6, window_bounds = array<i64: 1, 1, 128>}, {transform_indices = @transform_7, window_bounds = array<i64: 1, 1, 128>}]} {
    %c0 = arith.constant 0 : index
    %c0_0 = arith.constant 0 : index
    %c0_1 = arith.constant 0 : index
    %c0_2 = arith.constant 0 : index
    %0 = vector.load %arg1[%c0, %c0_0, %c0_1, %c0_2] : memref<1x18x18x4xf32, #tpu.memory_space<vmem>>, vector<1x18x16x4xf32>
    %1 = vector.shape_cast %0 : vector<1x18x16x4xf32> to vector<18x16x4xf32>
    %c0_3 = arith.constant 0 : index
    %c0_4 = arith.constant 0 : index
    %c1 = arith.constant 1 : index
    %c0_5 = arith.constant 0 : index
    %2 = vector.load %arg1[%c0_3, %c0_4, %c1, %c0_5] : memref<1x18x18x4xf32, #tpu.memory_space<vmem>>, vector<1x18x16x4xf32>
    %3 = vector.shape_cast %2 : vector<1x18x16x4xf32> to vector<18x16x4xf32>
    %c0_6 = arith.constant 0 : index
    %c0_7 = arith.constant 0 : index
    %c2 = arith.constant 2 : index
    %c0_8 = arith.constant 0 : index
    %4 = vector.load %arg1[%c0_6, %c0_7, %c2, %c0_8] : memref<1x18x18x4xf32, #tpu.memory_space<vmem>>, vector<1x18x16x4xf32>
    %5 = vector.shape_cast %4 : vector<1x18x16x4xf32> to vector<18x16x4xf32>
    %cst = arith.constant 0.000000e+00 : f32
    %6 = vector.broadcast %cst : f32 to vector<256x128xf32>
    %7 = vector.extract_strided_slice %1 {offsets = [0, 0, 0], sizes = [16, 16, 4], strides = [1, 1, 1]} : vector<18x16x4xf32> to vector<16x16x4xf32>
    %8 = vector.shape_cast %7 : vector<16x16x4xf32> to vector<256x4xf32>
    %c0_9 = arith.constant 0 : index
    %c0_10 = arith.constant 0 : index
    %c0_11 = arith.constant 0 : index
    %9 = vector.load %arg2[%c0_9, %c0_10, %c0_11] : memref<9x4x128xf32, #tpu.memory_space<vmem>>, vector<1x4x128xf32>
    %10 = vector.shape_cast %9 : vector<1x4x128xf32> to vector<4x128xf32>
    %cst_12 = arith.constant dense<0.000000e+00> : vector<256x128xf32>
    %11 = tpu.matmul %8, %10, %cst_12 {dimension_numbers = #tpu.dot_dimension_numbers<[1], [0], [0], [1], [0, 0, 1, 1], [], []>} : vector<256x4xf32>, vector<4x128xf32>, vector<256x128xf32> -> vector<256x128xf32>
    %12 = arith.addf %6, %11 : vector<256x128xf32>
    %13 = vector.extract_strided_slice %3 {offsets = [0, 0, 0], sizes = [16, 16, 4], strides = [1, 1, 1]} : vector<18x16x4xf32> to vector<16x16x4xf32>
    %14 = vector.shape_cast %13 : vector<16x16x4xf32> to vector<256x4xf32>
    %c1_13 = arith.constant 1 : index
    %c0_14 = arith.constant 0 : index
    %c0_15 = arith.constant 0 : index
    %15 = vector.load %arg2[%c1_13, %c0_14, %c0_15] : memref<9x4x128xf32, #tpu.memory_space<vmem>>, vector<1x4x128xf32>
    %16 = vector.shape_cast %15 : vector<1x4x128xf32> to vector<4x128xf32>
    %cst_16 = arith.constant dense<0.000000e+00> : vector<256x128xf32>
    %17 = tpu.matmul %14, %16, %cst_16 {dimension_numbers = #tpu.dot_dimension_numbers<[1], [0], [0], [1], [0, 0, 1, 1], [], []>} : vector<256x4xf32>, vector<4x128xf32>, vector<256x128xf32> -> vector<256x128xf32>
    %18 = arith.addf %12, %17 : vector<256x128xf32>
    %19 = vector.extract_strided_slice %5 {offsets = [0, 0, 0], sizes = [16, 16, 4], strides = [1, 1, 1]} : vector<18x16x4xf32> to vector<16x16x4xf32>
    %20 = vector.shape_cast %19 : vector<16x16x4xf32> to vector<256x4xf32>
    %c2_17 = arith.constant 2 : index
    %c0_18 = arith.constant 0 : index
    %c0_19 = arith.constant 0 : index
    %21 = vector.load %arg2[%c2_17, %c0_18, %c0_19] : memref<9x4x128xf32, #tpu.memory_space<vmem>>, vector<1x4x128xf32>
    %22 = vector.shape_cast %21 : vector<1x4x128xf32> to vector<4x128xf32>
    %cst_20 = arith.constant dense<0.000000e+00> : vector<256x128xf32>
    %23 = tpu.matmul %20, %22, %cst_20 {dimension_numbers = #tpu.dot_dimension_numbers<[1], [0], [0], [1], [0, 0, 1, 1], [], []>} : vector<256x4xf32>, vector<4x128xf32>, vector<256x128xf32> -> vector<256x128xf32>
    %24 = arith.addf %18, %23 : vector<256x128xf32>
    %25 = vector.extract_strided_slice %1 {offsets = [1, 0, 0], sizes = [16, 16, 4], strides = [1, 1, 1]} : vector<18x16x4xf32> to vector<16x16x4xf32>
    %26 = vector.shape_cast %25 : vector<16x16x4xf32> to vector<256x4xf32>
    %c3 = arith.constant 3 : index
    %c0_21 = arith.constant 0 : index
    %c0_22 = arith.constant 0 : index
    %27 = vector.load %arg2[%c3, %c0_21, %c0_22] : memref<9x4x128xf32, #tpu.memory_space<vmem>>, vector<1x4x128xf32>
    %28 = vector.shape_cast %27 : vector<1x4x128xf32> to vector<4x128xf32>
    %cst_23 = arith.constant dense<0.000000e+00> : vector<256x128xf32>
    %29 = tpu.matmul %26, %28, %cst_23 {dimension_numbers = #tpu.dot_dimension_numbers<[1], [0], [0], [1], [0, 0, 1, 1], [], []>} : vector<256x4xf32>, vector<4x128xf32>, vector<256x128xf32> -> vector<256x128xf32>
    %30 = arith.addf %24, %29 : vector<256x128xf32>
    %31 = vector.extract_strided_slice %3 {offsets = [1, 0, 0], sizes = [16, 16, 4], strides = [1, 1, 1]} : vector<18x16x4xf32> to vector<16x16x4xf32>
    %32 = vector.shape_cast %31 : vector<16x16x4xf32> to vector<256x4xf32>
    %c4 = arith.constant 4 : index
    %c0_24 = arith.constant 0 : index
    %c0_25 = arith.constant 0 : index
    %33 = vector.load %arg2[%c4, %c0_24, %c0_25] : memref<9x4x128xf32, #tpu.memory_space<vmem>>, vector<1x4x128xf32>
    %34 = vector.shape_cast %33 : vector<1x4x128xf32> to vector<4x128xf32>
    %cst_26 = arith.constant dense<0.000000e+00> : vector<256x128xf32>
    %35 = tpu.matmul %32, %34, %cst_26 {dimension_numbers = #tpu.dot_dimension_numbers<[1], [0], [0], [1], [0, 0, 1, 1], [], []>} : vector<256x4xf32>, vector<4x128xf32>, vector<256x128xf32> -> vector<256x128xf32>
    %36 = arith.addf %30, %35 : vector<256x128xf32>
    %37 = vector.extract_strided_slice %5 {offsets = [1, 0, 0], sizes = [16, 16, 4], strides = [1, 1, 1]} : vector<18x16x4xf32> to vector<16x16x4xf32>
    %38 = vector.shape_cast %37 : vector<16x16x4xf32> to vector<256x4xf32>
    %c5 = arith.constant 5 : index
    %c0_27 = arith.constant 0 : index
    %c0_28 = arith.constant 0 : index
    %39 = vector.load %arg2[%c5, %c0_27, %c0_28] : memref<9x4x128xf32, #tpu.memory_space<vmem>>, vector<1x4x128xf32>
    %40 = vector.shape_cast %39 : vector<1x4x128xf32> to vector<4x128xf32>
    %cst_29 = arith.constant dense<0.000000e+00> : vector<256x128xf32>
    %41 = tpu.matmul %38, %40, %cst_29 {dimension_numbers = #tpu.dot_dimension_numbers<[1], [0], [0], [1], [0, 0, 1, 1], [], []>} : vector<256x4xf32>, vector<4x128xf32>, vector<256x128xf32> -> vector<256x128xf32>
    %42 = arith.addf %36, %41 : vector<256x128xf32>
    %43 = vector.extract_strided_slice %1 {offsets = [2, 0, 0], sizes = [16, 16, 4], strides = [1, 1, 1]} : vector<18x16x4xf32> to vector<16x16x4xf32>
    %44 = vector.shape_cast %43 : vector<16x16x4xf32> to vector<256x4xf32>
    %c6 = arith.constant 6 : index
    %c0_30 = arith.constant 0 : index
    %c0_31 = arith.constant 0 : index
    %45 = vector.load %arg2[%c6, %c0_30, %c0_31] : memref<9x4x128xf32, #tpu.memory_space<vmem>>, vector<1x4x128xf32>
    %46 = vector.shape_cast %45 : vector<1x4x128xf32> to vector<4x128xf32>
    %cst_32 = arith.constant dense<0.000000e+00> : vector<256x128xf32>
    %47 = tpu.matmul %44, %46, %cst_32 {dimension_numbers = #tpu.dot_dimension_numbers<[1], [0], [0], [1], [0, 0, 1, 1], [], []>} : vector<256x4xf32>, vector<4x128xf32>, vector<256x128xf32> -> vector<256x128xf32>
    %48 = arith.addf %42, %47 : vector<256x128xf32>
    %49 = vector.extract_strided_slice %3 {offsets = [2, 0, 0], sizes = [16, 16, 4], strides = [1, 1, 1]} : vector<18x16x4xf32> to vector<16x16x4xf32>
    %50 = vector.shape_cast %49 : vector<16x16x4xf32> to vector<256x4xf32>
    %c7 = arith.constant 7 : index
    %c0_33 = arith.constant 0 : index
    %c0_34 = arith.constant 0 : index
    %51 = vector.load %arg2[%c7, %c0_33, %c0_34] : memref<9x4x128xf32, #tpu.memory_space<vmem>>, vector<1x4x128xf32>
    %52 = vector.shape_cast %51 : vector<1x4x128xf32> to vector<4x128xf32>
    %cst_35 = arith.constant dense<0.000000e+00> : vector<256x128xf32>
    %53 = tpu.matmul %50, %52, %cst_35 {dimension_numbers = #tpu.dot_dimension_numbers<[1], [0], [0], [1], [0, 0, 1, 1], [], []>} : vector<256x4xf32>, vector<4x128xf32>, vector<256x128xf32> -> vector<256x128xf32>
    %54 = arith.addf %48, %53 : vector<256x128xf32>
    %55 = vector.extract_strided_slice %5 {offsets = [2, 0, 0], sizes = [16, 16, 4], strides = [1, 1, 1]} : vector<18x16x4xf32> to vector<16x16x4xf32>
    %56 = vector.shape_cast %55 : vector<16x16x4xf32> to vector<256x4xf32>
    %c8 = arith.constant 8 : index
    %c0_36 = arith.constant 0 : index
    %c0_37 = arith.constant 0 : index
    %57 = vector.load %arg2[%c8, %c0_36, %c0_37] : memref<9x4x128xf32, #tpu.memory_space<vmem>>, vector<1x4x128xf32>
    %58 = vector.shape_cast %57 : vector<1x4x128xf32> to vector<4x128xf32>
    %cst_38 = arith.constant dense<0.000000e+00> : vector<256x128xf32>
    %59 = tpu.matmul %56, %58, %cst_38 {dimension_numbers = #tpu.dot_dimension_numbers<[1], [0], [0], [1], [0, 0, 1, 1], [], []>} : vector<256x4xf32>, vector<4x128xf32>, vector<256x128xf32> -> vector<256x128xf32>
    %60 = arith.addf %54, %59 : vector<256x128xf32>
    %61 = vector.extract_strided_slice %3 {offsets = [1, 0, 0], sizes = [16, 16, 4], strides = [1, 1, 1]} : vector<18x16x4xf32> to vector<16x16x4xf32>
    %62 = vector.shape_cast %61 : vector<16x16x4xf32> to vector<256x4xf32>
    %c0_39 = arith.constant 0 : index
    %c0_40 = arith.constant 0 : index
    %63 = vector.load %arg3[%c0_39, %c0_40] : memref<4x128xf32, #tpu.memory_space<vmem>>, vector<4x128xf32>
    %cst_41 = arith.constant dense<0.000000e+00> : vector<256x128xf32>
    %64 = tpu.matmul %62, %63, %cst_41 {dimension_numbers = #tpu.dot_dimension_numbers<[1], [0], [0], [1], [0, 0, 1, 1], [], []>} : vector<256x4xf32>, vector<4x128xf32>, vector<256x128xf32> -> vector<256x128xf32>
    %c0_42 = arith.constant 0 : index
    %c0_43 = arith.constant 0 : index
    %65 = vector.load %arg4[%c0_42, %c0_43] : memref<1x128xf32, #tpu.memory_space<vmem>>, vector<1x128xf32>
    %66 = vector.broadcast %65 : vector<1x128xf32> to vector<256x128xf32>
    %67 = arith.addf %64, %66 : vector<256x128xf32>
    %c0_44 = arith.constant 0 : index
    %c0_45 = arith.constant 0 : index
    %c0_46 = arith.constant 0 : index
    %68 = vector.load %arg6[%c0_44, %c0_45, %c0_46] : memref<1x256x128xf32, #tpu.memory_space<vmem>>, vector<1x256x128xf32>
    %69 = vector.shape_cast %68 : vector<1x256x128xf32> to vector<256x128xf32>
    %70 = vector.shape_cast %67 : vector<256x128xf32> to vector<1x256x128xf32>
    tpu.vector_store %arg6[%c0_44, %c0_45, %c0_46], %70 {strides = array<i32>} : memref<1x256x128xf32, #tpu.memory_space<vmem>>, vector<1x256x128xf32>,
    %c0_47 = arith.constant 0 : index
    %c0_48 = arith.constant 0 : index
    %c0_49 = arith.constant 0 : index
    %71 = vector.load %arg5[%c0_47, %c0_48, %c0_49] : memref<1x256x128xf32, #tpu.memory_space<vmem>>, vector<1x256x128xf32>
    %72 = vector.shape_cast %71 : vector<1x256x128xf32> to vector<256x128xf32>
    %73 = vector.shape_cast %60 : vector<256x128xf32> to vector<1x256x128xf32>
    tpu.vector_store %arg5[%c0_47, %c0_48, %c0_49], %73 {strides = array<i32>} : memref<1x256x128xf32, #tpu.memory_space<vmem>>, vector<1x256x128xf32>,
    %cst_50 = arith.constant dense<0.000000e+00> : vector<128xf32>
    %74 = vector.multi_reduction <add>, %60, %cst_50 [0] : vector<256x128xf32> to vector<128xf32>
    %75 = vector.shape_cast %74 : vector<128xf32> to vector<1x128xf32>
    %c0_51 = arith.constant 0 : index
    %c0_52 = arith.constant 0 : index
    %c0_53 = arith.constant 0 : index
    %76 = vector.load %arg7[%c0_51, %c0_52, %c0_53] : memref<1x1x128xf32, #tpu.memory_space<vmem>>, vector<1x1x128xf32>
    %77 = vector.shape_cast %76 : vector<1x1x128xf32> to vector<1x128xf32>
    %78 = vector.shape_cast %75 : vector<1x128xf32> to vector<1x1x128xf32>
    tpu.vector_store %arg7[%c0_51, %c0_52, %c0_53], %78 {strides = array<i32>} : memref<1x1x128xf32, #tpu.memory_space<vmem>>, vector<1x1x128xf32>,
    %79 = arith.mulf %60, %60 : vector<256x128xf32>
    %cst_54 = arith.constant dense<0.000000e+00> : vector<128xf32>
    %80 = vector.multi_reduction <add>, %79, %cst_54 [0] : vector<256x128xf32> to vector<128xf32>
    %81 = vector.shape_cast %80 : vector<128xf32> to vector<1x128xf32>
    %c0_55 = arith.constant 0 : index
    %c0_56 = arith.constant 0 : index
    %c0_57 = arith.constant 0 : index
    %82 = vector.load %arg8[%c0_55, %c0_56, %c0_57] : memref<1x1x128xf32, #tpu.memory_space<vmem>>, vector<1x1x128xf32>
    %83 = vector.shape_cast %82 : vector<1x1x128xf32> to vector<1x128xf32>
    %84 = vector.shape_cast %81 : vector<1x128xf32> to vector<1x1x128xf32>
    tpu.vector_store %arg8[%c0_55, %c0_56, %c0_57], %84 {strides = array<i32>} : memref<1x1x128xf32, #tpu.memory_space<vmem>>, vector<1x1x128xf32>,
    return
  }
  func.func @transform_0(%arg0: i32) -> (i32, i32, i32, i32) {
    %c0_i32 = arith.constant 0 : i32
    %c0_i32_0 = arith.constant 0 : i32
    %c0_i32_1 = arith.constant 0 : i32
    %c0_i32_2 = arith.constant 0 : i32
    return %arg0, %c0_i32, %c0_i32_0, %c0_i32_1 : i32, i32, i32, i32
  }
  func.func @transform_1(%arg0: i32) -> (i32, i32, i32) {
    %c0_i32 = arith.constant 0 : i32
    %c0_i32_0 = arith.constant 0 : i32
    %c0_i32_1 = arith.constant 0 : i32
    %c0_i32_2 = arith.constant 0 : i32
    return %c0_i32, %c0_i32_0, %c0_i32_1 : i32, i32, i32
  }
  func.func @transform_2(%arg0: i32) -> (i32, i32) {
    %c0_i32 = arith.constant 0 : i32
    %c0_i32_0 = arith.constant 0 : i32
    %c0_i32_1 = arith.constant 0 : i32
    return %c0_i32, %c0_i32_0 : i32, i32
  }
  func.func @transform_3(%arg0: i32) -> (i32, i32) {
    %c0_i32 = arith.constant 0 : i32
    %c0_i32_0 = arith.constant 0 : i32
    %c0_i32_1 = arith.constant 0 : i32
    return %c0_i32, %c0_i32_0 : i32, i32
  }
  func.func @transform_4(%arg0: i32) -> (i32, i32, i32) {
    %c0_i32 = arith.constant 0 : i32
    %c0_i32_0 = arith.constant 0 : i32
    %c0_i32_1 = arith.constant 0 : i32
    return %arg0, %c0_i32, %c0_i32_0 : i32, i32, i32
  }
  func.func @transform_5(%arg0: i32) -> (i32, i32, i32) {
    %c0_i32 = arith.constant 0 : i32
    %c0_i32_0 = arith.constant 0 : i32
    %c0_i32_1 = arith.constant 0 : i32
    return %arg0, %c0_i32, %c0_i32_0 : i32, i32, i32
  }
  func.func @transform_6(%arg0: i32) -> (i32, i32, i32) {
    %c0_i32 = arith.constant 0 : i32
    %c0_i32_0 = arith.constant 0 : i32
    %c0_i32_1 = arith.constant 0 : i32
    return %arg0, %c0_i32, %c0_i32_0 : i32, i32, i32
  }
  func.func @transform_7(%arg0: i32) -> (i32, i32, i32) {
    %c0_i32 = arith.constant 0 : i32
    %c0_i32_0 = arith.constant 0 : i32
    %c0_i32_1 = arith.constant 0 : i32
    return %arg0, %c0_i32, %c0_i32_0 : i32, i32, i32
  }
}

module attributes {stable_mosaic.version = 11 : i64} {
  func.func @_bn1_relu_conv2_kernel(%arg0: i32, %arg1: memref<1x256x128xf32, #tpu.memory_space<vmem>>, %arg2: memref<2x1x128xf32, #tpu.memory_space<vmem>>, %arg3: memref<2x1x128xf32, #tpu.memory_space<vmem>>, %arg4: memref<1x128xf32, #tpu.memory_space<vmem>>, %arg5: memref<1x128xf32, #tpu.memory_space<vmem>>, %arg6: memref<9x128x128xf32, #tpu.memory_space<vmem>>, %arg7: memref<1x256x128xf32, #tpu.memory_space<vmem>>, %arg8: memref<1x1x128xf32, #tpu.memory_space<vmem>>, %arg9: memref<1x1x128xf32, #tpu.memory_space<vmem>>, %arg10: memref<18x18x128xf32, #tpu.memory_space<vmem>>) attributes {dimension_semantics = [#tpu.dimension_semantics<parallel>], iteration_bounds = array<i64: 2>, scalar_prefetch = 0 : i64, scratch_operands = 1 : i64, tpu.core_type = #tpu.core_type<tc>, window_params = [{transform_indices = @transform_0, window_bounds = array<i64: 1, 256, 128>}, {pipeline_mode = #tpu.pipeline_mode<synchronous>, transform_indices = @transform_1, window_bounds = array<i64: 2, 1, 128>}, {pipeline_mode = #tpu.pipeline_mode<synchronous>, transform_indices = @transform_2, window_bounds = array<i64: 2, 1, 128>}, {pipeline_mode = #tpu.pipeline_mode<synchronous>, transform_indices = @transform_3, window_bounds = array<i64: 1, 128>}, {pipeline_mode = #tpu.pipeline_mode<synchronous>, transform_indices = @transform_4, window_bounds = array<i64: 1, 128>}, {pipeline_mode = #tpu.pipeline_mode<synchronous>, transform_indices = @transform_5, window_bounds = array<i64: 9, 128, 128>}, {transform_indices = @transform_6, window_bounds = array<i64: 1, 256, 128>}, {transform_indices = @transform_7, window_bounds = array<i64: 1, 1, 128>}, {transform_indices = @transform_8, window_bounds = array<i64: 1, 1, 128>}]} {
    %c0 = arith.constant 0 : index
    %c0_0 = arith.constant 0 : index
    %c0_1 = arith.constant 0 : index
    %0 = vector.load %arg2[%c0, %c0_0, %c0_1] : memref<2x1x128xf32, #tpu.memory_space<vmem>>, vector<2x1x128xf32>
    %cst = arith.constant dense<0.000000e+00> : vector<1x128xf32>
    %1 = vector.multi_reduction <add>, %0, %cst [0] : vector<2x1x128xf32> to vector<1x128xf32>
    %cst_2 = arith.constant 0.001953125 : f32
    %2 = vector.broadcast %cst_2 : f32 to vector<1x128xf32>
    %3 = arith.mulf %1, %2 : vector<1x128xf32>
    %c0_3 = arith.constant 0 : index
    %c0_4 = arith.constant 0 : index
    %c0_5 = arith.constant 0 : index
    %4 = vector.load %arg3[%c0_3, %c0_4, %c0_5] : memref<2x1x128xf32, #tpu.memory_space<vmem>>, vector<2x1x128xf32>
    %cst_6 = arith.constant dense<0.000000e+00> : vector<1x128xf32>
    %5 = vector.multi_reduction <add>, %4, %cst_6 [0] : vector<2x1x128xf32> to vector<1x128xf32>
    %cst_7 = arith.constant 0.001953125 : f32
    %6 = vector.broadcast %cst_7 : f32 to vector<1x128xf32>
    %7 = arith.mulf %5, %6 : vector<1x128xf32>
    %8 = arith.mulf %3, %3 : vector<1x128xf32>
    %9 = arith.subf %7, %8 : vector<1x128xf32>
    %c0_8 = arith.constant 0 : index
    %c0_9 = arith.constant 0 : index
    %10 = vector.load %arg4[%c0_8, %c0_9] : memref<1x128xf32, #tpu.memory_space<vmem>>, vector<1x128xf32>
    %cst_10 = arith.constant 9.99999974E-6 : f32
    %11 = vector.broadcast %cst_10 : f32 to vector<1x128xf32>
    %12 = arith.addf %9, %11 : vector<1x128xf32>
    %13 = math.rsqrt %12 : vector<1x128xf32>
    %14 = arith.mulf %10, %13 : vector<1x128xf32>
    %c0_11 = arith.constant 0 : index
    %c0_12 = arith.constant 0 : index
    %15 = vector.load %arg5[%c0_11, %c0_12] : memref<1x128xf32, #tpu.memory_space<vmem>>, vector<1x128xf32>
    %16 = arith.mulf %3, %14 : vector<1x128xf32>
    %17 = arith.subf %15, %16 : vector<1x128xf32>
    %c0_13 = arith.constant 0 : index
    %c0_14 = arith.constant 0 : index
    %c0_15 = arith.constant 0 : index
    %18 = vector.load %arg1[%c0_13, %c0_14, %c0_15] : memref<1x256x128xf32, #tpu.memory_space<vmem>>, vector<1x256x128xf32>
    %19 = vector.shape_cast %18 : vector<1x256x128xf32> to vector<256x128xf32>
    %20 = vector.broadcast %14 : vector<1x128xf32> to vector<256x128xf32>
    %21 = arith.mulf %19, %20 : vector<256x128xf32>
    %22 = vector.broadcast %17 : vector<1x128xf32> to vector<256x128xf32>
    %23 = arith.addf %21, %22 : vector<256x128xf32>
    %cst_16 = arith.constant 0.000000e+00 : f32
    %24 = vector.broadcast %cst_16 : f32 to vector<256x128xf32>
    %25 = arith.maximumf %23, %24 : vector<256x128xf32>
    %cst_17 = arith.constant 0.000000e+00 : f32
    %26 = vector.broadcast %cst_17 : f32 to vector<18x18x128xf32>
    %c0_18 = arith.constant 0 : index
    %c0_19 = arith.constant 0 : index
    %c0_20 = arith.constant 0 : index
    %27 = vector.load %arg10[%c0_18, %c0_19, %c0_20] : memref<18x18x128xf32, #tpu.memory_space<vmem>>, vector<18x18x128xf32>
    tpu.vector_store %arg10[%c0_18, %c0_19, %c0_20], %26 {strides = array<i32>} : memref<18x18x128xf32, #tpu.memory_space<vmem>>, vector<18x18x128xf32>,
    %28 = vector.shape_cast %25 : vector<256x128xf32> to vector<16x16x128xf32>
    %c1 = arith.constant 1 : index
    %c1_21 = arith.constant 1 : index
    %c0_22 = arith.constant 0 : index
    %29 = vector.load %arg10[%c1, %c1_21, %c0_22] : memref<18x18x128xf32, #tpu.memory_space<vmem>>, vector<16x16x128xf32>
    tpu.vector_store %arg10[%c1, %c1_21, %c0_22], %28 {strides = array<i32>} : memref<18x18x128xf32, #tpu.memory_space<vmem>>, vector<16x16x128xf32>,
    %c0_23 = arith.constant 0 : index
    %c0_24 = arith.constant 0 : index
    %c0_25 = arith.constant 0 : index
    %30 = vector.load %arg10[%c0_23, %c0_24, %c0_25] : memref<18x18x128xf32, #tpu.memory_space<vmem>>, vector<18x16x128xf32>
    %c0_26 = arith.constant 0 : index
    %c1_27 = arith.constant 1 : index
    %c0_28 = arith.constant 0 : index
    %31 = vector.load %arg10[%c0_26, %c1_27, %c0_28] : memref<18x18x128xf32, #tpu.memory_space<vmem>>, vector<18x16x128xf32>
    %c0_29 = arith.constant 0 : index
    %c2 = arith.constant 2 : index
    %c0_30 = arith.constant 0 : index
    %32 = vector.load %arg10[%c0_29, %c2, %c0_30] : memref<18x18x128xf32, #tpu.memory_space<vmem>>, vector<18x16x128xf32>
    %cst_31 = arith.constant 0.000000e+00 : f32
    %33 = vector.broadcast %cst_31 : f32 to vector<256x128xf32>
    %34 = vector.extract_strided_slice %30 {offsets = [0, 0, 0], sizes = [16, 16, 128], strides = [1, 1, 1]} : vector<18x16x128xf32> to vector<16x16x128xf32>
    %35 = vector.shape_cast %34 : vector<16x16x128xf32> to vector<256x128xf32>
    %c0_32 = arith.constant 0 : index
    %c0_33 = arith.constant 0 : index
    %c0_34 = arith.constant 0 : index
    %36 = vector.load %arg6[%c0_32, %c0_33, %c0_34] : memref<9x128x128xf32, #tpu.memory_space<vmem>>, vector<1x128x128xf32>
    %37 = vector.shape_cast %36 : vector<1x128x128xf32> to vector<128x128xf32>
    %cst_35 = arith.constant dense<0.000000e+00> : vector<256x128xf32>
    %38 = tpu.matmul %35, %37, %cst_35 {dimension_numbers = #tpu.dot_dimension_numbers<[1], [0], [0], [1], [0, 0, 1, 1], [], []>} : vector<256x128xf32>, vector<128x128xf32>, vector<256x128xf32> -> vector<256x128xf32>
    %39 = arith.addf %33, %38 : vector<256x128xf32>
    %40 = vector.extract_strided_slice %31 {offsets = [0, 0, 0], sizes = [16, 16, 128], strides = [1, 1, 1]} : vector<18x16x128xf32> to vector<16x16x128xf32>
    %41 = vector.shape_cast %40 : vector<16x16x128xf32> to vector<256x128xf32>
    %c1_36 = arith.constant 1 : index
    %c0_37 = arith.constant 0 : index
    %c0_38 = arith.constant 0 : index
    %42 = vector.load %arg6[%c1_36, %c0_37, %c0_38] : memref<9x128x128xf32, #tpu.memory_space<vmem>>, vector<1x128x128xf32>
    %43 = vector.shape_cast %42 : vector<1x128x128xf32> to vector<128x128xf32>
    %cst_39 = arith.constant dense<0.000000e+00> : vector<256x128xf32>
    %44 = tpu.matmul %41, %43, %cst_39 {dimension_numbers = #tpu.dot_dimension_numbers<[1], [0], [0], [1], [0, 0, 1, 1], [], []>} : vector<256x128xf32>, vector<128x128xf32>, vector<256x128xf32> -> vector<256x128xf32>
    %45 = arith.addf %39, %44 : vector<256x128xf32>
    %46 = vector.extract_strided_slice %32 {offsets = [0, 0, 0], sizes = [16, 16, 128], strides = [1, 1, 1]} : vector<18x16x128xf32> to vector<16x16x128xf32>
    %47 = vector.shape_cast %46 : vector<16x16x128xf32> to vector<256x128xf32>
    %c2_40 = arith.constant 2 : index
    %c0_41 = arith.constant 0 : index
    %c0_42 = arith.constant 0 : index
    %48 = vector.load %arg6[%c2_40, %c0_41, %c0_42] : memref<9x128x128xf32, #tpu.memory_space<vmem>>, vector<1x128x128xf32>
    %49 = vector.shape_cast %48 : vector<1x128x128xf32> to vector<128x128xf32>
    %cst_43 = arith.constant dense<0.000000e+00> : vector<256x128xf32>
    %50 = tpu.matmul %47, %49, %cst_43 {dimension_numbers = #tpu.dot_dimension_numbers<[1], [0], [0], [1], [0, 0, 1, 1], [], []>} : vector<256x128xf32>, vector<128x128xf32>, vector<256x128xf32> -> vector<256x128xf32>
    %51 = arith.addf %45, %50 : vector<256x128xf32>
    %52 = vector.extract_strided_slice %30 {offsets = [1, 0, 0], sizes = [16, 16, 128], strides = [1, 1, 1]} : vector<18x16x128xf32> to vector<16x16x128xf32>
    %53 = vector.shape_cast %52 : vector<16x16x128xf32> to vector<256x128xf32>
    %c3 = arith.constant 3 : index
    %c0_44 = arith.constant 0 : index
    %c0_45 = arith.constant 0 : index
    %54 = vector.load %arg6[%c3, %c0_44, %c0_45] : memref<9x128x128xf32, #tpu.memory_space<vmem>>, vector<1x128x128xf32>
    %55 = vector.shape_cast %54 : vector<1x128x128xf32> to vector<128x128xf32>
    %cst_46 = arith.constant dense<0.000000e+00> : vector<256x128xf32>
    %56 = tpu.matmul %53, %55, %cst_46 {dimension_numbers = #tpu.dot_dimension_numbers<[1], [0], [0], [1], [0, 0, 1, 1], [], []>} : vector<256x128xf32>, vector<128x128xf32>, vector<256x128xf32> -> vector<256x128xf32>
    %57 = arith.addf %51, %56 : vector<256x128xf32>
    %58 = vector.extract_strided_slice %31 {offsets = [1, 0, 0], sizes = [16, 16, 128], strides = [1, 1, 1]} : vector<18x16x128xf32> to vector<16x16x128xf32>
    %59 = vector.shape_cast %58 : vector<16x16x128xf32> to vector<256x128xf32>
    %c4 = arith.constant 4 : index
    %c0_47 = arith.constant 0 : index
    %c0_48 = arith.constant 0 : index
    %60 = vector.load %arg6[%c4, %c0_47, %c0_48] : memref<9x128x128xf32, #tpu.memory_space<vmem>>, vector<1x128x128xf32>
    %61 = vector.shape_cast %60 : vector<1x128x128xf32> to vector<128x128xf32>
    %cst_49 = arith.constant dense<0.000000e+00> : vector<256x128xf32>
    %62 = tpu.matmul %59, %61, %cst_49 {dimension_numbers = #tpu.dot_dimension_numbers<[1], [0], [0], [1], [0, 0, 1, 1], [], []>} : vector<256x128xf32>, vector<128x128xf32>, vector<256x128xf32> -> vector<256x128xf32>
    %63 = arith.addf %57, %62 : vector<256x128xf32>
    %64 = vector.extract_strided_slice %32 {offsets = [1, 0, 0], sizes = [16, 16, 128], strides = [1, 1, 1]} : vector<18x16x128xf32> to vector<16x16x128xf32>
    %65 = vector.shape_cast %64 : vector<16x16x128xf32> to vector<256x128xf32>
    %c5 = arith.constant 5 : index
    %c0_50 = arith.constant 0 : index
    %c0_51 = arith.constant 0 : index
    %66 = vector.load %arg6[%c5, %c0_50, %c0_51] : memref<9x128x128xf32, #tpu.memory_space<vmem>>, vector<1x128x128xf32>
    %67 = vector.shape_cast %66 : vector<1x128x128xf32> to vector<128x128xf32>
    %cst_52 = arith.constant dense<0.000000e+00> : vector<256x128xf32>
    %68 = tpu.matmul %65, %67, %cst_52 {dimension_numbers = #tpu.dot_dimension_numbers<[1], [0], [0], [1], [0, 0, 1, 1], [], []>} : vector<256x128xf32>, vector<128x128xf32>, vector<256x128xf32> -> vector<256x128xf32>
    %69 = arith.addf %63, %68 : vector<256x128xf32>
    %70 = vector.extract_strided_slice %30 {offsets = [2, 0, 0], sizes = [16, 16, 128], strides = [1, 1, 1]} : vector<18x16x128xf32> to vector<16x16x128xf32>
    %71 = vector.shape_cast %70 : vector<16x16x128xf32> to vector<256x128xf32>
    %c6 = arith.constant 6 : index
    %c0_53 = arith.constant 0 : index
    %c0_54 = arith.constant 0 : index
    %72 = vector.load %arg6[%c6, %c0_53, %c0_54] : memref<9x128x128xf32, #tpu.memory_space<vmem>>, vector<1x128x128xf32>
    %73 = vector.shape_cast %72 : vector<1x128x128xf32> to vector<128x128xf32>
    %cst_55 = arith.constant dense<0.000000e+00> : vector<256x128xf32>
    %74 = tpu.matmul %71, %73, %cst_55 {dimension_numbers = #tpu.dot_dimension_numbers<[1], [0], [0], [1], [0, 0, 1, 1], [], []>} : vector<256x128xf32>, vector<128x128xf32>, vector<256x128xf32> -> vector<256x128xf32>
    %75 = arith.addf %69, %74 : vector<256x128xf32>
    %76 = vector.extract_strided_slice %31 {offsets = [2, 0, 0], sizes = [16, 16, 128], strides = [1, 1, 1]} : vector<18x16x128xf32> to vector<16x16x128xf32>
    %77 = vector.shape_cast %76 : vector<16x16x128xf32> to vector<256x128xf32>
    %c7 = arith.constant 7 : index
    %c0_56 = arith.constant 0 : index
    %c0_57 = arith.constant 0 : index
    %78 = vector.load %arg6[%c7, %c0_56, %c0_57] : memref<9x128x128xf32, #tpu.memory_space<vmem>>, vector<1x128x128xf32>
    %79 = vector.shape_cast %78 : vector<1x128x128xf32> to vector<128x128xf32>
    %cst_58 = arith.constant dense<0.000000e+00> : vector<256x128xf32>
    %80 = tpu.matmul %77, %79, %cst_58 {dimension_numbers = #tpu.dot_dimension_numbers<[1], [0], [0], [1], [0, 0, 1, 1], [], []>} : vector<256x128xf32>, vector<128x128xf32>, vector<256x128xf32> -> vector<256x128xf32>
    %81 = arith.addf %75, %80 : vector<256x128xf32>
    %82 = vector.extract_strided_slice %32 {offsets = [2, 0, 0], sizes = [16, 16, 128], strides = [1, 1, 1]} : vector<18x16x128xf32> to vector<16x16x128xf32>
    %83 = vector.shape_cast %82 : vector<16x16x128xf32> to vector<256x128xf32>
    %c8 = arith.constant 8 : index
    %c0_59 = arith.constant 0 : index
    %c0_60 = arith.constant 0 : index
    %84 = vector.load %arg6[%c8, %c0_59, %c0_60] : memref<9x128x128xf32, #tpu.memory_space<vmem>>, vector<1x128x128xf32>
    %85 = vector.shape_cast %84 : vector<1x128x128xf32> to vector<128x128xf32>
    %cst_61 = arith.constant dense<0.000000e+00> : vector<256x128xf32>
    %86 = tpu.matmul %83, %85, %cst_61 {dimension_numbers = #tpu.dot_dimension_numbers<[1], [0], [0], [1], [0, 0, 1, 1], [], []>} : vector<256x128xf32>, vector<128x128xf32>, vector<256x128xf32> -> vector<256x128xf32>
    %87 = arith.addf %81, %86 : vector<256x128xf32>
    %c0_62 = arith.constant 0 : index
    %c0_63 = arith.constant 0 : index
    %c0_64 = arith.constant 0 : index
    %88 = vector.load %arg7[%c0_62, %c0_63, %c0_64] : memref<1x256x128xf32, #tpu.memory_space<vmem>>, vector<1x256x128xf32>
    %89 = vector.shape_cast %88 : vector<1x256x128xf32> to vector<256x128xf32>
    %90 = vector.shape_cast %87 : vector<256x128xf32> to vector<1x256x128xf32>
    tpu.vector_store %arg7[%c0_62, %c0_63, %c0_64], %90 {strides = array<i32>} : memref<1x256x128xf32, #tpu.memory_space<vmem>>, vector<1x256x128xf32>,
    %cst_65 = arith.constant dense<0.000000e+00> : vector<128xf32>
    %91 = vector.multi_reduction <add>, %87, %cst_65 [0] : vector<256x128xf32> to vector<128xf32>
    %92 = vector.shape_cast %91 : vector<128xf32> to vector<1x128xf32>
    %c0_66 = arith.constant 0 : index
    %c0_67 = arith.constant 0 : index
    %c0_68 = arith.constant 0 : index
    %93 = vector.load %arg8[%c0_66, %c0_67, %c0_68] : memref<1x1x128xf32, #tpu.memory_space<vmem>>, vector<1x1x128xf32>
    %94 = vector.shape_cast %93 : vector<1x1x128xf32> to vector<1x128xf32>
    %95 = vector.shape_cast %92 : vector<1x128xf32> to vector<1x1x128xf32>
    tpu.vector_store %arg8[%c0_66, %c0_67, %c0_68], %95 {strides = array<i32>} : memref<1x1x128xf32, #tpu.memory_space<vmem>>, vector<1x1x128xf32>,
    %96 = arith.mulf %87, %87 : vector<256x128xf32>
    %cst_69 = arith.constant dense<0.000000e+00> : vector<128xf32>
    %97 = vector.multi_reduction <add>, %96, %cst_69 [0] : vector<256x128xf32> to vector<128xf32>
    %98 = vector.shape_cast %97 : vector<128xf32> to vector<1x128xf32>
    %c0_70 = arith.constant 0 : index
    %c0_71 = arith.constant 0 : index
    %c0_72 = arith.constant 0 : index
    %99 = vector.load %arg9[%c0_70, %c0_71, %c0_72] : memref<1x1x128xf32, #tpu.memory_space<vmem>>, vector<1x1x128xf32>
    %100 = vector.shape_cast %99 : vector<1x1x128xf32> to vector<1x128xf32>
    %101 = vector.shape_cast %98 : vector<1x128xf32> to vector<1x1x128xf32>
    tpu.vector_store %arg9[%c0_70, %c0_71, %c0_72], %101 {strides = array<i32>} : memref<1x1x128xf32, #tpu.memory_space<vmem>>, vector<1x1x128xf32>,
    return
  }
  func.func @transform_0(%arg0: i32) -> (i32, i32, i32) {
    %c0_i32 = arith.constant 0 : i32
    %c0_i32_0 = arith.constant 0 : i32
    %c0_i32_1 = arith.constant 0 : i32
    return %arg0, %c0_i32, %c0_i32_0 : i32, i32, i32
  }
  func.func @transform_1(%arg0: i32) -> (i32, i32, i32) {
    %c0_i32 = arith.constant 0 : i32
    %c0_i32_0 = arith.constant 0 : i32
    %c0_i32_1 = arith.constant 0 : i32
    %c0_i32_2 = arith.constant 0 : i32
    return %c0_i32, %c0_i32_0, %c0_i32_1 : i32, i32, i32
  }
  func.func @transform_2(%arg0: i32) -> (i32, i32, i32) {
    %c0_i32 = arith.constant 0 : i32
    %c0_i32_0 = arith.constant 0 : i32
    %c0_i32_1 = arith.constant 0 : i32
    %c0_i32_2 = arith.constant 0 : i32
    return %c0_i32, %c0_i32_0, %c0_i32_1 : i32, i32, i32
  }
  func.func @transform_3(%arg0: i32) -> (i32, i32) {
    %c0_i32 = arith.constant 0 : i32
    %c0_i32_0 = arith.constant 0 : i32
    %c0_i32_1 = arith.constant 0 : i32
    return %c0_i32, %c0_i32_0 : i32, i32
  }
  func.func @transform_4(%arg0: i32) -> (i32, i32) {
    %c0_i32 = arith.constant 0 : i32
    %c0_i32_0 = arith.constant 0 : i32
    %c0_i32_1 = arith.constant 0 : i32
    return %c0_i32, %c0_i32_0 : i32, i32
  }
  func.func @transform_5(%arg0: i32) -> (i32, i32, i32) {
    %c0_i32 = arith.constant 0 : i32
    %c0_i32_0 = arith.constant 0 : i32
    %c0_i32_1 = arith.constant 0 : i32
    %c0_i32_2 = arith.constant 0 : i32
    return %c0_i32, %c0_i32_0, %c0_i32_1 : i32, i32, i32
  }
  func.func @transform_6(%arg0: i32) -> (i32, i32, i32) {
    %c0_i32 = arith.constant 0 : i32
    %c0_i32_0 = arith.constant 0 : i32
    %c0_i32_1 = arith.constant 0 : i32
    return %arg0, %c0_i32, %c0_i32_0 : i32, i32, i32
  }
  func.func @transform_7(%arg0: i32) -> (i32, i32, i32) {
    %c0_i32 = arith.constant 0 : i32
    %c0_i32_0 = arith.constant 0 : i32
    %c0_i32_1 = arith.constant 0 : i32
    return %arg0, %c0_i32, %c0_i32_0 : i32, i32, i32
  }
  func.func @transform_8(%arg0: i32) -> (i32, i32, i32) {
    %c0_i32 = arith.constant 0 : i32
    %c0_i32_0 = arith.constant 0 : i32
    %c0_i32_1 = arith.constant 0 : i32
    return %arg0, %c0_i32, %c0_i32_0 : i32, i32, i32
  }
}

module attributes {stable_mosaic.version = 11 : i64} {
  func.func @_bn2_add_relu_kernel(%arg0: i32, %arg1: memref<128x128xf32, #tpu.memory_space<vmem>>, %arg2: memref<128x128xf32, #tpu.memory_space<vmem>>, %arg3: memref<2x1x128xf32, #tpu.memory_space<vmem>>, %arg4: memref<2x1x128xf32, #tpu.memory_space<vmem>>, %arg5: memref<1x128xf32, #tpu.memory_space<vmem>>, %arg6: memref<1x128xf32, #tpu.memory_space<vmem>>, %arg7: memref<128x128xf32, #tpu.memory_space<vmem>>) attributes {dimension_semantics = [#tpu.dimension_semantics<parallel>], iteration_bounds = array<i64: 4>, scalar_prefetch = 0 : i64, scratch_operands = 0 : i64, tpu.core_type = #tpu.core_type<tc>, window_params = [{transform_indices = @transform_0, window_bounds = array<i64: 128, 128>}, {transform_indices = @transform_1, window_bounds = array<i64: 128, 128>}, {pipeline_mode = #tpu.pipeline_mode<synchronous>, transform_indices = @transform_2, window_bounds = array<i64: 2, 1, 128>}, {pipeline_mode = #tpu.pipeline_mode<synchronous>, transform_indices = @transform_3, window_bounds = array<i64: 2, 1, 128>}, {pipeline_mode = #tpu.pipeline_mode<synchronous>, transform_indices = @transform_4, window_bounds = array<i64: 1, 128>}, {pipeline_mode = #tpu.pipeline_mode<synchronous>, transform_indices = @transform_5, window_bounds = array<i64: 1, 128>}, {transform_indices = @transform_6, window_bounds = array<i64: 128, 128>}]} {
    %c0 = arith.constant 0 : index
    %c0_0 = arith.constant 0 : index
    %c0_1 = arith.constant 0 : index
    %0 = vector.load %arg3[%c0, %c0_0, %c0_1] : memref<2x1x128xf32, #tpu.memory_space<vmem>>, vector<2x1x128xf32>
    %cst = arith.constant dense<0.000000e+00> : vector<1x128xf32>
    %1 = vector.multi_reduction <add>, %0, %cst [0] : vector<2x1x128xf32> to vector<1x128xf32>
    %cst_2 = arith.constant 0.001953125 : f32
    %2 = vector.broadcast %cst_2 : f32 to vector<1x128xf32>
    %3 = arith.mulf %1, %2 : vector<1x128xf32>
    %c0_3 = arith.constant 0 : index
    %c0_4 = arith.constant 0 : index
    %c0_5 = arith.constant 0 : index
    %4 = vector.load %arg4[%c0_3, %c0_4, %c0_5] : memref<2x1x128xf32, #tpu.memory_space<vmem>>, vector<2x1x128xf32>
    %cst_6 = arith.constant dense<0.000000e+00> : vector<1x128xf32>
    %5 = vector.multi_reduction <add>, %4, %cst_6 [0] : vector<2x1x128xf32> to vector<1x128xf32>
    %cst_7 = arith.constant 0.001953125 : f32
    %6 = vector.broadcast %cst_7 : f32 to vector<1x128xf32>
    %7 = arith.mulf %5, %6 : vector<1x128xf32>
    %8 = arith.mulf %3, %3 : vector<1x128xf32>
    %9 = arith.subf %7, %8 : vector<1x128xf32>
    %c0_8 = arith.constant 0 : index
    %c0_9 = arith.constant 0 : index
    %10 = vector.load %arg5[%c0_8, %c0_9] : memref<1x128xf32, #tpu.memory_space<vmem>>, vector<1x128xf32>
    %cst_10 = arith.constant 9.99999974E-6 : f32
    %11 = vector.broadcast %cst_10 : f32 to vector<1x128xf32>
    %12 = arith.addf %9, %11 : vector<1x128xf32>
    %13 = math.rsqrt %12 : vector<1x128xf32>
    %14 = arith.mulf %10, %13 : vector<1x128xf32>
    %c0_11 = arith.constant 0 : index
    %c0_12 = arith.constant 0 : index
    %15 = vector.load %arg6[%c0_11, %c0_12] : memref<1x128xf32, #tpu.memory_space<vmem>>, vector<1x128xf32>
    %16 = arith.mulf %3, %14 : vector<1x128xf32>
    %17 = arith.subf %15, %16 : vector<1x128xf32>
    %c0_13 = arith.constant 0 : index
    %c0_14 = arith.constant 0 : index
    %18 = vector.load %arg1[%c0_13, %c0_14] : memref<128x128xf32, #tpu.memory_space<vmem>>, vector<128x128xf32>
    %19 = vector.broadcast %14 : vector<1x128xf32> to vector<128x128xf32>
    %20 = arith.mulf %18, %19 : vector<128x128xf32>
    %21 = vector.broadcast %17 : vector<1x128xf32> to vector<128x128xf32>
    %22 = arith.addf %20, %21 : vector<128x128xf32>
    %c0_15 = arith.constant 0 : index
    %c0_16 = arith.constant 0 : index
    %23 = vector.load %arg2[%c0_15, %c0_16] : memref<128x128xf32, #tpu.memory_space<vmem>>, vector<128x128xf32>
    %24 = arith.addf %22, %23 : vector<128x128xf32>
    %cst_17 = arith.constant 0.000000e+00 : f32
    %25 = vector.broadcast %cst_17 : f32 to vector<128x128xf32>
    %26 = arith.maximumf %24, %25 : vector<128x128xf32>
    %c0_18 = arith.constant 0 : index
    %c0_19 = arith.constant 0 : index
    %27 = vector.load %arg7[%c0_18, %c0_19] : memref<128x128xf32, #tpu.memory_space<vmem>>, vector<128x128xf32>
    tpu.vector_store %arg7[%c0_18, %c0_19], %26 {strides = array<i32>} : memref<128x128xf32, #tpu.memory_space<vmem>>, vector<128x128xf32>,
    return
  }
  func.func @transform_0(%arg0: i32) -> (i32, i32) {
    %c0_i32 = arith.constant 0 : i32
    %c0_i32_0 = arith.constant 0 : i32
    return %arg0, %c0_i32 : i32, i32
  }
  func.func @transform_1(%arg0: i32) -> (i32, i32) {
    %c0_i32 = arith.constant 0 : i32
    %c0_i32_0 = arith.constant 0 : i32
    return %arg0, %c0_i32 : i32, i32
  }
  func.func @transform_2(%arg0: i32) -> (i32, i32, i32) {
    %c0_i32 = arith.constant 0 : i32
    %c0_i32_0 = arith.constant 0 : i32
    %c0_i32_1 = arith.constant 0 : i32
    %c0_i32_2 = arith.constant 0 : i32
    return %c0_i32, %c0_i32_0, %c0_i32_1 : i32, i32, i32
  }
  func.func @transform_3(%arg0: i32) -> (i32, i32, i32) {
    %c0_i32 = arith.constant 0 : i32
    %c0_i32_0 = arith.constant 0 : i32
    %c0_i32_1 = arith.constant 0 : i32
    %c0_i32_2 = arith.constant 0 : i32
    return %c0_i32, %c0_i32_0, %c0_i32_1 : i32, i32, i32
  }
  func.func @transform_4(%arg0: i32) -> (i32, i32) {
    %c0_i32 = arith.constant 0 : i32
    %c0_i32_0 = arith.constant 0 : i32
    %c0_i32_1 = arith.constant 0 : i32
    return %c0_i32, %c0_i32_0 : i32, i32
  }
  func.func @transform_5(%arg0: i32) -> (i32, i32) {
    %c0_i32 = arith.constant 0 : i32
    %c0_i32_0 = arith.constant 0 : i32
    %c0_i32_1 = arith.constant 0 : i32
    return %c0_i32, %c0_i32_0 : i32, i32
  }
  func.func @transform_6(%arg0: i32) -> (i32, i32) {
    %c0_i32 = arith.constant 0 : i32
    %c0_i32_0 = arith.constant 0 : i32
    return %arg0, %c0_i32 : i32, i32
  }
}

</mosaic_0001>

<llo_original>
// kernel: simple_residual_block.5
$region0: #{simple_residual_block.5}
  #allocation0 [shape = 'u32[]', space=smem, size = 0x4, offset = 0x4, fixed_abs, tag = 'smem constant byte address 0x4 - core index']
  #allocation1 [shape = 'u32[144,128]{1,0:T(1,128)}', space=vmem, size = 0x12000, scoped, tag = 'internal scratch']
  %s0 = inlined_call_operand.hbm [shape: f32[512,128], index: 0, kind: input, shape index: {}]
  %s1 = inlined_call_operand.hbm [shape: f32[512,128], index: 1, kind: input, shape index: {}]
  %s2 = inlined_call_operand.hbm [shape: f32[2,1,128], index: 2, kind: input, shape index: {}]
  %s3 = inlined_call_operand.hbm [shape: f32[2,1,128], index: 3, kind: input, shape index: {}]
  %s4 = inlined_call_operand.hbm [shape: f32[1,128], index: 4, kind: input, shape index: {}]
  %s5 = inlined_call_operand.hbm [shape: f32[1,128], index: 5, kind: input, shape index: {}]
  %s6 = inlined_call_operand.hbm [shape: f32[512,128], index: 6, kind: output, shape index: {}]
  %s7 = sld [smem:[#allocation0]]
  $region81: #{simple_residual_block.5} parent=0
    _
  %s9 = ssub.s32 1, %s7
  %s10 = scalar_select 0, %s9, %s7
  $region1: #{simple_residual_block.5} parent=0
    #allocation2 [shape = 'u8[131072]{0}', space=vmem, size = 0x20000, scoped, tag = 'input window, operand 0']
    #allocation3 [shape = 's32[2]{0}', space=sflag, size = 0x8, scoped, tag = 'scoped memory for simple_residual_block.5']
    #allocation4 [shape = 's32[2]{0}', space=sflag, size = 0x8, scoped, tag = 'scoped memory for simple_residual_block.5']
    #allocation5 [shape = 'u8[131072]{0}', space=vmem, size = 0x20000, scoped, tag = 'input window, operand 1']
    #allocation6 [shape = 's32[2]{0}', space=sflag, size = 0x8, scoped, tag = 'scoped memory for simple_residual_block.5']
    #allocation7 [shape = 'u8[1024]{0}', space=vmem, size = 0x400, scoped, tag = 'input window, operand 2, single buffered']
    #allocation8 [shape = 'u8[1024]{0}', space=vmem, size = 0x400, scoped, tag = 'input window, operand 3, single buffered']
    #allocation9 [shape = 's32[1]{0}', space=sflag, size = 0x4, scoped, tag = 'scoped memory for simple_residual_block.5']
    #allocation10 [shape = 'u8[512]{0}', space=vmem, size = 0x400, scoped, tag = 'input window, operand 4, single buffered']
    #allocation11 [shape = 'u8[512]{0}', space=vmem, size = 0x400, scoped, tag = 'input window, operand 5, single buffered']
    #allocation12 [shape = 's32[1]{0}', space=sflag, size = 0x4, scoped, tag = 'scoped memory for simple_residual_block.5']
    #allocation13 [shape = 'u8[131072]{0}', space=vmem, size = 0x20000, scoped, tag = 'output window, operand 0']
    %11 = vsyncpa [#allocation3], 0
    %s12 = scalar_lea.sflag [#allocation3], 1
    %13 = vsyncpa %s12, 0
    %14 = vsyncpa [#allocation6], 0
    %s15 = scalar_lea.sflag [#allocation6], 1
    %16 = vsyncpa %s15, 0
    %17 = vsyncpa [#allocation9], 0
    %18 = vsyncpa [#allocation12], 0
    %19 = vsyncpa [#allocation4], 0
    %s20 = scalar_lea.sflag [#allocation4], 1
    %21 = vsyncpa %s20, 0
    loop: start=0, step=1, limit=6
    $region2: #{simple_residual_block.5} parent=1 // loop_pre_header
      _
    $region3: #{simple_residual_block.5} parent=1 // loop_header
      %s23 = sphi 0, %s27
      %p24 = scmp.ge.s32.totalorder %s23, 6
      %s33 = sphi 0, %s35
      %s36 = sphi 0, %s33
      %s37 = sphi 0, %s36
      %s53 = sphi 0, %s37
      %s59 = sphi 0, %s61
      %s62 = sphi 0, %s59
      %s63 = sphi 0, %s62
      %s79 = sphi 0, %s63
      %s83 = sphi 0, %s83
      %s85 = sphi 0, %s83
      %s86 = sphi 0, %s85
      %s100 = sphi 0, %s86
      %s104 = sphi 0, %s104
      %s106 = sphi 0, %s104
      %s107 = sphi 0, %s106
      %s121 = sphi 0, %s107
      %s125 = sphi 0, %s125
      %s127 = sphi 0, %s125
      %s128 = sphi 0, %s127
      %s142 = sphi 0, %s128
      %s146 = sphi 0, %s146
      %s148 = sphi 0, %s146
      %s149 = sphi 0, %s148
      %s163 = sphi 0, %s149
      %s169 = sphi 0, %s171
      %s172 = sphi 0, %s169
      %s173 = sphi 0, %s172
      %s189 = sphi 0, %s173
    $region4: #{simple_residual_block.5} parent=1 // loop_header_branch
      %26 = sbr.rel (%p24) target = $region8
    $region5: #{simple_residual_block.5} parent=1 // loop_body
      %s28 = ssub.s32 %s23, 1
      %s29 = ssub.s32 %s23, 2
      %s30 = sadd.s32 %s23, 1
      %s31 = ssub.s32 %s23, %s30
      %p32 = scmp.eq.s32.totalorder %s31, 0
      %s34 = sadd.s32 %s33, 1
      %s35 = scalar_select %p32, %s33, %s34
      %p38 = pneg %p32
      %p39 = scmp.eq.s32.totalorder %s23, 3
      %p40 = por %p38, %p39
      %p41 = scmp.ne.s32.totalorder %s33, %s36
      %p42 = scmp.eq.s32.totalorder %s23, 0
      %p43 = por %p41, %p42
      %p44 = scmp.ne.s32.totalorder %s33, %s36
      %p45 = scmp.eq.s32.totalorder %s28, 3
      %p46 = por %p44, %p45
      %p47 = scmp.ne.s32.totalorder %s36, %s37
      %p48 = scmp.eq.s32.totalorder %s28, 0
      %p49 = por %p47, %p48
      %p50 = scmp.ne.s32.totalorder %s36, %s37
      %p51 = scmp.eq.s32.totalorder %s29, 3
      %p52 = por %p50, %p51
      %p54 = scmp.ne.s32.totalorder %s37, %s53
      %p55 = scmp.eq.s32.totalorder %s29, 0
      %p56 = por %p54, %p55
      %s57 = ssub.s32 %s23, %s30
      %p58 = scmp.eq.s32.totalorder %s57, 0
      %s60 = sadd.s32 %s59, 1
      %s61 = scalar_select %p58, %s59, %s60
      %p64 = pneg %p58
      %p65 = scmp.eq.s32.totalorder %s23, 3
      %p66 = por %p64, %p65
      %p67 = scmp.ne.s32.totalorder %s59, %s62
      %p68 = scmp.eq.s32.totalorder %s23, 0
      %p69 = por %p67, %p68
      %p70 = scmp.ne.s32.totalorder %s59, %s62
      %p71 = scmp.eq.s32.totalorder %s28, 3
      %p72 = por %p70, %p71
      %p73 = scmp.ne.s32.totalorder %s62, %s63
      %p74 = scmp.eq.s32.totalorder %s28, 0
      %p75 = por %p73, %p74
      %p76 = scmp.ne.s32.totalorder %s62, %s63
      %p77 = scmp.eq.s32.totalorder %s29, 3
      %p78 = por %p76, %p77
      %p80 = scmp.ne.s32.totalorder %s63, %s79
      %p81 = scmp.eq.s32.totalorder %s29, 0
      %p82 = por %p80, %p81
      %s84 = sadd.s32 %s83, 1
      %p87 = scmp.eq.s32.totalorder %s23, 3
      %p88 = scmp.ne.s32.totalorder %s83, %s85
      %p89 = scmp.eq.s32.totalorder %s23, 0
      %p90 = por %p88, %p89
      %p91 = scmp.ne.s32.totalorder %s83, %s85
      %p92 = scmp.eq.s32.totalorder %s28, 3
      %p93 = por %p91, %p92
      %p94 = scmp.ne.s32.totalorder %s85, %s86
      %p95 = scmp.eq.s32.totalorder %s28, 0
      %p96 = por %p94, %p95
      %p97 = scmp.ne.s32.totalorder %s85, %s86
      %p98 = scmp.eq.s32.totalorder %s29, 3
      %p99 = por %p97, %p98
      %p101 = scmp.ne.s32.totalorder %s86, %s100
      %p102 = scmp.eq.s32.totalorder %s29, 0
      %p103 = por %p101, %p102
      %s105 = sadd.s32 %s104, 1
      %p108 = scmp.eq.s32.totalorder %s23, 3
      %p109 = scmp.ne.s32.totalorder %s104, %s106
      %p110 = scmp.eq.s32.totalorder %s23, 0
      %p111 = por %p109, %p110
      %p112 = scmp.ne.s32.totalorder %s104, %s106
      %p113 = scmp.eq.s32.totalorder %s28, 3
      %p114 = por %p112, %p113
      %p115 = scmp.ne.s32.totalorder %s106, %s107
      %p116 = scmp.eq.s32.totalorder %s28, 0
      %p117 = por %p115, %p116
      %p118 = scmp.ne.s32.totalorder %s106, %s107
      %p119 = scmp.eq.s32.totalorder %s29, 3
      %p120 = por %p118, %p119
      %p122 = scmp.ne.s32.totalorder %s107, %s121
      %p123 = scmp.eq.s32.totalorder %s29, 0
      %p124 = por %p122, %p123
      %s126 = sadd.s32 %s125, 1
      %p129 = scmp.eq.s32.totalorder %s23, 3
      %p130 = scmp.ne.s32.totalorder %s125, %s127
      %p131 = scmp.eq.s32.totalorder %s23, 0
      %p132 = por %p130, %p131
      %p133 = scmp.ne.s32.totalorder %s125, %s127
      %p134 = scmp.eq.s32.totalorder %s28, 3
      %p135 = por %p133, %p134
      %p136 = scmp.ne.s32.totalorder %s127, %s128
      %p137 = scmp.eq.s32.totalorder %s28, 0
      %p138 = por %p136, %p137
      %p139 = scmp.ne.s32.totalorder %s127, %s128
      %p140 = scmp.eq.s32.totalorder %s29, 3
      %p141 = por %p139, %p140
      %p143 = scmp.ne.s32.totalorder %s128, %s142
      %p144 = scmp.eq.s32.totalorder %s29, 0
      %p145 = por %p143, %p144
      %s147 = sadd.s32 %s146, 1
      %p150 = scmp.eq.s32.totalorder %s23, 3
      %p151 = scmp.ne.s32.totalorder %s146, %s148
      %p152 = scmp.eq.s32.totalorder %s23, 0
      %p153 = por %p151, %p152
      %p154 = scmp.ne.s32.totalorder %s146, %s148
      %p155 = scmp.eq.s32.totalorder %s28, 3
      %p156 = por %p154, %p155
      %p157 = scmp.ne.s32.totalorder %s148, %s149
      %p158 = scmp.eq.s32.totalorder %s28, 0
      %p159 = por %p157, %p158
      %p160 = scmp.ne.s32.totalorder %s148, %s149
      %p161 = scmp.eq.s32.totalorder %s29, 3
      %p162 = por %p160, %p161
      %p164 = scmp.ne.s32.totalorder %s149, %s163
      %p165 = scmp.eq.s32.totalorder %s29, 0
      %p166 = por %p164, %p165
      %s167 = ssub.s32 %s23, %s30
      %p168 = scmp.eq.s32.totalorder %s167, 0
      %s170 = sadd.s32 %s169, 1
      %s171 = scalar_select %p168, %s169, %s170
      %p174 = pneg %p168
      %p175 = scmp.eq.s32.totalorder %s23, 3
      %p176 = por %p174, %p175
      %p177 = scmp.ne.s32.totalorder %s169, %s172
      %p178 = scmp.eq.s32.totalorder %s23, 0
      %p179 = por %p177, %p178
      %p180 = scmp.ne.s32.totalorder %s169, %s172
      %p181 = scmp.eq.s32.totalorder %s28, 3
      %p182 = por %p180, %p181
      %p183 = scmp.ne.s32.totalorder %s172, %s173
      %p184 = scmp.eq.s32.totalorder %s28, 0
      %p185 = por %p183, %p184
      %p186 = scmp.ne.s32.totalorder %s172, %s173
      %p187 = scmp.eq.s32.totalorder %s29, 3
      %p188 = por %p186, %p187
      %p190 = scmp.ne.s32.totalorder %s173, %s189
      %p191 = scmp.eq.s32.totalorder %s29, 0
      %p192 = por %p190, %p191
      %p193 = scmp.le.s32.totalorder 1, %s23
      %p194 = scmp.lt.s32.totalorder %s23, 5
      %p195 = pnand %p193, %p194
      %p196 = pneg %p195
      // Predicated region
      $region9: #{simple_residual_block.5} parent=5 // pred_check
        _
      $region10: #{simple_residual_block.5} parent=5 // pred_check_branch
        %198 = sbr.rel (%p195) target = $region12
      $region11: #{simple_residual_block.5} parent=5 // pred_region
        %s199 = ssub.s32 %s23, 1
        // Predicated region
        $region13: #{simple_residual_block.5} parent=11 // pred_check
          %p200 = pneg %p96
        $region14: #{simple_residual_block.5} parent=11 // pred_check_branch
          %202 = sbr.rel (%p200) target = $region16
        $region15: #{simple_residual_block.5} parent=11 // pred_region
          %s204 = ssub.s32 32, 32
          %205 = vsyncadd [#allocation6], %s204
          %s206 = sshll.u32 [#allocation7], 4
          %s207 = int_to_ptr.vmem [resolvable:$true] %s206
          %212 = dma.hbm_to_vmem [thread:$0]  %s2, 32, %s207, [#allocation6], 16, 16, 1
        $region16: #{simple_residual_block.5} parent=11 // pred_fallthru
          _
        // Predicated region
        $region17: #{simple_residual_block.5} parent=11 // pred_check
          %p213 = pneg %p117
        $region18: #{simple_residual_block.5} parent=11 // pred_check_branch
          %215 = sbr.rel (%p213) target = $region20
        $region19: #{simple_residual_block.5} parent=11 // pred_region
          %s217 = ssub.s32 32, 32
          %218 = vsyncadd [#allocation9], %s217
          %s219 = sshll.u32 [#allocation8], 4
          %s220 = int_to_ptr.vmem [resolvable:$true] %s219
          %225 = dma.hbm_to_vmem [thread:$0]  %s3, 32, %s220, [#allocation9], 16, 16, 1
        $region20: #{simple_residual_block.5} parent=11 // pred_fallthru
          _
        // Predicated region
        $region21: #{simple_residual_block.5} parent=11 // pred_check
          %p226 = pneg %p138
        $region22: #{simple_residual_block.5} parent=11 // pred_check_branch
          %228 = sbr.rel (%p226) target = $region24
        $region23: #{simple_residual_block.5} parent=11 // pred_region
          %s230 = ssub.s32 16, 16
          %231 = vsyncadd [#allocation9], %s230
          %s233 = sshll.u32 [#allocation10], 4
          %s234 = int_to_ptr.vmem [resolvable:$true] %s233
          %236 = dma.hbm_to_vmem [thread:$0]  %s4, 16, %s234, [#allocation9]
        $region24: #{simple_residual_block.5} parent=11 // pred_fallthru
          _
        // Predicated region
        $region25: #{simple_residual_block.5} parent=11 // pred_check
          %p237 = pneg %p159
        $region26: #{simple_residual_block.5} parent=11 // pred_check_branch
          %239 = sbr.rel (%p237) target = $region28
        $region27: #{simple_residual_block.5} parent=11 // pred_region
          %s241 = ssub.s32 16, 16
          %242 = vsyncadd [#allocation12], %s241
          %s244 = sshll.u32 [#allocation11], 4
          %s245 = int_to_ptr.vmem [resolvable:$true] %s244
          %247 = dma.hbm_to_vmem [thread:$0]  %s5, 16, %s245, [#allocation12]
        $region28: #{simple_residual_block.5} parent=11 // pred_fallthru
          _
      $region12: #{simple_residual_block.5} parent=5 // pred_fallthru
        _
      %p248 = scmp.lt.s32.totalorder %s23, 4
      // Predicated region
      $region29: #{simple_residual_block.5} parent=5 // pred_check
        %p249 = pneg %p248
      $region30: #{simple_residual_block.5} parent=5 // pred_check_branch
        %251 = sbr.rel (%p249) target = $region32
      $region31: #{simple_residual_block.5} parent=5 // pred_region
        // Predicated region
        $region33: #{simple_residual_block.5} parent=31 // pred_check
          %p252 = pneg %p43
        $region34: #{simple_residual_block.5} parent=31 // pred_check_branch
          %254 = sbr.rel (%p252) target = $region36
        $region35: #{simple_residual_block.5} parent=31 // pred_region
          %s255 = sand.u32 %s33, 1
          %s256 = scalar_lea.sflag [#allocation3], %s255
          %s257 = sand.u32 %s33, 1
          %s258 = smul.addr %s257, 128
          %s259 = scalar_lea.vmem [#allocation2], %s258
          %s260 = smul.u32 16, %s23
          %s262 = ssub.s32 2048, 2048
          %263 = vsyncadd %s256, %s262
          %s264 = smul.addr %s260, 128
          %s265 = scalar_lea.hbm %s0, %s264
          %s266 = sshll.u32 %s259, 4
          %s267 = int_to_ptr.vmem [resolvable:$true] %s266
          %272 = dma.hbm_to_vmem [thread:$0]  %s265, 2048, %s267, %s256, 128, 128, 8
        $region36: #{simple_residual_block.5} parent=31 // pred_fallthru
          _
        // Predicated region
        $region37: #{simple_residual_block.5} parent=31 // pred_check
          %p273 = pneg %p69
        $region38: #{simple_residual_block.5} parent=31 // pred_check_branch
          %275 = sbr.rel (%p273) target = $region40
        $region39: #{simple_residual_block.5} parent=31 // pred_region
          %s276 = sand.u32 %s23, 1
          %s277 = scalar_lea.sflag [#allocation6], %s276
          %s278 = sand.u32 %s59, 1
          %s279 = smul.addr %s278, 128
          %s280 = scalar_lea.vmem [#allocation5], %s279
          %s281 = smul.u32 16, %s23
          %s283 = ssub.s32 2048, 2048
          %284 = vsyncadd %s277, %s283
          %s285 = smul.addr %s281, 128
          %s286 = scalar_lea.hbm %s1, %s285
          %s287 = sshll.u32 %s280, 4
          %s288 = int_to_ptr.vmem [resolvable:$true] %s287
          %293 = dma.hbm_to_vmem [thread:$0]  %s286, 2048, %s288, %s277, 128, 128, 8
        $region40: #{simple_residual_block.5} parent=31 // pred_fallthru
          _
      $region32: #{simple_residual_block.5} parent=5 // pred_fallthru
        _
      %p294 = scmp.le.s32.totalorder 1, %s23
      %p295 = scmp.lt.s32.totalorder %s23, 5
      %p296 = pnand %p294, %p295
      %p297 = pneg %p296
      // Predicated region
      $region41: #{simple_residual_block.5} parent=5 // pred_check
        _
      $region42: #{simple_residual_block.5} parent=5 // pred_check_branch
        %299 = sbr.rel (%p296) target = $region44
      $region43: #{simple_residual_block.5} parent=5 // pred_region
        %s300 = ssub.s32 %s23, 1
        %s301 = sand.u32 %s36, 1
        %s302 = scalar_lea.sflag [#allocation3], %s301
        %s303 = sand.u32 %s36, 1
        %s304 = smul.addr %s303, 128
        %s305 = scalar_lea.vmem [#allocation2], %s304
        // Predicated region
        $region45: #{simple_residual_block.5} parent=43 // pred_check
          %p306 = pneg %p49
        $region46: #{simple_residual_block.5} parent=43 // pred_check_branch
          %308 = sbr.rel (%p306) target = $region48
        $region47: #{simple_residual_block.5} parent=43 // pred_region
          %309 = dma.done %s302, 2048
        $region48: #{simple_residual_block.5} parent=43 // pred_fallthru
          _
        %s310 = sand.u32 %s28, 1
        %s311 = scalar_lea.sflag [#allocation6], %s310
        %s312 = sand.u32 %s62, 1
        %s313 = smul.addr %s312, 128
        %s314 = scalar_lea.vmem [#allocation5], %s313
        // Predicated region
        $region49: #{simple_residual_block.5} parent=43 // pred_check
          %p315 = pneg %p75
        $region50: #{simple_residual_block.5} parent=43 // pred_check_branch
          %317 = sbr.rel (%p315) target = $region52
        $region51: #{simple_residual_block.5} parent=43 // pred_region
          %318 = dma.done %s311, 2048
        $region52: #{simple_residual_block.5} parent=43 // pred_fallthru
          _
        // Predicated region
        $region53: #{simple_residual_block.5} parent=43 // pred_check
          %p319 = pneg %p96
        $region54: #{simple_residual_block.5} parent=43 // pred_check_branch
          %321 = sbr.rel (%p319) target = $region56
        $region55: #{simple_residual_block.5} parent=43 // pred_region
          %322 = dma.done [#allocation6], 32
        $region56: #{simple_residual_block.5} parent=43 // pred_fallthru
          _
        // Predicated region
        $region57: #{simple_residual_block.5} parent=43 // pred_check
          %p323 = pneg %p117
        $region58: #{simple_residual_block.5} parent=43 // pred_check_branch
          %325 = sbr.rel (%p323) target = $region60
        $region59: #{simple_residual_block.5} parent=43 // pred_region
          %326 = dma.done [#allocation9], 32
        $region60: #{simple_residual_block.5} parent=43 // pred_fallthru
          _
        // Predicated region
        $region61: #{simple_residual_block.5} parent=43 // pred_check
          %p327 = pneg %p138
        $region62: #{simple_residual_block.5} parent=43 // pred_check_branch
          %329 = sbr.rel (%p327) target = $region64
        $region63: #{simple_residual_block.5} parent=43 // pred_region
          %330 = dma.done [#allocation9], 16
        $region64: #{simple_residual_block.5} parent=43 // pred_fallthru
          _
        // Predicated region
        $region65: #{simple_residual_block.5} parent=43 // pred_check
          %p331 = pneg %p159
        $region66: #{simple_residual_block.5} parent=43 // pred_check_branch
          %333 = sbr.rel (%p331) target = $region68
        $region67: #{simple_residual_block.5} parent=43 // pred_region
          %334 = dma.done [#allocation12], 16
        $region68: #{simple_residual_block.5} parent=43 // pred_fallthru
          _
        %s335 = sand.u32 %s36, 1
        %s336 = scalar_lea.sflag [#allocation3], %s335
        %s337 = sand.u32 %s36, 1
        %s338 = smul.addr %s337, 128
        %s339 = scalar_lea.vmem [#allocation2], %s338
        %p340 = pneg %p49
        %p341 = pneg %p46
        %s342 = sand.u32 %s28, 1
        %s343 = scalar_lea.sflag [#allocation6], %s342
        %s344 = sand.u32 %s62, 1
        %s345 = smul.addr %s344, 128
        %s346 = scalar_lea.vmem [#allocation5], %s345
        %p347 = pneg %p75
        %p348 = pneg %p72
        %p349 = pneg %p96
        %p350 = pneg %p93
        %p351 = pneg %p117
        %p352 = pneg %p114
        %p353 = pneg %p138
        %p354 = pneg %p135
        %p355 = pneg %p159
        %p356 = pneg %p156
        %p357 = pneg %p185
        %p358 = pneg %p182
        %s359 = sand.u32 %s172, 1
        %s360 = scalar_lea.sflag [#allocation4], %s359
        %s361 = sand.u32 %s172, 1
        %s362 = smul.addr %s361, 128
        %s363 = scalar_lea.vmem [#allocation13], %s362
        %s364 = smul.u32 16, %s28
        %s365 = smul.u32 16, %s28
        %s366 = smul.u32 16, %s28
        %v367 = vld [vmem:[#allocation7] sm:$0x1]
        %v368 = vld [vmem:[#allocation7 + $0x1] sm:$0x1]
        %vm369 = vcmask 1040384
        %v370 = vsel %vm369, %v367, 0.0
        %v371 = vsel %vm369, %v368, 0.0
        %v372 = vadd.f32 %v370, %v371
        %v373 = vmul.f32 %v372, 0.001953125
        %v374 = vld [vmem:[#allocation8] sm:$0x1]
        %v375 = vld [vmem:[#allocation8 + $0x1] sm:$0x1]
        %v376 = vsel %vm369, %v374, 0.0
        %v377 = vsel %vm369, %v375, 0.0
        %v378 = vadd.f32 %v376, %v377
        %v379 = vmul.f32 %v378, 0.001953125
        %v380 = vmul.f32 %v373, %v373
        %v381 = vsub.f32 %v379, %v380
        %v382 = vld [vmem:[#allocation10] sm:$0x1]
        %v383 = vadd.f32 %v381, 1e-05
        %v384 = vrsqrt.pop %v383
        %v385 = vmul.f32 %v382, %v384
        %v386 = vld [vmem:[#allocation11] sm:$0x1]
        %v387 = vmul.f32 %v373, %v385
        %v388 = vsub.f32 %v386, %v387
        %v389 = vld [vmem:[%s305] sm:$0xff]
        %v390 = vld [vmem:[%s305 + $0x8] sm:$0xff]
        %v391 = vld [vmem:[%s305 + $0x10] sm:$0xff]
        %v392 = vld [vmem:[%s305 + $0x18] sm:$0xff]
        %v393 = vld [vmem:[%s305 + $0x20] sm:$0xff]
        %v394 = vld [vmem:[%s305 + $0x28] sm:$0xff]
        %v395 = vld [vmem:[%s305 + $0x30] sm:$0xff]
        %v396 = vld [vmem:[%s305 + $0x38] sm:$0xff]
        %v397 = vld [vmem:[%s305 + $0x40] sm:$0xff]
        %v398 = vld [vmem:[%s305 + $0x48] sm:$0xff]
        %v399 = vld [vmem:[%s305 + $0x50] sm:$0xff]
        %v400 = vld [vmem:[%s305 + $0x58] sm:$0xff]
        %v401 = vld [vmem:[%s305 + $0x60] sm:$0xff]
        %v402 = vld [vmem:[%s305 + $0x68] sm:$0xff]
        %v403 = vld [vmem:[%s305 + $0x70] sm:$0xff]
        %v404 = vld [vmem:[%s305 + $0x78] sm:$0xff]
        %v406 = vlaneseq
        %v407 = vshrl.u32 %v406, 7
        %v408 = vsub.s32 0, %v407
        %v409 = vrot.slane %v385, %v408
        %v411 = vmul.f32 %v389, %v409
        %v412 = vmul.f32 %v390, %v409
        %v413 = vmul.f32 %v391, %v409
        %v414 = vmul.f32 %v392, %v409
        %v415 = vmul.f32 %v393, %v409
        %v416 = vmul.f32 %v394, %v409
        %v417 = vmul.f32 %v395, %v409
        %v418 = vmul.f32 %v396, %v409
        %v419 = vmul.f32 %v397, %v409
        %v420 = vmul.f32 %v398, %v409
        %v421 = vmul.f32 %v399, %v409
        %v422 = vmul.f32 %v400, %v409
        %v423 = vmul.f32 %v401, %v409
        %v424 = vmul.f32 %v402, %v409
        %v425 = vmul.f32 %v403, %v409
        %v426 = vmul.f32 %v404, %v409
        %v428 = vlaneseq
        %v429 = vshrl.u32 %v428, 7
        %v430 = vsub.s32 0, %v429
        %v431 = vrot.slane %v388, %v430
        %v433 = vadd.f32 %v411, %v431
        %v434 = vadd.f32 %v412, %v431
        %v435 = vadd.f32 %v413, %v431
        %v436 = vadd.f32 %v414, %v431
        %v437 = vadd.f32 %v415, %v431
        %v438 = vadd.f32 %v416, %v431
        %v439 = vadd.f32 %v417, %v431
        %v440 = vadd.f32 %v418, %v431
        %v441 = vadd.f32 %v419, %v431
        %v442 = vadd.f32 %v420, %v431
        %v443 = vadd.f32 %v421, %v431
        %v444 = vadd.f32 %v422, %v431
        %v445 = vadd.f32 %v423, %v431
        %v446 = vadd.f32 %v424, %v431
        %v447 = vadd.f32 %v425, %v431
        %v448 = vadd.f32 %v426, %v431
        %v449 = vld [vmem:[%s314] sm:$0xff]
        %v450 = vld [vmem:[%s314 + $0x8] sm:$0xff]
        %v451 = vld [vmem:[%s314 + $0x10] sm:$0xff]
        %v452 = vld [vmem:[%s314 + $0x18] sm:$0xff]
        %v453 = vld [vmem:[%s314 + $0x20] sm:$0xff]
        %v454 = vld [vmem:[%s314 + $0x28] sm:$0xff]
        %v455 = vld [vmem:[%s314 + $0x30] sm:$0xff]
        %v456 = vld [vmem:[%s314 + $0x38] sm:$0xff]
        %v457 = vld [vmem:[%s314 + $0x40] sm:$0xff]
        %v458 = vld [vmem:[%s314 + $0x48] sm:$0xff]
        %v459 = vld [vmem:[%s314 + $0x50] sm:$0xff]
        %v460 = vld [vmem:[%s314 + $0x58] sm:$0xff]
        %v461 = vld [vmem:[%s314 + $0x60] sm:$0xff]
        %v462 = vld [vmem:[%s314 + $0x68] sm:$0xff]
        %v463 = vld [vmem:[%s314 + $0x70] sm:$0xff]
        %v464 = vld [vmem:[%s314 + $0x78] sm:$0xff]
        %v465 = vadd.f32 %v433, %v449
        %v466 = vadd.f32 %v434, %v450
        %v467 = vadd.f32 %v435, %v451
        %v468 = vadd.f32 %v436, %v452
        %v469 = vadd.f32 %v437, %v453
        %v470 = vadd.f32 %v438, %v454
        %v471 = vadd.f32 %v439, %v455
        %v472 = vadd.f32 %v440, %v456
        %v473 = vadd.f32 %v441, %v457
        %v474 = vadd.f32 %v442, %v458
        %v475 = vadd.f32 %v443, %v459
        %v476 = vadd.f32 %v444, %v460
        %v477 = vadd.f32 %v445, %v461
        %v478 = vadd.f32 %v446, %v462
        %v479 = vadd.f32 %v447, %v463
        %v480 = vadd.f32 %v448, %v464
        %v481 = vmax.f32 %v465, 0.0
        %v482 = vmax.f32 %v466, 0.0
        %v483 = vmax.f32 %v467, 0.0
        %v484 = vmax.f32 %v468, 0.0
        %v485 = vmax.f32 %v469, 0.0
        %v486 = vmax.f32 %v470, 0.0
        %v487 = vmax.f32 %v471, 0.0
        %v488 = vmax.f32 %v472, 0.0
        %v489 = vmax.f32 %v473, 0.0
        %v490 = vmax.f32 %v474, 0.0
        %v491 = vmax.f32 %v475, 0.0
        %v492 = vmax.f32 %v476, 0.0
        %v493 = vmax.f32 %v477, 0.0
        %v494 = vmax.f32 %v478, 0.0
        %v495 = vmax.f32 %v479, 0.0
        %v496 = vmax.f32 %v480, 0.0
        %497 = vst [vmem:[%s363] sm:$0xff] %v481
        %498 = vst [vmem:[%s363 + $0x8] sm:$0xff] %v482
        %499 = vst [vmem:[%s363 + $0x10] sm:$0xff] %v483
        %500 = vst [vmem:[%s363 + $0x18] sm:$0xff] %v484
        %501 = vst [vmem:[%s363 + $0x20] sm:$0xff] %v485
        %502 = vst [vmem:[%s363 + $0x28] sm:$0xff] %v486
        %503 = vst [vmem:[%s363 + $0x30] sm:$0xff] %v487
        %504 = vst [vmem:[%s363 + $0x38] sm:$0xff] %v488
        %505 = vst [vmem:[%s363 + $0x40] sm:$0xff] %v489
        %506 = vst [vmem:[%s363 + $0x48] sm:$0xff] %v490
        %507 = vst [vmem:[%s363 + $0x50] sm:$0xff] %v491
        %508 = vst [vmem:[%s363 + $0x58] sm:$0xff] %v492
        %509 = vst [vmem:[%s363 + $0x60] sm:$0xff] %v493
        %510 = vst [vmem:[%s363 + $0x68] sm:$0xff] %v494
        %511 = vst [vmem:[%s363 + $0x70] sm:$0xff] %v495
        %512 = vst [vmem:[%s363 + $0x78] sm:$0xff] %v496
        %s513 = sand.u32 %s172, 1
        %s514 = scalar_lea.sflag [#allocation4], %s513
        %s515 = sand.u32 %s172, 1
        %s516 = smul.addr %s515, 128
        %s517 = scalar_lea.vmem [#allocation13], %s516
        // Predicated region
        $region69: #{simple_residual_block.5} parent=43 // pred_check
          %p518 = pneg %p182
        $region70: #{simple_residual_block.5} parent=43 // pred_check_branch
          %520 = sbr.rel (%p518) target = $region72
        $region71: #{simple_residual_block.5} parent=43 // pred_region
          %s521 = smul.u32 16, %s28
          %s523 = ssub.s32 2048, 2048
          %524 = vsyncadd %s514, %s523
          %s525 = smul.addr %s521, 128
          %s526 = scalar_lea.hbm %s6, %s525
          %s527 = sshll.u32 %s517, 4
          %s528 = int_to_ptr.vmem [resolvable:$true] %s527
          %533 = dma.vmem_to_hbm [thread:$0]  %s528, 2048, %s526, %s514, 128, 128, 8
        $region72: #{simple_residual_block.5} parent=43 // pred_fallthru
          _
      $region44: #{simple_residual_block.5} parent=5 // pred_fallthru
        _
      %p534 = scmp.le.s32.totalorder 2, %s23
      // Predicated region
      $region73: #{simple_residual_block.5} parent=5 // pred_check
        %p535 = pneg %p534
      $region74: #{simple_residual_block.5} parent=5 // pred_check_branch
        %537 = sbr.rel (%p535) target = $region76
      $region75: #{simple_residual_block.5} parent=5 // pred_region
        %s538 = ssub.s32 %s23, 2
        // Predicated region
        $region77: #{simple_residual_block.5} parent=75 // pred_check
          %p539 = pneg %p188
        $region78: #{simple_residual_block.5} parent=75 // pred_check_branch
          %541 = sbr.rel (%p539) target = $region80
        $region79: #{simple_residual_block.5} parent=75 // pred_region
          %s542 = sand.u32 %s173, 1
          %s543 = scalar_lea.sflag [#allocation4], %s542
          %s544 = sand.u32 %s173, 1
          %s545 = smul.addr %s544, 128
          %s546 = scalar_lea.vmem [#allocation13], %s545
          %547 = dma.done %s543, 2048
        $region80: #{simple_residual_block.5} parent=75 // pred_fallthru
          _
      $region76: #{simple_residual_block.5} parent=5 // pred_fallthru
        _
    $region6: #{simple_residual_block.5} parent=1 // loop_footer
      %s27 = sadd.s32 1, %s23
    $region7: #{simple_residual_block.5} parent=1 // loop_footer_branch
      %22 = sbr.rel target = $region3
    $region8: #{simple_residual_block.5} parent=1 // loop_exit
      _
    %548 = vsyncpa [#allocation3], 1
    %s549 = scalar_lea.sflag [#allocation3], 1
    %550 = vsyncpa %s549, 1
    %551 = vsyncpa [#allocation6], 1
    %s552 = scalar_lea.sflag [#allocation6], 1
    %553 = vsyncpa %s552, 1
    %554 = vsyncpa [#allocation9], 1
    %555 = vsyncpa [#allocation12], 1
    %556 = vsyncpa [#allocation4], 1
    %s557 = scalar_lea.sflag [#allocation4], 1
    %558 = vsyncpa %s557, 1

// kernel: simple_residual_block.3
$region0: #{simple_residual_block.3}
  #allocation0 [shape = 'u32[]', space=smem, size = 0x4, offset = 0x4, fixed_abs, tag = 'smem constant byte address 0x4 - core index']
  #allocation1 [shape = 'u32[144,128]{1,0:T(1,128)}', space=vmem, size = 0x12000, scoped, tag = 'internal scratch']
  %s0 = inlined_call_operand.hbm [shape: f32[2,18,18,4], index: 0, kind: input, shape index: {}]
  %s1 = inlined_call_operand.hbm [shape: f32[9,4,128], index: 1, kind: input, shape index: {}]
  %s2 = inlined_call_operand.hbm [shape: f32[4,128], index: 2, kind: input, shape index: {}]
  %s3 = inlined_call_operand.hbm [shape: f32[1,128], index: 3, kind: input, shape index: {}]
  %s4 = inlined_call_operand.hbm [shape: f32[2,256,128], index: 4, kind: output, shape index: {0}]
  %s5 = inlined_call_operand.hbm [shape: f32[2,256,128], index: 5, kind: output, shape index: {1}]
  %s6 = inlined_call_operand.hbm [shape: f32[2,1,128], index: 6, kind: output, shape index: {2}]
  %s7 = inlined_call_operand.hbm [shape: f32[2,1,128], index: 7, kind: output, shape index: {3}]
  %8 = xla_tuple %s4, %s5, %s6, %s7
  %s9 = sld [smem:[#allocation0]]
  $region89: #{simple_residual_block.3} parent=0
    _
  %s11 = ssub.s32 1, %s9
  %s12 = scalar_select 0, %s11, %s9
  $region1: #{simple_residual_block.3} parent=0
    #allocation2 [shape = 'u8[442368]{0}', space=vmem, size = 0x6c000, scoped, tag = 'input window, operand 0']
    #allocation3 [shape = 's32[2]{0}', space=sflag, size = 0x8, scoped, tag = 'scoped memory for simple_residual_block.3']
    #allocation4 [shape = 's32[2]{0}', space=sflag, size = 0x8, scoped, tag = 'scoped memory for simple_residual_block.3']
    #allocation5 [shape = 'u8[18432]{0}', space=vmem, size = 0x4800, scoped, tag = 'input window, operand 1, single buffered']
    #allocation6 [shape = 's32[1]{0}', space=sflag, size = 0x4, scoped, tag = 'scoped memory for simple_residual_block.3']
    #allocation7 [shape = 'u8[2048]{0}', space=vmem, size = 0x800, scoped, tag = 'input window, operand 2, single buffered']
    #allocation8 [shape = 'u8[512]{0}', space=vmem, size = 0x400, scoped, tag = 'input window, operand 3, single buffered']
    #allocation9 [shape = 's32[1]{0}', space=sflag, size = 0x4, scoped, tag = 'scoped memory for simple_residual_block.3']
    #allocation10 [shape = 'u8[262144]{0}', space=vmem, size = 0x40000, scoped, tag = 'output window, operand 0']
    #allocation11 [shape = 'u8[262144]{0}', space=vmem, size = 0x40000, scoped, tag = 'output window, operand 1']
    #allocation12 [shape = 's32[2]{0}', space=sflag, size = 0x8, scoped, tag = 'scoped memory for simple_residual_block.3']
    #allocation13 [shape = 'u8[1024]{0}', space=vmem, size = 0x400, scoped, tag = 'output window, operand 2']
    #allocation14 [shape = 'u8[1024]{0}', space=vmem, size = 0x400, scoped, tag = 'output window, operand 3']
    #allocation15 [shape = 's32[2]{0}', space=sflag, size = 0x8, scoped, tag = 'scoped memory for simple_residual_block.3']
    %13 = vsyncpa [#allocation3], 0
    %s14 = scalar_lea.sflag [#allocation3], 1
    %15 = vsyncpa %s14, 0
    %16 = vsyncpa [#allocation6], 0
    %17 = vsyncpa [#allocation9], 0
    %18 = vsyncpa [#allocation4], 0
    %s19 = scalar_lea.sflag [#allocation4], 1
    %20 = vsyncpa %s19, 0
    %21 = vsyncpa [#allocation12], 0
    %s22 = scalar_lea.sflag [#allocation12], 1
    %23 = vsyncpa %s22, 0
    %24 = vsyncpa [#allocation15], 0
    %s25 = scalar_lea.sflag [#allocation15], 1
    %26 = vsyncpa %s25, 0
    loop: start=0, step=1, limit=4
    $region2: #{simple_residual_block.3} parent=1 // loop_pre_header
      _
    $region3: #{simple_residual_block.3} parent=1 // loop_header
      %s28 = sphi 0, %s32
      %p29 = scmp.ge.s32.totalorder %s28, 4
      %s38 = sphi 0, %s40
      %s41 = sphi 0, %s38
      %s42 = sphi 0, %s41
      %s58 = sphi 0, %s42
      %s62 = sphi 0, %s62
      %s64 = sphi 0, %s62
      %s65 = sphi 0, %s64
      %s79 = sphi 0, %s65
      %s83 = sphi 0, %s83
      %s85 = sphi 0, %s83
      %s86 = sphi 0, %s85
      %s100 = sphi 0, %s86
      %s104 = sphi 0, %s104
      %s106 = sphi 0, %s104
      %s107 = sphi 0, %s106
      %s121 = sphi 0, %s107
      %s127 = sphi 0, %s129
      %s130 = sphi 0, %s127
      %s131 = sphi 0, %s130
      %s147 = sphi 0, %s131
      %s153 = sphi 0, %s155
      %s156 = sphi 0, %s153
      %s157 = sphi 0, %s156
      %s173 = sphi 0, %s157
      %s179 = sphi 0, %s181
      %s182 = sphi 0, %s179
      %s183 = sphi 0, %s182
      %s199 = sphi 0, %s183
      %s205 = sphi 0, %s207
      %s208 = sphi 0, %s205
      %s209 = sphi 0, %s208
      %s225 = sphi 0, %s209
    $region4: #{simple_residual_block.3} parent=1 // loop_header_branch
      %31 = sbr.rel (%p29) target = $region8
    $region5: #{simple_residual_block.3} parent=1 // loop_body
      %s33 = ssub.s32 %s28, 1
      %s34 = ssub.s32 %s28, 2
      %s35 = sadd.s32 %s28, 1
      %s36 = ssub.s32 %s28, %s35
      %p37 = scmp.eq.s32.totalorder %s36, 0
      %s39 = sadd.s32 %s38, 1
      %s40 = scalar_select %p37, %s38, %s39
      %p43 = pneg %p37
      %p44 = scmp.eq.s32.totalorder %s28, 1
      %p45 = por %p43, %p44
      %p46 = scmp.ne.s32.totalorder %s38, %s41
      %p47 = scmp.eq.s32.totalorder %s28, 0
      %p48 = por %p46, %p47
      %p49 = scmp.ne.s32.totalorder %s38, %s41
      %p50 = scmp.eq.s32.totalorder %s33, 1
      %p51 = por %p49, %p50
      %p52 = scmp.ne.s32.totalorder %s41, %s42
      %p53 = scmp.eq.s32.totalorder %s33, 0
      %p54 = por %p52, %p53
      %p55 = scmp.ne.s32.totalorder %s41, %s42
      %p56 = scmp.eq.s32.totalorder %s34, 1
      %p57 = por %p55, %p56
      %p59 = scmp.ne.s32.totalorder %s42, %s58
      %p60 = scmp.eq.s32.totalorder %s34, 0
      %p61 = por %p59, %p60
      %s63 = sadd.s32 %s62, 1
      %p66 = scmp.eq.s32.totalorder %s28, 1
      %p67 = scmp.ne.s32.totalorder %s62, %s64
      %p68 = scmp.eq.s32.totalorder %s28, 0
      %p69 = por %p67, %p68
      %p70 = scmp.ne.s32.totalorder %s62, %s64
      %p71 = scmp.eq.s32.totalorder %s33, 1
      %p72 = por %p70, %p71
      %p73 = scmp.ne.s32.totalorder %s64, %s65
      %p74 = scmp.eq.s32.totalorder %s33, 0
      %p75 = por %p73, %p74
      %p76 = scmp.ne.s32.totalorder %s64, %s65
      %p77 = scmp.eq.s32.totalorder %s34, 1
      %p78 = por %p76, %p77
      %p80 = scmp.ne.s32.totalorder %s65, %s79
      %p81 = scmp.eq.s32.totalorder %s34, 0
      %p82 = por %p80, %p81
      %s84 = sadd.s32 %s83, 1
      %p87 = scmp.eq.s32.totalorder %s28, 1
      %p88 = scmp.ne.s32.totalorder %s83, %s85
      %p89 = scmp.eq.s32.totalorder %s28, 0
      %p90 = por %p88, %p89
      %p91 = scmp.ne.s32.totalorder %s83, %s85
      %p92 = scmp.eq.s32.totalorder %s33, 1
      %p93 = por %p91, %p92
      %p94 = scmp.ne.s32.totalorder %s85, %s86
      %p95 = scmp.eq.s32.totalorder %s33, 0
      %p96 = por %p94, %p95
      %p97 = scmp.ne.s32.totalorder %s85, %s86
      %p98 = scmp.eq.s32.totalorder %s34, 1
      %p99 = por %p97, %p98
      %p101 = scmp.ne.s32.totalorder %s86, %s100
      %p102 = scmp.eq.s32.totalorder %s34, 0
      %p103 = por %p101, %p102
      %s105 = sadd.s32 %s104, 1
      %p108 = scmp.eq.s32.totalorder %s28, 1
      %p109 = scmp.ne.s32.totalorder %s104, %s106
      %p110 = scmp.eq.s32.totalorder %s28, 0
      %p111 = por %p109, %p110
      %p112 = scmp.ne.s32.totalorder %s104, %s106
      %p113 = scmp.eq.s32.totalorder %s33, 1
      %p114 = por %p112, %p113
      %p115 = scmp.ne.s32.totalorder %s106, %s107
      %p116 = scmp.eq.s32.totalorder %s33, 0
      %p117 = por %p115, %p116
      %p118 = scmp.ne.s32.totalorder %s106, %s107
      %p119 = scmp.eq.s32.totalorder %s34, 1
      %p120 = por %p118, %p119
      %p122 = scmp.ne.s32.totalorder %s107, %s121
      %p123 = scmp.eq.s32.totalorder %s34, 0
      %p124 = por %p122, %p123
      %s125 = ssub.s32 %s28, %s35
      %p126 = scmp.eq.s32.totalorder %s125, 0
      %s128 = sadd.s32 %s127, 1
      %s129 = scalar_select %p126, %s127, %s128
      %p132 = pneg %p126
      %p133 = scmp.eq.s32.totalorder %s28, 1
      %p134 = por %p132, %p133
      %p135 = scmp.ne.s32.totalorder %s127, %s130
      %p136 = scmp.eq.s32.totalorder %s28, 0
      %p137 = por %p135, %p136
      %p138 = scmp.ne.s32.totalorder %s127, %s130
      %p139 = scmp.eq.s32.totalorder %s33, 1
      %p140 = por %p138, %p139
      %p141 = scmp.ne.s32.totalorder %s130, %s131
      %p142 = scmp.eq.s32.totalorder %s33, 0
      %p143 = por %p141, %p142
      %p144 = scmp.ne.s32.totalorder %s130, %s131
      %p145 = scmp.eq.s32.totalorder %s34, 1
      %p146 = por %p144, %p145
      %p148 = scmp.ne.s32.totalorder %s131, %s147
      %p149 = scmp.eq.s32.totalorder %s34, 0
      %p150 = por %p148, %p149
      %s151 = ssub.s32 %s28, %s35
      %p152 = scmp.eq.s32.totalorder %s151, 0
      %s154 = sadd.s32 %s153, 1
      %s155 = scalar_select %p152, %s153, %s154
      %p158 = pneg %p152
      %p159 = scmp.eq.s32.totalorder %s28, 1
      %p160 = por %p158, %p159
      %p161 = scmp.ne.s32.totalorder %s153, %s156
      %p162 = scmp.eq.s32.totalorder %s28, 0
      %p163 = por %p161, %p162
      %p164 = scmp.ne.s32.totalorder %s153, %s156
      %p165 = scmp.eq.s32.totalorder %s33, 1
      %p166 = por %p164, %p165
      %p167 = scmp.ne.s32.totalorder %s156, %s157
      %p168 = scmp.eq.s32.totalorder %s33, 0
      %p169 = por %p167, %p168
      %p170 = scmp.ne.s32.totalorder %s156, %s157
      %p171 = scmp.eq.s32.totalorder %s34, 1
      %p172 = por %p170, %p171
      %p174 = scmp.ne.s32.totalorder %s157, %s173
      %p175 = scmp.eq.s32.totalorder %s34, 0
      %p176 = por %p174, %p175
      %s177 = ssub.s32 %s28, %s35
      %p178 = scmp.eq.s32.totalorder %s177, 0
      %s180 = sadd.s32 %s179, 1
      %s181 = scalar_select %p178, %s179, %s180
      %p184 = pneg %p178
      %p185 = scmp.eq.s32.totalorder %s28, 1
      %p186 = por %p184, %p185
      %p187 = scmp.ne.s32.totalorder %s179, %s182
      %p188 = scmp.eq.s32.totalorder %s28, 0
      %p189 = por %p187, %p188
      %p190 = scmp.ne.s32.totalorder %s179, %s182
      %p191 = scmp.eq.s32.totalorder %s33, 1
      %p192 = por %p190, %p191
      %p193 = scmp.ne.s32.totalorder %s182, %s183
      %p194 = scmp.eq.s32.totalorder %s33, 0
      %p195 = por %p193, %p194
      %p196 = scmp.ne.s32.totalorder %s182, %s183
      %p197 = scmp.eq.s32.totalorder %s34, 1
      %p198 = por %p196, %p197
      %p200 = scmp.ne.s32.totalorder %s183, %s199
      %p201 = scmp.eq.s32.totalorder %s34, 0
      %p202 = por %p200, %p201
      %s203 = ssub.s32 %s28, %s35
      %p204 = scmp.eq.s32.totalorder %s203, 0
      %s206 = sadd.s32 %s205, 1
      %s207 = scalar_select %p204, %s205, %s206
      %p210 = pneg %p204
      %p211 = scmp.eq.s32.totalorder %s28, 1
      %p212 = por %p210, %p211
      %p213 = scmp.ne.s32.totalorder %s205, %s208
      %p214 = scmp.eq.s32.totalorder %s28, 0
      %p215 = por %p213, %p214
      %p216 = scmp.ne.s32.totalorder %s205, %s208
      %p217 = scmp.eq.s32.totalorder %s33, 1
      %p218 = por %p216, %p217
      %p219 = scmp.ne.s32.totalorder %s208, %s209
      %p220 = scmp.eq.s32.totalorder %s33, 0
      %p221 = por %p219, %p220
      %p222 = scmp.ne.s32.totalorder %s208, %s209
      %p223 = scmp.eq.s32.totalorder %s34, 1
      %p224 = por %p222, %p223
      %p226 = scmp.ne.s32.totalorder %s209, %s225
      %p227 = scmp.eq.s32.totalorder %s34, 0
      %p228 = por %p226, %p227
      %p229 = scmp.le.s32.totalorder 1, %s28
      %p230 = scmp.lt.s32.totalorder %s28, 3
      %p231 = pnand %p229, %p230
      %p232 = pneg %p231
      // Predicated region
      $region9: #{simple_residual_block.3} parent=5 // pred_check
        _
      $region10: #{simple_residual_block.3} parent=5 // pred_check_branch
        %234 = sbr.rel (%p231) target = $region12
      $region11: #{simple_residual_block.3} parent=5 // pred_region
        %s235 = ssub.s32 %s28, 1
        // Predicated region
        $region13: #{simple_residual_block.3} parent=11 // pred_check
          %p236 = pneg %p75
        $region14: #{simple_residual_block.3} parent=11 // pred_check_branch
          %238 = sbr.rel (%p236) target = $region16
        $region15: #{simple_residual_block.3} parent=11 // pred_region
          %s240 = ssub.s32 576, 576
          %241 = vsyncadd [#allocation6], %s240
          %s242 = sshll.u32 [#allocation5], 4
          %s243 = int_to_ptr.vmem [resolvable:$true] %s242
          %248 = dma.hbm_to_vmem [thread:$0]  %s1, 576, %s243, [#allocation6], 64, 64, 4
        $region16: #{simple_residual_block.3} parent=11 // pred_fallthru
          _
        // Predicated region
        $region17: #{simple_residual_block.3} parent=11 // pred_check
          %p249 = pneg %p96
        $region18: #{simple_residual_block.3} parent=11 // pred_check_branch
          %251 = sbr.rel (%p249) target = $region20
        $region19: #{simple_residual_block.3} parent=11 // pred_region
          %s253 = ssub.s32 64, 64
          %254 = vsyncadd [#allocation6], %s253
          %s256 = sshll.u32 [#allocation7], 4
          %s257 = int_to_ptr.vmem [resolvable:$true] %s256
          %259 = dma.hbm_to_vmem [thread:$0]  %s2, 64, %s257, [#allocation6]
        $region20: #{simple_residual_block.3} parent=11 // pred_fallthru
          _
        // Predicated region
        $region21: #{simple_residual_block.3} parent=11 // pred_check
          %p260 = pneg %p117
        $region22: #{simple_residual_block.3} parent=11 // pred_check_branch
          %262 = sbr.rel (%p260) target = $region24
        $region23: #{simple_residual_block.3} parent=11 // pred_region
          %s264 = ssub.s32 16, 16
          %265 = vsyncadd [#allocation9], %s264
          %s267 = sshll.u32 [#allocation8], 4
          %s268 = int_to_ptr.vmem [resolvable:$true] %s267
          %270 = dma.hbm_to_vmem [thread:$0]  %s3, 16, %s268, [#allocation9]
        $region24: #{simple_residual_block.3} parent=11 // pred_fallthru
          _
      $region12: #{simple_residual_block.3} parent=5 // pred_fallthru
        _
      %p271 = scmp.lt.s32.totalorder %s28, 2
      // Predicated region
      $region25: #{simple_residual_block.3} parent=5 // pred_check
        %p272 = pneg %p271
      $region26: #{simple_residual_block.3} parent=5 // pred_check_branch
        %274 = sbr.rel (%p272) target = $region28
      $region27: #{simple_residual_block.3} parent=5 // pred_region
        // Predicated region
        $region29: #{simple_residual_block.3} parent=27 // pred_check
          %p275 = pneg %p48
        $region30: #{simple_residual_block.3} parent=27 // pred_check_branch
          %277 = sbr.rel (%p275) target = $region32
        $region31: #{simple_residual_block.3} parent=27 // pred_region
          %s278 = sand.u32 %s38, 1
          %s279 = scalar_lea.sflag [#allocation3], %s278
          %s280 = sand.u32 %s38, 1
          %s281 = smul.addr %s280, 432
          %s282 = scalar_lea.vmem [#allocation2], %s281
          %s284 = ssub.s32 6912, 6912
          %285 = vsyncadd %s279, %s284
          %s286 = smul.addr %s28, 54
          %s287 = smul.addr %s286, 128
          %s288 = scalar_lea.hbm %s0, %s287
          %s289 = sshll.u32 %s282, 4
          %s290 = int_to_ptr.vmem [resolvable:$true] %s289
          %295 = dma.hbm_to_vmem [thread:$0]  %s288, 6912, %s290, %s279, 128, 128, 8
        $region32: #{simple_residual_block.3} parent=27 // pred_fallthru
          _
      $region28: #{simple_residual_block.3} parent=5 // pred_fallthru
        _
      %p296 = scmp.le.s32.totalorder 1, %s28
      %p297 = scmp.lt.s32.totalorder %s28, 3
      %p298 = pnand %p296, %p297
      %p299 = pneg %p298
      // Predicated region
      $region33: #{simple_residual_block.3} parent=5 // pred_check
        _
      $region34: #{simple_residual_block.3} parent=5 // pred_check_branch
        %301 = sbr.rel (%p298) target = $region36
      $region35: #{simple_residual_block.3} parent=5 // pred_region
        %s302 = ssub.s32 %s28, 1
        %s303 = sand.u32 %s41, 1
        %s304 = scalar_lea.sflag [#allocation3], %s303
        %s305 = sand.u32 %s41, 1
        %s306 = smul.addr %s305, 432
        %s307 = scalar_lea.vmem [#allocation2], %s306
        // Predicated region
        $region37: #{simple_residual_block.3} parent=35 // pred_check
          %p308 = pneg %p54
        $region38: #{simple_residual_block.3} parent=35 // pred_check_branch
          %310 = sbr.rel (%p308) target = $region40
        $region39: #{simple_residual_block.3} parent=35 // pred_region
          %311 = dma.done %s304, 6912
        $region40: #{simple_residual_block.3} parent=35 // pred_fallthru
          _
        // Predicated region
        $region41: #{simple_residual_block.3} parent=35 // pred_check
          %p312 = pneg %p75
        $region42: #{simple_residual_block.3} parent=35 // pred_check_branch
          %314 = sbr.rel (%p312) target = $region44
        $region43: #{simple_residual_block.3} parent=35 // pred_region
          %315 = dma.done [#allocation6], 576
        $region44: #{simple_residual_block.3} parent=35 // pred_fallthru
          _
        // Predicated region
        $region45: #{simple_residual_block.3} parent=35 // pred_check
          %p316 = pneg %p96
        $region46: #{simple_residual_block.3} parent=35 // pred_check_branch
          %318 = sbr.rel (%p316) target = $region48
        $region47: #{simple_residual_block.3} parent=35 // pred_region
          %319 = dma.done [#allocation6], 64
        $region48: #{simple_residual_block.3} parent=35 // pred_fallthru
          _
        // Predicated region
        $region49: #{simple_residual_block.3} parent=35 // pred_check
          %p320 = pneg %p117
        $region50: #{simple_residual_block.3} parent=35 // pred_check_branch
          %322 = sbr.rel (%p320) target = $region52
        $region51: #{simple_residual_block.3} parent=35 // pred_region
          %323 = dma.done [#allocation9], 16
        $region52: #{simple_residual_block.3} parent=35 // pred_fallthru
          _
        %s324 = sand.u32 %s41, 1
        %s325 = scalar_lea.sflag [#allocation3], %s324
        %s326 = sand.u32 %s41, 1
        %s327 = smul.addr %s326, 432
        %s328 = scalar_lea.vmem [#allocation2], %s327
        %p329 = pneg %p54
        %p330 = pneg %p51
        %p331 = pneg %p75
        %p332 = pneg %p72
        %p333 = pneg %p96
        %p334 = pneg %p93
        %p335 = pneg %p117
        %p336 = pneg %p114
        %p337 = pneg %p143
        %p338 = pneg %p140
        %s339 = sand.u32 %s130, 1
        %s340 = scalar_lea.sflag [#allocation4], %s339
        %s341 = sand.u32 %s130, 1
        %s342 = smul.addr %s341, 256
        %s343 = scalar_lea.vmem [#allocation10], %s342
        %p344 = pneg %p169
        %p345 = pneg %p166
        %s346 = sand.u32 %s33, 1
        %s347 = scalar_lea.sflag [#allocation12], %s346
        %s348 = sand.u32 %s156, 1
        %s349 = smul.addr %s348, 256
        %s350 = scalar_lea.vmem [#allocation11], %s349
        %p351 = pneg %p195
        %p352 = pneg %p192
        %s353 = sand.u32 %s33, 1
        %s354 = scalar_lea.sflag [#allocation12], %s353
        %s355 = sand.u32 %s182, 1
        %s356 = scalar_lea.vmem [#allocation13], %s355
        %p357 = pneg %p221
        %p358 = pneg %p218
        %s359 = sand.u32 %s208, 1
        %s360 = scalar_lea.sflag [#allocation15], %s359
        %s361 = sand.u32 %s208, 1
        %s362 = scalar_lea.vmem [#allocation14], %s361
        %v363 = vld [vmem:[%s307] sm:$0xff]
        %v364 = vld [vmem:[%s307 + $0x8] sm:$0xff]
        %v365 = vld [vmem:[%s307 + $0x18] sm:$0xff]
        %v366 = vld [vmem:[%s307 + $0x20] sm:$0xff]
        %v367 = vld [vmem:[%s307 + $0x30] sm:$0xff]
        %v368 = vld [vmem:[%s307 + $0x38] sm:$0xff]
        %v369 = vld [vmem:[%s307 + $0x48] sm:$0xff]
        %v370 = vld [vmem:[%s307 + $0x50] sm:$0xff]
        %v371 = vld [vmem:[%s307 + $0x60] sm:$0xff]
        %v372 = vld [vmem:[%s307 + $0x68] sm:$0xff]
        %v373 = vld [vmem:[%s307 + $0x78] sm:$0xff]
        %v374 = vld [vmem:[%s307 + $0x80] sm:$0xff]
        %v375 = vld [vmem:[%s307 + $0x90] sm:$0xff]
        %v376 = vld [vmem:[%s307 + $0x98] sm:$0xff]
        %v377 = vld [vmem:[%s307 + $0xa8] sm:$0xff]
        %v378 = vld [vmem:[%s307 + $0xb0] sm:$0xff]
        %v379 = vld [vmem:[%s307 + $0xc0] sm:$0xff]
        %v380 = vld [vmem:[%s307 + $0xc8] sm:$0xff]
        %v381 = vld [vmem:[%s307 + $0xd8] sm:$0xff]
        %v382 = vld [vmem:[%s307 + $0xe0] sm:$0xff]
        %v383 = vld [vmem:[%s307 + $0xf0] sm:$0xff]
        %v384 = vld [vmem:[%s307 + $0xf8] sm:$0xff]
        %v385 = vld [vmem:[%s307 + $0x108] sm:$0xff]
        %v386 = vld [vmem:[%s307 + $0x110] sm:$0xff]
        %v387 = vld [vmem:[%s307 + $0x120] sm:$0xff]
        %v388 = vld [vmem:[%s307 + $0x128] sm:$0xff]
        %v389 = vld [vmem:[%s307 + $0x138] sm:$0xff]
        %v390 = vld [vmem:[%s307 + $0x140] sm:$0xff]
        %v391 = vld [vmem:[%s307 + $0x150] sm:$0xff]
        %v392 = vld [vmem:[%s307 + $0x158] sm:$0xff]
        %v393 = vld [vmem:[%s307 + $0x168] sm:$0xff]
        %v394 = vld [vmem:[%s307 + $0x170] sm:$0xff]
        %v395 = vld [vmem:[%s307 + $0x180] sm:$0xff]
        %v396 = vld [vmem:[%s307 + $0x188] sm:$0xff]
        %v397 = vld [vmem:[%s307 + $0x198] sm:$0xff]
        %v398 = vld [vmem:[%s307 + $0x1a0] sm:$0xff]
        %v399 = vld [vmem:[%s307 + $0x1] sm:$0xff]
        %v400 = vld [vmem:[%s307 + $0x9] sm:$0xff]
        %v401 = vld [vmem:[%s307 + $0x19] sm:$0xff]
        %v402 = vld [vmem:[%s307 + $0x21] sm:$0xff]
        %v403 = vld [vmem:[%s307 + $0x31] sm:$0xff]
        %v404 = vld [vmem:[%s307 + $0x39] sm:$0xff]
        %v405 = vld [vmem:[%s307 + $0x49] sm:$0xff]
        %v406 = vld [vmem:[%s307 + $0x51] sm:$0xff]
        %v407 = vld [vmem:[%s307 + $0x61] sm:$0xff]
        %v408 = vld [vmem:[%s307 + $0x69] sm:$0xff]
        %v409 = vld [vmem:[%s307 + $0x79] sm:$0xff]
        %v410 = vld [vmem:[%s307 + $0x81] sm:$0xff]
        %v411 = vld [vmem:[%s307 + $0x91] sm:$0xff]
        %v412 = vld [vmem:[%s307 + $0x99] sm:$0xff]
        %v413 = vld [vmem:[%s307 + $0xa9] sm:$0xff]
        %v414 = vld [vmem:[%s307 + $0xb1] sm:$0xff]
        %v415 = vld [vmem:[%s307 + $0xc1] sm:$0xff]
        %v416 = vld [vmem:[%s307 + $0xc9] sm:$0xff]
        %v417 = vld [vmem:[%s307 + $0xd9] sm:$0xff]
        %v418 = vld [vmem:[%s307 + $0xe1] sm:$0xff]
        %v419 = vld [vmem:[%s307 + $0xf1] sm:$0xff]
        %v420 = vld [vmem:[%s307 + $0xf9] sm:$0xff]
        %v421 = vld [vmem:[%s307 + $0x109] sm:$0xff]
        %v422 = vld [vmem:[%s307 + $0x111] sm:$0xff]
        %v423 = vld [vmem:[%s307 + $0x121] sm:$0xff]
        %v424 = vld [vmem:[%s307 + $0x129] sm:$0xff]
        %v425 = vld [vmem:[%s307 + $0x139] sm:$0xff]
        %v426 = vld [vmem:[%s307 + $0x141] sm:$0xff]
        %v427 = vld [vmem:[%s307 + $0x151] sm:$0xff]
        %v428 = vld [vmem:[%s307 + $0x159] sm:$0xff]
        %v429 = vld [vmem:[%s307 + $0x169] sm:$0xff]
        %v430 = vld [vmem:[%s307 + $0x171] sm:$0xff]
        %v431 = vld [vmem:[%s307 + $0x181] sm:$0xff]
        %v432 = vld [vmem:[%s307 + $0x189] sm:$0xff]
        %v433 = vld [vmem:[%s307 + $0x199] sm:$0xff]
        %v434 = vld [vmem:[%s307 + $0x1a1] sm:$0xff]
        %v435 = vld [vmem:[%s307 + $0x2] sm:$0xff]
        %v436 = vld [vmem:[%s307 + $0xa] sm:$0xff]
        %v437 = vld [vmem:[%s307 + $0x1a] sm:$0xff]
        %v438 = vld [vmem:[%s307 + $0x22] sm:$0xff]
        %v439 = vld [vmem:[%s307 + $0x32] sm:$0xff]
        %v440 = vld [vmem:[%s307 + $0x3a] sm:$0xff]
        %v441 = vld [vmem:[%s307 + $0x4a] sm:$0xff]
        %v442 = vld [vmem:[%s307 + $0x52] sm:$0xff]
        %v443 = vld [vmem:[%s307 + $0x62] sm:$0xff]
        %v444 = vld [vmem:[%s307 + $0x6a] sm:$0xff]
        %v445 = vld [vmem:[%s307 + $0x7a] sm:$0xff]
        %v446 = vld [vmem:[%s307 + $0x82] sm:$0xff]
        %v447 = vld [vmem:[%s307 + $0x92] sm:$0xff]
        %v448 = vld [vmem:[%s307 + $0x9a] sm:$0xff]
        %v449 = vld [vmem:[%s307 + $0xaa] sm:$0xff]
        %v450 = vld [vmem:[%s307 + $0xb2] sm:$0xff]
        %v451 = vld [vmem:[%s307 + $0xc2] sm:$0xff]
        %v452 = vld [vmem:[%s307 + $0xca] sm:$0xff]
        %v453 = vld [vmem:[%s307 + $0xda] sm:$0xff]
        %v454 = vld [vmem:[%s307 + $0xe2] sm:$0xff]
        %v455 = vld [vmem:[%s307 + $0xf2] sm:$0xff]
        %v456 = vld [vmem:[%s307 + $0xfa] sm:$0xff]
        %v457 = vld [vmem:[%s307 + $0x10a] sm:$0xff]
        %v458 = vld [vmem:[%s307 + $0x112] sm:$0xff]
        %v459 = vld [vmem:[%s307 + $0x122] sm:$0xff]
        %v460 = vld [vmem:[%s307 + $0x12a] sm:$0xff]
        %v461 = vld [vmem:[%s307 + $0x13a] sm:$0xff]
        %v462 = vld [vmem:[%s307 + $0x142] sm:$0xff]
        %v463 = vld [vmem:[%s307 + $0x152] sm:$0xff]
        %v464 = vld [vmem:[%s307 + $0x15a] sm:$0xff]
        %v465 = vld [vmem:[%s307 + $0x16a] sm:$0xff]
        %v466 = vld [vmem:[%s307 + $0x172] sm:$0xff]
        %v467 = vld [vmem:[%s307 + $0x182] sm:$0xff]
        %v468 = vld [vmem:[%s307 + $0x18a] sm:$0xff]
        %v469 = vld [vmem:[%s307 + $0x19a] sm:$0xff]
        %v470 = vld [vmem:[%s307 + $0x1a2] sm:$0xff]
        %v471 = vld [vmem:[#allocation5] sm:$0xf]
        %s472 = scalar_lea.vmem [#allocation5], 4
        %v473 = vld [vmem:[%s472] sm:$0xf]
        %vm474 = vcmask 31744
        %v476 = vsel %vm474, %v399, 0
        %v479 = vsel %vm474, %v400, 0
        %v482 = vsel %vm474, %v401, 0
        %v485 = vsel %vm474, %v402, 0
        %v488 = vsel %vm474, %v403, 0
        %v491 = vsel %vm474, %v404, 0
        %v494 = vsel %vm474, %v405, 0
        %v497 = vsel %vm474, %v406, 0
        %v500 = vsel %vm474, %v407, 0
        %v503 = vsel %vm474, %v408, 0
        %v506 = vsel %vm474, %v409, 0
        %v509 = vsel %vm474, %v410, 0
        %v512 = vsel %vm474, %v411, 0
        %v515 = vsel %vm474, %v412, 0
        %v518 = vsel %vm474, %v413, 0
        %v521 = vsel %vm474, %v414, 0
        %v524 = vsel %vm474, %v415, 0
        %v527 = vsel %vm474, %v416, 0
        %v530 = vsel %vm474, %v417, 0
        %v533 = vsel %vm474, %v418, 0
        %v536 = vsel %vm474, %v419, 0
        %v539 = vsel %vm474, %v420, 0
        %v542 = vsel %vm474, %v421, 0
        %v545 = vsel %vm474, %v422, 0
        %v548 = vsel %vm474, %v423, 0
        %v551 = vsel %vm474, %v424, 0
        %v554 = vsel %vm474, %v425, 0
        %v557 = vsel %vm474, %v426, 0
        %v560 = vsel %vm474, %v427, 0
        %v563 = vsel %vm474, %v428, 0
        %v566 = vsel %vm474, %v429, 0
        %v569 = vsel %vm474, %v430, 0
        %vm571 = vcmask 1043456
        %v573 = vsel %vm571, %v473, 0
        %575 = vmatprep.subr.mxu0 0.0
        %576 = vmatpush1.msra.mxu0 %v573
        %577 = vmatprep.subr.mxu0 0.0
        %578 = vmatpush1.msra.mxu0 0.0
        %579 = vmatprep.subr.mxu0 0.0
        %580 = vmatpush1.msra.mxu0 0.0
        %581 = vmatprep.subr.mxu0 0.0
        %582 = vmatpush1.msra.mxu0 0.0
        %583 = vmatprep.subr.mxu0 0.0
        %584 = vmatpush1.msra.mxu0 0.0
        %585 = vmatprep.subr.mxu0 0.0
        %586 = vmatpush1.msra.mxu0 0.0
        %587 = vmatprep.subr.mxu0 0.0
        %588 = vmatpush1.msra.mxu0 0.0
        %589 = vmatprep.subr.mxu0 0.0
        %590 = vmatpush1.msra.mxu0 0.0
        %591 = vmatprep.subr.mxu0 0.0
        %592 = vmatpush1.msra.mxu0 0.0
        %593 = vmatprep.subr.mxu0 0.0
        %594 = vmatpush1.msra.mxu0 0.0
        %595 = vmatprep.subr.mxu0 0.0
        %596 = vmatpush1.msra.mxu0 0.0
        %597 = vmatprep.subr.mxu0 0.0
        %598 = vmatpush1.msra.mxu0 0.0
        %599 = vmatprep.subr.mxu0 0.0
        %600 = vmatpush1.msra.mxu0 0.0
        %601 = vmatprep.subr.mxu0 0.0
        %602 = vmatpush1.msra.mxu0 0.0
        %603 = vmatprep.subr.mxu0 0.0
        %604 = vmatpush1.msra.mxu0 0.0
        %605 = vmatprep.subr.mxu0 0.0
        %606 = vmatpush1.msra.mxu0 0.0
        %607 = vmatprep.subr.mxu0 0.0
        %608 = vmatpush1.msra.mxu0 0.0
        %609 = vmatprep.subr.mxu0 0.0
        %610 = vmatpush1.msra.mxu0 0.0
        %611 = vmatprep.subr.mxu0 0.0
        %612 = vmatpush1.msra.mxu0 0.0
        %613 = vmatprep.subr.mxu0 0.0
        %614 = vmatpush1.msra.mxu0 0.0
        %615 = vmatprep.subr.mxu0 0.0
        %616 = vmatpush1.msra.mxu0 0.0
        %617 = vmatprep.subr.mxu0 0.0
        %618 = vmatpush1.msra.mxu0 0.0
        %619 = vmatprep.subr.mxu0 0.0
        %620 = vmatpush1.msra.mxu0 0.0
        %621 = vmatprep.subr.mxu0 0.0
        %622 = vmatpush1.msra.mxu0 0.0
        %623 = vmatprep.subr.mxu0 0.0
        %624 = vmatpush1.msra.mxu0 0.0
        %625 = vmatprep.subr.mxu0 0.0
        %626 = vmatpush1.msra.mxu0 0.0
        %627 = vmatprep.subr.mxu0 0.0
        %628 = vmatpush1.msra.mxu0 0.0
        %629 = vmatprep.subr.mxu0 0.0
        %630 = vmatpush1.msra.mxu0 0.0
        %631 = vmatprep.subr.mxu0 0.0
        %632 = vmatpush1.msra.mxu0 0.0
        %633 = vmatprep.subr.mxu0 0.0
        %634 = vmatpush1.msra.mxu0 0.0
        %635 = vmatprep.subr.mxu0 0.0
        %636 = vmatpush1.msra.mxu0 0.0
        %637 = vmatprep.subr.mxu0 0.0
        %638 = vmatpush1.msra.mxu0 0.0
        %639 = vmatprep.mubr.f32.mxu0 0.0
        %640 = vmatmul.mubr.f32.gmra.mrb[0].mxu0 %v476
        %v641 = vpop.f32.mrb[0].mxu0
        %v642 = vadd.f32 0.0, %v641
        %v643 = vpop.f32.mrb[0].mxu0
        %644 = vmatprep.mubr.f32.mxu0 0.0
        %645 = vmatmul.mubr.f32.gmra.mrb[0].mxu0 %v479
        %v646 = vpop.f32.mrb[0].mxu0
        %v647 = vadd.f32 0.0, %v646
        %v648 = vpop.f32.mrb[0].mxu0
        %649 = vmatprep.mubr.f32.mxu0 0.0
        %650 = vmatmul.mubr.f32.gmra.mrb[0].mxu0 %v482
        %v651 = vpop.f32.mrb[0].mxu0
        %v652 = vadd.f32 0.0, %v651
        %v653 = vpop.f32.mrb[0].mxu0
        %654 = vmatprep.mubr.f32.mxu0 0.0
        %655 = vmatmul.mubr.f32.gmra.mrb[0].mxu0 %v485
        %v656 = vpop.f32.mrb[0].mxu0
        %v657 = vadd.f32 0.0, %v656
        %v658 = vpop.f32.mrb[0].mxu0
        %659 = vmatprep.mubr.f32.mxu0 0.0
        %660 = vmatmul.mubr.f32.gmra.mrb[0].mxu0 %v488
        %v661 = vpop.f32.mrb[0].mxu0
        %v662 = vadd.f32 0.0, %v661
        %v663 = vpop.f32.mrb[0].mxu0
        %664 = vmatprep.mubr.f32.mxu0 0.0
        %665 = vmatmul.mubr.f32.gmra.mrb[0].mxu0 %v491
        %v666 = vpop.f32.mrb[0].mxu0
        %v667 = vadd.f32 0.0, %v666
        %v668 = vpop.f32.mrb[0].mxu0
        %669 = vmatprep.mubr.f32.mxu0 0.0
        %670 = vmatmul.mubr.f32.gmra.mrb[0].mxu0 %v494
        %v671 = vpop.f32.mrb[0].mxu0
        %v672 = vadd.f32 0.0, %v671
        %v673 = vpop.f32.mrb[0].mxu0
        %674 = vmatprep.mubr.f32.mxu0 0.0
        %675 = vmatmul.mubr.f32.gmra.mrb[0].mxu0 %v497
        %v676 = vpop.f32.mrb[0].mxu0
        %v677 = vadd.f32 0.0, %v676
        %v678 = vpop.f32.mrb[0].mxu0
        %679 = vmatprep.mubr.f32.mxu0 0.0
        %680 = vmatmul.mubr.f32.gmra.mrb[0].mxu0 %v500
        %v681 = vpop.f32.mrb[0].mxu0
        %v682 = vadd.f32 0.0, %v681
        %v683 = vpop.f32.mrb[0].mxu0
        %684 = vmatprep.mubr.f32.mxu0 0.0
        %685 = vmatmul.mubr.f32.gmra.mrb[0].mxu0 %v503
        %v686 = vpop.f32.mrb[0].mxu0
        %v687 = vadd.f32 0.0, %v686
        %v688 = vpop.f32.mrb[0].mxu0
        %689 = vmatprep.mubr.f32.mxu0 0.0
        %690 = vmatmul.mubr.f32.gmra.mrb[0].mxu0 %v506
        %v691 = vpop.f32.mrb[0].mxu0
        %v692 = vadd.f32 0.0, %v691
        %v693 = vpop.f32.mrb[0].mxu0
        %694 = vmatprep.mubr.f32.mxu0 0.0
        %695 = vmatmul.mubr.f32.gmra.mrb[0].mxu0 %v509
        %v696 = vpop.f32.mrb[0].mxu0
        %v697 = vadd.f32 0.0, %v696
        %v698 = vpop.f32.mrb[0].mxu0
        %699 = vmatprep.mubr.f32.mxu0 0.0
        %700 = vmatmul.mubr.f32.gmra.mrb[0].mxu0 %v512
        %v701 = vpop.f32.mrb[0].mxu0
        %v702 = vadd.f32 0.0, %v701
        %v703 = vpop.f32.mrb[0].mxu0
        %704 = vmatprep.mubr.f32.mxu0 0.0
        %705 = vmatmul.mubr.f32.gmra.mrb[0].mxu0 %v515
        %v706 = vpop.f32.mrb[0].mxu0
        %v707 = vadd.f32 0.0, %v706
        %v708 = vpop.f32.mrb[0].mxu0
        %709 = vmatprep.mubr.f32.mxu0 0.0
        %710 = vmatmul.mubr.f32.gmra.mrb[0].mxu0 %v518
        %v711 = vpop.f32.mrb[0].mxu0
        %v712 = vadd.f32 0.0, %v711
        %v713 = vpop.f32.mrb[0].mxu0
        %714 = vmatprep.mubr.f32.mxu0 0.0
        %715 = vmatmul.mubr.f32.gmra.mrb[0].mxu0 %v521
        %v716 = vpop.f32.mrb[0].mxu0
        %v717 = vadd.f32 0.0, %v716
        %v718 = vpop.f32.mrb[0].mxu0
        %719 = vmatprep.mubr.f32.mxu0 0.0
        %720 = vmatmul.mubr.f32.gmra.mrb[0].mxu0 %v524
        %v721 = vpop.f32.mrb[0].mxu0
        %v722 = vadd.f32 0.0, %v721
        %v723 = vpop.f32.mrb[0].mxu0
        %724 = vmatprep.mubr.f32.mxu0 0.0
        %725 = vmatmul.mubr.f32.gmra.mrb[0].mxu0 %v527
        %v726 = vpop.f32.mrb[0].mxu0
        %v727 = vadd.f32 0.0, %v726
        %v728 = vpop.f32.mrb[0].mxu0
        %729 = vmatprep.mubr.f32.mxu0 0.0
        %730 = vmatmul.mubr.f32.gmra.mrb[0].mxu0 %v530
        %v731 = vpop.f32.mrb[0].mxu0
        %v732 = vadd.f32 0.0, %v731
        %v733 = vpop.f32.mrb[0].mxu0
        %734 = vmatprep.mubr.f32.mxu0 0.0
        %735 = vmatmul.mubr.f32.gmra.mrb[0].mxu0 %v533
        %v736 = vpop.f32.mrb[0].mxu0
        %v737 = vadd.f32 0.0, %v736
        %v738 = vpop.f32.mrb[0].mxu0
        %739 = vmatprep.mubr.f32.mxu0 0.0
        %740 = vmatmul.mubr.f32.gmra.mrb[0].mxu0 %v536
        %v741 = vpop.f32.mrb[0].mxu0
        %v742 = vadd.f32 0.0, %v741
        %v743 = vpop.f32.mrb[0].mxu0
        %744 = vmatprep.mubr.f32.mxu0 0.0
        %745 = vmatmul.mubr.f32.gmra.mrb[0].mxu0 %v539
        %v746 = vpop.f32.mrb[0].mxu0
        %v747 = vadd.f32 0.0, %v746
        %v748 = vpop.f32.mrb[0].mxu0
        %749 = vmatprep.mubr.f32.mxu0 0.0
        %750 = vmatmul.mubr.f32.gmra.mrb[0].mxu0 %v542
        %v751 = vpop.f32.mrb[0].mxu0
        %v752 = vadd.f32 0.0, %v751
        %v753 = vpop.f32.mrb[0].mxu0
        %754 = vmatprep.mubr.f32.mxu0 0.0
        %755 = vmatmul.mubr.f32.gmra.mrb[0].mxu0 %v545
        %v756 = vpop.f32.mrb[0].mxu0
        %v757 = vadd.f32 0.0, %v756
        %v758 = vpop.f32.mrb[0].mxu0
        %759 = vmatprep.mubr.f32.mxu0 0.0
        %760 = vmatmul.mubr.f32.gmra.mrb[0].mxu0 %v548
        %v761 = vpop.f32.mrb[0].mxu0
        %v762 = vadd.f32 0.0, %v761
        %v763 = vpop.f32.mrb[0].mxu0
        %764 = vmatprep.mubr.f32.mxu0 0.0
        %765 = vmatmul.mubr.f32.gmra.mrb[0].mxu0 %v551
        %v766 = vpop.f32.mrb[0].mxu0
        %v767 = vadd.f32 0.0, %v766
        %v768 = vpop.f32.mrb[0].mxu0
        %769 = vmatprep.mubr.f32.mxu0 0.0
        %770 = vmatmul.mubr.f32.gmra.mrb[0].mxu0 %v554
        %v771 = vpop.f32.mrb[0].mxu0
        %v772 = vadd.f32 0.0, %v771
        %v773 = vpop.f32.mrb[0].mxu0
        %774 = vmatprep.mubr.f32.mxu0 0.0
        %775 = vmatmul.mubr.f32.gmra.mrb[0].mxu0 %v557
        %v776 = vpop.f32.mrb[0].mxu0
        %v777 = vadd.f32 0.0, %v776
        %v778 = vpop.f32.mrb[0].mxu0
        %779 = vmatprep.mubr.f32.mxu0 0.0
        %780 = vmatmul.mubr.f32.gmra.mrb[0].mxu0 %v560
        %v781 = vpop.f32.mrb[0].mxu0
        %v782 = vadd.f32 0.0, %v781
        %v783 = vpop.f32.mrb[0].mxu0
        %784 = vmatprep.mubr.f32.mxu0 0.0
        %785 = vmatmul.mubr.f32.gmra.mrb[0].mxu0 %v563
        %v786 = vpop.f32.mrb[0].mxu0
        %v787 = vadd.f32 0.0, %v786
        %v788 = vpop.f32.mrb[0].mxu0
        %789 = vmatprep.mubr.f32.mxu0 0.0
        %790 = vmatmul.mubr.f32.gmra.mrb[0].mxu0 %v566
        %v791 = vpop.f32.mrb[0].mxu0
        %v792 = vadd.f32 0.0, %v791
        %v793 = vpop.f32.mrb[0].mxu0
        %794 = vmatprep.mubr.f32.mxu0 0.0
        %795 = vmatmul.mubr.f32.gmra.mrb[0].mxu0 %v569
        %v796 = vpop.f32.mrb[0].mxu0
        %v797 = vadd.f32 0.0, %v796
        %v798 = vpop.f32.mrb[0].mxu0
        %799 = vdwg.mxu0
        %v801 = vsel %vm474, %v363, 0
        %v804 = vsel %vm474, %v364, 0
        %v807 = vsel %vm474, %v365, 0
        %v810 = vsel %vm474, %v366, 0
        %v813 = vsel %vm474, %v367, 0
        %v816 = vsel %vm474, %v368, 0
        %v819 = vsel %vm474, %v369, 0
        %v822 = vsel %vm474, %v370, 0
        %v825 = vsel %vm474, %v371, 0
        %v828 = vsel %vm474, %v372, 0
        %v831 = vsel %vm474, %v373, 0
        %v834 = vsel %vm474, %v374, 0
        %v837 = vsel %vm474, %v375, 0
        %v840 = vsel %vm474, %v376, 0
        %v843 = vsel %vm474, %v377, 0
        %v846 = vsel %vm474, %v378, 0
        %v849 = vsel %vm474, %v379, 0
        %v852 = vsel %vm474, %v380, 0
        %v855 = vsel %vm474, %v381, 0
        %v858 = vsel %vm474, %v382, 0
        %v861 = vsel %vm474, %v383, 0
        %v864 = vsel %vm474, %v384, 0
        %v867 = vsel %vm474, %v385, 0
        %v870 = vsel %vm474, %v386, 0
        %v873 = vsel %vm474, %v387, 0
        %v876 = vsel %vm474, %v388, 0
        %v879 = vsel %vm474, %v389, 0
        %v882 = vsel %vm474, %v390, 0
        %v885 = vsel %vm474, %v391, 0
        %v888 = vsel %vm474, %v392, 0
        %v891 = vsel %vm474, %v393, 0
        %v894 = vsel %vm474, %v394, 0
        %v897 = vsel %vm571, %v471, 0
        %899 = vmatprep.subr.mxu0 0.0
        %900 = vmatpush1.msra.mxu0 %v897
        %901 = vmatprep.subr.mxu0 0.0
        %902 = vmatpush1.msra.mxu0 0.0
        %903 = vmatprep.subr.mxu0 0.0
        %904 = vmatpush1.msra.mxu0 0.0
        %905 = vmatprep.subr.mxu0 0.0
        %906 = vmatpush1.msra.mxu0 0.0
        %907 = vmatprep.subr.mxu0 0.0
        %908 = vmatpush1.msra.mxu0 0.0
        %909 = vmatprep.subr.mxu0 0.0
        %910 = vmatpush1.msra.mxu0 0.0
        %911 = vmatprep.subr.mxu0 0.0
        %912 = vmatpush1.msra.mxu0 0.0
        %913 = vmatprep.subr.mxu0 0.0
        %914 = vmatpush1.msra.mxu0 0.0
        %915 = vmatprep.subr.mxu0 0.0
        %916 = vmatpush1.msra.mxu0 0.0
        %917 = vmatprep.subr.mxu0 0.0
        %918 = vmatpush1.msra.mxu0 0.0
        %919 = vmatprep.subr.mxu0 0.0
        %920 = vmatpush1.msra.mxu0 0.0
        %921 = vmatprep.subr.mxu0 0.0
        %922 = vmatpush1.msra.mxu0 0.0
        %923 = vmatprep.subr.mxu0 0.0
        %924 = vmatpush1.msra.mxu0 0.0
        %925 = vmatprep.subr.mxu0 0.0
        %926 = vmatpush1.msra.mxu0 0.0
        %927 = vmatprep.subr.mxu0 0.0
        %928 = vmatpush1.msra.mxu0 0.0
        %929 = vmatprep.subr.mxu0 0.0
        %930 = vmatpush1.msra.mxu0 0.0
        %931 = vmatprep.subr.mxu0 0.0
        %932 = vmatpush1.msra.mxu0 0.0
        %933 = vmatprep.subr.mxu0 0.0
        %934 = vmatpush1.msra.mxu0 0.0
        %935 = vmatprep.subr.mxu0 0.0
        %936 = vmatpush1.msra.mxu0 0.0
        %937 = vmatprep.subr.mxu0 0.0
        %938 = vmatpush1.msra.mxu0 0.0
        %939 = vmatprep.subr.mxu0 0.0
        %940 = vmatpush1.msra.mxu0 0.0
        %941 = vmatprep.subr.mxu0 0.0
        %942 = vmatpush1.msra.mxu0 0.0
        %943 = vmatprep.subr.mxu0 0.0
        %944 = vmatpush1.msra.mxu0 0.0
        %945 = vmatprep.subr.mxu0 0.0
        %946 = vmatpush1.msra.mxu0 0.0
        %947 = vmatprep.subr.mxu0 0.0
        %948 = vmatpush1.msra.mxu0 0.0
        %949 = vmatprep.subr.mxu0 0.0
        %950 = vmatpush1.msra.mxu0 0.0
        %951 = vmatprep.subr.mxu0 0.0
        %952 = vmatpush1.msra.mxu0 0.0
        %953 = vmatprep.subr.mxu0 0.0
        %954 = vmatpush1.msra.mxu0 0.0
        %955 = vmatprep.subr.mxu0 0.0
        %956 = vmatpush1.msra.mxu0 0.0
        %957 = vmatprep.subr.mxu0 0.0
        %958 = vmatpush1.msra.mxu0 0.0
        %959 = vmatprep.subr.mxu0 0.0
        %960 = vmatpush1.msra.mxu0 0.0
        %961 = vmatprep.subr.mxu0 0.0
        %962 = vmatpush1.msra.mxu0 0.0
        %963 = vmatprep.mubr.f32.mxu0 0.0
        %964 = vmatmul.mubr.f32.gmra.mrb[0].mxu0 %v801
        %v965 = vpop.f32.mrb[0].mxu0
        %v966 = vadd.f32 %v642, %v965
        %v967 = vpop.f32.mrb[0].mxu0
        %968 = vmatprep.mubr.f32.mxu0 0.0
        %969 = vmatmul.mubr.f32.gmra.mrb[0].mxu0 %v804
        %v970 = vpop.f32.mrb[0].mxu0
        %v971 = vadd.f32 %v647, %v970
        %v972 = vpop.f32.mrb[0].mxu0
        %973 = vmatprep.mubr.f32.mxu0 0.0
        %974 = vmatmul.mubr.f32.gmra.mrb[0].mxu0 %v807
        %v975 = vpop.f32.mrb[0].mxu0
        %v976 = vadd.f32 %v652, %v975
        %v977 = vpop.f32.mrb[0].mxu0
        %978 = vmatprep.mubr.f32.mxu0 0.0
        %979 = vmatmul.mubr.f32.gmra.mrb[0].mxu0 %v810
        %v980 = vpop.f32.mrb[0].mxu0
        %v981 = vadd.f32 %v657, %v980
        %v982 = vpop.f32.mrb[0].mxu0
        %983 = vmatprep.mubr.f32.mxu0 0.0
        %984 = vmatmul.mubr.f32.gmra.mrb[0].mxu0 %v813
        %v985 = vpop.f32.mrb[0].mxu0
        %v986 = vadd.f32 %v662, %v985
        %v987 = vpop.f32.mrb[0].mxu0
        %988 = vmatprep.mubr.f32.mxu0 0.0
        %989 = vmatmul.mubr.f32.gmra.mrb[0].mxu0 %v816
        %v990 = vpop.f32.mrb[0].mxu0
        %v991 = vadd.f32 %v667, %v990
        %v992 = vpop.f32.mrb[0].mxu0
        %993 = vmatprep.mubr.f32.mxu0 0.0
        %994 = vmatmul.mubr.f32.gmra.mrb[0].mxu0 %v819
        %v995 = vpop.f32.mrb[0].mxu0
        %v996 = vadd.f32 %v672, %v995
        %v997 = vpop.f32.mrb[0].mxu0
        %998 = vmatprep.mubr.f32.mxu0 0.0
        %999 = vmatmul.mubr.f32.gmra.mrb[0].mxu0 %v822
        %v1000 = vpop.f32.mrb[0].mxu0
        %v1001 = vadd.f32 %v677, %v1000
        %v1002 = vpop.f32.mrb[0].mxu0
        %1003 = vmatprep.mubr.f32.mxu0 0.0
        %1004 = vmatmul.mubr.f32.gmra.mrb[0].mxu0 %v825
        %v1005 = vpop.f32.mrb[0].mxu0
        %v1006 = vadd.f32 %v682, %v1005
        %v1007 = vpop.f32.mrb[0].mxu0
        %1008 = vmatprep.mubr.f32.mxu0 0.0
        %1009 = vmatmul.mubr.f32.gmra.mrb[0].mxu0 %v828
        %v1010 = vpop.f32.mrb[0].mxu0
        %v1011 = vadd.f32 %v687, %v1010
        %v1012 = vpop.f32.mrb[0].mxu0
        %1013 = vmatprep.mubr.f32.mxu0 0.0
        %1014 = vmatmul.mubr.f32.gmra.mrb[0].mxu0 %v831
        %v1015 = vpop.f32.mrb[0].mxu0
        %v1016 = vadd.f32 %v692, %v1015
        %v1017 = vpop.f32.mrb[0].mxu0
        %1018 = vmatprep.mubr.f32.mxu0 0.0
        %1019 = vmatmul.mubr.f32.gmra.mrb[0].mxu0 %v834
        %v1020 = vpop.f32.mrb[0].mxu0
        %v1021 = vadd.f32 %v697, %v1020
        %v1022 = vpop.f32.mrb[0].mxu0
        %1023 = vmatprep.mubr.f32.mxu0 0.0
        %1024 = vmatmul.mubr.f32.gmra.mrb[0].mxu0 %v837
        %v1025 = vpop.f32.mrb[0].mxu0
        %v1026 = vadd.f32 %v702, %v1025
        %v1027 = vpop.f32.mrb[0].mxu0
        %1028 = vmatprep.mubr.f32.mxu0 0.0
        %1029 = vmatmul.mubr.f32.gmra.mrb[0].mxu0 %v840
        %v1030 = vpop.f32.mrb[0].mxu0
        %v1031 = vadd.f32 %v707, %v1030
        %v1032 = vpop.f32.mrb[0].mxu0
        %1033 = vmatprep.mubr.f32.mxu0 0.0
        %1034 = vmatmul.mubr.f32.gmra.mrb[0].mxu0 %v843
        %v1035 = vpop.f32.mrb[0].mxu0
        %v1036 = vadd.f32 %v712, %v1035
        %v1037 = vpop.f32.mrb[0].mxu0
        %1038 = vmatprep.mubr.f32.mxu0 0.0
        %1039 = vmatmul.mubr.f32.gmra.mrb[0].mxu0 %v846
        %v1040 = vpop.f32.mrb[0].mxu0
        %v1041 = vadd.f32 %v717, %v1040
        %v1042 = vpop.f32.mrb[0].mxu0
        %1043 = vmatprep.mubr.f32.mxu0 0.0
        %1044 = vmatmul.mubr.f32.gmra.mrb[0].mxu0 %v849
        %v1045 = vpop.f32.mrb[0].mxu0
        %v1046 = vadd.f32 %v722, %v1045
        %v1047 = vpop.f32.mrb[0].mxu0
        %1048 = vmatprep.mubr.f32.mxu0 0.0
        %1049 = vmatmul.mubr.f32.gmra.mrb[0].mxu0 %v852
        %v1050 = vpop.f32.mrb[0].mxu0
        %v1051 = vadd.f32 %v727, %v1050
        %v1052 = vpop.f32.mrb[0].mxu0
        %1053 = vmatprep.mubr.f32.mxu0 0.0
        %1054 = vmatmul.mubr.f32.gmra.mrb[0].mxu0 %v855
        %v1055 = vpop.f32.mrb[0].mxu0
        %v1056 = vadd.f32 %v732, %v1055
        %v1057 = vpop.f32.mrb[0].mxu0
        %1058 = vmatprep.mubr.f32.mxu0 0.0
        %1059 = vmatmul.mubr.f32.gmra.mrb[0].mxu0 %v858
        %v1060 = vpop.f32.mrb[0].mxu0
        %v1061 = vadd.f32 %v737, %v1060
        %v1062 = vpop.f32.mrb[0].mxu0
        %1063 = vmatprep.mubr.f32.mxu0 0.0
        %1064 = vmatmul.mubr.f32.gmra.mrb[0].mxu0 %v861
        %v1065 = vpop.f32.mrb[0].mxu0
        %v1066 = vadd.f32 %v742, %v1065
        %v1067 = vpop.f32.mrb[0].mxu0
        %1068 = vmatprep.mubr.f32.mxu0 0.0
        %1069 = vmatmul.mubr.f32.gmra.mrb[0].mxu0 %v864
        %v1070 = vpop.f32.mrb[0].mxu0
        %v1071 = vadd.f32 %v747, %v1070
        %v1072 = vpop.f32.mrb[0].mxu0
        %1073 = vmatprep.mubr.f32.mxu0 0.0
        %1074 = vmatmul.mubr.f32.gmra.mrb[0].mxu0 %v867
        %v1075 = vpop.f32.mrb[0].mxu0
        %v1076 = vadd.f32 %v752, %v1075
        %v1077 = vpop.f32.mrb[0].mxu0
        %1078 = vmatprep.mubr.f32.mxu0 0.0
        %1079 = vmatmul.mubr.f32.gmra.mrb[0].mxu0 %v870
        %v1080 = vpop.f32.mrb[0].mxu0
        %v1081 = vadd.f32 %v757, %v1080
        %v1082 = vpop.f32.mrb[0].mxu0
        %1083 = vmatprep.mubr.f32.mxu0 0.0
        %1084 = vmatmul.mubr.f32.gmra.mrb[0].mxu0 %v873
        %v1085 = vpop.f32.mrb[0].mxu0
        %v1086 = vadd.f32 %v762, %v1085
        %v1087 = vpop.f32.mrb[0].mxu0
        %1088 = vmatprep.mubr.f32.mxu0 0.0
        %1089 = vmatmul.mubr.f32.gmra.mrb[0].mxu0 %v876
        %v1090 = vpop.f32.mrb[0].mxu0
        %v1091 = vadd.f32 %v767, %v1090
        %v1092 = vpop.f32.mrb[0].mxu0
        %1093 = vmatprep.mubr.f32.mxu0 0.0
        %1094 = vmatmul.mubr.f32.gmra.mrb[0].mxu0 %v879
        %v1095 = vpop.f32.mrb[0].mxu0
        %v1096 = vadd.f32 %v772, %v1095
        %v1097 = vpop.f32.mrb[0].mxu0
        %1098 = vmatprep.mubr.f32.mxu0 0.0
        %1099 = vmatmul.mubr.f32.gmra.mrb[0].mxu0 %v882
        %v1100 = vpop.f32.mrb[0].mxu0
        %v1101 = vadd.f32 %v777, %v1100
        %v1102 = vpop.f32.mrb[0].mxu0
        %1103 = vmatprep.mubr.f32.mxu0 0.0
        %1104 = vmatmul.mubr.f32.gmra.mrb[0].mxu0 %v885
        %v1105 = vpop.f32.mrb[0].mxu0
        %v1106 = vadd.f32 %v782, %v1105
        %v1107 = vpop.f32.mrb[0].mxu0
        %1108 = vmatprep.mubr.f32.mxu0 0.0
        %1109 = vmatmul.mubr.f32.gmra.mrb[0].mxu0 %v888
        %v1110 = vpop.f32.mrb[0].mxu0
        %v1111 = vadd.f32 %v787, %v1110
        %v1112 = vpop.f32.mrb[0].mxu0
        %1113 = vmatprep.mubr.f32.mxu0 0.0
        %1114 = vmatmul.mubr.f32.gmra.mrb[0].mxu0 %v891
        %v1115 = vpop.f32.mrb[0].mxu0
        %v1116 = vadd.f32 %v792, %v1115
        %v1117 = vpop.f32.mrb[0].mxu0
        %1118 = vmatprep.mubr.f32.mxu0 0.0
        %1119 = vmatmul.mubr.f32.gmra.mrb[0].mxu0 %v894
        %v1120 = vpop.f32.mrb[0].mxu0
        %v1121 = vadd.f32 %v797, %v1120
        %v1122 = vpop.f32.mrb[0].mxu0
        %1123 = vdwg.mxu0
        %s1124 = scalar_lea.vmem [#allocation5], 8
        %v1125 = vld [vmem:[%s1124] sm:$0xf]
        %v1127 = vsel %vm474, %v435, 0
        %v1130 = vsel %vm474, %v436, 0
        %v1133 = vsel %vm474, %v437, 0
        %v1136 = vsel %vm474, %v438, 0
        %v1139 = vsel %vm474, %v439, 0
        %v1142 = vsel %vm474, %v440, 0
        %v1145 = vsel %vm474, %v441, 0
        %v1148 = vsel %vm474, %v442, 0
        %v1151 = vsel %vm474, %v443, 0
        %v1154 = vsel %vm474, %v444, 0
        %v1157 = vsel %vm474, %v445, 0
        %v1160 = vsel %vm474, %v446, 0
        %v1163 = vsel %vm474, %v447, 0
        %v1166 = vsel %vm474, %v448, 0
        %v1169 = vsel %vm474, %v449, 0
        %v1172 = vsel %vm474, %v450, 0
        %v1175 = vsel %vm474, %v451, 0
        %v1178 = vsel %vm474, %v452, 0
        %v1181 = vsel %vm474, %v453, 0
        %v1184 = vsel %vm474, %v454, 0
        %v1187 = vsel %vm474, %v455, 0
        %v1190 = vsel %vm474, %v456, 0
        %v1193 = vsel %vm474, %v457, 0
        %v1196 = vsel %vm474, %v458, 0
        %v1199 = vsel %vm474, %v459, 0
        %v1202 = vsel %vm474, %v460, 0
        %v1205 = vsel %vm474, %v461, 0
        %v1208 = vsel %vm474, %v462, 0
        %v1211 = vsel %vm474, %v463, 0
        %v1214 = vsel %vm474, %v464, 0
        %v1217 = vsel %vm474, %v465, 0
        %v1220 = vsel %vm474, %v466, 0
        %v1223 = vsel %vm571, %v1125, 0
        %1225 = vmatprep.subr.mxu0 0.0
        %1226 = vmatpush1.msra.mxu0 %v1223
        %1227 = vmatprep.subr.mxu0 0.0
        %1228 = vmatpush1.msra.mxu0 0.0
        %1229 = vmatprep.subr.mxu0 0.0
        %1230 = vmatpush1.msra.mxu0 0.0
        %1231 = vmatprep.subr.mxu0 0.0
        %1232 = vmatpush1.msra.mxu0 0.0
        %1233 = vmatprep.subr.mxu0 0.0
        %1234 = vmatpush1.msra.mxu0 0.0
        %1235 = vmatprep.subr.mxu0 0.0
        %1236 = vmatpush1.msra.mxu0 0.0
        %1237 = vmatprep.subr.mxu0 0.0
        %1238 = vmatpush1.msra.mxu0 0.0
        %1239 = vmatprep.subr.mxu0 0.0
        %1240 = vmatpush1.msra.mxu0 0.0
        %1241 = vmatprep.subr.mxu0 0.0
        %1242 = vmatpush1.msra.mxu0 0.0
        %1243 = vmatprep.subr.mxu0 0.0
        %1244 = vmatpush1.msra.mxu0 0.0
        %1245 = vmatprep.subr.mxu0 0.0
        %1246 = vmatpush1.msra.mxu0 0.0
        %1247 = vmatprep.subr.mxu0 0.0
        %1248 = vmatpush1.msra.mxu0 0.0
        %1249 = vmatprep.subr.mxu0 0.0
        %1250 = vmatpush1.msra.mxu0 0.0
        %1251 = vmatprep.subr.mxu0 0.0
        %1252 = vmatpush1.msra.mxu0 0.0
        %1253 = vmatprep.subr.mxu0 0.0
        %1254 = vmatpush1.msra.mxu0 0.0
        %1255 = vmatprep.subr.mxu0 0.0
        %1256 = vmatpush1.msra.mxu0 0.0
        %1257 = vmatprep.subr.mxu0 0.0
        %1258 = vmatpush1.msra.mxu0 0.0
        %1259 = vmatprep.subr.mxu0 0.0
        %1260 = vmatpush1.msra.mxu0 0.0
        %1261 = vmatprep.subr.mxu0 0.0
        %1262 = vmatpush1.msra.mxu0 0.0
        %1263 = vmatprep.subr.mxu0 0.0
        %1264 = vmatpush1.msra.mxu0 0.0
        %1265 = vmatprep.subr.mxu0 0.0
        %1266 = vmatpush1.msra.mxu0 0.0
        %1267 = vmatprep.subr.mxu0 0.0
        %1268 = vmatpush1.msra.mxu0 0.0
        %1269 = vmatprep.subr.mxu0 0.0
        %1270 = vmatpush1.msra.mxu0 0.0
        %1271 = vmatprep.subr.mxu0 0.0
        %1272 = vmatpush1.msra.mxu0 0.0
        %1273 = vmatprep.subr.mxu0 0.0
        %1274 = vmatpush1.msra.mxu0 0.0
        %1275 = vmatprep.subr.mxu0 0.0
        %1276 = vmatpush1.msra.mxu0 0.0
        %1277 = vmatprep.subr.mxu0 0.0
        %1278 = vmatpush1.msra.mxu0 0.0
        %1279 = vmatprep.subr.mxu0 0.0
        %1280 = vmatpush1.msra.mxu0 0.0
        %1281 = vmatprep.subr.mxu0 0.0
        %1282 = vmatpush1.msra.mxu0 0.0
        %1283 = vmatprep.subr.mxu0 0.0
        %1284 = vmatpush1.msra.mxu0 0.0
        %1285 = vmatprep.subr.mxu0 0.0
        %1286 = vmatpush1.msra.mxu0 0.0
        %1287 = vmatprep.subr.mxu0 0.0
        %1288 = vmatpush1.msra.mxu0 0.0
        %1289 = vmatprep.mubr.f32.mxu0 0.0
        %1290 = vmatmul.mubr.f32.gmra.mrb[0].mxu0 %v1127
        %v1291 = vpop.f32.mrb[0].mxu0
        %v1292 = vadd.f32 0.0, %v1291
        %v1293 = vpop.f32.mrb[0].mxu0
        %1294 = vmatprep.mubr.f32.mxu0 0.0
        %1295 = vmatmul.mubr.f32.gmra.mrb[0].mxu0 %v1130
        %v1296 = vpop.f32.mrb[0].mxu0
        %v1297 = vadd.f32 0.0, %v1296
        %v1298 = vpop.f32.mrb[0].mxu0
        %1299 = vmatprep.mubr.f32.mxu0 0.0
        %1300 = vmatmul.mubr.f32.gmra.mrb[0].mxu0 %v1133
        %v1301 = vpop.f32.mrb[0].mxu0
        %v1302 = vadd.f32 0.0, %v1301
        %v1303 = vpop.f32.mrb[0].mxu0
        %1304 = vmatprep.mubr.f32.mxu0 0.0
        %1305 = vmatmul.mubr.f32.gmra.mrb[0].mxu0 %v1136
        %v1306 = vpop.f32.mrb[0].mxu0
        %v1307 = vadd.f32 0.0, %v1306
        %v1308 = vpop.f32.mrb[0].mxu0
        %1309 = vmatprep.mubr.f32.mxu0 0.0
        %1310 = vmatmul.mubr.f32.gmra.mrb[0].mxu0 %v1139
        %v1311 = vpop.f32.mrb[0].mxu0
        %v1312 = vadd.f32 0.0, %v1311
        %v1313 = vpop.f32.mrb[0].mxu0
        %1314 = vmatprep.mubr.f32.mxu0 0.0
        %1315 = vmatmul.mubr.f32.gmra.mrb[0].mxu0 %v1142
        %v1316 = vpop.f32.mrb[0].mxu0
        %v1317 = vadd.f32 0.0, %v1316
        %v1318 = vpop.f32.mrb[0].mxu0
        %1319 = vmatprep.mubr.f32.mxu0 0.0
        %1320 = vmatmul.mubr.f32.gmra.mrb[0].mxu0 %v1145
        %v1321 = vpop.f32.mrb[0].mxu0
        %v1322 = vadd.f32 0.0, %v1321
        %v1323 = vpop.f32.mrb[0].mxu0
        %1324 = vmatprep.mubr.f32.mxu0 0.0
        %1325 = vmatmul.mubr.f32.gmra.mrb[0].mxu0 %v1148
        %v1326 = vpop.f32.mrb[0].mxu0
        %v1327 = vadd.f32 0.0, %v1326
        %v1328 = vpop.f32.mrb[0].mxu0
        %1329 = vmatprep.mubr.f32.mxu0 0.0
        %1330 = vmatmul.mubr.f32.gmra.mrb[0].mxu0 %v1151
        %v1331 = vpop.f32.mrb[0].mxu0
        %v1332 = vadd.f32 0.0, %v1331
        %v1333 = vpop.f32.mrb[0].mxu0
        %1334 = vmatprep.mubr.f32.mxu0 0.0
        %1335 = vmatmul.mubr.f32.gmra.mrb[0].mxu0 %v1154
        %v1336 = vpop.f32.mrb[0].mxu0
        %v1337 = vadd.f32 0.0, %v1336
        %v1338 = vpop.f32.mrb[0].mxu0
        %1339 = vmatprep.mubr.f32.mxu0 0.0
        %1340 = vmatmul.mubr.f32.gmra.mrb[0].mxu0 %v1157
        %v1341 = vpop.f32.mrb[0].mxu0
        %v1342 = vadd.f32 0.0, %v1341
        %v1343 = vpop.f32.mrb[0].mxu0
        %1344 = vmatprep.mubr.f32.mxu0 0.0
        %1345 = vmatmul.mubr.f32.gmra.mrb[0].mxu0 %v1160
        %v1346 = vpop.f32.mrb[0].mxu0
        %v1347 = vadd.f32 0.0, %v1346
        %v1348 = vpop.f32.mrb[0].mxu0
        %1349 = vmatprep.mubr.f32.mxu0 0.0
        %1350 = vmatmul.mubr.f32.gmra.mrb[0].mxu0 %v1163
        %v1351 = vpop.f32.mrb[0].mxu0
        %v1352 = vadd.f32 0.0, %v1351
        %v1353 = vpop.f32.mrb[0].mxu0
        %1354 = vmatprep.mubr.f32.mxu0 0.0
        %1355 = vmatmul.mubr.f32.gmra.mrb[0].mxu0 %v1166
        %v1356 = vpop.f32.mrb[0].mxu0
        %v1357 = vadd.f32 0.0, %v1356
        %v1358 = vpop.f32.mrb[0].mxu0
        %1359 = vmatprep.mubr.f32.mxu0 0.0
        %1360 = vmatmul.mubr.f32.gmra.mrb[0].mxu0 %v1169
        %v1361 = vpop.f32.mrb[0].mxu0
        %v1362 = vadd.f32 0.0, %v1361
        %v1363 = vpop.f32.mrb[0].mxu0
        %1364 = vmatprep.mubr.f32.mxu0 0.0
        %1365 = vmatmul.mubr.f32.gmra.mrb[0].mxu0 %v1172
        %v1366 = vpop.f32.mrb[0].mxu0
        %v1367 = vadd.f32 0.0, %v1366
        %v1368 = vpop.f32.mrb[0].mxu0
        %1369 = vmatprep.mubr.f32.mxu0 0.0
        %1370 = vmatmul.mubr.f32.gmra.mrb[0].mxu0 %v1175
        %v1371 = vpop.f32.mrb[0].mxu0
        %v1372 = vadd.f32 0.0, %v1371
        %v1373 = vpop.f32.mrb[0].mxu0
        %1374 = vmatprep.mubr.f32.mxu0 0.0
        %1375 = vmatmul.mubr.f32.gmra.mrb[0].mxu0 %v1178
        %v1376 = vpop.f32.mrb[0].mxu0
        %v1377 = vadd.f32 0.0, %v1376
        %v1378 = vpop.f32.mrb[0].mxu0
        %1379 = vmatprep.mubr.f32.mxu0 0.0
        %1380 = vmatmul.mubr.f32.gmra.mrb[0].mxu0 %v1181
        %v1381 = vpop.f32.mrb[0].mxu0
        %v1382 = vadd.f32 0.0, %v1381
        %v1383 = vpop.f32.mrb[0].mxu0
        %1384 = vmatprep.mubr.f32.mxu0 0.0
        %1385 = vmatmul.mubr.f32.gmra.mrb[0].mxu0 %v1184
        %v1386 = vpop.f32.mrb[0].mxu0
        %v1387 = vadd.f32 0.0, %v1386
        %v1388 = vpop.f32.mrb[0].mxu0
        %1389 = vmatprep.mubr.f32.mxu0 0.0
        %1390 = vmatmul.mubr.f32.gmra.mrb[0].mxu0 %v1187
        %v1391 = vpop.f32.mrb[0].mxu0
        %v1392 = vadd.f32 0.0, %v1391
        %v1393 = vpop.f32.mrb[0].mxu0
        %1394 = vmatprep.mubr.f32.mxu0 0.0
        %1395 = vmatmul.mubr.f32.gmra.mrb[0].mxu0 %v1190
        %v1396 = vpop.f32.mrb[0].mxu0
        %v1397 = vadd.f32 0.0, %v1396
        %v1398 = vpop.f32.mrb[0].mxu0
        %1399 = vmatprep.mubr.f32.mxu0 0.0
        %1400 = vmatmul.mubr.f32.gmra.mrb[0].mxu0 %v1193
        %v1401 = vpop.f32.mrb[0].mxu0
        %v1402 = vadd.f32 0.0, %v1401
        %v1403 = vpop.f32.mrb[0].mxu0
        %1404 = vmatprep.mubr.f32.mxu0 0.0
        %1405 = vmatmul.mubr.f32.gmra.mrb[0].mxu0 %v1196
        %v1406 = vpop.f32.mrb[0].mxu0
        %v1407 = vadd.f32 0.0, %v1406
        %v1408 = vpop.f32.mrb[0].mxu0
        %1409 = vmatprep.mubr.f32.mxu0 0.0
        %1410 = vmatmul.mubr.f32.gmra.mrb[0].mxu0 %v1199
        %v1411 = vpop.f32.mrb[0].mxu0
        %v1412 = vadd.f32 0.0, %v1411
        %v1413 = vpop.f32.mrb[0].mxu0
        %1414 = vmatprep.mubr.f32.mxu0 0.0
        %1415 = vmatmul.mubr.f32.gmra.mrb[0].mxu0 %v1202
        %v1416 = vpop.f32.mrb[0].mxu0
        %v1417 = vadd.f32 0.0, %v1416
        %v1418 = vpop.f32.mrb[0].mxu0
        %1419 = vmatprep.mubr.f32.mxu0 0.0
        %1420 = vmatmul.mubr.f32.gmra.mrb[0].mxu0 %v1205
        %v1421 = vpop.f32.mrb[0].mxu0
        %v1422 = vadd.f32 0.0, %v1421
        %v1423 = vpop.f32.mrb[0].mxu0
        %1424 = vmatprep.mubr.f32.mxu0 0.0
        %1425 = vmatmul.mubr.f32.gmra.mrb[0].mxu0 %v1208
        %v1426 = vpop.f32.mrb[0].mxu0
        %v1427 = vadd.f32 0.0, %v1426
        %v1428 = vpop.f32.mrb[0].mxu0
        %1429 = vmatprep.mubr.f32.mxu0 0.0
        %1430 = vmatmul.mubr.f32.gmra.mrb[0].mxu0 %v1211
        %v1431 = vpop.f32.mrb[0].mxu0
        %v1432 = vadd.f32 0.0, %v1431
        %v1433 = vpop.f32.mrb[0].mxu0
        %1434 = vmatprep.mubr.f32.mxu0 0.0
        %1435 = vmatmul.mubr.f32.gmra.mrb[0].mxu0 %v1214
        %v1436 = vpop.f32.mrb[0].mxu0
        %v1437 = vadd.f32 0.0, %v1436
        %v1438 = vpop.f32.mrb[0].mxu0
        %1439 = vmatprep.mubr.f32.mxu0 0.0
        %1440 = vmatmul.mubr.f32.gmra.mrb[0].mxu0 %v1217
        %v1441 = vpop.f32.mrb[0].mxu0
        %v1442 = vadd.f32 0.0, %v1441
        %v1443 = vpop.f32.mrb[0].mxu0
        %1444 = vmatprep.mubr.f32.mxu0 0.0
        %1445 = vmatmul.mubr.f32.gmra.mrb[0].mxu0 %v1220
        %v1446 = vpop.f32.mrb[0].mxu0
        %v1447 = vadd.f32 0.0, %v1446
        %v1448 = vpop.f32.mrb[0].mxu0
        %1449 = vdwg.mxu0
        %v1450 = vadd.f32 %v966, %v1292
        %v1451 = vadd.f32 %v971, %v1297
        %v1452 = vadd.f32 %v976, %v1302
        %v1453 = vadd.f32 %v981, %v1307
        %v1454 = vadd.f32 %v986, %v1312
        %v1455 = vadd.f32 %v991, %v1317
        %v1456 = vadd.f32 %v996, %v1322
        %v1457 = vadd.f32 %v1001, %v1327
        %v1458 = vadd.f32 %v1006, %v1332
        %v1459 = vadd.f32 %v1011, %v1337
        %v1460 = vadd.f32 %v1016, %v1342
        %v1461 = vadd.f32 %v1021, %v1347
        %v1462 = vadd.f32 %v1026, %v1352
        %v1463 = vadd.f32 %v1031, %v1357
        %v1464 = vadd.f32 %v1036, %v1362
        %v1465 = vadd.f32 %v1041, %v1367
        %v1466 = vadd.f32 %v1046, %v1372
        %v1467 = vadd.f32 %v1051, %v1377
        %v1468 = vadd.f32 %v1056, %v1382
        %v1469 = vadd.f32 %v1061, %v1387
        %v1470 = vadd.f32 %v1066, %v1392
        %v1471 = vadd.f32 %v1071, %v1397
        %v1472 = vadd.f32 %v1076, %v1402
        %v1473 = vadd.f32 %v1081, %v1407
        %v1474 = vadd.f32 %v1086, %v1412
        %v1475 = vadd.f32 %v1091, %v1417
        %v1476 = vadd.f32 %v1096, %v1422
        %v1477 = vadd.f32 %v1101, %v1427
        %v1478 = vadd.f32 %v1106, %v1432
        %v1479 = vadd.f32 %v1111, %v1437
        %v1480 = vadd.f32 %v1116, %v1442
        %v1481 = vadd.f32 %v1121, %v1447
        %s1482 = scalar_lea.vmem [#allocation5], 12
        %v1483 = vld [vmem:[%s1482] sm:$0xf]
        %v1485 = vsel %vm474, %v395, 0
        %v1488 = vsel %vm474, %v396, 0
        %v1491 = vsel %vm571, %v1483, 0
        %1493 = vmatprep.subr.mxu0 0.0
        %1494 = vmatpush1.msra.mxu0 %v1491
        %1495 = vmatprep.subr.mxu0 0.0
        %1496 = vmatpush1.msra.mxu0 0.0
        %1497 = vmatprep.subr.mxu0 0.0
        %1498 = vmatpush1.msra.mxu0 0.0
        %1499 = vmatprep.subr.mxu0 0.0
        %1500 = vmatpush1.msra.mxu0 0.0
        %1501 = vmatprep.subr.mxu0 0.0
        %1502 = vmatpush1.msra.mxu0 0.0
        %1503 = vmatprep.subr.mxu0 0.0
        %1504 = vmatpush1.msra.mxu0 0.0
        %1505 = vmatprep.subr.mxu0 0.0
        %1506 = vmatpush1.msra.mxu0 0.0
        %1507 = vmatprep.subr.mxu0 0.0
        %1508 = vmatpush1.msra.mxu0 0.0
        %1509 = vmatprep.subr.mxu0 0.0
        %1510 = vmatpush1.msra.mxu0 0.0
        %1511 = vmatprep.subr.mxu0 0.0
        %1512 = vmatpush1.msra.mxu0 0.0
        %1513 = vmatprep.subr.mxu0 0.0
        %1514 = vmatpush1.msra.mxu0 0.0
        %1515 = vmatprep.subr.mxu0 0.0
        %1516 = vmatpush1.msra.mxu0 0.0
        %1517 = vmatprep.subr.mxu0 0.0
        %1518 = vmatpush1.msra.mxu0 0.0
        %1519 = vmatprep.subr.mxu0 0.0
        %1520 = vmatpush1.msra.mxu0 0.0
        %1521 = vmatprep.subr.mxu0 0.0
        %1522 = vmatpush1.msra.mxu0 0.0
        %1523 = vmatprep.subr.mxu0 0.0
        %1524 = vmatpush1.msra.mxu0 0.0
        %1525 = vmatprep.subr.mxu0 0.0
        %1526 = vmatpush1.msra.mxu0 0.0
        %1527 = vmatprep.subr.mxu0 0.0
        %1528 = vmatpush1.msra.mxu0 0.0
        %1529 = vmatprep.subr.mxu0 0.0
        %1530 = vmatpush1.msra.mxu0 0.0
        %1531 = vmatprep.subr.mxu0 0.0
        %1532 = vmatpush1.msra.mxu0 0.0
        %1533 = vmatprep.subr.mxu0 0.0
        %1534 = vmatpush1.msra.mxu0 0.0
        %1535 = vmatprep.subr.mxu0 0.0
        %1536 = vmatpush1.msra.mxu0 0.0
        %1537 = vmatprep.subr.mxu0 0.0
        %1538 = vmatpush1.msra.mxu0 0.0
        %1539 = vmatprep.subr.mxu0 0.0
        %1540 = vmatpush1.msra.mxu0 0.0
        %1541 = vmatprep.subr.mxu0 0.0
        %1542 = vmatpush1.msra.mxu0 0.0
        %1543 = vmatprep.subr.mxu0 0.0
        %1544 = vmatpush1.msra.mxu0 0.0
        %1545 = vmatprep.subr.mxu0 0.0
        %1546 = vmatpush1.msra.mxu0 0.0
        %1547 = vmatprep.subr.mxu0 0.0
        %1548 = vmatpush1.msra.mxu0 0.0
        %1549 = vmatprep.subr.mxu0 0.0
        %1550 = vmatpush1.msra.mxu0 0.0
        %1551 = vmatprep.subr.mxu0 0.0
        %1552 = vmatpush1.msra.mxu0 0.0
        %1553 = vmatprep.subr.mxu0 0.0
        %1554 = vmatpush1.msra.mxu0 0.0
        %1555 = vmatprep.subr.mxu0 0.0
        %1556 = vmatpush1.msra.mxu0 0.0
        %1557 = vmatprep.mubr.f32.mxu0 0.0
        %1558 = vmatmul.mubr.f32.gmra.mrb[0].mxu0 %v807
        %v1559 = vpop.f32.mrb[0].mxu0
        %v1560 = vadd.f32 0.0, %v1559
        %v1561 = vpop.f32.mrb[0].mxu0
        %1562 = vmatprep.mubr.f32.mxu0 0.0
        %1563 = vmatmul.mubr.f32.gmra.mrb[0].mxu0 %v810
        %v1564 = vpop.f32.mrb[0].mxu0
        %v1565 = vadd.f32 0.0, %v1564
        %v1566 = vpop.f32.mrb[0].mxu0
        %1567 = vmatprep.mubr.f32.mxu0 0.0
        %1568 = vmatmul.mubr.f32.gmra.mrb[0].mxu0 %v813
        %v1569 = vpop.f32.mrb[0].mxu0
        %v1570 = vadd.f32 0.0, %v1569
        %v1571 = vpop.f32.mrb[0].mxu0
        %1572 = vmatprep.mubr.f32.mxu0 0.0
        %1573 = vmatmul.mubr.f32.gmra.mrb[0].mxu0 %v816
        %v1574 = vpop.f32.mrb[0].mxu0
        %v1575 = vadd.f32 0.0, %v1574
        %v1576 = vpop.f32.mrb[0].mxu0
        %1577 = vmatprep.mubr.f32.mxu0 0.0
        %1578 = vmatmul.mubr.f32.gmra.mrb[0].mxu0 %v819
        %v1579 = vpop.f32.mrb[0].mxu0
        %v1580 = vadd.f32 0.0, %v1579
        %v1581 = vpop.f32.mrb[0].mxu0
        %1582 = vmatprep.mubr.f32.mxu0 0.0
        %1583 = vmatmul.mubr.f32.gmra.mrb[0].mxu0 %v822
        %v1584 = vpop.f32.mrb[0].mxu0
        %v1585 = vadd.f32 0.0, %v1584
        %v1586 = vpop.f32.mrb[0].mxu0
        %1587 = vmatprep.mubr.f32.mxu0 0.0
        %1588 = vmatmul.mubr.f32.gmra.mrb[0].mxu0 %v825
        %v1589 = vpop.f32.mrb[0].mxu0
        %v1590 = vadd.f32 0.0, %v1589
        %v1591 = vpop.f32.mrb[0].mxu0
        %1592 = vmatprep.mubr.f32.mxu0 0.0
        %1593 = vmatmul.mubr.f32.gmra.mrb[0].mxu0 %v828
        %v1594 = vpop.f32.mrb[0].mxu0
        %v1595 = vadd.f32 0.0, %v1594
        %v1596 = vpop.f32.mrb[0].mxu0
        %1597 = vmatprep.mubr.f32.mxu0 0.0
        %1598 = vmatmul.mubr.f32.gmra.mrb[0].mxu0 %v831
        %v1599 = vpop.f32.mrb[0].mxu0
        %v1600 = vadd.f32 0.0, %v1599
        %v1601 = vpop.f32.mrb[0].mxu0
        %1602 = vmatprep.mubr.f32.mxu0 0.0
        %1603 = vmatmul.mubr.f32.gmra.mrb[0].mxu0 %v834
        %v1604 = vpop.f32.mrb[0].mxu0
        %v1605 = vadd.f32 0.0, %v1604
        %v1606 = vpop.f32.mrb[0].mxu0
        %1607 = vmatprep.mubr.f32.mxu0 0.0
        %1608 = vmatmul.mubr.f32.gmra.mrb[0].mxu0 %v837
        %v1609 = vpop.f32.mrb[0].mxu0
        %v1610 = vadd.f32 0.0, %v1609
        %v1611 = vpop.f32.mrb[0].mxu0
        %1612 = vmatprep.mubr.f32.mxu0 0.0
        %1613 = vmatmul.mubr.f32.gmra.mrb[0].mxu0 %v840
        %v1614 = vpop.f32.mrb[0].mxu0
        %v1615 = vadd.f32 0.0, %v1614
        %v1616 = vpop.f32.mrb[0].mxu0
        %1617 = vmatprep.mubr.f32.mxu0 0.0
        %1618 = vmatmul.mubr.f32.gmra.mrb[0].mxu0 %v843
        %v1619 = vpop.f32.mrb[0].mxu0
        %v1620 = vadd.f32 0.0, %v1619
        %v1621 = vpop.f32.mrb[0].mxu0
        %1622 = vmatprep.mubr.f32.mxu0 0.0
        %1623 = vmatmul.mubr.f32.gmra.mrb[0].mxu0 %v846
        %v1624 = vpop.f32.mrb[0].mxu0
        %v1625 = vadd.f32 0.0, %v1624
        %v1626 = vpop.f32.mrb[0].mxu0
        %1627 = vmatprep.mubr.f32.mxu0 0.0
        %1628 = vmatmul.mubr.f32.gmra.mrb[0].mxu0 %v849
        %v1629 = vpop.f32.mrb[0].mxu0
        %v1630 = vadd.f32 0.0, %v1629
        %v1631 = vpop.f32.mrb[0].mxu0
        %1632 = vmatprep.mubr.f32.mxu0 0.0
        %1633 = vmatmul.mubr.f32.gmra.mrb[0].mxu0 %v852
        %v1634 = vpop.f32.mrb[0].mxu0
        %v1635 = vadd.f32 0.0, %v1634
        %v1636 = vpop.f32.mrb[0].mxu0
        %1637 = vmatprep.mubr.f32.mxu0 0.0
        %1638 = vmatmul.mubr.f32.gmra.mrb[0].mxu0 %v855
        %v1639 = vpop.f32.mrb[0].mxu0
        %v1640 = vadd.f32 0.0, %v1639
        %v1641 = vpop.f32.mrb[0].mxu0
        %1642 = vmatprep.mubr.f32.mxu0 0.0
        %1643 = vmatmul.mubr.f32.gmra.mrb[0].mxu0 %v858
        %v1644 = vpop.f32.mrb[0].mxu0
        %v1645 = vadd.f32 0.0, %v1644
        %v1646 = vpop.f32.mrb[0].mxu0
        %1647 = vmatprep.mubr.f32.mxu0 0.0
        %1648 = vmatmul.mubr.f32.gmra.mrb[0].mxu0 %v861
        %v1649 = vpop.f32.mrb[0].mxu0
        %v1650 = vadd.f32 0.0, %v1649
        %v1651 = vpop.f32.mrb[0].mxu0
        %1652 = vmatprep.mubr.f32.mxu0 0.0
        %1653 = vmatmul.mubr.f32.gmra.mrb[0].mxu0 %v864
        %v1654 = vpop.f32.mrb[0].mxu0
        %v1655 = vadd.f32 0.0, %v1654
        %v1656 = vpop.f32.mrb[0].mxu0
        %1657 = vmatprep.mubr.f32.mxu0 0.0
        %1658 = vmatmul.mubr.f32.gmra.mrb[0].mxu0 %v867
        %v1659 = vpop.f32.mrb[0].mxu0
        %v1660 = vadd.f32 0.0, %v1659
        %v1661 = vpop.f32.mrb[0].mxu0
        %1662 = vmatprep.mubr.f32.mxu0 0.0
        %1663 = vmatmul.mubr.f32.gmra.mrb[0].mxu0 %v870
        %v1664 = vpop.f32.mrb[0].mxu0
        %v1665 = vadd.f32 0.0, %v1664
        %v1666 = vpop.f32.mrb[0].mxu0
        %1667 = vmatprep.mubr.f32.mxu0 0.0
        %1668 = vmatmul.mubr.f32.gmra.mrb[0].mxu0 %v873
        %v1669 = vpop.f32.mrb[0].mxu0
        %v1670 = vadd.f32 0.0, %v1669
        %v1671 = vpop.f32.mrb[0].mxu0
        %1672 = vmatprep.mubr.f32.mxu0 0.0
        %1673 = vmatmul.mubr.f32.gmra.mrb[0].mxu0 %v876
        %v1674 = vpop.f32.mrb[0].mxu0
        %v1675 = vadd.f32 0.0, %v1674
        %v1676 = vpop.f32.mrb[0].mxu0
        %1677 = vmatprep.mubr.f32.mxu0 0.0
        %1678 = vmatmul.mubr.f32.gmra.mrb[0].mxu0 %v879
        %v1679 = vpop.f32.mrb[0].mxu0
        %v1680 = vadd.f32 0.0, %v1679
        %v1681 = vpop.f32.mrb[0].mxu0
        %1682 = vmatprep.mubr.f32.mxu0 0.0
        %1683 = vmatmul.mubr.f32.gmra.mrb[0].mxu0 %v882
        %v1684 = vpop.f32.mrb[0].mxu0
        %v1685 = vadd.f32 0.0, %v1684
        %v1686 = vpop.f32.mrb[0].mxu0
        %1687 = vmatprep.mubr.f32.mxu0 0.0
        %1688 = vmatmul.mubr.f32.gmra.mrb[0].mxu0 %v885
        %v1689 = vpop.f32.mrb[0].mxu0
        %v1690 = vadd.f32 0.0, %v1689
        %v1691 = vpop.f32.mrb[0].mxu0
        %1692 = vmatprep.mubr.f32.mxu0 0.0
        %1693 = vmatmul.mubr.f32.gmra.mrb[0].mxu0 %v888
        %v1694 = vpop.f32.mrb[0].mxu0
        %v1695 = vadd.f32 0.0, %v1694
        %v1696 = vpop.f32.mrb[0].mxu0
        %1697 = vmatprep.mubr.f32.mxu0 0.0
        %1698 = vmatmul.mubr.f32.gmra.mrb[0].mxu0 %v891
        %v1699 = vpop.f32.mrb[0].mxu0
        %v1700 = vadd.f32 0.0, %v1699
        %v1701 = vpop.f32.mrb[0].mxu0
        %1702 = vmatprep.mubr.f32.mxu0 0.0
        %1703 = vmatmul.mubr.f32.gmra.mrb[0].mxu0 %v894
        %v1704 = vpop.f32.mrb[0].mxu0
        %v1705 = vadd.f32 0.0, %v1704
        %v1706 = vpop.f32.mrb[0].mxu0
        %1707 = vmatprep.mubr.f32.mxu0 0.0
        %1708 = vmatmul.mubr.f32.gmra.mrb[0].mxu0 %v1485
        %v1709 = vpop.f32.mrb[0].mxu0
        %v1710 = vadd.f32 0.0, %v1709
        %v1711 = vpop.f32.mrb[0].mxu0
        %1712 = vmatprep.mubr.f32.mxu0 0.0
        %1713 = vmatmul.mubr.f32.gmra.mrb[0].mxu0 %v1488
        %v1714 = vpop.f32.mrb[0].mxu0
        %v1715 = vadd.f32 0.0, %v1714
        %v1716 = vpop.f32.mrb[0].mxu0
        %1717 = vdwg.mxu0
        %v1718 = vadd.f32 %v1450, %v1560
        %v1719 = vadd.f32 %v1451, %v1565
        %v1720 = vadd.f32 %v1452, %v1570
        %v1721 = vadd.f32 %v1453, %v1575
        %v1722 = vadd.f32 %v1454, %v1580
        %v1723 = vadd.f32 %v1455, %v1585
        %v1724 = vadd.f32 %v1456, %v1590
        %v1725 = vadd.f32 %v1457, %v1595
        %v1726 = vadd.f32 %v1458, %v1600
        %v1727 = vadd.f32 %v1459, %v1605
        %v1728 = vadd.f32 %v1460, %v1610
        %v1729 = vadd.f32 %v1461, %v1615
        %v1730 = vadd.f32 %v1462, %v1620
        %v1731 = vadd.f32 %v1463, %v1625
        %v1732 = vadd.f32 %v1464, %v1630
        %v1733 = vadd.f32 %v1465, %v1635
        %v1734 = vadd.f32 %v1466, %v1640
        %v1735 = vadd.f32 %v1467, %v1645
        %v1736 = vadd.f32 %v1468, %v1650
        %v1737 = vadd.f32 %v1469, %v1655
        %v1738 = vadd.f32 %v1470, %v1660
        %v1739 = vadd.f32 %v1471, %v1665
        %v1740 = vadd.f32 %v1472, %v1670
        %v1741 = vadd.f32 %v1473, %v1675
        %v1742 = vadd.f32 %v1474, %v1680
        %v1743 = vadd.f32 %v1475, %v1685
        %v1744 = vadd.f32 %v1476, %v1690
        %v1745 = vadd.f32 %v1477, %v1695
        %v1746 = vadd.f32 %v1478, %v1700
        %v1747 = vadd.f32 %v1479, %v1705
        %v1748 = vadd.f32 %v1480, %v1710
        %v1749 = vadd.f32 %v1481, %v1715
        %s1750 = scalar_lea.vmem [#allocation5], 16
        %v1751 = vld [vmem:[%s1750] sm:$0xf]
        %v1753 = vsel %vm474, %v431, 0
        %v1756 = vsel %vm474, %v432, 0
        %v1759 = vsel %vm571, %v1751, 0
        %1761 = vmatprep.subr.mxu0 0.0
        %1762 = vmatpush1.msra.mxu0 %v1759
        %1763 = vmatprep.subr.mxu0 0.0
        %1764 = vmatpush1.msra.mxu0 0.0
        %1765 = vmatprep.subr.mxu0 0.0
        %1766 = vmatpush1.msra.mxu0 0.0
        %1767 = vmatprep.subr.mxu0 0.0
        %1768 = vmatpush1.msra.mxu0 0.0
        %1769 = vmatprep.subr.mxu0 0.0
        %1770 = vmatpush1.msra.mxu0 0.0
        %1771 = vmatprep.subr.mxu0 0.0
        %1772 = vmatpush1.msra.mxu0 0.0
        %1773 = vmatprep.subr.mxu0 0.0
        %1774 = vmatpush1.msra.mxu0 0.0
        %1775 = vmatprep.subr.mxu0 0.0
        %1776 = vmatpush1.msra.mxu0 0.0
        %1777 = vmatprep.subr.mxu0 0.0
        %1778 = vmatpush1.msra.mxu0 0.0
        %1779 = vmatprep.subr.mxu0 0.0
        %1780 = vmatpush1.msra.mxu0 0.0
        %1781 = vmatprep.subr.mxu0 0.0
        %1782 = vmatpush1.msra.mxu0 0.0
        %1783 = vmatprep.subr.mxu0 0.0
        %1784 = vmatpush1.msra.mxu0 0.0
        %1785 = vmatprep.subr.mxu0 0.0
        %1786 = vmatpush1.msra.mxu0 0.0
        %1787 = vmatprep.subr.mxu0 0.0
        %1788 = vmatpush1.msra.mxu0 0.0
        %1789 = vmatprep.subr.mxu0 0.0
        %1790 = vmatpush1.msra.mxu0 0.0
        %1791 = vmatprep.subr.mxu0 0.0
        %1792 = vmatpush1.msra.mxu0 0.0
        %1793 = vmatprep.subr.mxu0 0.0
        %1794 = vmatpush1.msra.mxu0 0.0
        %1795 = vmatprep.subr.mxu0 0.0
        %1796 = vmatpush1.msra.mxu0 0.0
        %1797 = vmatprep.subr.mxu0 0.0
        %1798 = vmatpush1.msra.mxu0 0.0
        %1799 = vmatprep.subr.mxu0 0.0
        %1800 = vmatpush1.msra.mxu0 0.0
        %1801 = vmatprep.subr.mxu0 0.0
        %1802 = vmatpush1.msra.mxu0 0.0
        %1803 = vmatprep.subr.mxu0 0.0
        %1804 = vmatpush1.msra.mxu0 0.0
        %1805 = vmatprep.subr.mxu0 0.0
        %1806 = vmatpush1.msra.mxu0 0.0
        %1807 = vmatprep.subr.mxu0 0.0
        %1808 = vmatpush1.msra.mxu0 0.0
        %1809 = vmatprep.subr.mxu0 0.0
        %1810 = vmatpush1.msra.mxu0 0.0
        %1811 = vmatprep.subr.mxu0 0.0
        %1812 = vmatpush1.msra.mxu0 0.0
        %1813 = vmatprep.subr.mxu0 0.0
        %1814 = vmatpush1.msra.mxu0 0.0
        %1815 = vmatprep.subr.mxu0 0.0
        %1816 = vmatpush1.msra.mxu0 0.0
        %1817 = vmatprep.subr.mxu0 0.0
        %1818 = vmatpush1.msra.mxu0 0.0
        %1819 = vmatprep.subr.mxu0 0.0
        %1820 = vmatpush1.msra.mxu0 0.0
        %1821 = vmatprep.subr.mxu0 0.0
        %1822 = vmatpush1.msra.mxu0 0.0
        %1823 = vmatprep.subr.mxu0 0.0
        %1824 = vmatpush1.msra.mxu0 0.0
        %1825 = vmatprep.mubr.f32.mxu0 0.0
        %1826 = vmatmul.mubr.f32.gmra.mrb[0].mxu0 %v482
        %v1827 = vpop.f32.mrb[0].mxu0
        %v1828 = vadd.f32 0.0, %v1827
        %v1829 = vpop.f32.mrb[0].mxu0
        %1830 = vmatprep.mubr.f32.mxu0 0.0
        %1831 = vmatmul.mubr.f32.gmra.mrb[0].mxu0 %v485
        %v1832 = vpop.f32.mrb[0].mxu0
        %v1833 = vadd.f32 0.0, %v1832
        %v1834 = vpop.f32.mrb[0].mxu0
        %1835 = vmatprep.mubr.f32.mxu0 0.0
        %1836 = vmatmul.mubr.f32.gmra.mrb[0].mxu0 %v488
        %v1837 = vpop.f32.mrb[0].mxu0
        %v1838 = vadd.f32 0.0, %v1837
        %v1839 = vpop.f32.mrb[0].mxu0
        %1840 = vmatprep.mubr.f32.mxu0 0.0
        %1841 = vmatmul.mubr.f32.gmra.mrb[0].mxu0 %v491
        %v1842 = vpop.f32.mrb[0].mxu0
        %v1843 = vadd.f32 0.0, %v1842
        %v1844 = vpop.f32.mrb[0].mxu0
        %1845 = vmatprep.mubr.f32.mxu0 0.0
        %1846 = vmatmul.mubr.f32.gmra.mrb[0].mxu0 %v494
        %v1847 = vpop.f32.mrb[0].mxu0
        %v1848 = vadd.f32 0.0, %v1847
        %v1849 = vpop.f32.mrb[0].mxu0
        %1850 = vmatprep.mubr.f32.mxu0 0.0
        %1851 = vmatmul.mubr.f32.gmra.mrb[0].mxu0 %v497
        %v1852 = vpop.f32.mrb[0].mxu0
        %v1853 = vadd.f32 0.0, %v1852
        %v1854 = vpop.f32.mrb[0].mxu0
        %1855 = vmatprep.mubr.f32.mxu0 0.0
        %1856 = vmatmul.mubr.f32.gmra.mrb[0].mxu0 %v500
        %v1857 = vpop.f32.mrb[0].mxu0
        %v1858 = vadd.f32 0.0, %v1857
        %v1859 = vpop.f32.mrb[0].mxu0
        %1860 = vmatprep.mubr.f32.mxu0 0.0
        %1861 = vmatmul.mubr.f32.gmra.mrb[0].mxu0 %v503
        %v1862 = vpop.f32.mrb[0].mxu0
        %v1863 = vadd.f32 0.0, %v1862
        %v1864 = vpop.f32.mrb[0].mxu0
        %1865 = vmatprep.mubr.f32.mxu0 0.0
        %1866 = vmatmul.mubr.f32.gmra.mrb[0].mxu0 %v506
        %v1867 = vpop.f32.mrb[0].mxu0
        %v1868 = vadd.f32 0.0, %v1867
        %v1869 = vpop.f32.mrb[0].mxu0
        %1870 = vmatprep.mubr.f32.mxu0 0.0
        %1871 = vmatmul.mubr.f32.gmra.mrb[0].mxu0 %v509
        %v1872 = vpop.f32.mrb[0].mxu0
        %v1873 = vadd.f32 0.0, %v1872
        %v1874 = vpop.f32.mrb[0].mxu0
        %1875 = vmatprep.mubr.f32.mxu0 0.0
        %1876 = vmatmul.mubr.f32.gmra.mrb[0].mxu0 %v512
        %v1877 = vpop.f32.mrb[0].mxu0
        %v1878 = vadd.f32 0.0, %v1877
        %v1879 = vpop.f32.mrb[0].mxu0
        %1880 = vmatprep.mubr.f32.mxu0 0.0
        %1881 = vmatmul.mubr.f32.gmra.mrb[0].mxu0 %v515
        %v1882 = vpop.f32.mrb[0].mxu0
        %v1883 = vadd.f32 0.0, %v1882
        %v1884 = vpop.f32.mrb[0].mxu0
        %1885 = vmatprep.mubr.f32.mxu0 0.0
        %1886 = vmatmul.mubr.f32.gmra.mrb[0].mxu0 %v518
        %v1887 = vpop.f32.mrb[0].mxu0
        %v1888 = vadd.f32 0.0, %v1887
        %v1889 = vpop.f32.mrb[0].mxu0
        %1890 = vmatprep.mubr.f32.mxu0 0.0
        %1891 = vmatmul.mubr.f32.gmra.mrb[0].mxu0 %v521
        %v1892 = vpop.f32.mrb[0].mxu0
        %v1893 = vadd.f32 0.0, %v1892
        %v1894 = vpop.f32.mrb[0].mxu0
        %1895 = vmatprep.mubr.f32.mxu0 0.0
        %1896 = vmatmul.mubr.f32.gmra.mrb[0].mxu0 %v524
        %v1897 = vpop.f32.mrb[0].mxu0
        %v1898 = vadd.f32 0.0, %v1897
        %v1899 = vpop.f32.mrb[0].mxu0
        %1900 = vmatprep.mubr.f32.mxu0 0.0
        %1901 = vmatmul.mubr.f32.gmra.mrb[0].mxu0 %v527
        %v1902 = vpop.f32.mrb[0].mxu0
        %v1903 = vadd.f32 0.0, %v1902
        %v1904 = vpop.f32.mrb[0].mxu0
        %1905 = vmatprep.mubr.f32.mxu0 0.0
        %1906 = vmatmul.mubr.f32.gmra.mrb[0].mxu0 %v530
        %v1907 = vpop.f32.mrb[0].mxu0
        %v1908 = vadd.f32 0.0, %v1907
        %v1909 = vpop.f32.mrb[0].mxu0
        %1910 = vmatprep.mubr.f32.mxu0 0.0
        %1911 = vmatmul.mubr.f32.gmra.mrb[0].mxu0 %v533
        %v1912 = vpop.f32.mrb[0].mxu0
        %v1913 = vadd.f32 0.0, %v1912
        %v1914 = vpop.f32.mrb[0].mxu0
        %1915 = vmatprep.mubr.f32.mxu0 0.0
        %1916 = vmatmul.mubr.f32.gmra.mrb[0].mxu0 %v536
        %v1917 = vpop.f32.mrb[0].mxu0
        %v1918 = vadd.f32 0.0, %v1917
        %v1919 = vpop.f32.mrb[0].mxu0
        %1920 = vmatprep.mubr.f32.mxu0 0.0
        %1921 = vmatmul.mubr.f32.gmra.mrb[0].mxu0 %v539
        %v1922 = vpop.f32.mrb[0].mxu0
        %v1923 = vadd.f32 0.0, %v1922
        %v1924 = vpop.f32.mrb[0].mxu0
        %1925 = vmatprep.mubr.f32.mxu0 0.0
        %1926 = vmatmul.mubr.f32.gmra.mrb[0].mxu0 %v542
        %v1927 = vpop.f32.mrb[0].mxu0
        %v1928 = vadd.f32 0.0, %v1927
        %v1929 = vpop.f32.mrb[0].mxu0
        %1930 = vmatprep.mubr.f32.mxu0 0.0
        %1931 = vmatmul.mubr.f32.gmra.mrb[0].mxu0 %v545
        %v1932 = vpop.f32.mrb[0].mxu0
        %v1933 = vadd.f32 0.0, %v1932
        %v1934 = vpop.f32.mrb[0].mxu0
        %1935 = vmatprep.mubr.f32.mxu0 0.0
        %1936 = vmatmul.mubr.f32.gmra.mrb[0].mxu0 %v548
        %v1937 = vpop.f32.mrb[0].mxu0
        %v1938 = vadd.f32 0.0, %v1937
        %v1939 = vpop.f32.mrb[0].mxu0
        %1940 = vmatprep.mubr.f32.mxu0 0.0
        %1941 = vmatmul.mubr.f32.gmra.mrb[0].mxu0 %v551
        %v1942 = vpop.f32.mrb[0].mxu0
        %v1943 = vadd.f32 0.0, %v1942
        %v1944 = vpop.f32.mrb[0].mxu0
        %1945 = vmatprep.mubr.f32.mxu0 0.0
        %1946 = vmatmul.mubr.f32.gmra.mrb[0].mxu0 %v554
        %v1947 = vpop.f32.mrb[0].mxu0
        %v1948 = vadd.f32 0.0, %v1947
        %v1949 = vpop.f32.mrb[0].mxu0
        %1950 = vmatprep.mubr.f32.mxu0 0.0
        %1951 = vmatmul.mubr.f32.gmra.mrb[0].mxu0 %v557
        %v1952 = vpop.f32.mrb[0].mxu0
        %v1953 = vadd.f32 0.0, %v1952
        %v1954 = vpop.f32.mrb[0].mxu0
        %1955 = vmatprep.mubr.f32.mxu0 0.0
        %1956 = vmatmul.mubr.f32.gmra.mrb[0].mxu0 %v560
        %v1957 = vpop.f32.mrb[0].mxu0
        %v1958 = vadd.f32 0.0, %v1957
        %v1959 = vpop.f32.mrb[0].mxu0
        %1960 = vmatprep.mubr.f32.mxu0 0.0
        %1961 = vmatmul.mubr.f32.gmra.mrb[0].mxu0 %v563
        %v1962 = vpop.f32.mrb[0].mxu0
        %v1963 = vadd.f32 0.0, %v1962
        %v1964 = vpop.f32.mrb[0].mxu0
        %1965 = vmatprep.mubr.f32.mxu0 0.0
        %1966 = vmatmul.mubr.f32.gmra.mrb[0].mxu0 %v566
        %v1967 = vpop.f32.mrb[0].mxu0
        %v1968 = vadd.f32 0.0, %v1967
        %v1969 = vpop.f32.mrb[0].mxu0
        %1970 = vmatprep.mubr.f32.mxu0 0.0
        %1971 = vmatmul.mubr.f32.gmra.mrb[0].mxu0 %v569
        %v1972 = vpop.f32.mrb[0].mxu0
        %v1973 = vadd.f32 0.0, %v1972
        %v1974 = vpop.f32.mrb[0].mxu0
        %1975 = vmatprep.mubr.f32.mxu0 0.0
        %1976 = vmatmul.mubr.f32.gmra.mrb[0].mxu0 %v1753
        %v1977 = vpop.f32.mrb[0].mxu0
        %v1978 = vadd.f32 0.0, %v1977
        %v1979 = vpop.f32.mrb[0].mxu0
        %1980 = vmatprep.mubr.f32.mxu0 0.0
        %1981 = vmatmul.mubr.f32.gmra.mrb[0].mxu0 %v1756
        %v1982 = vpop.f32.mrb[0].mxu0
        %v1983 = vadd.f32 0.0, %v1982
        %v1984 = vpop.f32.mrb[0].mxu0
        %1985 = vdwg.mxu0
        %v1986 = vadd.f32 %v1718, %v1828
        %v1987 = vadd.f32 %v1719, %v1833
        %v1988 = vadd.f32 %v1720, %v1838
        %v1989 = vadd.f32 %v1721, %v1843
        %v1990 = vadd.f32 %v1722, %v1848
        %v1991 = vadd.f32 %v1723, %v1853
        %v1992 = vadd.f32 %v1724, %v1858
        %v1993 = vadd.f32 %v1725, %v1863
        %v1994 = vadd.f32 %v1726, %v1868
        %v1995 = vadd.f32 %v1727, %v1873
        %v1996 = vadd.f32 %v1728, %v1878
        %v1997 = vadd.f32 %v1729, %v1883
        %v1998 = vadd.f32 %v1730, %v1888
        %v1999 = vadd.f32 %v1731, %v1893
        %v2000 = vadd.f32 %v1732, %v1898
        %v2001 = vadd.f32 %v1733, %v1903
        %v2002 = vadd.f32 %v1734, %v1908
        %v2003 = vadd.f32 %v1735, %v1913
        %v2004 = vadd.f32 %v1736, %v1918
        %v2005 = vadd.f32 %v1737, %v1923
        %v2006 = vadd.f32 %v1738, %v1928
        %v2007 = vadd.f32 %v1739, %v1933
        %v2008 = vadd.f32 %v1740, %v1938
        %v2009 = vadd.f32 %v1741, %v1943
        %v2010 = vadd.f32 %v1742, %v1948
        %v2011 = vadd.f32 %v1743, %v1953
        %v2012 = vadd.f32 %v1744, %v1958
        %v2013 = vadd.f32 %v1745, %v1963
        %v2014 = vadd.f32 %v1746, %v1968
        %v2015 = vadd.f32 %v1747, %v1973
        %v2016 = vadd.f32 %v1748, %v1978
        %v2017 = vadd.f32 %v1749, %v1983
        %s2018 = scalar_lea.vmem [#allocation5], 20
        %v2019 = vld [vmem:[%s2018] sm:$0xf]
        %v2021 = vsel %vm474, %v467, 0
        %v2024 = vsel %vm474, %v468, 0
        %v2027 = vsel %vm571, %v2019, 0
        %2029 = vmatprep.subr.mxu0 0.0
        %2030 = vmatpush1.msra.mxu0 %v2027
        %2031 = vmatprep.subr.mxu0 0.0
        %2032 = vmatpush1.msra.mxu0 0.0
        %2033 = vmatprep.subr.mxu0 0.0
        %2034 = vmatpush1.msra.mxu0 0.0
        %2035 = vmatprep.subr.mxu0 0.0
        %2036 = vmatpush1.msra.mxu0 0.0
        %2037 = vmatprep.subr.mxu0 0.0
        %2038 = vmatpush1.msra.mxu0 0.0
        %2039 = vmatprep.subr.mxu0 0.0
        %2040 = vmatpush1.msra.mxu0 0.0
        %2041 = vmatprep.subr.mxu0 0.0
        %2042 = vmatpush1.msra.mxu0 0.0
        %2043 = vmatprep.subr.mxu0 0.0
        %2044 = vmatpush1.msra.mxu0 0.0
        %2045 = vmatprep.subr.mxu0 0.0
        %2046 = vmatpush1.msra.mxu0 0.0
        %2047 = vmatprep.subr.mxu0 0.0
        %2048 = vmatpush1.msra.mxu0 0.0
        %2049 = vmatprep.subr.mxu0 0.0
        %2050 = vmatpush1.msra.mxu0 0.0
        %2051 = vmatprep.subr.mxu0 0.0
        %2052 = vmatpush1.msra.mxu0 0.0
        %2053 = vmatprep.subr.mxu0 0.0
        %2054 = vmatpush1.msra.mxu0 0.0
        %2055 = vmatprep.subr.mxu0 0.0
        %2056 = vmatpush1.msra.mxu0 0.0
        %2057 = vmatprep.subr.mxu0 0.0
        %2058 = vmatpush1.msra.mxu0 0.0
        %2059 = vmatprep.subr.mxu0 0.0
        %2060 = vmatpush1.msra.mxu0 0.0
        %2061 = vmatprep.subr.mxu0 0.0
        %2062 = vmatpush1.msra.mxu0 0.0
        %2063 = vmatprep.subr.mxu0 0.0
        %2064 = vmatpush1.msra.mxu0 0.0
        %2065 = vmatprep.subr.mxu0 0.0
        %2066 = vmatpush1.msra.mxu0 0.0
        %2067 = vmatprep.subr.mxu0 0.0
        %2068 = vmatpush1.msra.mxu0 0.0
        %2069 = vmatprep.subr.mxu0 0.0
        %2070 = vmatpush1.msra.mxu0 0.0
        %2071 = vmatprep.subr.mxu0 0.0
        %2072 = vmatpush1.msra.mxu0 0.0
        %2073 = vmatprep.subr.mxu0 0.0
        %2074 = vmatpush1.msra.mxu0 0.0
        %2075 = vmatprep.subr.mxu0 0.0
        %2076 = vmatpush1.msra.mxu0 0.0
        %2077 = vmatprep.subr.mxu0 0.0
        %2078 = vmatpush1.msra.mxu0 0.0
        %2079 = vmatprep.subr.mxu0 0.0
        %2080 = vmatpush1.msra.mxu0 0.0
        %2081 = vmatprep.subr.mxu0 0.0
        %2082 = vmatpush1.msra.mxu0 0.0
        %2083 = vmatprep.subr.mxu0 0.0
        %2084 = vmatpush1.msra.mxu0 0.0
        %2085 = vmatprep.subr.mxu0 0.0
        %2086 = vmatpush1.msra.mxu0 0.0
        %2087 = vmatprep.subr.mxu0 0.0
        %2088 = vmatpush1.msra.mxu0 0.0
        %2089 = vmatprep.subr.mxu0 0.0
        %2090 = vmatpush1.msra.mxu0 0.0
        %2091 = vmatprep.subr.mxu0 0.0
        %2092 = vmatpush1.msra.mxu0 0.0
        %2093 = vmatprep.mubr.f32.mxu0 0.0
        %2094 = vmatmul.mubr.f32.gmra.mrb[0].mxu0 %v1133
        %v2095 = vpop.f32.mrb[0].mxu0
        %v2096 = vadd.f32 0.0, %v2095
        %v2097 = vpop.f32.mrb[0].mxu0
        %2098 = vmatprep.mubr.f32.mxu0 0.0
        %2099 = vmatmul.mubr.f32.gmra.mrb[0].mxu0 %v1136
        %v2100 = vpop.f32.mrb[0].mxu0
        %v2101 = vadd.f32 0.0, %v2100
        %v2102 = vpop.f32.mrb[0].mxu0
        %2103 = vmatprep.mubr.f32.mxu0 0.0
        %2104 = vmatmul.mubr.f32.gmra.mrb[0].mxu0 %v1139
        %v2105 = vpop.f32.mrb[0].mxu0
        %v2106 = vadd.f32 0.0, %v2105
        %v2107 = vpop.f32.mrb[0].mxu0
        %2108 = vmatprep.mubr.f32.mxu0 0.0
        %2109 = vmatmul.mubr.f32.gmra.mrb[0].mxu0 %v1142
        %v2110 = vpop.f32.mrb[0].mxu0
        %v2111 = vadd.f32 0.0, %v2110
        %v2112 = vpop.f32.mrb[0].mxu0
        %2113 = vmatprep.mubr.f32.mxu0 0.0
        %2114 = vmatmul.mubr.f32.gmra.mrb[0].mxu0 %v1145
        %v2115 = vpop.f32.mrb[0].mxu0
        %v2116 = vadd.f32 0.0, %v2115
        %v2117 = vpop.f32.mrb[0].mxu0
        %2118 = vmatprep.mubr.f32.mxu0 0.0
        %2119 = vmatmul.mubr.f32.gmra.mrb[0].mxu0 %v1148
        %v2120 = vpop.f32.mrb[0].mxu0
        %v2121 = vadd.f32 0.0, %v2120
        %v2122 = vpop.f32.mrb[0].mxu0
        %2123 = vmatprep.mubr.f32.mxu0 0.0
        %2124 = vmatmul.mubr.f32.gmra.mrb[0].mxu0 %v1151
        %v2125 = vpop.f32.mrb[0].mxu0
        %v2126 = vadd.f32 0.0, %v2125
        %v2127 = vpop.f32.mrb[0].mxu0
        %2128 = vmatprep.mubr.f32.mxu0 0.0
        %2129 = vmatmul.mubr.f32.gmra.mrb[0].mxu0 %v1154
        %v2130 = vpop.f32.mrb[0].mxu0
        %v2131 = vadd.f32 0.0, %v2130
        %v2132 = vpop.f32.mrb[0].mxu0
        %2133 = vmatprep.mubr.f32.mxu0 0.0
        %2134 = vmatmul.mubr.f32.gmra.mrb[0].mxu0 %v1157
        %v2135 = vpop.f32.mrb[0].mxu0
        %v2136 = vadd.f32 0.0, %v2135
        %v2137 = vpop.f32.mrb[0].mxu0
        %2138 = vmatprep.mubr.f32.mxu0 0.0
        %2139 = vmatmul.mubr.f32.gmra.mrb[0].mxu0 %v1160
        %v2140 = vpop.f32.mrb[0].mxu0
        %v2141 = vadd.f32 0.0, %v2140
        %v2142 = vpop.f32.mrb[0].mxu0
        %2143 = vmatprep.mubr.f32.mxu0 0.0
        %2144 = vmatmul.mubr.f32.gmra.mrb[0].mxu0 %v1163
        %v2145 = vpop.f32.mrb[0].mxu0
        %v2146 = vadd.f32 0.0, %v2145
        %v2147 = vpop.f32.mrb[0].mxu0
        %2148 = vmatprep.mubr.f32.mxu0 0.0
        %2149 = vmatmul.mubr.f32.gmra.mrb[0].mxu0 %v1166
        %v2150 = vpop.f32.mrb[0].mxu0
        %v2151 = vadd.f32 0.0, %v2150
        %v2152 = vpop.f32.mrb[0].mxu0
        %2153 = vmatprep.mubr.f32.mxu0 0.0
        %2154 = vmatmul.mubr.f32.gmra.mrb[0].mxu0 %v1169
        %v2155 = vpop.f32.mrb[0].mxu0
        %v2156 = vadd.f32 0.0, %v2155
        %v2157 = vpop.f32.mrb[0].mxu0
        %2158 = vmatprep.mubr.f32.mxu0 0.0
        %2159 = vmatmul.mubr.f32.gmra.mrb[0].mxu0 %v1172
        %v2160 = vpop.f32.mrb[0].mxu0
        %v2161 = vadd.f32 0.0, %v2160
        %v2162 = vpop.f32.mrb[0].mxu0
        %2163 = vmatprep.mubr.f32.mxu0 0.0
        %2164 = vmatmul.mubr.f32.gmra.mrb[0].mxu0 %v1175
        %v2165 = vpop.f32.mrb[0].mxu0
        %v2166 = vadd.f32 0.0, %v2165
        %v2167 = vpop.f32.mrb[0].mxu0
        %2168 = vmatprep.mubr.f32.mxu0 0.0
        %2169 = vmatmul.mubr.f32.gmra.mrb[0].mxu0 %v1178
        %v2170 = vpop.f32.mrb[0].mxu0
        %v2171 = vadd.f32 0.0, %v2170
        %v2172 = vpop.f32.mrb[0].mxu0
        %2173 = vmatprep.mubr.f32.mxu0 0.0
        %2174 = vmatmul.mubr.f32.gmra.mrb[0].mxu0 %v1181
        %v2175 = vpop.f32.mrb[0].mxu0
        %v2176 = vadd.f32 0.0, %v2175
        %v2177 = vpop.f32.mrb[0].mxu0
        %2178 = vmatprep.mubr.f32.mxu0 0.0
        %2179 = vmatmul.mubr.f32.gmra.mrb[0].mxu0 %v1184
        %v2180 = vpop.f32.mrb[0].mxu0
        %v2181 = vadd.f32 0.0, %v2180
        %v2182 = vpop.f32.mrb[0].mxu0
        %2183 = vmatprep.mubr.f32.mxu0 0.0
        %2184 = vmatmul.mubr.f32.gmra.mrb[0].mxu0 %v1187
        %v2185 = vpop.f32.mrb[0].mxu0
        %v2186 = vadd.f32 0.0, %v2185
        %v2187 = vpop.f32.mrb[0].mxu0
        %2188 = vmatprep.mubr.f32.mxu0 0.0
        %2189 = vmatmul.mubr.f32.gmra.mrb[0].mxu0 %v1190
        %v2190 = vpop.f32.mrb[0].mxu0
        %v2191 = vadd.f32 0.0, %v2190
        %v2192 = vpop.f32.mrb[0].mxu0
        %2193 = vmatprep.mubr.f32.mxu0 0.0
        %2194 = vmatmul.mubr.f32.gmra.mrb[0].mxu0 %v1193
        %v2195 = vpop.f32.mrb[0].mxu0
        %v2196 = vadd.f32 0.0, %v2195
        %v2197 = vpop.f32.mrb[0].mxu0
        %2198 = vmatprep.mubr.f32.mxu0 0.0
        %2199 = vmatmul.mubr.f32.gmra.mrb[0].mxu0 %v1196
        %v2200 = vpop.f32.mrb[0].mxu0
        %v2201 = vadd.f32 0.0, %v2200
        %v2202 = vpop.f32.mrb[0].mxu0
        %2203 = vmatprep.mubr.f32.mxu0 0.0
        %2204 = vmatmul.mubr.f32.gmra.mrb[0].mxu0 %v1199
        %v2205 = vpop.f32.mrb[0].mxu0
        %v2206 = vadd.f32 0.0, %v2205
        %v2207 = vpop.f32.mrb[0].mxu0
        %2208 = vmatprep.mubr.f32.mxu0 0.0
        %2209 = vmatmul.mubr.f32.gmra.mrb[0].mxu0 %v1202
        %v2210 = vpop.f32.mrb[0].mxu0
        %v2211 = vadd.f32 0.0, %v2210
        %v2212 = vpop.f32.mrb[0].mxu0
        %2213 = vmatprep.mubr.f32.mxu0 0.0
        %2214 = vmatmul.mubr.f32.gmra.mrb[0].mxu0 %v1205
        %v2215 = vpop.f32.mrb[0].mxu0
        %v2216 = vadd.f32 0.0, %v2215
        %v2217 = vpop.f32.mrb[0].mxu0
        %2218 = vmatprep.mubr.f32.mxu0 0.0
        %2219 = vmatmul.mubr.f32.gmra.mrb[0].mxu0 %v1208
        %v2220 = vpop.f32.mrb[0].mxu0
        %v2221 = vadd.f32 0.0, %v2220
        %v2222 = vpop.f32.mrb[0].mxu0
        %2223 = vmatprep.mubr.f32.mxu0 0.0
        %2224 = vmatmul.mubr.f32.gmra.mrb[0].mxu0 %v1211
        %v2225 = vpop.f32.mrb[0].mxu0
        %v2226 = vadd.f32 0.0, %v2225
        %v2227 = vpop.f32.mrb[0].mxu0
        %2228 = vmatprep.mubr.f32.mxu0 0.0
        %2229 = vmatmul.mubr.f32.gmra.mrb[0].mxu0 %v1214
        %v2230 = vpop.f32.mrb[0].mxu0
        %v2231 = vadd.f32 0.0, %v2230
        %v2232 = vpop.f32.mrb[0].mxu0
        %2233 = vmatprep.mubr.f32.mxu0 0.0
        %2234 = vmatmul.mubr.f32.gmra.mrb[0].mxu0 %v1217
        %v2235 = vpop.f32.mrb[0].mxu0
        %v2236 = vadd.f32 0.0, %v2235
        %v2237 = vpop.f32.mrb[0].mxu0
        %2238 = vmatprep.mubr.f32.mxu0 0.0
        %2239 = vmatmul.mubr.f32.gmra.mrb[0].mxu0 %v1220
        %v2240 = vpop.f32.mrb[0].mxu0
        %v2241 = vadd.f32 0.0, %v2240
        %v2242 = vpop.f32.mrb[0].mxu0
        %2243 = vmatprep.mubr.f32.mxu0 0.0
        %2244 = vmatmul.mubr.f32.gmra.mrb[0].mxu0 %v2021
        %v2245 = vpop.f32.mrb[0].mxu0
        %v2246 = vadd.f32 0.0, %v2245
        %v2247 = vpop.f32.mrb[0].mxu0
        %2248 = vmatprep.mubr.f32.mxu0 0.0
        %2249 = vmatmul.mubr.f32.gmra.mrb[0].mxu0 %v2024
        %v2250 = vpop.f32.mrb[0].mxu0
        %v2251 = vadd.f32 0.0, %v2250
        %v2252 = vpop.f32.mrb[0].mxu0
        %2253 = vdwg.mxu0
        %v2254 = vadd.f32 %v1986, %v2096
        %v2255 = vadd.f32 %v1987, %v2101
        %v2256 = vadd.f32 %v1988, %v2106
        %v2257 = vadd.f32 %v1989, %v2111
        %v2258 = vadd.f32 %v1990, %v2116
        %v2259 = vadd.f32 %v1991, %v2121
        %v2260 = vadd.f32 %v1992, %v2126
        %v2261 = vadd.f32 %v1993, %v2131
        %v2262 = vadd.f32 %v1994, %v2136
        %v2263 = vadd.f32 %v1995, %v2141
        %v2264 = vadd.f32 %v1996, %v2146
        %v2265 = vadd.f32 %v1997, %v2151
        %v2266 = vadd.f32 %v1998, %v2156
        %v2267 = vadd.f32 %v1999, %v2161
        %v2268 = vadd.f32 %v2000, %v2166
        %v2269 = vadd.f32 %v2001, %v2171
        %v2270 = vadd.f32 %v2002, %v2176
        %v2271 = vadd.f32 %v2003, %v2181
        %v2272 = vadd.f32 %v2004, %v2186
        %v2273 = vadd.f32 %v2005, %v2191
        %v2274 = vadd.f32 %v2006, %v2196
        %v2275 = vadd.f32 %v2007, %v2201
        %v2276 = vadd.f32 %v2008, %v2206
        %v2277 = vadd.f32 %v2009, %v2211
        %v2278 = vadd.f32 %v2010, %v2216
        %v2279 = vadd.f32 %v2011, %v2221
        %v2280 = vadd.f32 %v2012, %v2226
        %v2281 = vadd.f32 %v2013, %v2231
        %v2282 = vadd.f32 %v2014, %v2236
        %v2283 = vadd.f32 %v2015, %v2241
        %v2284 = vadd.f32 %v2016, %v2246
        %v2285 = vadd.f32 %v2017, %v2251
        %s2286 = scalar_lea.vmem [#allocation5], 24
        %v2287 = vld [vmem:[%s2286] sm:$0xf]
        %v2289 = vsel %vm474, %v397, 0
        %v2292 = vsel %vm474, %v398, 0
        %v2295 = vsel %vm571, %v2287, 0
        %2297 = vmatprep.subr.mxu0 0.0
        %2298 = vmatpush1.msra.mxu0 %v2295
        %2299 = vmatprep.subr.mxu0 0.0
        %2300 = vmatpush1.msra.mxu0 0.0
        %2301 = vmatprep.subr.mxu0 0.0
        %2302 = vmatpush1.msra.mxu0 0.0
        %2303 = vmatprep.subr.mxu0 0.0
        %2304 = vmatpush1.msra.mxu0 0.0
        %2305 = vmatprep.subr.mxu0 0.0
        %2306 = vmatpush1.msra.mxu0 0.0
        %2307 = vmatprep.subr.mxu0 0.0
        %2308 = vmatpush1.msra.mxu0 0.0
        %2309 = vmatprep.subr.mxu0 0.0
        %2310 = vmatpush1.msra.mxu0 0.0
        %2311 = vmatprep.subr.mxu0 0.0
        %2312 = vmatpush1.msra.mxu0 0.0
        %2313 = vmatprep.subr.mxu0 0.0
        %2314 = vmatpush1.msra.mxu0 0.0
        %2315 = vmatprep.subr.mxu0 0.0
        %2316 = vmatpush1.msra.mxu0 0.0
        %2317 = vmatprep.subr.mxu0 0.0
        %2318 = vmatpush1.msra.mxu0 0.0
        %2319 = vmatprep.subr.mxu0 0.0
        %2320 = vmatpush1.msra.mxu0 0.0
        %2321 = vmatprep.subr.mxu0 0.0
        %2322 = vmatpush1.msra.mxu0 0.0
        %2323 = vmatprep.subr.mxu0 0.0
        %2324 = vmatpush1.msra.mxu0 0.0
        %2325 = vmatprep.subr.mxu0 0.0
        %2326 = vmatpush1.msra.mxu0 0.0
        %2327 = vmatprep.subr.mxu0 0.0
        %2328 = vmatpush1.msra.mxu0 0.0
        %2329 = vmatprep.subr.mxu0 0.0
        %2330 = vmatpush1.msra.mxu0 0.0
        %2331 = vmatprep.subr.mxu0 0.0
        %2332 = vmatpush1.msra.mxu0 0.0
        %2333 = vmatprep.subr.mxu0 0.0
        %2334 = vmatpush1.msra.mxu0 0.0
        %2335 = vmatprep.subr.mxu0 0.0
        %2336 = vmatpush1.msra.mxu0 0.0
        %2337 = vmatprep.subr.mxu0 0.0
        %2338 = vmatpush1.msra.mxu0 0.0
        %2339 = vmatprep.subr.mxu0 0.0
        %2340 = vmatpush1.msra.mxu0 0.0
        %2341 = vmatprep.subr.mxu0 0.0
        %2342 = vmatpush1.msra.mxu0 0.0
        %2343 = vmatprep.subr.mxu0 0.0
        %2344 = vmatpush1.msra.mxu0 0.0
        %2345 = vmatprep.subr.mxu0 0.0
        %2346 = vmatpush1.msra.mxu0 0.0
        %2347 = vmatprep.subr.mxu0 0.0
        %2348 = vmatpush1.msra.mxu0 0.0
        %2349 = vmatprep.subr.mxu0 0.0
        %2350 = vmatpush1.msra.mxu0 0.0
        %2351 = vmatprep.subr.mxu0 0.0
        %2352 = vmatpush1.msra.mxu0 0.0
        %2353 = vmatprep.subr.mxu0 0.0
        %2354 = vmatpush1.msra.mxu0 0.0
        %2355 = vmatprep.subr.mxu0 0.0
        %2356 = vmatpush1.msra.mxu0 0.0
        %2357 = vmatprep.subr.mxu0 0.0
        %2358 = vmatpush1.msra.mxu0 0.0
        %2359 = vmatprep.subr.mxu0 0.0
        %2360 = vmatpush1.msra.mxu0 0.0
        %2361 = vmatprep.mubr.f32.mxu0 0.0
        %2362 = vmatmul.mubr.f32.gmra.mrb[0].mxu0 %v813
        %v2363 = vpop.f32.mrb[0].mxu0
        %v2364 = vadd.f32 0.0, %v2363
        %v2365 = vpop.f32.mrb[0].mxu0
        %2366 = vmatprep.mubr.f32.mxu0 0.0
        %2367 = vmatmul.mubr.f32.gmra.mrb[0].mxu0 %v816
        %v2368 = vpop.f32.mrb[0].mxu0
        %v2369 = vadd.f32 0.0, %v2368
        %v2370 = vpop.f32.mrb[0].mxu0
        %2371 = vmatprep.mubr.f32.mxu0 0.0
        %2372 = vmatmul.mubr.f32.gmra.mrb[0].mxu0 %v819
        %v2373 = vpop.f32.mrb[0].mxu0
        %v2374 = vadd.f32 0.0, %v2373
        %v2375 = vpop.f32.mrb[0].mxu0
        %2376 = vmatprep.mubr.f32.mxu0 0.0
        %2377 = vmatmul.mubr.f32.gmra.mrb[0].mxu0 %v822
        %v2378 = vpop.f32.mrb[0].mxu0
        %v2379 = vadd.f32 0.0, %v2378
        %v2380 = vpop.f32.mrb[0].mxu0
        %2381 = vmatprep.mubr.f32.mxu0 0.0
        %2382 = vmatmul.mubr.f32.gmra.mrb[0].mxu0 %v825
        %v2383 = vpop.f32.mrb[0].mxu0
        %v2384 = vadd.f32 0.0, %v2383
        %v2385 = vpop.f32.mrb[0].mxu0
        %2386 = vmatprep.mubr.f32.mxu0 0.0
        %2387 = vmatmul.mubr.f32.gmra.mrb[0].mxu0 %v828
        %v2388 = vpop.f32.mrb[0].mxu0
        %v2389 = vadd.f32 0.0, %v2388
        %v2390 = vpop.f32.mrb[0].mxu0
        %2391 = vmatprep.mubr.f32.mxu0 0.0
        %2392 = vmatmul.mubr.f32.gmra.mrb[0].mxu0 %v831
        %v2393 = vpop.f32.mrb[0].mxu0
        %v2394 = vadd.f32 0.0, %v2393
        %v2395 = vpop.f32.mrb[0].mxu0
        %2396 = vmatprep.mubr.f32.mxu0 0.0
        %2397 = vmatmul.mubr.f32.gmra.mrb[0].mxu0 %v834
        %v2398 = vpop.f32.mrb[0].mxu0
        %v2399 = vadd.f32 0.0, %v2398
        %v2400 = vpop.f32.mrb[0].mxu0
        %2401 = vmatprep.mubr.f32.mxu0 0.0
        %2402 = vmatmul.mubr.f32.gmra.mrb[0].mxu0 %v837
        %v2403 = vpop.f32.mrb[0].mxu0
        %v2404 = vadd.f32 0.0, %v2403
        %v2405 = vpop.f32.mrb[0].mxu0
        %2406 = vmatprep.mubr.f32.mxu0 0.0
        %2407 = vmatmul.mubr.f32.gmra.mrb[0].mxu0 %v840
        %v2408 = vpop.f32.mrb[0].mxu0
        %v2409 = vadd.f32 0.0, %v2408
        %v2410 = vpop.f32.mrb[0].mxu0
        %2411 = vmatprep.mubr.f32.mxu0 0.0
        %2412 = vmatmul.mubr.f32.gmra.mrb[0].mxu0 %v843
        %v2413 = vpop.f32.mrb[0].mxu0
        %v2414 = vadd.f32 0.0, %v2413
        %v2415 = vpop.f32.mrb[0].mxu0
        %2416 = vmatprep.mubr.f32.mxu0 0.0
        %2417 = vmatmul.mubr.f32.gmra.mrb[0].mxu0 %v846
        %v2418 = vpop.f32.mrb[0].mxu0
        %v2419 = vadd.f32 0.0, %v2418
        %v2420 = vpop.f32.mrb[0].mxu0
        %2421 = vmatprep.mubr.f32.mxu0 0.0
        %2422 = vmatmul.mubr.f32.gmra.mrb[0].mxu0 %v849
        %v2423 = vpop.f32.mrb[0].mxu0
        %v2424 = vadd.f32 0.0, %v2423
        %v2425 = vpop.f32.mrb[0].mxu0
        %2426 = vmatprep.mubr.f32.mxu0 0.0
        %2427 = vmatmul.mubr.f32.gmra.mrb[0].mxu0 %v852
        %v2428 = vpop.f32.mrb[0].mxu0
        %v2429 = vadd.f32 0.0, %v2428
        %v2430 = vpop.f32.mrb[0].mxu0
        %2431 = vmatprep.mubr.f32.mxu0 0.0
        %2432 = vmatmul.mubr.f32.gmra.mrb[0].mxu0 %v855
        %v2433 = vpop.f32.mrb[0].mxu0
        %v2434 = vadd.f32 0.0, %v2433
        %v2435 = vpop.f32.mrb[0].mxu0
        %2436 = vmatprep.mubr.f32.mxu0 0.0
        %2437 = vmatmul.mubr.f32.gmra.mrb[0].mxu0 %v858
        %v2438 = vpop.f32.mrb[0].mxu0
        %v2439 = vadd.f32 0.0, %v2438
        %v2440 = vpop.f32.mrb[0].mxu0
        %2441 = vmatprep.mubr.f32.mxu0 0.0
        %2442 = vmatmul.mubr.f32.gmra.mrb[0].mxu0 %v861
        %v2443 = vpop.f32.mrb[0].mxu0
        %v2444 = vadd.f32 0.0, %v2443
        %v2445 = vpop.f32.mrb[0].mxu0
        %2446 = vmatprep.mubr.f32.mxu0 0.0
        %2447 = vmatmul.mubr.f32.gmra.mrb[0].mxu0 %v864
        %v2448 = vpop.f32.mrb[0].mxu0
        %v2449 = vadd.f32 0.0, %v2448
        %v2450 = vpop.f32.mrb[0].mxu0
        %2451 = vmatprep.mubr.f32.mxu0 0.0
        %2452 = vmatmul.mubr.f32.gmra.mrb[0].mxu0 %v867
        %v2453 = vpop.f32.mrb[0].mxu0
        %v2454 = vadd.f32 0.0, %v2453
        %v2455 = vpop.f32.mrb[0].mxu0
        %2456 = vmatprep.mubr.f32.mxu0 0.0
        %2457 = vmatmul.mubr.f32.gmra.mrb[0].mxu0 %v870
        %v2458 = vpop.f32.mrb[0].mxu0
        %v2459 = vadd.f32 0.0, %v2458
        %v2460 = vpop.f32.mrb[0].mxu0
        %2461 = vmatprep.mubr.f32.mxu0 0.0
        %2462 = vmatmul.mubr.f32.gmra.mrb[0].mxu0 %v873
        %v2463 = vpop.f32.mrb[0].mxu0
        %v2464 = vadd.f32 0.0, %v2463
        %v2465 = vpop.f32.mrb[0].mxu0
        %2466 = vmatprep.mubr.f32.mxu0 0.0
        %2467 = vmatmul.mubr.f32.gmra.mrb[0].mxu0 %v876
        %v2468 = vpop.f32.mrb[0].mxu0
        %v2469 = vadd.f32 0.0, %v2468
        %v2470 = vpop.f32.mrb[0].mxu0
        %2471 = vmatprep.mubr.f32.mxu0 0.0
        %2472 = vmatmul.mubr.f32.gmra.mrb[0].mxu0 %v879
        %v2473 = vpop.f32.mrb[0].mxu0
        %v2474 = vadd.f32 0.0, %v2473
        %v2475 = vpop.f32.mrb[0].mxu0
        %2476 = vmatprep.mubr.f32.mxu0 0.0
        %2477 = vmatmul.mubr.f32.gmra.mrb[0].mxu0 %v882
        %v2478 = vpop.f32.mrb[0].mxu0
        %v2479 = vadd.f32 0.0, %v2478
        %v2480 = vpop.f32.mrb[0].mxu0
        %2481 = vmatprep.mubr.f32.mxu0 0.0
        %2482 = vmatmul.mubr.f32.gmra.mrb[0].mxu0 %v885
        %v2483 = vpop.f32.mrb[0].mxu0
        %v2484 = vadd.f32 0.0, %v2483
        %v2485 = vpop.f32.mrb[0].mxu0
        %2486 = vmatprep.mubr.f32.mxu0 0.0
        %2487 = vmatmul.mubr.f32.gmra.mrb[0].mxu0 %v888
        %v2488 = vpop.f32.mrb[0].mxu0
        %v2489 = vadd.f32 0.0, %v2488
        %v2490 = vpop.f32.mrb[0].mxu0
        %2491 = vmatprep.mubr.f32.mxu0 0.0
        %2492 = vmatmul.mubr.f32.gmra.mrb[0].mxu0 %v891
        %v2493 = vpop.f32.mrb[0].mxu0
        %v2494 = vadd.f32 0.0, %v2493
        %v2495 = vpop.f32.mrb[0].mxu0
        %2496 = vmatprep.mubr.f32.mxu0 0.0
        %2497 = vmatmul.mubr.f32.gmra.mrb[0].mxu0 %v894
        %v2498 = vpop.f32.mrb[0].mxu0
        %v2499 = vadd.f32 0.0, %v2498
        %v2500 = vpop.f32.mrb[0].mxu0
        %2501 = vmatprep.mubr.f32.mxu0 0.0
        %2502 = vmatmul.mubr.f32.gmra.mrb[0].mxu0 %v1485
        %v2503 = vpop.f32.mrb[0].mxu0
        %v2504 = vadd.f32 0.0, %v2503
        %v2505 = vpop.f32.mrb[0].mxu0
        %2506 = vmatprep.mubr.f32.mxu0 0.0
        %2507 = vmatmul.mubr.f32.gmra.mrb[0].mxu0 %v1488
        %v2508 = vpop.f32.mrb[0].mxu0
        %v2509 = vadd.f32 0.0, %v2508
        %v2510 = vpop.f32.mrb[0].mxu0
        %2511 = vmatprep.mubr.f32.mxu0 0.0
        %2512 = vmatmul.mubr.f32.gmra.mrb[0].mxu0 %v2289
        %v2513 = vpop.f32.mrb[0].mxu0
        %v2514 = vadd.f32 0.0, %v2513
        %v2515 = vpop.f32.mrb[0].mxu0
        %2516 = vmatprep.mubr.f32.mxu0 0.0
        %2517 = vmatmul.mubr.f32.gmra.mrb[0].mxu0 %v2292
        %v2518 = vpop.f32.mrb[0].mxu0
        %v2519 = vadd.f32 0.0, %v2518
        %v2520 = vpop.f32.mrb[0].mxu0
        %2521 = vdwg.mxu0
        %v2522 = vadd.f32 %v2254, %v2364
        %v2523 = vadd.f32 %v2255, %v2369
        %v2524 = vadd.f32 %v2256, %v2374
        %v2525 = vadd.f32 %v2257, %v2379
        %v2526 = vadd.f32 %v2258, %v2384
        %v2527 = vadd.f32 %v2259, %v2389
        %v2528 = vadd.f32 %v2260, %v2394
        %v2529 = vadd.f32 %v2261, %v2399
        %v2530 = vadd.f32 %v2262, %v2404
        %v2531 = vadd.f32 %v2263, %v2409
        %v2532 = vadd.f32 %v2264, %v2414
        %v2533 = vadd.f32 %v2265, %v2419
        %v2534 = vadd.f32 %v2266, %v2424
        %v2535 = vadd.f32 %v2267, %v2429
        %v2536 = vadd.f32 %v2268, %v2434
        %v2537 = vadd.f32 %v2269, %v2439
        %v2538 = vadd.f32 %v2270, %v2444
        %v2539 = vadd.f32 %v2271, %v2449
        %v2540 = vadd.f32 %v2272, %v2454
        %v2541 = vadd.f32 %v2273, %v2459
        %v2542 = vadd.f32 %v2274, %v2464
        %v2543 = vadd.f32 %v2275, %v2469
        %v2544 = vadd.f32 %v2276, %v2474
        %v2545 = vadd.f32 %v2277, %v2479
        %v2546 = vadd.f32 %v2278, %v2484
        %v2547 = vadd.f32 %v2279, %v2489
        %v2548 = vadd.f32 %v2280, %v2494
        %v2549 = vadd.f32 %v2281, %v2499
        %v2550 = vadd.f32 %v2282, %v2504
        %v2551 = vadd.f32 %v2283, %v2509
        %v2552 = vadd.f32 %v2284, %v2514
        %v2553 = vadd.f32 %v2285, %v2519
        %s2554 = scalar_lea.vmem [#allocation5], 28
        %v2555 = vld [vmem:[%s2554] sm:$0xf]
        %v2557 = vsel %vm474, %v433, 0
        %v2560 = vsel %vm474, %v434, 0
        %v2563 = vsel %vm571, %v2555, 0
        %2565 = vmatprep.subr.mxu0 0.0
        %2566 = vmatpush1.msra.mxu0 %v2563
        %2567 = vmatprep.subr.mxu0 0.0
        %2568 = vmatpush1.msra.mxu0 0.0
        %2569 = vmatprep.subr.mxu0 0.0
        %2570 = vmatpush1.msra.mxu0 0.0
        %2571 = vmatprep.subr.mxu0 0.0
        %2572 = vmatpush1.msra.mxu0 0.0
        %2573 = vmatprep.subr.mxu0 0.0
        %2574 = vmatpush1.msra.mxu0 0.0
        %2575 = vmatprep.subr.mxu0 0.0
        %2576 = vmatpush1.msra.mxu0 0.0
        %2577 = vmatprep.subr.mxu0 0.0
        %2578 = vmatpush1.msra.mxu0 0.0
        %2579 = vmatprep.subr.mxu0 0.0
        %2580 = vmatpush1.msra.mxu0 0.0
        %2581 = vmatprep.subr.mxu0 0.0
        %2582 = vmatpush1.msra.mxu0 0.0
        %2583 = vmatprep.subr.mxu0 0.0
        %2584 = vmatpush1.msra.mxu0 0.0
        %2585 = vmatprep.subr.mxu0 0.0
        %2586 = vmatpush1.msra.mxu0 0.0
        %2587 = vmatprep.subr.mxu0 0.0
        %2588 = vmatpush1.msra.mxu0 0.0
        %2589 = vmatprep.subr.mxu0 0.0
        %2590 = vmatpush1.msra.mxu0 0.0
        %2591 = vmatprep.subr.mxu0 0.0
        %2592 = vmatpush1.msra.mxu0 0.0
        %2593 = vmatprep.subr.mxu0 0.0
        %2594 = vmatpush1.msra.mxu0 0.0
        %2595 = vmatprep.subr.mxu0 0.0
        %2596 = vmatpush1.msra.mxu0 0.0
        %2597 = vmatprep.subr.mxu0 0.0
        %2598 = vmatpush1.msra.mxu0 0.0
        %2599 = vmatprep.subr.mxu0 0.0
        %2600 = vmatpush1.msra.mxu0 0.0
        %2601 = vmatprep.subr.mxu0 0.0
        %2602 = vmatpush1.msra.mxu0 0.0
        %2603 = vmatprep.subr.mxu0 0.0
        %2604 = vmatpush1.msra.mxu0 0.0
        %2605 = vmatprep.subr.mxu0 0.0
        %2606 = vmatpush1.msra.mxu0 0.0
        %2607 = vmatprep.subr.mxu0 0.0
        %2608 = vmatpush1.msra.mxu0 0.0
        %2609 = vmatprep.subr.mxu0 0.0
        %2610 = vmatpush1.msra.mxu0 0.0
        %2611 = vmatprep.subr.mxu0 0.0
        %2612 = vmatpush1.msra.mxu0 0.0
        %2613 = vmatprep.subr.mxu0 0.0
        %2614 = vmatpush1.msra.mxu0 0.0
        %2615 = vmatprep.subr.mxu0 0.0
        %2616 = vmatpush1.msra.mxu0 0.0
        %2617 = vmatprep.subr.mxu0 0.0
        %2618 = vmatpush1.msra.mxu0 0.0
        %2619 = vmatprep.subr.mxu0 0.0
        %2620 = vmatpush1.msra.mxu0 0.0
        %2621 = vmatprep.subr.mxu0 0.0
        %2622 = vmatpush1.msra.mxu0 0.0
        %2623 = vmatprep.subr.mxu0 0.0
        %2624 = vmatpush1.msra.mxu0 0.0
        %2625 = vmatprep.subr.mxu0 0.0
        %2626 = vmatpush1.msra.mxu0 0.0
        %2627 = vmatprep.subr.mxu0 0.0
        %2628 = vmatpush1.msra.mxu0 0.0
        %2629 = vmatprep.mubr.f32.mxu0 0.0
        %2630 = vmatmul.mubr.f32.gmra.mrb[0].mxu0 %v488
        %v2631 = vpop.f32.mrb[0].mxu0
        %v2632 = vadd.f32 0.0, %v2631
        %v2633 = vpop.f32.mrb[0].mxu0
        %2634 = vmatprep.mubr.f32.mxu0 0.0
        %2635 = vmatmul.mubr.f32.gmra.mrb[0].mxu0 %v491
        %v2636 = vpop.f32.mrb[0].mxu0
        %v2637 = vadd.f32 0.0, %v2636
        %v2638 = vpop.f32.mrb[0].mxu0
        %2639 = vmatprep.mubr.f32.mxu0 0.0
        %2640 = vmatmul.mubr.f32.gmra.mrb[0].mxu0 %v494
        %v2641 = vpop.f32.mrb[0].mxu0
        %v2642 = vadd.f32 0.0, %v2641
        %v2643 = vpop.f32.mrb[0].mxu0
        %2644 = vmatprep.mubr.f32.mxu0 0.0
        %2645 = vmatmul.mubr.f32.gmra.mrb[0].mxu0 %v497
        %v2646 = vpop.f32.mrb[0].mxu0
        %v2647 = vadd.f32 0.0, %v2646
        %v2648 = vpop.f32.mrb[0].mxu0
        %2649 = vmatprep.mubr.f32.mxu0 0.0
        %2650 = vmatmul.mubr.f32.gmra.mrb[0].mxu0 %v500
        %v2651 = vpop.f32.mrb[0].mxu0
        %v2652 = vadd.f32 0.0, %v2651
        %v2653 = vpop.f32.mrb[0].mxu0
        %2654 = vmatprep.mubr.f32.mxu0 0.0
        %2655 = vmatmul.mubr.f32.gmra.mrb[0].mxu0 %v503
        %v2656 = vpop.f32.mrb[0].mxu0
        %v2657 = vadd.f32 0.0, %v2656
        %v2658 = vpop.f32.mrb[0].mxu0
        %2659 = vmatprep.mubr.f32.mxu0 0.0
        %2660 = vmatmul.mubr.f32.gmra.mrb[0].mxu0 %v506
        %v2661 = vpop.f32.mrb[0].mxu0
        %v2662 = vadd.f32 0.0, %v2661
        %v2663 = vpop.f32.mrb[0].mxu0
        %2664 = vmatprep.mubr.f32.mxu0 0.0
        %2665 = vmatmul.mubr.f32.gmra.mrb[0].mxu0 %v509
        %v2666 = vpop.f32.mrb[0].mxu0
        %v2667 = vadd.f32 0.0, %v2666
        %v2668 = vpop.f32.mrb[0].mxu0
        %2669 = vmatprep.mubr.f32.mxu0 0.0
        %2670 = vmatmul.mubr.f32.gmra.mrb[0].mxu0 %v512
        %v2671 = vpop.f32.mrb[0].mxu0
        %v2672 = vadd.f32 0.0, %v2671
        %v2673 = vpop.f32.mrb[0].mxu0
        %2674 = vmatprep.mubr.f32.mxu0 0.0
        %2675 = vmatmul.mubr.f32.gmra.mrb[0].mxu0 %v515
        %v2676 = vpop.f32.mrb[0].mxu0
        %v2677 = vadd.f32 0.0, %v2676
        %v2678 = vpop.f32.mrb[0].mxu0
        %2679 = vmatprep.mubr.f32.mxu0 0.0
        %2680 = vmatmul.mubr.f32.gmra.mrb[0].mxu0 %v518
        %v2681 = vpop.f32.mrb[0].mxu0
        %v2682 = vadd.f32 0.0, %v2681
        %v2683 = vpop.f32.mrb[0].mxu0
        %2684 = vmatprep.mubr.f32.mxu0 0.0
        %2685 = vmatmul.mubr.f32.gmra.mrb[0].mxu0 %v521
        %v2686 = vpop.f32.mrb[0].mxu0
        %v2687 = vadd.f32 0.0, %v2686
        %v2688 = vpop.f32.mrb[0].mxu0
        %2689 = vmatprep.mubr.f32.mxu0 0.0
        %2690 = vmatmul.mubr.f32.gmra.mrb[0].mxu0 %v524
        %v2691 = vpop.f32.mrb[0].mxu0
        %v2692 = vadd.f32 0.0, %v2691
        %v2693 = vpop.f32.mrb[0].mxu0
        %2694 = vmatprep.mubr.f32.mxu0 0.0
        %2695 = vmatmul.mubr.f32.gmra.mrb[0].mxu0 %v527
        %v2696 = vpop.f32.mrb[0].mxu0
        %v2697 = vadd.f32 0.0, %v2696
        %v2698 = vpop.f32.mrb[0].mxu0
        %2699 = vmatprep.mubr.f32.mxu0 0.0
        %2700 = vmatmul.mubr.f32.gmra.mrb[0].mxu0 %v530
        %v2701 = vpop.f32.mrb[0].mxu0
        %v2702 = vadd.f32 0.0, %v2701
        %v2703 = vpop.f32.mrb[0].mxu0
        %2704 = vmatprep.mubr.f32.mxu0 0.0
        %2705 = vmatmul.mubr.f32.gmra.mrb[0].mxu0 %v533
        %v2706 = vpop.f32.mrb[0].mxu0
        %v2707 = vadd.f32 0.0, %v2706
        %v2708 = vpop.f32.mrb[0].mxu0
        %2709 = vmatprep.mubr.f32.mxu0 0.0
        %2710 = vmatmul.mubr.f32.gmra.mrb[0].mxu0 %v536
        %v2711 = vpop.f32.mrb[0].mxu0
        %v2712 = vadd.f32 0.0, %v2711
        %v2713 = vpop.f32.mrb[0].mxu0
        %2714 = vmatprep.mubr.f32.mxu0 0.0
        %2715 = vmatmul.mubr.f32.gmra.mrb[0].mxu0 %v539
        %v2716 = vpop.f32.mrb[0].mxu0
        %v2717 = vadd.f32 0.0, %v2716
        %v2718 = vpop.f32.mrb[0].mxu0
        %2719 = vmatprep.mubr.f32.mxu0 0.0
        %2720 = vmatmul.mubr.f32.gmra.mrb[0].mxu0 %v542
        %v2721 = vpop.f32.mrb[0].mxu0
        %v2722 = vadd.f32 0.0, %v2721
        %v2723 = vpop.f32.mrb[0].mxu0
        %2724 = vmatprep.mubr.f32.mxu0 0.0
        %2725 = vmatmul.mubr.f32.gmra.mrb[0].mxu0 %v545
        %v2726 = vpop.f32.mrb[0].mxu0
        %v2727 = vadd.f32 0.0, %v2726
        %v2728 = vpop.f32.mrb[0].mxu0
        %2729 = vmatprep.mubr.f32.mxu0 0.0
        %2730 = vmatmul.mubr.f32.gmra.mrb[0].mxu0 %v548
        %v2731 = vpop.f32.mrb[0].mxu0
        %v2732 = vadd.f32 0.0, %v2731
        %v2733 = vpop.f32.mrb[0].mxu0
        %2734 = vmatprep.mubr.f32.mxu0 0.0
        %2735 = vmatmul.mubr.f32.gmra.mrb[0].mxu0 %v551
        %v2736 = vpop.f32.mrb[0].mxu0
        %v2737 = vadd.f32 0.0, %v2736
        %v2738 = vpop.f32.mrb[0].mxu0
        %2739 = vmatprep.mubr.f32.mxu0 0.0
        %2740 = vmatmul.mubr.f32.gmra.mrb[0].mxu0 %v554
        %v2741 = vpop.f32.mrb[0].mxu0
        %v2742 = vadd.f32 0.0, %v2741
        %v2743 = vpop.f32.mrb[0].mxu0
        %2744 = vmatprep.mubr.f32.mxu0 0.0
        %2745 = vmatmul.mubr.f32.gmra.mrb[0].mxu0 %v557
        %v2746 = vpop.f32.mrb[0].mxu0
        %v2747 = vadd.f32 0.0, %v2746
        %v2748 = vpop.f32.mrb[0].mxu0
        %2749 = vmatprep.mubr.f32.mxu0 0.0
        %2750 = vmatmul.mubr.f32.gmra.mrb[0].mxu0 %v560
        %v2751 = vpop.f32.mrb[0].mxu0
        %v2752 = vadd.f32 0.0, %v2751
        %v2753 = vpop.f32.mrb[0].mxu0
        %2754 = vmatprep.mubr.f32.mxu0 0.0
        %2755 = vmatmul.mubr.f32.gmra.mrb[0].mxu0 %v563
        %v2756 = vpop.f32.mrb[0].mxu0
        %v2757 = vadd.f32 0.0, %v2756
        %v2758 = vpop.f32.mrb[0].mxu0
        %2759 = vmatprep.mubr.f32.mxu0 0.0
        %2760 = vmatmul.mubr.f32.gmra.mrb[0].mxu0 %v566
        %v2761 = vpop.f32.mrb[0].mxu0
        %v2762 = vadd.f32 0.0, %v2761
        %v2763 = vpop.f32.mrb[0].mxu0
        %2764 = vmatprep.mubr.f32.mxu0 0.0
        %2765 = vmatmul.mubr.f32.gmra.mrb[0].mxu0 %v569
        %v2766 = vpop.f32.mrb[0].mxu0
        %v2767 = vadd.f32 0.0, %v2766
        %v2768 = vpop.f32.mrb[0].mxu0
        %2769 = vmatprep.mubr.f32.mxu0 0.0
        %2770 = vmatmul.mubr.f32.gmra.mrb[0].mxu0 %v1753
        %v2771 = vpop.f32.mrb[0].mxu0
        %v2772 = vadd.f32 0.0, %v2771
        %v2773 = vpop.f32.mrb[0].mxu0
        %2774 = vmatprep.mubr.f32.mxu0 0.0
        %2775 = vmatmul.mubr.f32.gmra.mrb[0].mxu0 %v1756
        %v2776 = vpop.f32.mrb[0].mxu0
        %v2777 = vadd.f32 0.0, %v2776
        %v2778 = vpop.f32.mrb[0].mxu0
        %2779 = vmatprep.mubr.f32.mxu0 0.0
        %2780 = vmatmul.mubr.f32.gmra.mrb[0].mxu0 %v2557
        %v2781 = vpop.f32.mrb[0].mxu0
        %v2782 = vadd.f32 0.0, %v2781
        %v2783 = vpop.f32.mrb[0].mxu0
        %2784 = vmatprep.mubr.f32.mxu0 0.0
        %2785 = vmatmul.mubr.f32.gmra.mrb[0].mxu0 %v2560
        %v2786 = vpop.f32.mrb[0].mxu0
        %v2787 = vadd.f32 0.0, %v2786
        %v2788 = vpop.f32.mrb[0].mxu0
        %2789 = vdwg.mxu0
        %v2790 = vadd.f32 %v2522, %v2632
        %v2791 = vadd.f32 %v2523, %v2637
        %v2792 = vadd.f32 %v2524, %v2642
        %v2793 = vadd.f32 %v2525, %v2647
        %v2794 = vadd.f32 %v2526, %v2652
        %v2795 = vadd.f32 %v2527, %v2657
        %v2796 = vadd.f32 %v2528, %v2662
        %v2797 = vadd.f32 %v2529, %v2667
        %v2798 = vadd.f32 %v2530, %v2672
        %v2799 = vadd.f32 %v2531, %v2677
        %v2800 = vadd.f32 %v2532, %v2682
        %v2801 = vadd.f32 %v2533, %v2687
        %v2802 = vadd.f32 %v2534, %v2692
        %v2803 = vadd.f32 %v2535, %v2697
        %v2804 = vadd.f32 %v2536, %v2702
        %v2805 = vadd.f32 %v2537, %v2707
        %v2806 = vadd.f32 %v2538, %v2712
        %v2807 = vadd.f32 %v2539, %v2717
        %v2808 = vadd.f32 %v2540, %v2722
        %v2809 = vadd.f32 %v2541, %v2727
        %v2810 = vadd.f32 %v2542, %v2732
        %v2811 = vadd.f32 %v2543, %v2737
        %v2812 = vadd.f32 %v2544, %v2742
        %v2813 = vadd.f32 %v2545, %v2747
        %v2814 = vadd.f32 %v2546, %v2752
        %v2815 = vadd.f32 %v2547, %v2757
        %v2816 = vadd.f32 %v2548, %v2762
        %v2817 = vadd.f32 %v2549, %v2767
        %v2818 = vadd.f32 %v2550, %v2772
        %v2819 = vadd.f32 %v2551, %v2777
        %v2820 = vadd.f32 %v2552, %v2782
        %v2821 = vadd.f32 %v2553, %v2787
        %s2822 = scalar_lea.vmem [#allocation5], 32
        %v2823 = vld [vmem:[%s2822] sm:$0xf]
        %v2825 = vsel %vm474, %v469, 0
        %v2828 = vsel %vm474, %v470, 0
        %v2831 = vsel %vm571, %v2823, 0
        %2833 = vmatprep.subr.mxu0 0.0
        %2834 = vmatpush1.msra.mxu0 %v2831
        %2835 = vmatprep.subr.mxu0 0.0
        %2836 = vmatpush1.msra.mxu0 0.0
        %2837 = vmatprep.subr.mxu0 0.0
        %2838 = vmatpush1.msra.mxu0 0.0
        %2839 = vmatprep.subr.mxu0 0.0
        %2840 = vmatpush1.msra.mxu0 0.0
        %2841 = vmatprep.subr.mxu0 0.0
        %2842 = vmatpush1.msra.mxu0 0.0
        %2843 = vmatprep.subr.mxu0 0.0
        %2844 = vmatpush1.msra.mxu0 0.0
        %2845 = vmatprep.subr.mxu0 0.0
        %2846 = vmatpush1.msra.mxu0 0.0
        %2847 = vmatprep.subr.mxu0 0.0
        %2848 = vmatpush1.msra.mxu0 0.0
        %2849 = vmatprep.subr.mxu0 0.0
        %2850 = vmatpush1.msra.mxu0 0.0
        %2851 = vmatprep.subr.mxu0 0.0
        %2852 = vmatpush1.msra.mxu0 0.0
        %2853 = vmatprep.subr.mxu0 0.0
        %2854 = vmatpush1.msra.mxu0 0.0
        %2855 = vmatprep.subr.mxu0 0.0
        %2856 = vmatpush1.msra.mxu0 0.0
        %2857 = vmatprep.subr.mxu0 0.0
        %2858 = vmatpush1.msra.mxu0 0.0
        %2859 = vmatprep.subr.mxu0 0.0
        %2860 = vmatpush1.msra.mxu0 0.0
        %2861 = vmatprep.subr.mxu0 0.0
        %2862 = vmatpush1.msra.mxu0 0.0
        %2863 = vmatprep.subr.mxu0 0.0
        %2864 = vmatpush1.msra.mxu0 0.0
        %2865 = vmatprep.subr.mxu0 0.0
        %2866 = vmatpush1.msra.mxu0 0.0
        %2867 = vmatprep.subr.mxu0 0.0
        %2868 = vmatpush1.msra.mxu0 0.0
        %2869 = vmatprep.subr.mxu0 0.0
        %2870 = vmatpush1.msra.mxu0 0.0
        %2871 = vmatprep.subr.mxu0 0.0
        %2872 = vmatpush1.msra.mxu0 0.0
        %2873 = vmatprep.subr.mxu0 0.0
        %2874 = vmatpush1.msra.mxu0 0.0
        %2875 = vmatprep.subr.mxu0 0.0
        %2876 = vmatpush1.msra.mxu0 0.0
        %2877 = vmatprep.subr.mxu0 0.0
        %2878 = vmatpush1.msra.mxu0 0.0
        %2879 = vmatprep.subr.mxu0 0.0
        %2880 = vmatpush1.msra.mxu0 0.0
        %2881 = vmatprep.subr.mxu0 0.0
        %2882 = vmatpush1.msra.mxu0 0.0
        %2883 = vmatprep.subr.mxu0 0.0
        %2884 = vmatpush1.msra.mxu0 0.0
        %2885 = vmatprep.subr.mxu0 0.0
        %2886 = vmatpush1.msra.mxu0 0.0
        %2887 = vmatprep.subr.mxu0 0.0
        %2888 = vmatpush1.msra.mxu0 0.0
        %2889 = vmatprep.subr.mxu0 0.0
        %2890 = vmatpush1.msra.mxu0 0.0
        %2891 = vmatprep.subr.mxu0 0.0
        %2892 = vmatpush1.msra.mxu0 0.0
        %2893 = vmatprep.subr.mxu0 0.0
        %2894 = vmatpush1.msra.mxu0 0.0
        %2895 = vmatprep.subr.mxu0 0.0
        %2896 = vmatpush1.msra.mxu0 0.0
        %2897 = vmatprep.mubr.f32.mxu0 0.0
        %2898 = vmatmul.mubr.f32.gmra.mrb[0].mxu0 %v1139
        %v2899 = vpop.f32.mrb[0].mxu0
        %v2900 = vadd.f32 0.0, %v2899
        %v2901 = vpop.f32.mrb[0].mxu0
        %2902 = vmatprep.mubr.f32.mxu0 0.0
        %2903 = vmatmul.mubr.f32.gmra.mrb[0].mxu0 %v1142
        %v2904 = vpop.f32.mrb[0].mxu0
        %v2905 = vadd.f32 0.0, %v2904
        %v2906 = vpop.f32.mrb[0].mxu0
        %2907 = vmatprep.mubr.f32.mxu0 0.0
        %2908 = vmatmul.mubr.f32.gmra.mrb[0].mxu0 %v1145
        %v2909 = vpop.f32.mrb[0].mxu0
        %v2910 = vadd.f32 0.0, %v2909
        %v2911 = vpop.f32.mrb[0].mxu0
        %2912 = vmatprep.mubr.f32.mxu0 0.0
        %2913 = vmatmul.mubr.f32.gmra.mrb[0].mxu0 %v1148
        %v2914 = vpop.f32.mrb[0].mxu0
        %v2915 = vadd.f32 0.0, %v2914
        %v2916 = vpop.f32.mrb[0].mxu0
        %2917 = vmatprep.mubr.f32.mxu0 0.0
        %2918 = vmatmul.mubr.f32.gmra.mrb[0].mxu0 %v1151
        %v2919 = vpop.f32.mrb[0].mxu0
        %v2920 = vadd.f32 0.0, %v2919
        %v2921 = vpop.f32.mrb[0].mxu0
        %2922 = vmatprep.mubr.f32.mxu0 0.0
        %2923 = vmatmul.mubr.f32.gmra.mrb[0].mxu0 %v1154
        %v2924 = vpop.f32.mrb[0].mxu0
        %v2925 = vadd.f32 0.0, %v2924
        %v2926 = vpop.f32.mrb[0].mxu0
        %2927 = vmatprep.mubr.f32.mxu0 0.0
        %2928 = vmatmul.mubr.f32.gmra.mrb[0].mxu0 %v1157
        %v2929 = vpop.f32.mrb[0].mxu0
        %v2930 = vadd.f32 0.0, %v2929
        %v2931 = vpop.f32.mrb[0].mxu0
        %2932 = vmatprep.mubr.f32.mxu0 0.0
        %2933 = vmatmul.mubr.f32.gmra.mrb[0].mxu0 %v1160
        %v2934 = vpop.f32.mrb[0].mxu0
        %v2935 = vadd.f32 0.0, %v2934
        %v2936 = vpop.f32.mrb[0].mxu0
        %2937 = vmatprep.mubr.f32.mxu0 0.0
        %2938 = vmatmul.mubr.f32.gmra.mrb[0].mxu0 %v1163
        %v2939 = vpop.f32.mrb[0].mxu0
        %v2940 = vadd.f32 0.0, %v2939
        %v2941 = vpop.f32.mrb[0].mxu0
        %2942 = vmatprep.mubr.f32.mxu0 0.0
        %2943 = vmatmul.mubr.f32.gmra.mrb[0].mxu0 %v1166
        %v2944 = vpop.f32.mrb[0].mxu0
        %v2945 = vadd.f32 0.0, %v2944
        %v2946 = vpop.f32.mrb[0].mxu0
        %2947 = vmatprep.mubr.f32.mxu0 0.0
        %2948 = vmatmul.mubr.f32.gmra.mrb[0].mxu0 %v1169
        %v2949 = vpop.f32.mrb[0].mxu0
        %v2950 = vadd.f32 0.0, %v2949
        %v2951 = vpop.f32.mrb[0].mxu0
        %2952 = vmatprep.mubr.f32.mxu0 0.0
        %2953 = vmatmul.mubr.f32.gmra.mrb[0].mxu0 %v1172
        %v2954 = vpop.f32.mrb[0].mxu0
        %v2955 = vadd.f32 0.0, %v2954
        %v2956 = vpop.f32.mrb[0].mxu0
        %2957 = vmatprep.mubr.f32.mxu0 0.0
        %2958 = vmatmul.mubr.f32.gmra.mrb[0].mxu0 %v1175
        %v2959 = vpop.f32.mrb[0].mxu0
        %v2960 = vadd.f32 0.0, %v2959
        %v2961 = vpop.f32.mrb[0].mxu0
        %2962 = vmatprep.mubr.f32.mxu0 0.0
        %2963 = vmatmul.mubr.f32.gmra.mrb[0].mxu0 %v1178
        %v2964 = vpop.f32.mrb[0].mxu0
        %v2965 = vadd.f32 0.0, %v2964
        %v2966 = vpop.f32.mrb[0].mxu0
        %2967 = vmatprep.mubr.f32.mxu0 0.0
        %2968 = vmatmul.mubr.f32.gmra.mrb[0].mxu0 %v1181
        %v2969 = vpop.f32.mrb[0].mxu0
        %v2970 = vadd.f32 0.0, %v2969
        %v2971 = vpop.f32.mrb[0].mxu0
        %2972 = vmatprep.mubr.f32.mxu0 0.0
        %2973 = vmatmul.mubr.f32.gmra.mrb[0].mxu0 %v1184
        %v2974 = vpop.f32.mrb[0].mxu0
        %v2975 = vadd.f32 0.0, %v2974
        %v2976 = vpop.f32.mrb[0].mxu0
        %2977 = vmatprep.mubr.f32.mxu0 0.0
        %2978 = vmatmul.mubr.f32.gmra.mrb[0].mxu0 %v1187
        %v2979 = vpop.f32.mrb[0].mxu0
        %v2980 = vadd.f32 0.0, %v2979
        %v2981 = vpop.f32.mrb[0].mxu0
        %2982 = vmatprep.mubr.f32.mxu0 0.0
        %2983 = vmatmul.mubr.f32.gmra.mrb[0].mxu0 %v1190
        %v2984 = vpop.f32.mrb[0].mxu0
        %v2985 = vadd.f32 0.0, %v2984
        %v2986 = vpop.f32.mrb[0].mxu0
        %2987 = vmatprep.mubr.f32.mxu0 0.0
        %2988 = vmatmul.mubr.f32.gmra.mrb[0].mxu0 %v1193
        %v2989 = vpop.f32.mrb[0].mxu0
        %v2990 = vadd.f32 0.0, %v2989
        %v2991 = vpop.f32.mrb[0].mxu0
        %2992 = vmatprep.mubr.f32.mxu0 0.0
        %2993 = vmatmul.mubr.f32.gmra.mrb[0].mxu0 %v1196
        %v2994 = vpop.f32.mrb[0].mxu0
        %v2995 = vadd.f32 0.0, %v2994
        %v2996 = vpop.f32.mrb[0].mxu0
        %2997 = vmatprep.mubr.f32.mxu0 0.0
        %2998 = vmatmul.mubr.f32.gmra.mrb[0].mxu0 %v1199
        %v2999 = vpop.f32.mrb[0].mxu0
        %v3000 = vadd.f32 0.0, %v2999
        %v3001 = vpop.f32.mrb[0].mxu0
        %3002 = vmatprep.mubr.f32.mxu0 0.0
        %3003 = vmatmul.mubr.f32.gmra.mrb[0].mxu0 %v1202
        %v3004 = vpop.f32.mrb[0].mxu0
        %v3005 = vadd.f32 0.0, %v3004
        %v3006 = vpop.f32.mrb[0].mxu0
        %3007 = vmatprep.mubr.f32.mxu0 0.0
        %3008 = vmatmul.mubr.f32.gmra.mrb[0].mxu0 %v1205
        %v3009 = vpop.f32.mrb[0].mxu0
        %v3010 = vadd.f32 0.0, %v3009
        %v3011 = vpop.f32.mrb[0].mxu0
        %3012 = vmatprep.mubr.f32.mxu0 0.0
        %3013 = vmatmul.mubr.f32.gmra.mrb[0].mxu0 %v1208
        %v3014 = vpop.f32.mrb[0].mxu0
        %v3015 = vadd.f32 0.0, %v3014
        %v3016 = vpop.f32.mrb[0].mxu0
        %3017 = vmatprep.mubr.f32.mxu0 0.0
        %3018 = vmatmul.mubr.f32.gmra.mrb[0].mxu0 %v1211
        %v3019 = vpop.f32.mrb[0].mxu0
        %v3020 = vadd.f32 0.0, %v3019
        %v3021 = vpop.f32.mrb[0].mxu0
        %3022 = vmatprep.mubr.f32.mxu0 0.0
        %3023 = vmatmul.mubr.f32.gmra.mrb[0].mxu0 %v1214
        %v3024 = vpop.f32.mrb[0].mxu0
        %v3025 = vadd.f32 0.0, %v3024
        %v3026 = vpop.f32.mrb[0].mxu0
        %3027 = vmatprep.mubr.f32.mxu0 0.0
        %3028 = vmatmul.mubr.f32.gmra.mrb[0].mxu0 %v1217
        %v3029 = vpop.f32.mrb[0].mxu0
        %v3030 = vadd.f32 0.0, %v3029
        %v3031 = vpop.f32.mrb[0].mxu0
        %3032 = vmatprep.mubr.f32.mxu0 0.0
        %3033 = vmatmul.mubr.f32.gmra.mrb[0].mxu0 %v1220
        %v3034 = vpop.f32.mrb[0].mxu0
        %v3035 = vadd.f32 0.0, %v3034
        %v3036 = vpop.f32.mrb[0].mxu0
        %3037 = vmatprep.mubr.f32.mxu0 0.0
        %3038 = vmatmul.mubr.f32.gmra.mrb[0].mxu0 %v2021
        %v3039 = vpop.f32.mrb[0].mxu0
        %v3040 = vadd.f32 0.0, %v3039
        %v3041 = vpop.f32.mrb[0].mxu0
        %3042 = vmatprep.mubr.f32.mxu0 0.0
        %3043 = vmatmul.mubr.f32.gmra.mrb[0].mxu0 %v2024
        %v3044 = vpop.f32.mrb[0].mxu0
        %v3045 = vadd.f32 0.0, %v3044
        %v3046 = vpop.f32.mrb[0].mxu0
        %3047 = vmatprep.mubr.f32.mxu0 0.0
        %3048 = vmatmul.mubr.f32.gmra.mrb[0].mxu0 %v2825
        %v3049 = vpop.f32.mrb[0].mxu0
        %v3050 = vadd.f32 0.0, %v3049
        %v3051 = vpop.f32.mrb[0].mxu0
        %3052 = vmatprep.mubr.f32.mxu0 0.0
        %3053 = vmatmul.mubr.f32.gmra.mrb[0].mxu0 %v2828
        %v3054 = vpop.f32.mrb[0].mxu0
        %v3055 = vadd.f32 0.0, %v3054
        %v3056 = vpop.f32.mrb[0].mxu0
        %3057 = vdwg.mxu0
        %v3058 = vadd.f32 %v2790, %v2900
        %v3059 = vadd.f32 %v2791, %v2905
        %v3060 = vadd.f32 %v2792, %v2910
        %v3061 = vadd.f32 %v2793, %v2915
        %v3062 = vadd.f32 %v2794, %v2920
        %v3063 = vadd.f32 %v2795, %v2925
        %v3064 = vadd.f32 %v2796, %v2930
        %v3065 = vadd.f32 %v2797, %v2935
        %v3066 = vadd.f32 %v2798, %v2940
        %v3067 = vadd.f32 %v2799, %v2945
        %v3068 = vadd.f32 %v2800, %v2950
        %v3069 = vadd.f32 %v2801, %v2955
        %v3070 = vadd.f32 %v2802, %v2960
        %v3071 = vadd.f32 %v2803, %v2965
        %v3072 = vadd.f32 %v2804, %v2970
        %v3073 = vadd.f32 %v2805, %v2975
        %v3074 = vadd.f32 %v2806, %v2980
        %v3075 = vadd.f32 %v2807, %v2985
        %v3076 = vadd.f32 %v2808, %v2990
        %v3077 = vadd.f32 %v2809, %v2995
        %v3078 = vadd.f32 %v2810, %v3000
        %v3079 = vadd.f32 %v2811, %v3005
        %v3080 = vadd.f32 %v2812, %v3010
        %v3081 = vadd.f32 %v2813, %v3015
        %v3082 = vadd.f32 %v2814, %v3020
        %v3083 = vadd.f32 %v2815, %v3025
        %v3084 = vadd.f32 %v2816, %v3030
        %v3085 = vadd.f32 %v2817, %v3035
        %v3086 = vadd.f32 %v2818, %v3040
        %v3087 = vadd.f32 %v2819, %v3045
        %v3088 = vadd.f32 %v2820, %v3050
        %v3089 = vadd.f32 %v2821, %v3055
        %v3090 = vld [vmem:[#allocation7] sm:$0xf]
        %v3091 = vld [vmem:[#allocation8] sm:$0x1]
        %v3093 = vlaneseq
        %v3094 = vshrl.u32 %v3093, 7
        %v3095 = vsub.s32 0, %v3094
        %v3096 = vrot.slane %v3091, %v3095
        %v3099 = vsel %vm571, %v3090, 0
        %3101 = vmatprep.subr.mxu0 0.0
        %3102 = vmatpush1.msra.mxu0 %v3099
        %3103 = vmatprep.subr.mxu0 0.0
        %3104 = vmatpush1.msra.mxu0 0.0
        %3105 = vmatprep.subr.mxu0 0.0
        %3106 = vmatpush1.msra.mxu0 0.0
        %3107 = vmatprep.subr.mxu0 0.0
        %3108 = vmatpush1.msra.mxu0 0.0
        %3109 = vmatprep.subr.mxu0 0.0
        %3110 = vmatpush1.msra.mxu0 0.0
        %3111 = vmatprep.subr.mxu0 0.0
        %3112 = vmatpush1.msra.mxu0 0.0
        %3113 = vmatprep.subr.mxu0 0.0
        %3114 = vmatpush1.msra.mxu0 0.0
        %3115 = vmatprep.subr.mxu0 0.0
        %3116 = vmatpush1.msra.mxu0 0.0
        %3117 = vmatprep.subr.mxu0 0.0
        %3118 = vmatpush1.msra.mxu0 0.0
        %3119 = vmatprep.subr.mxu0 0.0
        %3120 = vmatpush1.msra.mxu0 0.0
        %3121 = vmatprep.subr.mxu0 0.0
        %3122 = vmatpush1.msra.mxu0 0.0
        %3123 = vmatprep.subr.mxu0 0.0
        %3124 = vmatpush1.msra.mxu0 0.0
        %3125 = vmatprep.subr.mxu0 0.0
        %3126 = vmatpush1.msra.mxu0 0.0
        %3127 = vmatprep.subr.mxu0 0.0
        %3128 = vmatpush1.msra.mxu0 0.0
        %3129 = vmatprep.subr.mxu0 0.0
        %3130 = vmatpush1.msra.mxu0 0.0
        %3131 = vmatprep.subr.mxu0 0.0
        %3132 = vmatpush1.msra.mxu0 0.0
        %3133 = vmatprep.subr.mxu0 0.0
        %3134 = vmatpush1.msra.mxu0 0.0
        %3135 = vmatprep.subr.mxu0 0.0
        %3136 = vmatpush1.msra.mxu0 0.0
        %3137 = vmatprep.subr.mxu0 0.0
        %3138 = vmatpush1.msra.mxu0 0.0
        %3139 = vmatprep.subr.mxu0 0.0
        %3140 = vmatpush1.msra.mxu0 0.0
        %3141 = vmatprep.subr.mxu0 0.0
        %3142 = vmatpush1.msra.mxu0 0.0
        %3143 = vmatprep.subr.mxu0 0.0
        %3144 = vmatpush1.msra.mxu0 0.0
        %3145 = vmatprep.subr.mxu0 0.0
        %3146 = vmatpush1.msra.mxu0 0.0
        %3147 = vmatprep.subr.mxu0 0.0
        %3148 = vmatpush1.msra.mxu0 0.0
        %3149 = vmatprep.subr.mxu0 0.0
        %3150 = vmatpush1.msra.mxu0 0.0
        %3151 = vmatprep.subr.mxu0 0.0
        %3152 = vmatpush1.msra.mxu0 0.0
        %3153 = vmatprep.subr.mxu0 0.0
        %3154 = vmatpush1.msra.mxu0 0.0
        %3155 = vmatprep.subr.mxu0 0.0
        %3156 = vmatpush1.msra.mxu0 0.0
        %3157 = vmatprep.subr.mxu0 0.0
        %3158 = vmatpush1.msra.mxu0 0.0
        %3159 = vmatprep.subr.mxu0 0.0
        %3160 = vmatpush1.msra.mxu0 0.0
        %3161 = vmatprep.subr.mxu0 0.0
        %3162 = vmatpush1.msra.mxu0 0.0
        %3163 = vmatprep.subr.mxu0 0.0
        %3164 = vmatpush1.msra.mxu0 0.0
        %3165 = vmatprep.mubr.f32.mxu0 0.0
        %3166 = vmatmul.mubr.f32.gmra.mrb[0].mxu0 %v482
        %v3167 = vpop.f32.mrb[0].mxu0
        %v3168 = vadd.f32 %v3096, %v3167
        %v3169 = vpop.f32.mrb[0].mxu0
        %3170 = vmatprep.mubr.f32.mxu0 0.0
        %3171 = vmatmul.mubr.f32.gmra.mrb[0].mxu0 %v485
        %v3172 = vpop.f32.mrb[0].mxu0
        %v3173 = vadd.f32 %v3096, %v3172
        %v3174 = vpop.f32.mrb[0].mxu0
        %3175 = vmatprep.mubr.f32.mxu0 0.0
        %3176 = vmatmul.mubr.f32.gmra.mrb[0].mxu0 %v488
        %v3177 = vpop.f32.mrb[0].mxu0
        %v3178 = vadd.f32 %v3096, %v3177
        %v3179 = vpop.f32.mrb[0].mxu0
        %3180 = vmatprep.mubr.f32.mxu0 0.0
        %3181 = vmatmul.mubr.f32.gmra.mrb[0].mxu0 %v491
        %v3182 = vpop.f32.mrb[0].mxu0
        %v3183 = vadd.f32 %v3096, %v3182
        %v3184 = vpop.f32.mrb[0].mxu0
        %3185 = vmatprep.mubr.f32.mxu0 0.0
        %3186 = vmatmul.mubr.f32.gmra.mrb[0].mxu0 %v494
        %v3187 = vpop.f32.mrb[0].mxu0
        %v3188 = vadd.f32 %v3096, %v3187
        %v3189 = vpop.f32.mrb[0].mxu0
        %3190 = vmatprep.mubr.f32.mxu0 0.0
        %3191 = vmatmul.mubr.f32.gmra.mrb[0].mxu0 %v497
        %v3192 = vpop.f32.mrb[0].mxu0
        %v3193 = vadd.f32 %v3096, %v3192
        %v3194 = vpop.f32.mrb[0].mxu0
        %3195 = vmatprep.mubr.f32.mxu0 0.0
        %3196 = vmatmul.mubr.f32.gmra.mrb[0].mxu0 %v500
        %v3197 = vpop.f32.mrb[0].mxu0
        %v3198 = vadd.f32 %v3096, %v3197
        %v3199 = vpop.f32.mrb[0].mxu0
        %3200 = vmatprep.mubr.f32.mxu0 0.0
        %3201 = vmatmul.mubr.f32.gmra.mrb[0].mxu0 %v503
        %v3202 = vpop.f32.mrb[0].mxu0
        %v3203 = vadd.f32 %v3096, %v3202
        %v3204 = vpop.f32.mrb[0].mxu0
        %3205 = vmatprep.mubr.f32.mxu0 0.0
        %3206 = vmatmul.mubr.f32.gmra.mrb[0].mxu0 %v506
        %v3207 = vpop.f32.mrb[0].mxu0
        %v3208 = vadd.f32 %v3096, %v3207
        %v3209 = vpop.f32.mrb[0].mxu0
        %3210 = vmatprep.mubr.f32.mxu0 0.0
        %3211 = vmatmul.mubr.f32.gmra.mrb[0].mxu0 %v509
        %v3212 = vpop.f32.mrb[0].mxu0
        %v3213 = vadd.f32 %v3096, %v3212
        %v3214 = vpop.f32.mrb[0].mxu0
        %3215 = vmatprep.mubr.f32.mxu0 0.0
        %3216 = vmatmul.mubr.f32.gmra.mrb[0].mxu0 %v512
        %v3217 = vpop.f32.mrb[0].mxu0
        %v3218 = vadd.f32 %v3096, %v3217
        %v3219 = vpop.f32.mrb[0].mxu0
        %3220 = vmatprep.mubr.f32.mxu0 0.0
        %3221 = vmatmul.mubr.f32.gmra.mrb[0].mxu0 %v515
        %v3222 = vpop.f32.mrb[0].mxu0
        %v3223 = vadd.f32 %v3096, %v3222
        %v3224 = vpop.f32.mrb[0].mxu0
        %3225 = vmatprep.mubr.f32.mxu0 0.0
        %3226 = vmatmul.mubr.f32.gmra.mrb[0].mxu0 %v518
        %v3227 = vpop.f32.mrb[0].mxu0
        %v3228 = vadd.f32 %v3096, %v3227
        %v3229 = vpop.f32.mrb[0].mxu0
        %3230 = vmatprep.mubr.f32.mxu0 0.0
        %3231 = vmatmul.mubr.f32.gmra.mrb[0].mxu0 %v521
        %v3232 = vpop.f32.mrb[0].mxu0
        %v3233 = vadd.f32 %v3096, %v3232
        %v3234 = vpop.f32.mrb[0].mxu0
        %3235 = vmatprep.mubr.f32.mxu0 0.0
        %3236 = vmatmul.mubr.f32.gmra.mrb[0].mxu0 %v524
        %v3237 = vpop.f32.mrb[0].mxu0
        %v3238 = vadd.f32 %v3096, %v3237
        %v3239 = vpop.f32.mrb[0].mxu0
        %3240 = vmatprep.mubr.f32.mxu0 0.0
        %3241 = vmatmul.mubr.f32.gmra.mrb[0].mxu0 %v527
        %v3242 = vpop.f32.mrb[0].mxu0
        %v3243 = vadd.f32 %v3096, %v3242
        %v3244 = vpop.f32.mrb[0].mxu0
        %3245 = vmatprep.mubr.f32.mxu0 0.0
        %3246 = vmatmul.mubr.f32.gmra.mrb[0].mxu0 %v530
        %v3247 = vpop.f32.mrb[0].mxu0
        %v3248 = vadd.f32 %v3096, %v3247
        %v3249 = vpop.f32.mrb[0].mxu0
        %3250 = vmatprep.mubr.f32.mxu0 0.0
        %3251 = vmatmul.mubr.f32.gmra.mrb[0].mxu0 %v533
        %v3252 = vpop.f32.mrb[0].mxu0
        %v3253 = vadd.f32 %v3096, %v3252
        %v3254 = vpop.f32.mrb[0].mxu0
        %3255 = vmatprep.mubr.f32.mxu0 0.0
        %3256 = vmatmul.mubr.f32.gmra.mrb[0].mxu0 %v536
        %v3257 = vpop.f32.mrb[0].mxu0
        %v3258 = vadd.f32 %v3096, %v3257
        %v3259 = vpop.f32.mrb[0].mxu0
        %3260 = vmatprep.mubr.f32.mxu0 0.0
        %3261 = vmatmul.mubr.f32.gmra.mrb[0].mxu0 %v539
        %v3262 = vpop.f32.mrb[0].mxu0
        %v3263 = vadd.f32 %v3096, %v3262
        %v3264 = vpop.f32.mrb[0].mxu0
        %3265 = vmatprep.mubr.f32.mxu0 0.0
        %3266 = vmatmul.mubr.f32.gmra.mrb[0].mxu0 %v542
        %v3267 = vpop.f32.mrb[0].mxu0
        %v3268 = vadd.f32 %v3096, %v3267
        %v3269 = vpop.f32.mrb[0].mxu0
        %3270 = vmatprep.mubr.f32.mxu0 0.0
        %3271 = vmatmul.mubr.f32.gmra.mrb[0].mxu0 %v545
        %v3272 = vpop.f32.mrb[0].mxu0
        %v3273 = vadd.f32 %v3096, %v3272
        %v3274 = vpop.f32.mrb[0].mxu0
        %3275 = vmatprep.mubr.f32.mxu0 0.0
        %3276 = vmatmul.mubr.f32.gmra.mrb[0].mxu0 %v548
        %v3277 = vpop.f32.mrb[0].mxu0
        %v3278 = vadd.f32 %v3096, %v3277
        %v3279 = vpop.f32.mrb[0].mxu0
        %3280 = vmatprep.mubr.f32.mxu0 0.0
        %3281 = vmatmul.mubr.f32.gmra.mrb[0].mxu0 %v551
        %v3282 = vpop.f32.mrb[0].mxu0
        %v3283 = vadd.f32 %v3096, %v3282
        %v3284 = vpop.f32.mrb[0].mxu0
        %3285 = vmatprep.mubr.f32.mxu0 0.0
        %3286 = vmatmul.mubr.f32.gmra.mrb[0].mxu0 %v554
        %v3287 = vpop.f32.mrb[0].mxu0
        %v3288 = vadd.f32 %v3096, %v3287
        %v3289 = vpop.f32.mrb[0].mxu0
        %3290 = vmatprep.mubr.f32.mxu0 0.0
        %3291 = vmatmul.mubr.f32.gmra.mrb[0].mxu0 %v557
        %v3292 = vpop.f32.mrb[0].mxu0
        %v3293 = vadd.f32 %v3096, %v3292
        %v3294 = vpop.f32.mrb[0].mxu0
        %3295 = vmatprep.mubr.f32.mxu0 0.0
        %3296 = vmatmul.mubr.f32.gmra.mrb[0].mxu0 %v560
        %v3297 = vpop.f32.mrb[0].mxu0
        %v3298 = vadd.f32 %v3096, %v3297
        %v3299 = vpop.f32.mrb[0].mxu0
        %3300 = vmatprep.mubr.f32.mxu0 0.0
        %3301 = vmatmul.mubr.f32.gmra.mrb[0].mxu0 %v563
        %v3302 = vpop.f32.mrb[0].mxu0
        %v3303 = vadd.f32 %v3096, %v3302
        %v3304 = vpop.f32.mrb[0].mxu0
        %3305 = vmatprep.mubr.f32.mxu0 0.0
        %3306 = vmatmul.mubr.f32.gmra.mrb[0].mxu0 %v566
        %v3307 = vpop.f32.mrb[0].mxu0
        %v3308 = vadd.f32 %v3096, %v3307
        %v3309 = vpop.f32.mrb[0].mxu0
        %3310 = vmatprep.mubr.f32.mxu0 0.0
        %3311 = vmatmul.mubr.f32.gmra.mrb[0].mxu0 %v569
        %v3312 = vpop.f32.mrb[0].mxu0
        %v3313 = vadd.f32 %v3096, %v3312
        %v3314 = vpop.f32.mrb[0].mxu0
        %3315 = vmatprep.mubr.f32.mxu0 0.0
        %3316 = vmatmul.mubr.f32.gmra.mrb[0].mxu0 %v1753
        %v3317 = vpop.f32.mrb[0].mxu0
        %v3318 = vadd.f32 %v3096, %v3317
        %v3319 = vpop.f32.mrb[0].mxu0
        %3320 = vmatprep.mubr.f32.mxu0 0.0
        %3321 = vmatmul.mubr.f32.gmra.mrb[0].mxu0 %v1756
        %v3322 = vpop.f32.mrb[0].mxu0
        %v3323 = vadd.f32 %v3096, %v3322
        %v3324 = vpop.f32.mrb[0].mxu0
        %3325 = vdwg.mxu0
        %3326 = vst [vmem:[%s350] sm:$0xff] %v3168
        %3327 = vst [vmem:[%s350 + $0x8] sm:$0xff] %v3173
        %3328 = vst [vmem:[%s350 + $0x10] sm:$0xff] %v3178
        %3329 = vst [vmem:[%s350 + $0x18] sm:$0xff] %v3183
        %3330 = vst [vmem:[%s350 + $0x20] sm:$0xff] %v3188
        %3331 = vst [vmem:[%s350 + $0x28] sm:$0xff] %v3193
        %3332 = vst [vmem:[%s350 + $0x30] sm:$0xff] %v3198
        %3333 = vst [vmem:[%s350 + $0x38] sm:$0xff] %v3203
        %3334 = vst [vmem:[%s350 + $0x40] sm:$0xff] %v3208
        %3335 = vst [vmem:[%s350 + $0x48] sm:$0xff] %v3213
        %3336 = vst [vmem:[%s350 + $0x50] sm:$0xff] %v3218
        %3337 = vst [vmem:[%s350 + $0x58] sm:$0xff] %v3223
        %3338 = vst [vmem:[%s350 + $0x60] sm:$0xff] %v3228
        %3339 = vst [vmem:[%s350 + $0x68] sm:$0xff] %v3233
        %3340 = vst [vmem:[%s350 + $0x70] sm:$0xff] %v3238
        %3341 = vst [vmem:[%s350 + $0x78] sm:$0xff] %v3243
        %3342 = vst [vmem:[%s350 + $0x80] sm:$0xff] %v3248
        %3343 = vst [vmem:[%s350 + $0x88] sm:$0xff] %v3253
        %3344 = vst [vmem:[%s350 + $0x90] sm:$0xff] %v3258
        %3345 = vst [vmem:[%s350 + $0x98] sm:$0xff] %v3263
        %3346 = vst [vmem:[%s350 + $0xa0] sm:$0xff] %v3268
        %3347 = vst [vmem:[%s350 + $0xa8] sm:$0xff] %v3273
        %3348 = vst [vmem:[%s350 + $0xb0] sm:$0xff] %v3278
        %3349 = vst [vmem:[%s350 + $0xb8] sm:$0xff] %v3283
        %3350 = vst [vmem:[%s350 + $0xc0] sm:$0xff] %v3288
        %3351 = vst [vmem:[%s350 + $0xc8] sm:$0xff] %v3293
        %3352 = vst [vmem:[%s350 + $0xd0] sm:$0xff] %v3298
        %3353 = vst [vmem:[%s350 + $0xd8] sm:$0xff] %v3303
        %3354 = vst [vmem:[%s350 + $0xe0] sm:$0xff] %v3308
        %3355 = vst [vmem:[%s350 + $0xe8] sm:$0xff] %v3313
        %3356 = vst [vmem:[%s350 + $0xf0] sm:$0xff] %v3318
        %3357 = vst [vmem:[%s350 + $0xf8] sm:$0xff] %v3323
        %3358 = vst [vmem:[%s343] sm:$0xff] %v3058
        %3359 = vst [vmem:[%s343 + $0x8] sm:$0xff] %v3059
        %3360 = vst [vmem:[%s343 + $0x10] sm:$0xff] %v3060
        %3361 = vst [vmem:[%s343 + $0x18] sm:$0xff] %v3061
        %3362 = vst [vmem:[%s343 + $0x20] sm:$0xff] %v3062
        %3363 = vst [vmem:[%s343 + $0x28] sm:$0xff] %v3063
        %3364 = vst [vmem:[%s343 + $0x30] sm:$0xff] %v3064
        %3365 = vst [vmem:[%s343 + $0x38] sm:$0xff] %v3065
        %3366 = vst [vmem:[%s343 + $0x40] sm:$0xff] %v3066
        %3367 = vst [vmem:[%s343 + $0x48] sm:$0xff] %v3067
        %3368 = vst [vmem:[%s343 + $0x50] sm:$0xff] %v3068
        %3369 = vst [vmem:[%s343 + $0x58] sm:$0xff] %v3069
        %3370 = vst [vmem:[%s343 + $0x60] sm:$0xff] %v3070
        %3371 = vst [vmem:[%s343 + $0x68] sm:$0xff] %v3071
        %3372 = vst [vmem:[%s343 + $0x70] sm:$0xff] %v3072
        %3373 = vst [vmem:[%s343 + $0x78] sm:$0xff] %v3073
        %3374 = vst [vmem:[%s343 + $0x80] sm:$0xff] %v3074
        %3375 = vst [vmem:[%s343 + $0x88] sm:$0xff] %v3075
        %3376 = vst [vmem:[%s343 + $0x90] sm:$0xff] %v3076
        %3377 = vst [vmem:[%s343 + $0x98] sm:$0xff] %v3077
        %3378 = vst [vmem:[%s343 + $0xa0] sm:$0xff] %v3078
        %3379 = vst [vmem:[%s343 + $0xa8] sm:$0xff] %v3079
        %3380 = vst [vmem:[%s343 + $0xb0] sm:$0xff] %v3080
        %3381 = vst [vmem:[%s343 + $0xb8] sm:$0xff] %v3081
        %3382 = vst [vmem:[%s343 + $0xc0] sm:$0xff] %v3082
        %3383 = vst [vmem:[%s343 + $0xc8] sm:$0xff] %v3083
        %3384 = vst [vmem:[%s343 + $0xd0] sm:$0xff] %v3084
        %3385 = vst [vmem:[%s343 + $0xd8] sm:$0xff] %v3085
        %3386 = vst [vmem:[%s343 + $0xe0] sm:$0xff] %v3086
        %3387 = vst [vmem:[%s343 + $0xe8] sm:$0xff] %v3087
        %3388 = vst [vmem:[%s343 + $0xf0] sm:$0xff] %v3088
        %3389 = vst [vmem:[%s343 + $0xf8] sm:$0xff] %v3089
        %v3390 = vadd.f32 %v3058, %v3059
        %v3391 = vadd.f32 %v3390, %v3060
        %v3392 = vadd.f32 %v3391, %v3061
        %v3393 = vadd.f32 %v3392, %v3062
        %v3394 = vadd.f32 %v3393, %v3063
        %v3395 = vadd.f32 %v3394, %v3064
        %v3396 = vadd.f32 %v3395, %v3065
        %v3397 = vadd.f32 %v3396, %v3066
        %v3398 = vadd.f32 %v3397, %v3067
        %v3399 = vadd.f32 %v3398, %v3068
        %v3400 = vadd.f32 %v3399, %v3069
        %v3401 = vadd.f32 %v3400, %v3070
        %v3402 = vadd.f32 %v3401, %v3071
        %v3403 = vadd.f32 %v3402, %v3072
        %v3404 = vadd.f32 %v3403, %v3073
        %v3405 = vadd.f32 %v3404, %v3074
        %v3406 = vadd.f32 %v3405, %v3075
        %v3407 = vadd.f32 %v3406, %v3076
        %v3408 = vadd.f32 %v3407, %v3077
        %v3409 = vadd.f32 %v3408, %v3078
        %v3410 = vadd.f32 %v3409, %v3079
        %v3411 = vadd.f32 %v3410, %v3080
        %v3412 = vadd.f32 %v3411, %v3081
        %v3413 = vadd.f32 %v3412, %v3082
        %v3414 = vadd.f32 %v3413, %v3083
        %v3415 = vadd.f32 %v3414, %v3084
        %v3416 = vadd.f32 %v3415, %v3085
        %v3417 = vadd.f32 %v3416, %v3086
        %v3418 = vadd.f32 %v3417, %v3087
        %v3419 = vadd.f32 %v3418, %v3088
        %v3420 = vadd.f32 %v3419, %v3089
        %v3421 = vrot.slane %v3420, 4
        %v3422 = vadd.f32 %v3420, %v3421
        %v3423 = vrot.slane %v3422, 2
        %v3424 = vadd.f32 %v3422, %v3423
        %v3425 = vrot.slane %v3424, 1
        %v3426 = vadd.f32 %v3424, %v3425
        %3427 = vst [vmem:[%s356] sm:$0x1] %v3426
        %v3428 = vmul.f32 %v3058, %v3058
        %v3429 = vmul.f32 %v3059, %v3059
        %v3430 = vmul.f32 %v3060, %v3060
        %v3431 = vmul.f32 %v3061, %v3061
        %v3432 = vmul.f32 %v3062, %v3062
        %v3433 = vmul.f32 %v3063, %v3063
        %v3434 = vmul.f32 %v3064, %v3064
        %v3435 = vmul.f32 %v3065, %v3065
        %v3436 = vmul.f32 %v3066, %v3066
        %v3437 = vmul.f32 %v3067, %v3067
        %v3438 = vmul.f32 %v3068, %v3068
        %v3439 = vmul.f32 %v3069, %v3069
        %v3440 = vmul.f32 %v3070, %v3070
        %v3441 = vmul.f32 %v3071, %v3071
        %v3442 = vmul.f32 %v3072, %v3072
        %v3443 = vmul.f32 %v3073, %v3073
        %v3444 = vmul.f32 %v3074, %v3074
        %v3445 = vmul.f32 %v3075, %v3075
        %v3446 = vmul.f32 %v3076, %v3076
        %v3447 = vmul.f32 %v3077, %v3077
        %v3448 = vmul.f32 %v3078, %v3078
        %v3449 = vmul.f32 %v3079, %v3079
        %v3450 = vmul.f32 %v3080, %v3080
        %v3451 = vmul.f32 %v3081, %v3081
        %v3452 = vmul.f32 %v3082, %v3082
        %v3453 = vmul.f32 %v3083, %v3083
        %v3454 = vmul.f32 %v3084, %v3084
        %v3455 = vmul.f32 %v3085, %v3085
        %v3456 = vmul.f32 %v3086, %v3086
        %v3457 = vmul.f32 %v3087, %v3087
        %v3458 = vmul.f32 %v3088, %v3088
        %v3459 = vmul.f32 %v3089, %v3089
        %v3460 = vadd.f32 %v3428, %v3429
        %v3461 = vadd.f32 %v3460, %v3430
        %v3462 = vadd.f32 %v3461, %v3431
        %v3463 = vadd.f32 %v3462, %v3432
        %v3464 = vadd.f32 %v3463, %v3433
        %v3465 = vadd.f32 %v3464, %v3434
        %v3466 = vadd.f32 %v3465, %v3435
        %v3467 = vadd.f32 %v3466, %v3436
        %v3468 = vadd.f32 %v3467, %v3437
        %v3469 = vadd.f32 %v3468, %v3438
        %v3470 = vadd.f32 %v3469, %v3439
        %v3471 = vadd.f32 %v3470, %v3440
        %v3472 = vadd.f32 %v3471, %v3441
        %v3473 = vadd.f32 %v3472, %v3442
        %v3474 = vadd.f32 %v3473, %v3443
        %v3475 = vadd.f32 %v3474, %v3444
        %v3476 = vadd.f32 %v3475, %v3445
        %v3477 = vadd.f32 %v3476, %v3446
        %v3478 = vadd.f32 %v3477, %v3447
        %v3479 = vadd.f32 %v3478, %v3448
        %v3480 = vadd.f32 %v3479, %v3449
        %v3481 = vadd.f32 %v3480, %v3450
        %v3482 = vadd.f32 %v3481, %v3451
        %v3483 = vadd.f32 %v3482, %v3452
        %v3484 = vadd.f32 %v3483, %v3453
        %v3485 = vadd.f32 %v3484, %v3454
        %v3486 = vadd.f32 %v3485, %v3455
        %v3487 = vadd.f32 %v3486, %v3456
        %v3488 = vadd.f32 %v3487, %v3457
        %v3489 = vadd.f32 %v3488, %v3458
        %v3490 = vadd.f32 %v3489, %v3459
        %v3491 = vrot.slane %v3490, 4
        %v3492 = vadd.f32 %v3490, %v3491
        %v3493 = vrot.slane %v3492, 2
        %v3494 = vadd.f32 %v3492, %v3493
        %v3495 = vrot.slane %v3494, 1
        %v3496 = vadd.f32 %v3494, %v3495
        %3497 = vst [vmem:[%s362] sm:$0x1] %v3496
        %s3498 = sand.u32 %s130, 1
        %s3499 = scalar_lea.sflag [#allocation4], %s3498
        %s3500 = sand.u32 %s130, 1
        %s3501 = smul.addr %s3500, 256
        %s3502 = scalar_lea.vmem [#allocation10], %s3501
        %s3503 = sand.u32 %s33, 1
        %s3504 = scalar_lea.sflag [#allocation12], %s3503
        %s3505 = sand.u32 %s156, 1
        %s3506 = smul.addr %s3505, 256
        %s3507 = scalar_lea.vmem [#allocation11], %s3506
        %s3508 = sand.u32 %s33, 1
        %s3509 = scalar_lea.sflag [#allocation12], %s3508
        %s3510 = sand.u32 %s182, 1
        %s3511 = scalar_lea.vmem [#allocation13], %s3510
        %s3512 = sand.u32 %s208, 1
        %s3513 = scalar_lea.sflag [#allocation15], %s3512
        %s3514 = sand.u32 %s208, 1
        %s3515 = scalar_lea.vmem [#allocation14], %s3514
        // Predicated region
        $region53: #{simple_residual_block.3} parent=35 // pred_check
          %p3516 = pneg %p140
        $region54: #{simple_residual_block.3} parent=35 // pred_check_branch
          %3518 = sbr.rel (%p3516) target = $region56
        $region55: #{simple_residual_block.3} parent=35 // pred_region
          %s3520 = ssub.s32 4096, 4096
          %3521 = vsyncadd %s3499, %s3520
          %s3522 = smul.addr %s33, 32
          %s3523 = smul.addr %s3522, 128
          %s3524 = scalar_lea.hbm %s4, %s3523
          %s3525 = sshll.u32 %s3502, 4
          %s3526 = int_to_ptr.vmem [resolvable:$true] %s3525
          %3531 = dma.vmem_to_hbm [thread:$0]  %s3526, 4096, %s3524, %s3499, 128, 128, 8
        $region56: #{simple_residual_block.3} parent=35 // pred_fallthru
          _
        // Predicated region
        $region57: #{simple_residual_block.3} parent=35 // pred_check
          %p3532 = pneg %p166
        $region58: #{simple_residual_block.3} parent=35 // pred_check_branch
          %3534 = sbr.rel (%p3532) target = $region60
        $region59: #{simple_residual_block.3} parent=35 // pred_region
          %s3536 = ssub.s32 4096, 4096
          %3537 = vsyncadd %s3504, %s3536
          %s3538 = smul.addr %s33, 32
          %s3539 = smul.addr %s3538, 128
          %s3540 = scalar_lea.hbm %s5, %s3539
          %s3541 = sshll.u32 %s3507, 4
          %s3542 = int_to_ptr.vmem [resolvable:$true] %s3541
          %3547 = dma.vmem_to_hbm [thread:$0]  %s3542, 4096, %s3540, %s3504, 128, 128, 8
        $region60: #{simple_residual_block.3} parent=35 // pred_fallthru
          _
        // Predicated region
        $region61: #{simple_residual_block.3} parent=35 // pred_check
          %p3548 = pneg %p192
        $region62: #{simple_residual_block.3} parent=35 // pred_check_branch
          %3550 = sbr.rel (%p3548) target = $region64
        $region63: #{simple_residual_block.3} parent=35 // pred_region
          %s3552 = ssub.s32 16, 16
          %3553 = vsyncadd %s3509, %s3552
          %s3554 = smul.addr %s33, 16
          %s3555 = scalar_lea.hbm %s6, %s3554
          %s3557 = sshll.u32 %s3511, 4
          %s3558 = int_to_ptr.vmem [resolvable:$true] %s3557
          %3560 = dma.vmem_to_hbm [thread:$0]  %s3558, 16, %s3555, %s3509
        $region64: #{simple_residual_block.3} parent=35 // pred_fallthru
          _
        // Predicated region
        $region65: #{simple_residual_block.3} parent=35 // pred_check
          %p3561 = pneg %p218
        $region66: #{simple_residual_block.3} parent=35 // pred_check_branch
          %3563 = sbr.rel (%p3561) target = $region68
        $region67: #{simple_residual_block.3} parent=35 // pred_region
          %s3565 = ssub.s32 16, 16
          %3566 = vsyncadd %s3513, %s3565
          %s3567 = smul.addr %s33, 16
          %s3568 = scalar_lea.hbm %s7, %s3567
          %s3570 = sshll.u32 %s3515, 4
          %s3571 = int_to_ptr.vmem [resolvable:$true] %s3570
          %3573 = dma.vmem_to_hbm [thread:$0]  %s3571, 16, %s3568, %s3513
        $region68: #{simple_residual_block.3} parent=35 // pred_fallthru
          _
      $region36: #{simple_residual_block.3} parent=5 // pred_fallthru
        _
      %p3574 = scmp.le.s32.totalorder 2, %s28
      // Predicated region
      $region69: #{simple_residual_block.3} parent=5 // pred_check
        %p3575 = pneg %p3574
      $region70: #{simple_residual_block.3} parent=5 // pred_check_branch
        %3577 = sbr.rel (%p3575) target = $region72
      $region71: #{simple_residual_block.3} parent=5 // pred_region
        %s3578 = ssub.s32 %s28, 2
        // Predicated region
        $region73: #{simple_residual_block.3} parent=71 // pred_check
          %p3579 = pneg %p146
        $region74: #{simple_residual_block.3} parent=71 // pred_check_branch
          %3581 = sbr.rel (%p3579) target = $region76
        $region75: #{simple_residual_block.3} parent=71 // pred_region
          %s3582 = sand.u32 %s131, 1
          %s3583 = scalar_lea.sflag [#allocation4], %s3582
          %s3584 = sand.u32 %s131, 1
          %s3585 = smul.addr %s3584, 256
          %s3586 = scalar_lea.vmem [#allocation10], %s3585
          %3587 = dma.done %s3583, 4096
        $region76: #{simple_residual_block.3} parent=71 // pred_fallthru
          _
        // Predicated region
        $region77: #{simple_residual_block.3} parent=71 // pred_check
          %p3588 = pneg %p172
        $region78: #{simple_residual_block.3} parent=71 // pred_check_branch
          %3590 = sbr.rel (%p3588) target = $region80
        $region79: #{simple_residual_block.3} parent=71 // pred_region
          %s3591 = sand.u32 %s34, 1
          %s3592 = scalar_lea.sflag [#allocation12], %s3591
          %s3593 = sand.u32 %s157, 1
          %s3594 = smul.addr %s3593, 256
          %s3595 = scalar_lea.vmem [#allocation11], %s3594
          %3596 = dma.done %s3592, 4096
        $region80: #{simple_residual_block.3} parent=71 // pred_fallthru
          _
        // Predicated region
        $region81: #{simple_residual_block.3} parent=71 // pred_check
          %p3597 = pneg %p198
        $region82: #{simple_residual_block.3} parent=71 // pred_check_branch
          %3599 = sbr.rel (%p3597) target = $region84
        $region83: #{simple_residual_block.3} parent=71 // pred_region
          %s3600 = sand.u32 %s34, 1
          %s3601 = scalar_lea.sflag [#allocation12], %s3600
          %s3602 = sand.u32 %s183, 1
          %s3603 = scalar_lea.vmem [#allocation13], %s3602
          %3604 = dma.done %s3601, 16
        $region84: #{simple_residual_block.3} parent=71 // pred_fallthru
          _
        // Predicated region
        $region85: #{simple_residual_block.3} parent=71 // pred_check
          %p3605 = pneg %p224
        $region86: #{simple_residual_block.3} parent=71 // pred_check_branch
          %3607 = sbr.rel (%p3605) target = $region88
        $region87: #{simple_residual_block.3} parent=71 // pred_region
          %s3608 = sand.u32 %s209, 1
          %s3609 = scalar_lea.sflag [#allocation15], %s3608
          %s3610 = sand.u32 %s209, 1
          %s3611 = scalar_lea.vmem [#allocation14], %s3610
          %3612 = dma.done %s3609, 16
        $region88: #{simple_residual_block.3} parent=71 // pred_fallthru
          _
      $region72: #{simple_residual_block.3} parent=5 // pred_fallthru
        _
    $region6: #{simple_residual_block.3} parent=1 // loop_footer
      %s32 = sadd.s32 1, %s28
    $region7: #{simple_residual_block.3} parent=1 // loop_footer_branch
      %27 = sbr.rel target = $region3
    $region8: #{simple_residual_block.3} parent=1 // loop_exit
      _
    %3613 = vsyncpa [#allocation3], 1
    %s3614 = scalar_lea.sflag [#allocation3], 1
    %3615 = vsyncpa %s3614, 1
    %3616 = vsyncpa [#allocation6], 1
    %3617 = vsyncpa [#allocation9], 1
    %3618 = vsyncpa [#allocation4], 1
    %s3619 = scalar_lea.sflag [#allocation4], 1
    %3620 = vsyncpa %s3619, 1
    %3621 = vsyncpa [#allocation12], 1
    %s3622 = scalar_lea.sflag [#allocation12], 1
    %3623 = vsyncpa %s3622, 1
    %3624 = vsyncpa [#allocation15], 1
    %s3625 = scalar_lea.sflag [#allocation15], 1
    %3626 = vsyncpa %s3625, 1

// kernel: simple_residual_block.4
$region0: #{simple_residual_block.4}
  #allocation0 [shape = 'u32[]', space=smem, size = 0x4, offset = 0x4, fixed_abs, tag = 'smem constant byte address 0x4 - core index']
  #allocation1 [shape = 'u32[144,128]{1,0:T(1,128)}', space=vmem, size = 0x12000, scoped, tag = 'internal scratch']
  #allocation2 [shape = 'f32[18,18,128]{2,1,0:T(8,128)}', space=vmem, size = 0x36000, scoped, tag = 'scratch operand']
  %s0 = inlined_call_operand.hbm [shape: f32[2,256,128], index: 0, kind: input, shape index: {}]
  %s1 = inlined_call_operand.hbm [shape: f32[2,1,128], index: 1, kind: input, shape index: {}]
  %s2 = inlined_call_operand.hbm [shape: f32[2,1,128], index: 2, kind: input, shape index: {}]
  %s3 = inlined_call_operand.hbm [shape: f32[1,128], index: 3, kind: input, shape index: {}]
  %s4 = inlined_call_operand.hbm [shape: f32[1,128], index: 4, kind: input, shape index: {}]
  %s5 = inlined_call_operand.hbm [shape: f32[9,128,128], index: 5, kind: input, shape index: {}]
  %s6 = inlined_call_operand.hbm [shape: f32[2,256,128], index: 6, kind: output, shape index: {0}]
  %s7 = inlined_call_operand.hbm [shape: f32[2,1,128], index: 7, kind: output, shape index: {1}]
  %s8 = inlined_call_operand.hbm [shape: f32[2,1,128], index: 8, kind: output, shape index: {2}]
  %9 = xla_tuple %s6, %s7, %s8
  %s10 = sld [smem:[#allocation0]]
  $region97: #{simple_residual_block.4} parent=0
    _
  %s12 = ssub.s32 1, %s10
  %s13 = scalar_select 0, %s12, %s10
  $region1: #{simple_residual_block.4} parent=0
    #allocation3 [shape = 'u8[262144]{0}', space=vmem, size = 0x40000, scoped, tag = 'input window, operand 0']
    #allocation4 [shape = 's32[2]{0}', space=sflag, size = 0x8, scoped, tag = 'scoped memory for simple_residual_block.4']
    #allocation5 [shape = 's32[2]{0}', space=sflag, size = 0x8, scoped, tag = 'scoped memory for simple_residual_block.4']
    #allocation6 [shape = 'u8[1024]{0}', space=vmem, size = 0x400, scoped, tag = 'input window, operand 1, single buffered']
    #allocation7 [shape = 's32[1]{0}', space=sflag, size = 0x4, scoped, tag = 'scoped memory for simple_residual_block.4']
    #allocation8 [shape = 'u8[1024]{0}', space=vmem, size = 0x400, scoped, tag = 'input window, operand 2, single buffered']
    #allocation9 [shape = 'u8[512]{0}', space=vmem, size = 0x400, scoped, tag = 'input window, operand 3, single buffered']
    #allocation10 [shape = 's32[1]{0}', space=sflag, size = 0x4, scoped, tag = 'scoped memory for simple_residual_block.4']
    #allocation11 [shape = 'u8[512]{0}', space=vmem, size = 0x400, scoped, tag = 'input window, operand 4, single buffered']
    #allocation12 [shape = 'u8[589824]{0}', space=vmem, size = 0x90000, scoped, tag = 'input window, operand 5, single buffered']
    #allocation13 [shape = 's32[1]{0}', space=sflag, size = 0x4, scoped, tag = 'scoped memory for simple_residual_block.4']
    #allocation14 [shape = 'u8[262144]{0}', space=vmem, size = 0x40000, scoped, tag = 'output window, operand 0']
    #allocation15 [shape = 'u8[1024]{0}', space=vmem, size = 0x400, scoped, tag = 'output window, operand 1']
    #allocation16 [shape = 's32[2]{0}', space=sflag, size = 0x8, scoped, tag = 'scoped memory for simple_residual_block.4']
    #allocation17 [shape = 'u8[1024]{0}', space=vmem, size = 0x400, scoped, tag = 'output window, operand 2']
    %14 = vsyncpa [#allocation4], 0
    %s15 = scalar_lea.sflag [#allocation4], 1
    %16 = vsyncpa %s15, 0
    %17 = vsyncpa [#allocation7], 0
    %18 = vsyncpa [#allocation10], 0
    %19 = vsyncpa [#allocation13], 0
    %20 = vsyncpa [#allocation5], 0
    %s21 = scalar_lea.sflag [#allocation5], 1
    %22 = vsyncpa %s21, 0
    %23 = vsyncpa [#allocation16], 0
    %s24 = scalar_lea.sflag [#allocation16], 1
    %25 = vsyncpa %s24, 0
    loop: start=0, step=1, limit=4
    $region2: #{simple_residual_block.4} parent=1 // loop_pre_header
      _
    $region3: #{simple_residual_block.4} parent=1 // loop_header
      %s27 = sphi 0, %s31
      %p28 = scmp.ge.s32.totalorder %s27, 4
      %s37 = sphi 0, %s39
      %s40 = sphi 0, %s37
      %s41 = sphi 0, %s40
      %s57 = sphi 0, %s41
      %s61 = sphi 0, %s61
      %s63 = sphi 0, %s61
      %s64 = sphi 0, %s63
      %s78 = sphi 0, %s64
      %s82 = sphi 0, %s82
      %s84 = sphi 0, %s82
      %s85 = sphi 0, %s84
      %s99 = sphi 0, %s85
      %s103 = sphi 0, %s103
      %s105 = sphi 0, %s103
      %s106 = sphi 0, %s105
      %s120 = sphi 0, %s106
      %s124 = sphi 0, %s124
      %s126 = sphi 0, %s124
      %s127 = sphi 0, %s126
      %s141 = sphi 0, %s127
      %s145 = sphi 0, %s145
      %s147 = sphi 0, %s145
      %s148 = sphi 0, %s147
      %s162 = sphi 0, %s148
      %s168 = sphi 0, %s170
      %s171 = sphi 0, %s168
      %s172 = sphi 0, %s171
      %s188 = sphi 0, %s172
      %s194 = sphi 0, %s196
      %s197 = sphi 0, %s194
      %s198 = sphi 0, %s197
      %s214 = sphi 0, %s198
      %s220 = sphi 0, %s222
      %s223 = sphi 0, %s220
      %s224 = sphi 0, %s223
      %s240 = sphi 0, %s224
    $region4: #{simple_residual_block.4} parent=1 // loop_header_branch
      %30 = sbr.rel (%p28) target = $region8
    $region5: #{simple_residual_block.4} parent=1 // loop_body
      %s32 = ssub.s32 %s27, 1
      %s33 = ssub.s32 %s27, 2
      %s34 = sadd.s32 %s27, 1
      %s35 = ssub.s32 %s27, %s34
      %p36 = scmp.eq.s32.totalorder %s35, 0
      %s38 = sadd.s32 %s37, 1
      %s39 = scalar_select %p36, %s37, %s38
      %p42 = pneg %p36
      %p43 = scmp.eq.s32.totalorder %s27, 1
      %p44 = por %p42, %p43
      %p45 = scmp.ne.s32.totalorder %s37, %s40
      %p46 = scmp.eq.s32.totalorder %s27, 0
      %p47 = por %p45, %p46
      %p48 = scmp.ne.s32.totalorder %s37, %s40
      %p49 = scmp.eq.s32.totalorder %s32, 1
      %p50 = por %p48, %p49
      %p51 = scmp.ne.s32.totalorder %s40, %s41
      %p52 = scmp.eq.s32.totalorder %s32, 0
      %p53 = por %p51, %p52
      %p54 = scmp.ne.s32.totalorder %s40, %s41
      %p55 = scmp.eq.s32.totalorder %s33, 1
      %p56 = por %p54, %p55
      %p58 = scmp.ne.s32.totalorder %s41, %s57
      %p59 = scmp.eq.s32.totalorder %s33, 0
      %p60 = por %p58, %p59
      %s62 = sadd.s32 %s61, 1
      %p65 = scmp.eq.s32.totalorder %s27, 1
      %p66 = scmp.ne.s32.totalorder %s61, %s63
      %p67 = scmp.eq.s32.totalorder %s27, 0
      %p68 = por %p66, %p67
      %p69 = scmp.ne.s32.totalorder %s61, %s63
      %p70 = scmp.eq.s32.totalorder %s32, 1
      %p71 = por %p69, %p70
      %p72 = scmp.ne.s32.totalorder %s63, %s64
      %p73 = scmp.eq.s32.totalorder %s32, 0
      %p74 = por %p72, %p73
      %p75 = scmp.ne.s32.totalorder %s63, %s64
      %p76 = scmp.eq.s32.totalorder %s33, 1
      %p77 = por %p75, %p76
      %p79 = scmp.ne.s32.totalorder %s64, %s78
      %p80 = scmp.eq.s32.totalorder %s33, 0
      %p81 = por %p79, %p80
      %s83 = sadd.s32 %s82, 1
      %p86 = scmp.eq.s32.totalorder %s27, 1
      %p87 = scmp.ne.s32.totalorder %s82, %s84
      %p88 = scmp.eq.s32.totalorder %s27, 0
      %p89 = por %p87, %p88
      %p90 = scmp.ne.s32.totalorder %s82, %s84
      %p91 = scmp.eq.s32.totalorder %s32, 1
      %p92 = por %p90, %p91
      %p93 = scmp.ne.s32.totalorder %s84, %s85
      %p94 = scmp.eq.s32.totalorder %s32, 0
      %p95 = por %p93, %p94
      %p96 = scmp.ne.s32.totalorder %s84, %s85
      %p97 = scmp.eq.s32.totalorder %s33, 1
      %p98 = por %p96, %p97
      %p100 = scmp.ne.s32.totalorder %s85, %s99
      %p101 = scmp.eq.s32.totalorder %s33, 0
      %p102 = por %p100, %p101
      %s104 = sadd.s32 %s103, 1
      %p107 = scmp.eq.s32.totalorder %s27, 1
      %p108 = scmp.ne.s32.totalorder %s103, %s105
      %p109 = scmp.eq.s32.totalorder %s27, 0
      %p110 = por %p108, %p109
      %p111 = scmp.ne.s32.totalorder %s103, %s105
      %p112 = scmp.eq.s32.totalorder %s32, 1
      %p113 = por %p111, %p112
      %p114 = scmp.ne.s32.totalorder %s105, %s106
      %p115 = scmp.eq.s32.totalorder %s32, 0
      %p116 = por %p114, %p115
      %p117 = scmp.ne.s32.totalorder %s105, %s106
      %p118 = scmp.eq.s32.totalorder %s33, 1
      %p119 = por %p117, %p118
      %p121 = scmp.ne.s32.totalorder %s106, %s120
      %p122 = scmp.eq.s32.totalorder %s33, 0
      %p123 = por %p121, %p122
      %s125 = sadd.s32 %s124, 1
      %p128 = scmp.eq.s32.totalorder %s27, 1
      %p129 = scmp.ne.s32.totalorder %s124, %s126
      %p130 = scmp.eq.s32.totalorder %s27, 0
      %p131 = por %p129, %p130
      %p132 = scmp.ne.s32.totalorder %s124, %s126
      %p133 = scmp.eq.s32.totalorder %s32, 1
      %p134 = por %p132, %p133
      %p135 = scmp.ne.s32.totalorder %s126, %s127
      %p136 = scmp.eq.s32.totalorder %s32, 0
      %p137 = por %p135, %p136
      %p138 = scmp.ne.s32.totalorder %s126, %s127
      %p139 = scmp.eq.s32.totalorder %s33, 1
      %p140 = por %p138, %p139
      %p142 = scmp.ne.s32.totalorder %s127, %s141
      %p143 = scmp.eq.s32.totalorder %s33, 0
      %p144 = por %p142, %p143
      %s146 = sadd.s32 %s145, 1
      %p149 = scmp.eq.s32.totalorder %s27, 1
      %p150 = scmp.ne.s32.totalorder %s145, %s147
      %p151 = scmp.eq.s32.totalorder %s27, 0
      %p152 = por %p150, %p151
      %p153 = scmp.ne.s32.totalorder %s145, %s147
      %p154 = scmp.eq.s32.totalorder %s32, 1
      %p155 = por %p153, %p154
      %p156 = scmp.ne.s32.totalorder %s147, %s148
      %p157 = scmp.eq.s32.totalorder %s32, 0
      %p158 = por %p156, %p157
      %p159 = scmp.ne.s32.totalorder %s147, %s148
      %p160 = scmp.eq.s32.totalorder %s33, 1
      %p161 = por %p159, %p160
      %p163 = scmp.ne.s32.totalorder %s148, %s162
      %p164 = scmp.eq.s32.totalorder %s33, 0
      %p165 = por %p163, %p164
      %s166 = ssub.s32 %s27, %s34
      %p167 = scmp.eq.s32.totalorder %s166, 0
      %s169 = sadd.s32 %s168, 1
      %s170 = scalar_select %p167, %s168, %s169
      %p173 = pneg %p167
      %p174 = scmp.eq.s32.totalorder %s27, 1
      %p175 = por %p173, %p174
      %p176 = scmp.ne.s32.totalorder %s168, %s171
      %p177 = scmp.eq.s32.totalorder %s27, 0
      %p178 = por %p176, %p177
      %p179 = scmp.ne.s32.totalorder %s168, %s171
      %p180 = scmp.eq.s32.totalorder %s32, 1
      %p181 = por %p179, %p180
      %p182 = scmp.ne.s32.totalorder %s171, %s172
      %p183 = scmp.eq.s32.totalorder %s32, 0
      %p184 = por %p182, %p183
      %p185 = scmp.ne.s32.totalorder %s171, %s172
      %p186 = scmp.eq.s32.totalorder %s33, 1
      %p187 = por %p185, %p186
      %p189 = scmp.ne.s32.totalorder %s172, %s188
      %p190 = scmp.eq.s32.totalorder %s33, 0
      %p191 = por %p189, %p190
      %s192 = ssub.s32 %s27, %s34
      %p193 = scmp.eq.s32.totalorder %s192, 0
      %s195 = sadd.s32 %s194, 1
      %s196 = scalar_select %p193, %s194, %s195
      %p199 = pneg %p193
      %p200 = scmp.eq.s32.totalorder %s27, 1
      %p201 = por %p199, %p200
      %p202 = scmp.ne.s32.totalorder %s194, %s197
      %p203 = scmp.eq.s32.totalorder %s27, 0
      %p204 = por %p202, %p203
      %p205 = scmp.ne.s32.totalorder %s194, %s197
      %p206 = scmp.eq.s32.totalorder %s32, 1
      %p207 = por %p205, %p206
      %p208 = scmp.ne.s32.totalorder %s197, %s198
      %p209 = scmp.eq.s32.totalorder %s32, 0
      %p210 = por %p208, %p209
      %p211 = scmp.ne.s32.totalorder %s197, %s198
      %p212 = scmp.eq.s32.totalorder %s33, 1
      %p213 = por %p211, %p212
      %p215 = scmp.ne.s32.totalorder %s198, %s214
      %p216 = scmp.eq.s32.totalorder %s33, 0
      %p217 = por %p215, %p216
      %s218 = ssub.s32 %s27, %s34
      %p219 = scmp.eq.s32.totalorder %s218, 0
      %s221 = sadd.s32 %s220, 1
      %s222 = scalar_select %p219, %s220, %s221
      %p225 = pneg %p219
      %p226 = scmp.eq.s32.totalorder %s27, 1
      %p227 = por %p225, %p226
      %p228 = scmp.ne.s32.totalorder %s220, %s223
      %p229 = scmp.eq.s32.totalorder %s27, 0
      %p230 = por %p228, %p229
      %p231 = scmp.ne.s32.totalorder %s220, %s223
      %p232 = scmp.eq.s32.totalorder %s32, 1
      %p233 = por %p231, %p232
      %p234 = scmp.ne.s32.totalorder %s223, %s224
      %p235 = scmp.eq.s32.totalorder %s32, 0
      %p236 = por %p234, %p235
      %p237 = scmp.ne.s32.totalorder %s223, %s224
      %p238 = scmp.eq.s32.totalorder %s33, 1
      %p239 = por %p237, %p238
      %p241 = scmp.ne.s32.totalorder %s224, %s240
      %p242 = scmp.eq.s32.totalorder %s33, 0
      %p243 = por %p241, %p242
      %p244 = scmp.le.s32.totalorder 1, %s27
      %p245 = scmp.lt.s32.totalorder %s27, 3
      %p246 = pnand %p244, %p245
      %p247 = pneg %p246
      // Predicated region
      $region9: #{simple_residual_block.4} parent=5 // pred_check
        _
      $region10: #{simple_residual_block.4} parent=5 // pred_check_branch
        %249 = sbr.rel (%p246) target = $region12
      $region11: #{simple_residual_block.4} parent=5 // pred_region
        %s250 = ssub.s32 %s27, 1
        // Predicated region
        $region13: #{simple_residual_block.4} parent=11 // pred_check
          %p251 = pneg %p74
        $region14: #{simple_residual_block.4} parent=11 // pred_check_branch
          %253 = sbr.rel (%p251) target = $region16
        $region15: #{simple_residual_block.4} parent=11 // pred_region
          %s255 = ssub.s32 32, 32
          %256 = vsyncadd [#allocation7], %s255
          %s257 = sshll.u32 [#allocation6], 4
          %s258 = int_to_ptr.vmem [resolvable:$true] %s257
          %263 = dma.hbm_to_vmem [thread:$0]  %s1, 32, %s258, [#allocation7], 16, 16, 1
        $region16: #{simple_residual_block.4} parent=11 // pred_fallthru
          _
        // Predicated region
        $region17: #{simple_residual_block.4} parent=11 // pred_check
          %p264 = pneg %p95
        $region18: #{simple_residual_block.4} parent=11 // pred_check_branch
          %266 = sbr.rel (%p264) target = $region20
        $region19: #{simple_residual_block.4} parent=11 // pred_region
          %s268 = ssub.s32 32, 32
          %269 = vsyncadd [#allocation7], %s268
          %s270 = sshll.u32 [#allocation8], 4
          %s271 = int_to_ptr.vmem [resolvable:$true] %s270
          %276 = dma.hbm_to_vmem [thread:$0]  %s2, 32, %s271, [#allocation7], 16, 16, 1
        $region20: #{simple_residual_block.4} parent=11 // pred_fallthru
          _
        // Predicated region
        $region21: #{simple_residual_block.4} parent=11 // pred_check
          %p277 = pneg %p116
        $region22: #{simple_residual_block.4} parent=11 // pred_check_branch
          %279 = sbr.rel (%p277) target = $region24
        $region23: #{simple_residual_block.4} parent=11 // pred_region
          %s281 = ssub.s32 16, 16
          %282 = vsyncadd [#allocation10], %s281
          %s284 = sshll.u32 [#allocation9], 4
          %s285 = int_to_ptr.vmem [resolvable:$true] %s284
          %287 = dma.hbm_to_vmem [thread:$0]  %s3, 16, %s285, [#allocation10]
        $region24: #{simple_residual_block.4} parent=11 // pred_fallthru
          _
        // Predicated region
        $region25: #{simple_residual_block.4} parent=11 // pred_check
          %p288 = pneg %p137
        $region26: #{simple_residual_block.4} parent=11 // pred_check_branch
          %290 = sbr.rel (%p288) target = $region28
        $region27: #{simple_residual_block.4} parent=11 // pred_region
          %s292 = ssub.s32 16, 16
          %293 = vsyncadd [#allocation10], %s292
          %s295 = sshll.u32 [#allocation11], 4
          %s296 = int_to_ptr.vmem [resolvable:$true] %s295
          %298 = dma.hbm_to_vmem [thread:$0]  %s4, 16, %s296, [#allocation10]
        $region28: #{simple_residual_block.4} parent=11 // pred_fallthru
          _
        // Predicated region
        $region29: #{simple_residual_block.4} parent=11 // pred_check
          %p299 = pneg %p158
        $region30: #{simple_residual_block.4} parent=11 // pred_check_branch
          %301 = sbr.rel (%p299) target = $region32
        $region31: #{simple_residual_block.4} parent=11 // pred_region
          %s303 = ssub.s32 18432, 18432
          %304 = vsyncadd [#allocation13], %s303
          %s305 = sshll.u32 [#allocation12], 4
          %s306 = int_to_ptr.vmem [resolvable:$true] %s305
          %311 = dma.hbm_to_vmem [thread:$0]  %s5, 18432, %s306, [#allocation13], 128, 128, 8
        $region32: #{simple_residual_block.4} parent=11 // pred_fallthru
          _
      $region12: #{simple_residual_block.4} parent=5 // pred_fallthru
        _
      %p312 = scmp.lt.s32.totalorder %s27, 2
      // Predicated region
      $region33: #{simple_residual_block.4} parent=5 // pred_check
        %p313 = pneg %p312
      $region34: #{simple_residual_block.4} parent=5 // pred_check_branch
        %315 = sbr.rel (%p313) target = $region36
      $region35: #{simple_residual_block.4} parent=5 // pred_region
        // Predicated region
        $region37: #{simple_residual_block.4} parent=35 // pred_check
          %p316 = pneg %p47
        $region38: #{simple_residual_block.4} parent=35 // pred_check_branch
          %318 = sbr.rel (%p316) target = $region40
        $region39: #{simple_residual_block.4} parent=35 // pred_region
          %s319 = sand.u32 %s37, 1
          %s320 = scalar_lea.sflag [#allocation4], %s319
          %s321 = sand.u32 %s37, 1
          %s322 = smul.addr %s321, 256
          %s323 = scalar_lea.vmem [#allocation3], %s322
          %s325 = ssub.s32 4096, 4096
          %326 = vsyncadd %s320, %s325
          %s327 = smul.addr %s27, 32
          %s328 = smul.addr %s327, 128
          %s329 = scalar_lea.hbm %s0, %s328
          %s330 = sshll.u32 %s323, 4
          %s331 = int_to_ptr.vmem [resolvable:$true] %s330
          %336 = dma.hbm_to_vmem [thread:$0]  %s329, 4096, %s331, %s320, 128, 128, 8
        $region40: #{simple_residual_block.4} parent=35 // pred_fallthru
          _
      $region36: #{simple_residual_block.4} parent=5 // pred_fallthru
        _
      %p337 = scmp.le.s32.totalorder 1, %s27
      %p338 = scmp.lt.s32.totalorder %s27, 3
      %p339 = pnand %p337, %p338
      %p340 = pneg %p339
      // Predicated region
      $region41: #{simple_residual_block.4} parent=5 // pred_check
        _
      $region42: #{simple_residual_block.4} parent=5 // pred_check_branch
        %342 = sbr.rel (%p339) target = $region44
      $region43: #{simple_residual_block.4} parent=5 // pred_region
        %s343 = ssub.s32 %s27, 1
        %s344 = sand.u32 %s40, 1
        %s345 = scalar_lea.sflag [#allocation4], %s344
        %s346 = sand.u32 %s40, 1
        %s347 = smul.addr %s346, 256
        %s348 = scalar_lea.vmem [#allocation3], %s347
        // Predicated region
        $region45: #{simple_residual_block.4} parent=43 // pred_check
          %p349 = pneg %p53
        $region46: #{simple_residual_block.4} parent=43 // pred_check_branch
          %351 = sbr.rel (%p349) target = $region48
        $region47: #{simple_residual_block.4} parent=43 // pred_region
          %352 = dma.done %s345, 4096
        $region48: #{simple_residual_block.4} parent=43 // pred_fallthru
          _
        // Predicated region
        $region49: #{simple_residual_block.4} parent=43 // pred_check
          %p353 = pneg %p74
        $region50: #{simple_residual_block.4} parent=43 // pred_check_branch
          %355 = sbr.rel (%p353) target = $region52
        $region51: #{simple_residual_block.4} parent=43 // pred_region
          %356 = dma.done [#allocation7], 32
        $region52: #{simple_residual_block.4} parent=43 // pred_fallthru
          _
        // Predicated region
        $region53: #{simple_residual_block.4} parent=43 // pred_check
          %p357 = pneg %p95
        $region54: #{simple_residual_block.4} parent=43 // pred_check_branch
          %359 = sbr.rel (%p357) target = $region56
        $region55: #{simple_residual_block.4} parent=43 // pred_region
          %360 = dma.done [#allocation7], 32
        $region56: #{simple_residual_block.4} parent=43 // pred_fallthru
          _
        // Predicated region
        $region57: #{simple_residual_block.4} parent=43 // pred_check
          %p361 = pneg %p116
        $region58: #{simple_residual_block.4} parent=43 // pred_check_branch
          %363 = sbr.rel (%p361) target = $region60
        $region59: #{simple_residual_block.4} parent=43 // pred_region
          %364 = dma.done [#allocation10], 16
        $region60: #{simple_residual_block.4} parent=43 // pred_fallthru
          _
        // Predicated region
        $region61: #{simple_residual_block.4} parent=43 // pred_check
          %p365 = pneg %p137
        $region62: #{simple_residual_block.4} parent=43 // pred_check_branch
          %367 = sbr.rel (%p365) target = $region64
        $region63: #{simple_residual_block.4} parent=43 // pred_region
          %368 = dma.done [#allocation10], 16
        $region64: #{simple_residual_block.4} parent=43 // pred_fallthru
          _
        // Predicated region
        $region65: #{simple_residual_block.4} parent=43 // pred_check
          %p369 = pneg %p158
        $region66: #{simple_residual_block.4} parent=43 // pred_check_branch
          %371 = sbr.rel (%p369) target = $region68
        $region67: #{simple_residual_block.4} parent=43 // pred_region
          %372 = dma.done [#allocation13], 18432
        $region68: #{simple_residual_block.4} parent=43 // pred_fallthru
          _
        %s373 = sand.u32 %s40, 1
        %s374 = scalar_lea.sflag [#allocation4], %s373
        %s375 = sand.u32 %s40, 1
        %s376 = smul.addr %s375, 256
        %s377 = scalar_lea.vmem [#allocation3], %s376
        %p378 = pneg %p53
        %p379 = pneg %p50
        %p380 = pneg %p74
        %p381 = pneg %p71
        %p382 = pneg %p95
        %p383 = pneg %p92
        %p384 = pneg %p116
        %p385 = pneg %p113
        %p386 = pneg %p137
        %p387 = pneg %p134
        %p388 = pneg %p158
        %p389 = pneg %p155
        %p390 = pneg %p184
        %p391 = pneg %p181
        %s392 = sand.u32 %s171, 1
        %s393 = scalar_lea.sflag [#allocation5], %s392
        %s394 = sand.u32 %s171, 1
        %s395 = smul.addr %s394, 256
        %s396 = scalar_lea.vmem [#allocation14], %s395
        %p397 = pneg %p210
        %p398 = pneg %p207
        %s399 = sand.u32 %s32, 1
        %s400 = scalar_lea.sflag [#allocation16], %s399
        %s401 = sand.u32 %s197, 1
        %s402 = scalar_lea.vmem [#allocation15], %s401
        %p403 = pneg %p236
        %p404 = pneg %p233
        %s405 = sand.u32 %s32, 1
        %s406 = scalar_lea.sflag [#allocation16], %s405
        %s407 = sand.u32 %s223, 1
        %s408 = scalar_lea.vmem [#allocation17], %s407
        %v409 = vld [vmem:[#allocation6] sm:$0x1]
        %v410 = vld [vmem:[#allocation6 + $0x1] sm:$0x1]
        %vm411 = vcmask 1040384
        %v412 = vsel %vm411, %v409, 0.0
        %v413 = vsel %vm411, %v410, 0.0
        %v414 = vadd.f32 %v412, %v413
        %v415 = vmul.f32 %v414, 0.001953125
        %v416 = vld [vmem:[#allocation8] sm:$0x1]
        %v417 = vld [vmem:[#allocation8 + $0x1] sm:$0x1]
        %v418 = vsel %vm411, %v416, 0.0
        %v419 = vsel %vm411, %v417, 0.0
        %v420 = vadd.f32 %v418, %v419
        %v421 = vmul.f32 %v420, 0.001953125
        %v422 = vmul.f32 %v415, %v415
        %v423 = vsub.f32 %v421, %v422
        %v424 = vld [vmem:[#allocation9] sm:$0x1]
        %v425 = vadd.f32 %v423, 1e-05
        %v426 = vrsqrt.pop %v425
        %v427 = vmul.f32 %v424, %v426
        %v428 = vld [vmem:[#allocation11] sm:$0x1]
        %v429 = vmul.f32 %v415, %v427
        %v430 = vsub.f32 %v428, %v429
        %v431 = vld [vmem:[%s348] sm:$0xff]
        %v432 = vld [vmem:[%s348 + $0x8] sm:$0xff]
        %v433 = vld [vmem:[%s348 + $0x10] sm:$0xff]
        %v434 = vld [vmem:[%s348 + $0x18] sm:$0xff]
        %v435 = vld [vmem:[%s348 + $0x20] sm:$0xff]
        %v436 = vld [vmem:[%s348 + $0x28] sm:$0xff]
        %v437 = vld [vmem:[%s348 + $0x30] sm:$0xff]
        %v438 = vld [vmem:[%s348 + $0x38] sm:$0xff]
        %v439 = vld [vmem:[%s348 + $0x40] sm:$0xff]
        %v440 = vld [vmem:[%s348 + $0x48] sm:$0xff]
        %v441 = vld [vmem:[%s348 + $0x50] sm:$0xff]
        %v442 = vld [vmem:[%s348 + $0x58] sm:$0xff]
        %v443 = vld [vmem:[%s348 + $0x60] sm:$0xff]
        %v444 = vld [vmem:[%s348 + $0x68] sm:$0xff]
        %v445 = vld [vmem:[%s348 + $0x70] sm:$0xff]
        %v446 = vld [vmem:[%s348 + $0x78] sm:$0xff]
        %v447 = vld [vmem:[%s348 + $0x80] sm:$0xff]
        %v448 = vld [vmem:[%s348 + $0x88] sm:$0xff]
        %v449 = vld [vmem:[%s348 + $0x90] sm:$0xff]
        %v450 = vld [vmem:[%s348 + $0x98] sm:$0xff]
        %v451 = vld [vmem:[%s348 + $0xa0] sm:$0xff]
        %v452 = vld [vmem:[%s348 + $0xa8] sm:$0xff]
        %v453 = vld [vmem:[%s348 + $0xb0] sm:$0xff]
        %v454 = vld [vmem:[%s348 + $0xb8] sm:$0xff]
        %v455 = vld [vmem:[%s348 + $0xc0] sm:$0xff]
        %v456 = vld [vmem:[%s348 + $0xc8] sm:$0xff]
        %v457 = vld [vmem:[%s348 + $0xd0] sm:$0xff]
        %v458 = vld [vmem:[%s348 + $0xd8] sm:$0xff]
        %v459 = vld [vmem:[%s348 + $0xe0] sm:$0xff]
        %v460 = vld [vmem:[%s348 + $0xe8] sm:$0xff]
        %v461 = vld [vmem:[%s348 + $0xf0] sm:$0xff]
        %v462 = vld [vmem:[%s348 + $0xf8] sm:$0xff]
        %v464 = vlaneseq
        %v465 = vshrl.u32 %v464, 7
        %v466 = vsub.s32 0, %v465
        %v467 = vrot.slane %v427, %v466
        %v469 = vmul.f32 %v431, %v467
        %v470 = vmul.f32 %v432, %v467
        %v471 = vmul.f32 %v433, %v467
        %v472 = vmul.f32 %v434, %v467
        %v473 = vmul.f32 %v435, %v467
        %v474 = vmul.f32 %v436, %v467
        %v475 = vmul.f32 %v437, %v467
        %v476 = vmul.f32 %v438, %v467
        %v477 = vmul.f32 %v439, %v467
        %v478 = vmul.f32 %v440, %v467
        %v479 = vmul.f32 %v441, %v467
        %v480 = vmul.f32 %v442, %v467
        %v481 = vmul.f32 %v443, %v467
        %v482 = vmul.f32 %v444, %v467
        %v483 = vmul.f32 %v445, %v467
        %v484 = vmul.f32 %v446, %v467
        %v485 = vmul.f32 %v447, %v467
        %v486 = vmul.f32 %v448, %v467
        %v487 = vmul.f32 %v449, %v467
        %v488 = vmul.f32 %v450, %v467
        %v489 = vmul.f32 %v451, %v467
        %v490 = vmul.f32 %v452, %v467
        %v491 = vmul.f32 %v453, %v467
        %v492 = vmul.f32 %v454, %v467
        %v493 = vmul.f32 %v455, %v467
        %v494 = vmul.f32 %v456, %v467
        %v495 = vmul.f32 %v457, %v467
        %v496 = vmul.f32 %v458, %v467
        %v497 = vmul.f32 %v459, %v467
        %v498 = vmul.f32 %v460, %v467
        %v499 = vmul.f32 %v461, %v467
        %v500 = vmul.f32 %v462, %v467
        %v502 = vlaneseq
        %v503 = vshrl.u32 %v502, 7
        %v504 = vsub.s32 0, %v503
        %v505 = vrot.slane %v430, %v504
        %v507 = vadd.f32 %v469, %v505
        %v508 = vadd.f32 %v470, %v505
        %v509 = vadd.f32 %v471, %v505
        %v510 = vadd.f32 %v472, %v505
        %v511 = vadd.f32 %v473, %v505
        %v512 = vadd.f32 %v474, %v505
        %v513 = vadd.f32 %v475, %v505
        %v514 = vadd.f32 %v476, %v505
        %v515 = vadd.f32 %v477, %v505
        %v516 = vadd.f32 %v478, %v505
        %v517 = vadd.f32 %v479, %v505
        %v518 = vadd.f32 %v480, %v505
        %v519 = vadd.f32 %v481, %v505
        %v520 = vadd.f32 %v482, %v505
        %v521 = vadd.f32 %v483, %v505
        %v522 = vadd.f32 %v484, %v505
        %v523 = vadd.f32 %v485, %v505
        %v524 = vadd.f32 %v486, %v505
        %v525 = vadd.f32 %v487, %v505
        %v526 = vadd.f32 %v488, %v505
        %v527 = vadd.f32 %v489, %v505
        %v528 = vadd.f32 %v490, %v505
        %v529 = vadd.f32 %v491, %v505
        %v530 = vadd.f32 %v492, %v505
        %v531 = vadd.f32 %v493, %v505
        %v532 = vadd.f32 %v494, %v505
        %v533 = vadd.f32 %v495, %v505
        %v534 = vadd.f32 %v496, %v505
        %v535 = vadd.f32 %v497, %v505
        %v536 = vadd.f32 %v498, %v505
        %v537 = vadd.f32 %v499, %v505
        %v538 = vadd.f32 %v500, %v505
        %v539 = vmax.f32 %v507, 0.0
        %v540 = vmax.f32 %v508, 0.0
        %v541 = vmax.f32 %v509, 0.0
        %v542 = vmax.f32 %v510, 0.0
        %v543 = vmax.f32 %v511, 0.0
        %v544 = vmax.f32 %v512, 0.0
        %v545 = vmax.f32 %v513, 0.0
        %v546 = vmax.f32 %v514, 0.0
        %v547 = vmax.f32 %v515, 0.0
        %v548 = vmax.f32 %v516, 0.0
        %v549 = vmax.f32 %v517, 0.0
        %v550 = vmax.f32 %v518, 0.0
        %v551 = vmax.f32 %v519, 0.0
        %v552 = vmax.f32 %v520, 0.0
        %v553 = vmax.f32 %v521, 0.0
        %v554 = vmax.f32 %v522, 0.0
        %v555 = vmax.f32 %v523, 0.0
        %v556 = vmax.f32 %v524, 0.0
        %v557 = vmax.f32 %v525, 0.0
        %v558 = vmax.f32 %v526, 0.0
        %v559 = vmax.f32 %v527, 0.0
        %v560 = vmax.f32 %v528, 0.0
        %v561 = vmax.f32 %v529, 0.0
        %v562 = vmax.f32 %v530, 0.0
        %v563 = vmax.f32 %v531, 0.0
        %v564 = vmax.f32 %v532, 0.0
        %v565 = vmax.f32 %v533, 0.0
        %v566 = vmax.f32 %v534, 0.0
        %v567 = vmax.f32 %v535, 0.0
        %v568 = vmax.f32 %v536, 0.0
        %v569 = vmax.f32 %v537, 0.0
        %v570 = vmax.f32 %v538, 0.0
        %571 = vst [vmem:[#allocation2] sm:$0xff] 0.0
        %572 = vst [vmem:[#allocation2 + $0x8] sm:$0xff] 0.0
        %573 = vst [vmem:[#allocation2 + $0x10] sm:$0x3] 0.0
        %574 = vst [vmem:[#allocation2 + $0x18] sm:$0xff] 0.0
        %575 = vst [vmem:[#allocation2 + $0x20] sm:$0xff] 0.0
        %576 = vst [vmem:[#allocation2 + $0x28] sm:$0x3] 0.0
        %577 = vst [vmem:[#allocation2 + $0x30] sm:$0xff] 0.0
        %578 = vst [vmem:[#allocation2 + $0x38] sm:$0xff] 0.0
        %579 = vst [vmem:[#allocation2 + $0x40] sm:$0x3] 0.0
        %580 = vst [vmem:[#allocation2 + $0x48] sm:$0xff] 0.0
        %581 = vst [vmem:[#allocation2 + $0x50] sm:$0xff] 0.0
        %582 = vst [vmem:[#allocation2 + $0x58] sm:$0x3] 0.0
        %583 = vst [vmem:[#allocation2 + $0x60] sm:$0xff] 0.0
        %584 = vst [vmem:[#allocation2 + $0x68] sm:$0xff] 0.0
        %585 = vst [vmem:[#allocation2 + $0x70] sm:$0x3] 0.0
        %586 = vst [vmem:[#allocation2 + $0x78] sm:$0xff] 0.0
        %587 = vst [vmem:[#allocation2 + $0x80] sm:$0xff] 0.0
        %588 = vst [vmem:[#allocation2 + $0x88] sm:$0x3] 0.0
        %589 = vst [vmem:[#allocation2 + $0x90] sm:$0xff] 0.0
        %590 = vst [vmem:[#allocation2 + $0x98] sm:$0xff] 0.0
        %591 = vst [vmem:[#allocation2 + $0xa0] sm:$0x3] 0.0
        %592 = vst [vmem:[#allocation2 + $0xa8] sm:$0xff] 0.0
        %593 = vst [vmem:[#allocation2 + $0xb0] sm:$0xff] 0.0
        %594 = vst [vmem:[#allocation2 + $0xb8] sm:$0x3] 0.0
        %595 = vst [vmem:[#allocation2 + $0xc0] sm:$0xff] 0.0
        %596 = vst [vmem:[#allocation2 + $0xc8] sm:$0xff] 0.0
        %597 = vst [vmem:[#allocation2 + $0xd0] sm:$0x3] 0.0
        %598 = vst [vmem:[#allocation2 + $0xd8] sm:$0xff] 0.0
        %599 = vst [vmem:[#allocation2 + $0xe0] sm:$0xff] 0.0
        %600 = vst [vmem:[#allocation2 + $0xe8] sm:$0x3] 0.0
        %601 = vst [vmem:[#allocation2 + $0xf0] sm:$0xff] 0.0
        %602 = vst [vmem:[#allocation2 + $0xf8] sm:$0xff] 0.0
        %603 = vst [vmem:[#allocation2 + $0x100] sm:$0x3] 0.0
        %604 = vst [vmem:[#allocation2 + $0x108] sm:$0xff] 0.0
        %605 = vst [vmem:[#allocation2 + $0x110] sm:$0xff] 0.0
        %606 = vst [vmem:[#allocation2 + $0x118] sm:$0x3] 0.0
        %607 = vst [vmem:[#allocation2 + $0x120] sm:$0xff] 0.0
        %608 = vst [vmem:[#allocation2 + $0x128] sm:$0xff] 0.0
        %609 = vst [vmem:[#allocation2 + $0x130] sm:$0x3] 0.0
        %610 = vst [vmem:[#allocation2 + $0x138] sm:$0xff] 0.0
        %611 = vst [vmem:[#allocation2 + $0x140] sm:$0xff] 0.0
        %612 = vst [vmem:[#allocation2 + $0x148] sm:$0x3] 0.0
        %613 = vst [vmem:[#allocation2 + $0x150] sm:$0xff] 0.0
        %614 = vst [vmem:[#allocation2 + $0x158] sm:$0xff] 0.0
        %615 = vst [vmem:[#allocation2 + $0x160] sm:$0x3] 0.0
        %616 = vst [vmem:[#allocation2 + $0x168] sm:$0xff] 0.0
        %617 = vst [vmem:[#allocation2 + $0x170] sm:$0xff] 0.0
        %618 = vst [vmem:[#allocation2 + $0x178] sm:$0x3] 0.0
        %619 = vst [vmem:[#allocation2 + $0x180] sm:$0xff] 0.0
        %620 = vst [vmem:[#allocation2 + $0x188] sm:$0xff] 0.0
        %621 = vst [vmem:[#allocation2 + $0x190] sm:$0x3] 0.0
        %622 = vst [vmem:[#allocation2 + $0x198] sm:$0xff] 0.0
        %623 = vst [vmem:[#allocation2 + $0x1a0] sm:$0xff] 0.0
        %624 = vst [vmem:[#allocation2 + $0x1a8] sm:$0x3] 0.0
        %s625 = scalar_lea.vmem [#allocation2], 24
        %626 = vst [vmem:[%s625 + $0x1] sm:$0xff] %v539
        %627 = vst [vmem:[%s625 + $0x9] sm:$0xff] %v540
        %628 = vst [vmem:[%s625 + $0x19] sm:$0xff] %v541
        %629 = vst [vmem:[%s625 + $0x21] sm:$0xff] %v542
        %630 = vst [vmem:[%s625 + $0x31] sm:$0xff] %v543
        %631 = vst [vmem:[%s625 + $0x39] sm:$0xff] %v544
        %632 = vst [vmem:[%s625 + $0x49] sm:$0xff] %v545
        %633 = vst [vmem:[%s625 + $0x51] sm:$0xff] %v546
        %634 = vst [vmem:[%s625 + $0x61] sm:$0xff] %v547
        %635 = vst [vmem:[%s625 + $0x69] sm:$0xff] %v548
        %636 = vst [vmem:[%s625 + $0x79] sm:$0xff] %v549
        %637 = vst [vmem:[%s625 + $0x81] sm:$0xff] %v550
        %638 = vst [vmem:[%s625 + $0x91] sm:$0xff] %v551
        %639 = vst [vmem:[%s625 + $0x99] sm:$0xff] %v552
        %640 = vst [vmem:[%s625 + $0xa9] sm:$0xff] %v553
        %641 = vst [vmem:[%s625 + $0xb1] sm:$0xff] %v554
        %642 = vst [vmem:[%s625 + $0xc1] sm:$0xff] %v555
        %643 = vst [vmem:[%s625 + $0xc9] sm:$0xff] %v556
        %644 = vst [vmem:[%s625 + $0xd9] sm:$0xff] %v557
        %645 = vst [vmem:[%s625 + $0xe1] sm:$0xff] %v558
        %646 = vst [vmem:[%s625 + $0xf1] sm:$0xff] %v559
        %647 = vst [vmem:[%s625 + $0xf9] sm:$0xff] %v560
        %648 = vst [vmem:[%s625 + $0x109] sm:$0xff] %v561
        %649 = vst [vmem:[%s625 + $0x111] sm:$0xff] %v562
        %650 = vst [vmem:[%s625 + $0x121] sm:$0xff] %v563
        %651 = vst [vmem:[%s625 + $0x129] sm:$0xff] %v564
        %652 = vst [vmem:[%s625 + $0x139] sm:$0xff] %v565
        %653 = vst [vmem:[%s625 + $0x141] sm:$0xff] %v566
        %654 = vst [vmem:[%s625 + $0x151] sm:$0xff] %v567
        %655 = vst [vmem:[%s625 + $0x159] sm:$0xff] %v568
        %656 = vst [vmem:[%s625 + $0x169] sm:$0xff] %v569
        %657 = vst [vmem:[%s625 + $0x171] sm:$0xff] %v570
        %v658 = vld [vmem:[#allocation2] sm:$0xff]
        %v659 = vld [vmem:[#allocation2 + $0x8] sm:$0xff]
        %v660 = vld [vmem:[#allocation2 + $0x18] sm:$0xff]
        %v661 = vld [vmem:[#allocation2 + $0x20] sm:$0xff]
        %v662 = vld [vmem:[#allocation2 + $0x30] sm:$0xff]
        %v663 = vld [vmem:[#allocation2 + $0x38] sm:$0xff]
        %v664 = vld [vmem:[#allocation2 + $0x48] sm:$0xff]
        %v665 = vld [vmem:[#allocation2 + $0x50] sm:$0xff]
        %v666 = vld [vmem:[#allocation2 + $0x60] sm:$0xff]
        %v667 = vld [vmem:[#allocation2 + $0x68] sm:$0xff]
        %v668 = vld [vmem:[#allocation2 + $0x78] sm:$0xff]
        %v669 = vld [vmem:[#allocation2 + $0x80] sm:$0xff]
        %v670 = vld [vmem:[#allocation2 + $0x90] sm:$0xff]
        %v671 = vld [vmem:[#allocation2 + $0x98] sm:$0xff]
        %v672 = vld [vmem:[#allocation2 + $0xa8] sm:$0xff]
        %v673 = vld [vmem:[#allocation2 + $0xb0] sm:$0xff]
        %v674 = vld [vmem:[#allocation2 + $0xc0] sm:$0xff]
        %v675 = vld [vmem:[#allocation2 + $0xc8] sm:$0xff]
        %v676 = vld [vmem:[#allocation2 + $0xd8] sm:$0xff]
        %v677 = vld [vmem:[#allocation2 + $0xe0] sm:$0xff]
        %v678 = vld [vmem:[#allocation2 + $0xf0] sm:$0xff]
        %v679 = vld [vmem:[#allocation2 + $0xf8] sm:$0xff]
        %v680 = vld [vmem:[#allocation2 + $0x108] sm:$0xff]
        %v681 = vld [vmem:[#allocation2 + $0x110] sm:$0xff]
        %v682 = vld [vmem:[#allocation2 + $0x120] sm:$0xff]
        %v683 = vld [vmem:[#allocation2 + $0x128] sm:$0xff]
        %v684 = vld [vmem:[#allocation2 + $0x138] sm:$0xff]
        %v685 = vld [vmem:[#allocation2 + $0x140] sm:$0xff]
        %v686 = vld [vmem:[#allocation2 + $0x150] sm:$0xff]
        %v687 = vld [vmem:[#allocation2 + $0x158] sm:$0xff]
        %v688 = vld [vmem:[#allocation2 + $0x168] sm:$0xff]
        %v689 = vld [vmem:[#allocation2 + $0x170] sm:$0xff]
        %v690 = vld [vmem:[#allocation2 + $0x180] sm:$0xff]
        %v691 = vld [vmem:[#allocation2 + $0x188] sm:$0xff]
        %v692 = vld [vmem:[#allocation2 + $0x198] sm:$0xff]
        %v693 = vld [vmem:[#allocation2 + $0x1a0] sm:$0xff]
        %v694 = vld [vmem:[#allocation2 + $0x1] sm:$0xff]
        %v695 = vld [vmem:[#allocation2 + $0x9] sm:$0xff]
        %v696 = vld [vmem:[#allocation2 + $0x19] sm:$0xff]
        %v697 = vld [vmem:[#allocation2 + $0x21] sm:$0xff]
        %v698 = vld [vmem:[#allocation2 + $0x31] sm:$0xff]
        %v699 = vld [vmem:[#allocation2 + $0x39] sm:$0xff]
        %v700 = vld [vmem:[#allocation2 + $0x49] sm:$0xff]
        %v701 = vld [vmem:[#allocation2 + $0x51] sm:$0xff]
        %v702 = vld [vmem:[#allocation2 + $0x61] sm:$0xff]
        %v703 = vld [vmem:[#allocation2 + $0x69] sm:$0xff]
        %v704 = vld [vmem:[#allocation2 + $0x79] sm:$0xff]
        %v705 = vld [vmem:[#allocation2 + $0x81] sm:$0xff]
        %v706 = vld [vmem:[#allocation2 + $0x91] sm:$0xff]
        %v707 = vld [vmem:[#allocation2 + $0x99] sm:$0xff]
        %v708 = vld [vmem:[#allocation2 + $0xa9] sm:$0xff]
        %v709 = vld [vmem:[#allocation2 + $0xb1] sm:$0xff]
        %v710 = vld [vmem:[#allocation2 + $0xc1] sm:$0xff]
        %v711 = vld [vmem:[#allocation2 + $0xc9] sm:$0xff]
        %v712 = vld [vmem:[#allocation2 + $0xd9] sm:$0xff]
        %v713 = vld [vmem:[#allocation2 + $0xe1] sm:$0xff]
        %v714 = vld [vmem:[#allocation2 + $0xf1] sm:$0xff]
        %v715 = vld [vmem:[#allocation2 + $0xf9] sm:$0xff]
        %v716 = vld [vmem:[#allocation2 + $0x109] sm:$0xff]
        %v717 = vld [vmem:[#allocation2 + $0x111] sm:$0xff]
        %v718 = vld [vmem:[#allocation2 + $0x121] sm:$0xff]
        %v719 = vld [vmem:[#allocation2 + $0x129] sm:$0xff]
        %v720 = vld [vmem:[#allocation2 + $0x139] sm:$0xff]
        %v721 = vld [vmem:[#allocation2 + $0x141] sm:$0xff]
        %v722 = vld [vmem:[#allocation2 + $0x151] sm:$0xff]
        %v723 = vld [vmem:[#allocation2 + $0x159] sm:$0xff]
        %v724 = vld [vmem:[#allocation2 + $0x169] sm:$0xff]
        %v725 = vld [vmem:[#allocation2 + $0x171] sm:$0xff]
        %v726 = vld [vmem:[#allocation2 + $0x181] sm:$0xff]
        %v727 = vld [vmem:[#allocation2 + $0x189] sm:$0xff]
        %v728 = vld [vmem:[#allocation2 + $0x199] sm:$0xff]
        %v729 = vld [vmem:[#allocation2 + $0x1a1] sm:$0xff]
        %v730 = vld [vmem:[#allocation2 + $0x2] sm:$0xff]
        %v731 = vld [vmem:[#allocation2 + $0xa] sm:$0xff]
        %v732 = vld [vmem:[#allocation2 + $0x1a] sm:$0xff]
        %v733 = vld [vmem:[#allocation2 + $0x22] sm:$0xff]
        %v734 = vld [vmem:[#allocation2 + $0x32] sm:$0xff]
        %v735 = vld [vmem:[#allocation2 + $0x3a] sm:$0xff]
        %v736 = vld [vmem:[#allocation2 + $0x4a] sm:$0xff]
        %v737 = vld [vmem:[#allocation2 + $0x52] sm:$0xff]
        %v738 = vld [vmem:[#allocation2 + $0x62] sm:$0xff]
        %v739 = vld [vmem:[#allocation2 + $0x6a] sm:$0xff]
        %v740 = vld [vmem:[#allocation2 + $0x7a] sm:$0xff]
        %v741 = vld [vmem:[#allocation2 + $0x82] sm:$0xff]
        %v742 = vld [vmem:[#allocation2 + $0x92] sm:$0xff]
        %v743 = vld [vmem:[#allocation2 + $0x9a] sm:$0xff]
        %v744 = vld [vmem:[#allocation2 + $0xaa] sm:$0xff]
        %v745 = vld [vmem:[#allocation2 + $0xb2] sm:$0xff]
        %v746 = vld [vmem:[#allocation2 + $0xc2] sm:$0xff]
        %v747 = vld [vmem:[#allocation2 + $0xca] sm:$0xff]
        %v748 = vld [vmem:[#allocation2 + $0xda] sm:$0xff]
        %v749 = vld [vmem:[#allocation2 + $0xe2] sm:$0xff]
        %v750 = vld [vmem:[#allocation2 + $0xf2] sm:$0xff]
        %v751 = vld [vmem:[#allocation2 + $0xfa] sm:$0xff]
        %v752 = vld [vmem:[#allocation2 + $0x10a] sm:$0xff]
        %v753 = vld [vmem:[#allocation2 + $0x112] sm:$0xff]
        %v754 = vld [vmem:[#allocation2 + $0x122] sm:$0xff]
        %v755 = vld [vmem:[#allocation2 + $0x12a] sm:$0xff]
        %v756 = vld [vmem:[#allocation2 + $0x13a] sm:$0xff]
        %v757 = vld [vmem:[#allocation2 + $0x142] sm:$0xff]
        %v758 = vld [vmem:[#allocation2 + $0x152] sm:$0xff]
        %v759 = vld [vmem:[#allocation2 + $0x15a] sm:$0xff]
        %v760 = vld [vmem:[#allocation2 + $0x16a] sm:$0xff]
        %v761 = vld [vmem:[#allocation2 + $0x172] sm:$0xff]
        %v762 = vld [vmem:[#allocation2 + $0x182] sm:$0xff]
        %v763 = vld [vmem:[#allocation2 + $0x18a] sm:$0xff]
        %v764 = vld [vmem:[#allocation2 + $0x19a] sm:$0xff]
        %v765 = vld [vmem:[#allocation2 + $0x1a2] sm:$0xff]
        %v766 = vld [vmem:[#allocation12] sm:$0xff]
        %v767 = vld [vmem:[#allocation12 + $0x8] sm:$0xff]
        %v768 = vld [vmem:[#allocation12 + $0x10] sm:$0xff]
        %v769 = vld [vmem:[#allocation12 + $0x18] sm:$0xff]
        %v770 = vld [vmem:[#allocation12 + $0x20] sm:$0xff]
        %v771 = vld [vmem:[#allocation12 + $0x28] sm:$0xff]
        %v772 = vld [vmem:[#allocation12 + $0x30] sm:$0xff]
        %v773 = vld [vmem:[#allocation12 + $0x38] sm:$0xff]
        %v774 = vld [vmem:[#allocation12 + $0x40] sm:$0xff]
        %v775 = vld [vmem:[#allocation12 + $0x48] sm:$0xff]
        %v776 = vld [vmem:[#allocation12 + $0x50] sm:$0xff]
        %v777 = vld [vmem:[#allocation12 + $0x58] sm:$0xff]
        %v778 = vld [vmem:[#allocation12 + $0x60] sm:$0xff]
        %v779 = vld [vmem:[#allocation12 + $0x68] sm:$0xff]
        %v780 = vld [vmem:[#allocation12 + $0x70] sm:$0xff]
        %v781 = vld [vmem:[#allocation12 + $0x78] sm:$0xff]
        %s782 = scalar_lea.vmem [#allocation12], 128
        %v783 = vld [vmem:[%s782] sm:$0xff]
        %v784 = vld [vmem:[%s782 + $0x8] sm:$0xff]
        %v785 = vld [vmem:[%s782 + $0x10] sm:$0xff]
        %v786 = vld [vmem:[%s782 + $0x18] sm:$0xff]
        %v787 = vld [vmem:[%s782 + $0x20] sm:$0xff]
        %v788 = vld [vmem:[%s782 + $0x28] sm:$0xff]
        %v789 = vld [vmem:[%s782 + $0x30] sm:$0xff]
        %v790 = vld [vmem:[%s782 + $0x38] sm:$0xff]
        %v791 = vld [vmem:[%s782 + $0x40] sm:$0xff]
        %v792 = vld [vmem:[%s782 + $0x48] sm:$0xff]
        %v793 = vld [vmem:[%s782 + $0x50] sm:$0xff]
        %v794 = vld [vmem:[%s782 + $0x58] sm:$0xff]
        %v795 = vld [vmem:[%s782 + $0x60] sm:$0xff]
        %v796 = vld [vmem:[%s782 + $0x68] sm:$0xff]
        %v797 = vld [vmem:[%s782 + $0x70] sm:$0xff]
        %v798 = vld [vmem:[%s782 + $0x78] sm:$0xff]
        %799 = vmatprep.subr.mxu0 0.0
        %800 = vmatpush1.msra.mxu0 %v783
        %801 = vmatprep.subr.mxu0 0.0
        %802 = vmatpush1.msra.mxu0 %v784
        %803 = vmatprep.subr.mxu0 0.0
        %804 = vmatpush1.msra.mxu0 %v785
        %805 = vmatprep.subr.mxu0 0.0
        %806 = vmatpush1.msra.mxu0 %v786
        %807 = vmatprep.subr.mxu0 0.0
        %808 = vmatpush1.msra.mxu0 %v787
        %809 = vmatprep.subr.mxu0 0.0
        %810 = vmatpush1.msra.mxu0 %v788
        %811 = vmatprep.subr.mxu0 0.0
        %812 = vmatpush1.msra.mxu0 %v789
        %813 = vmatprep.subr.mxu0 0.0
        %814 = vmatpush1.msra.mxu0 %v790
        %815 = vmatprep.subr.mxu0 0.0
        %816 = vmatpush1.msra.mxu0 %v791
        %817 = vmatprep.subr.mxu0 0.0
        %818 = vmatpush1.msra.mxu0 %v792
        %819 = vmatprep.subr.mxu0 0.0
        %820 = vmatpush1.msra.mxu0 %v793
        %821 = vmatprep.subr.mxu0 0.0
        %822 = vmatpush1.msra.mxu0 %v794
        %823 = vmatprep.subr.mxu0 0.0
        %824 = vmatpush1.msra.mxu0 %v795
        %825 = vmatprep.subr.mxu0 0.0
        %826 = vmatpush1.msra.mxu0 %v796
        %827 = vmatprep.subr.mxu0 0.0
        %828 = vmatpush1.msra.mxu0 %v797
        %829 = vmatprep.subr.mxu0 0.0
        %830 = vmatpush1.msra.mxu0 %v798
        %831 = vmatprep.subr.mxu0 0.0
        %832 = vmatpush1.msra.mxu0 0.0
        %833 = vmatprep.subr.mxu0 0.0
        %834 = vmatpush1.msra.mxu0 0.0
        %835 = vmatprep.subr.mxu0 0.0
        %836 = vmatpush1.msra.mxu0 0.0
        %837 = vmatprep.subr.mxu0 0.0
        %838 = vmatpush1.msra.mxu0 0.0
        %839 = vmatprep.subr.mxu0 0.0
        %840 = vmatpush1.msra.mxu0 0.0
        %841 = vmatprep.subr.mxu0 0.0
        %842 = vmatpush1.msra.mxu0 0.0
        %843 = vmatprep.subr.mxu0 0.0
        %844 = vmatpush1.msra.mxu0 0.0
        %845 = vmatprep.subr.mxu0 0.0
        %846 = vmatpush1.msra.mxu0 0.0
        %847 = vmatprep.subr.mxu0 0.0
        %848 = vmatpush1.msra.mxu0 0.0
        %849 = vmatprep.subr.mxu0 0.0
        %850 = vmatpush1.msra.mxu0 0.0
        %851 = vmatprep.subr.mxu0 0.0
        %852 = vmatpush1.msra.mxu0 0.0
        %853 = vmatprep.subr.mxu0 0.0
        %854 = vmatpush1.msra.mxu0 0.0
        %855 = vmatprep.subr.mxu0 0.0
        %856 = vmatpush1.msra.mxu0 0.0
        %857 = vmatprep.subr.mxu0 0.0
        %858 = vmatpush1.msra.mxu0 0.0
        %859 = vmatprep.subr.mxu0 0.0
        %860 = vmatpush1.msra.mxu0 0.0
        %861 = vmatprep.subr.mxu0 0.0
        %862 = vmatpush1.msra.mxu0 0.0
        %863 = vmatprep.mubr.f32.mxu0 0.0
        %864 = vmatmul.mubr.f32.gmra.mrb[0].mxu0 %v694
        %v865 = vpop.f32.mrb[0].mxu0
        %v866 = vadd.f32 0.0, %v865
        %v867 = vpop.f32.mrb[0].mxu0
        %868 = vmatprep.mubr.f32.mxu0 0.0
        %869 = vmatmul.mubr.f32.gmra.mrb[0].mxu0 %v695
        %v870 = vpop.f32.mrb[0].mxu0
        %v871 = vadd.f32 0.0, %v870
        %v872 = vpop.f32.mrb[0].mxu0
        %873 = vmatprep.mubr.f32.mxu0 0.0
        %874 = vmatmul.mubr.f32.gmra.mrb[0].mxu0 %v696
        %v875 = vpop.f32.mrb[0].mxu0
        %v876 = vadd.f32 0.0, %v875
        %v877 = vpop.f32.mrb[0].mxu0
        %878 = vmatprep.mubr.f32.mxu0 0.0
        %879 = vmatmul.mubr.f32.gmra.mrb[0].mxu0 %v697
        %v880 = vpop.f32.mrb[0].mxu0
        %v881 = vadd.f32 0.0, %v880
        %v882 = vpop.f32.mrb[0].mxu0
        %883 = vmatprep.mubr.f32.mxu0 0.0
        %884 = vmatmul.mubr.f32.gmra.mrb[0].mxu0 %v698
        %v885 = vpop.f32.mrb[0].mxu0
        %v886 = vadd.f32 0.0, %v885
        %v887 = vpop.f32.mrb[0].mxu0
        %888 = vmatprep.mubr.f32.mxu0 0.0
        %889 = vmatmul.mubr.f32.gmra.mrb[0].mxu0 %v699
        %v890 = vpop.f32.mrb[0].mxu0
        %v891 = vadd.f32 0.0, %v890
        %v892 = vpop.f32.mrb[0].mxu0
        %893 = vmatprep.mubr.f32.mxu0 0.0
        %894 = vmatmul.mubr.f32.gmra.mrb[0].mxu0 %v700
        %v895 = vpop.f32.mrb[0].mxu0
        %v896 = vadd.f32 0.0, %v895
        %v897 = vpop.f32.mrb[0].mxu0
        %898 = vmatprep.mubr.f32.mxu0 0.0
        %899 = vmatmul.mubr.f32.gmra.mrb[0].mxu0 %v701
        %v900 = vpop.f32.mrb[0].mxu0
        %v901 = vadd.f32 0.0, %v900
        %v902 = vpop.f32.mrb[0].mxu0
        %903 = vmatprep.mubr.f32.mxu0 0.0
        %904 = vmatmul.mubr.f32.gmra.mrb[0].mxu0 %v702
        %v905 = vpop.f32.mrb[0].mxu0
        %v906 = vadd.f32 0.0, %v905
        %v907 = vpop.f32.mrb[0].mxu0
        %908 = vmatprep.mubr.f32.mxu0 0.0
        %909 = vmatmul.mubr.f32.gmra.mrb[0].mxu0 %v703
        %v910 = vpop.f32.mrb[0].mxu0
        %v911 = vadd.f32 0.0, %v910
        %v912 = vpop.f32.mrb[0].mxu0
        %913 = vmatprep.mubr.f32.mxu0 0.0
        %914 = vmatmul.mubr.f32.gmra.mrb[0].mxu0 %v704
        %v915 = vpop.f32.mrb[0].mxu0
        %v916 = vadd.f32 0.0, %v915
        %v917 = vpop.f32.mrb[0].mxu0
        %918 = vmatprep.mubr.f32.mxu0 0.0
        %919 = vmatmul.mubr.f32.gmra.mrb[0].mxu0 %v705
        %v920 = vpop.f32.mrb[0].mxu0
        %v921 = vadd.f32 0.0, %v920
        %v922 = vpop.f32.mrb[0].mxu0
        %923 = vmatprep.mubr.f32.mxu0 0.0
        %924 = vmatmul.mubr.f32.gmra.mrb[0].mxu0 %v706
        %v925 = vpop.f32.mrb[0].mxu0
        %v926 = vadd.f32 0.0, %v925
        %v927 = vpop.f32.mrb[0].mxu0
        %928 = vmatprep.mubr.f32.mxu0 0.0
        %929 = vmatmul.mubr.f32.gmra.mrb[0].mxu0 %v707
        %v930 = vpop.f32.mrb[0].mxu0
        %v931 = vadd.f32 0.0, %v930
        %v932 = vpop.f32.mrb[0].mxu0
        %933 = vmatprep.mubr.f32.mxu0 0.0
        %934 = vmatmul.mubr.f32.gmra.mrb[0].mxu0 %v708
        %v935 = vpop.f32.mrb[0].mxu0
        %v936 = vadd.f32 0.0, %v935
        %v937 = vpop.f32.mrb[0].mxu0
        %938 = vmatprep.mubr.f32.mxu0 0.0
        %939 = vmatmul.mubr.f32.gmra.mrb[0].mxu0 %v709
        %v940 = vpop.f32.mrb[0].mxu0
        %v941 = vadd.f32 0.0, %v940
        %v942 = vpop.f32.mrb[0].mxu0
        %943 = vmatprep.mubr.f32.mxu0 0.0
        %944 = vmatmul.mubr.f32.gmra.mrb[0].mxu0 %v710
        %v945 = vpop.f32.mrb[0].mxu0
        %v946 = vadd.f32 0.0, %v945
        %v947 = vpop.f32.mrb[0].mxu0
        %948 = vmatprep.mubr.f32.mxu0 0.0
        %949 = vmatmul.mubr.f32.gmra.mrb[0].mxu0 %v711
        %v950 = vpop.f32.mrb[0].mxu0
        %v951 = vadd.f32 0.0, %v950
        %v952 = vpop.f32.mrb[0].mxu0
        %953 = vmatprep.mubr.f32.mxu0 0.0
        %954 = vmatmul.mubr.f32.gmra.mrb[0].mxu0 %v712
        %v955 = vpop.f32.mrb[0].mxu0
        %v956 = vadd.f32 0.0, %v955
        %v957 = vpop.f32.mrb[0].mxu0
        %958 = vmatprep.mubr.f32.mxu0 0.0
        %959 = vmatmul.mubr.f32.gmra.mrb[0].mxu0 %v713
        %v960 = vpop.f32.mrb[0].mxu0
        %v961 = vadd.f32 0.0, %v960
        %v962 = vpop.f32.mrb[0].mxu0
        %963 = vmatprep.mubr.f32.mxu0 0.0
        %964 = vmatmul.mubr.f32.gmra.mrb[0].mxu0 %v714
        %v965 = vpop.f32.mrb[0].mxu0
        %v966 = vadd.f32 0.0, %v965
        %v967 = vpop.f32.mrb[0].mxu0
        %968 = vmatprep.mubr.f32.mxu0 0.0
        %969 = vmatmul.mubr.f32.gmra.mrb[0].mxu0 %v715
        %v970 = vpop.f32.mrb[0].mxu0
        %v971 = vadd.f32 0.0, %v970
        %v972 = vpop.f32.mrb[0].mxu0
        %973 = vmatprep.mubr.f32.mxu0 0.0
        %974 = vmatmul.mubr.f32.gmra.mrb[0].mxu0 %v716
        %v975 = vpop.f32.mrb[0].mxu0
        %v976 = vadd.f32 0.0, %v975
        %v977 = vpop.f32.mrb[0].mxu0
        %978 = vmatprep.mubr.f32.mxu0 0.0
        %979 = vmatmul.mubr.f32.gmra.mrb[0].mxu0 %v717
        %v980 = vpop.f32.mrb[0].mxu0
        %v981 = vadd.f32 0.0, %v980
        %v982 = vpop.f32.mrb[0].mxu0
        %983 = vmatprep.mubr.f32.mxu0 0.0
        %984 = vmatmul.mubr.f32.gmra.mrb[0].mxu0 %v718
        %v985 = vpop.f32.mrb[0].mxu0
        %v986 = vadd.f32 0.0, %v985
        %v987 = vpop.f32.mrb[0].mxu0
        %988 = vmatprep.mubr.f32.mxu0 0.0
        %989 = vmatmul.mubr.f32.gmra.mrb[0].mxu0 %v719
        %v990 = vpop.f32.mrb[0].mxu0
        %v991 = vadd.f32 0.0, %v990
        %v992 = vpop.f32.mrb[0].mxu0
        %993 = vmatprep.mubr.f32.mxu0 0.0
        %994 = vmatmul.mubr.f32.gmra.mrb[0].mxu0 %v720
        %v995 = vpop.f32.mrb[0].mxu0
        %v996 = vadd.f32 0.0, %v995
        %v997 = vpop.f32.mrb[0].mxu0
        %998 = vmatprep.mubr.f32.mxu0 0.0
        %999 = vmatmul.mubr.f32.gmra.mrb[0].mxu0 %v721
        %v1000 = vpop.f32.mrb[0].mxu0
        %v1001 = vadd.f32 0.0, %v1000
        %v1002 = vpop.f32.mrb[0].mxu0
        %1003 = vmatprep.mubr.f32.mxu0 0.0
        %1004 = vmatmul.mubr.f32.gmra.mrb[0].mxu0 %v722
        %v1005 = vpop.f32.mrb[0].mxu0
        %v1006 = vadd.f32 0.0, %v1005
        %v1007 = vpop.f32.mrb[0].mxu0
        %1008 = vmatprep.mubr.f32.mxu0 0.0
        %1009 = vmatmul.mubr.f32.gmra.mrb[0].mxu0 %v723
        %v1010 = vpop.f32.mrb[0].mxu0
        %v1011 = vadd.f32 0.0, %v1010
        %v1012 = vpop.f32.mrb[0].mxu0
        %1013 = vmatprep.mubr.f32.mxu0 0.0
        %1014 = vmatmul.mubr.f32.gmra.mrb[0].mxu0 %v724
        %v1015 = vpop.f32.mrb[0].mxu0
        %v1016 = vadd.f32 0.0, %v1015
        %v1017 = vpop.f32.mrb[0].mxu0
        %1018 = vmatprep.mubr.f32.mxu0 0.0
        %1019 = vmatmul.mubr.f32.gmra.mrb[0].mxu0 %v725
        %v1020 = vpop.f32.mrb[0].mxu0
        %v1021 = vadd.f32 0.0, %v1020
        %v1022 = vpop.f32.mrb[0].mxu0
        %1023 = vdwg.mxu0
        %1024 = vmatprep.subr.mxu0 0.0
        %1025 = vmatpush1.msra.mxu0 %v766
        %1026 = vmatprep.subr.mxu0 0.0
        %1027 = vmatpush1.msra.mxu0 %v767
        %1028 = vmatprep.subr.mxu0 0.0
        %1029 = vmatpush1.msra.mxu0 %v768
        %1030 = vmatprep.subr.mxu0 0.0
        %1031 = vmatpush1.msra.mxu0 %v769
        %1032 = vmatprep.subr.mxu0 0.0
        %1033 = vmatpush1.msra.mxu0 %v770
        %1034 = vmatprep.subr.mxu0 0.0
        %1035 = vmatpush1.msra.mxu0 %v771
        %1036 = vmatprep.subr.mxu0 0.0
        %1037 = vmatpush1.msra.mxu0 %v772
        %1038 = vmatprep.subr.mxu0 0.0
        %1039 = vmatpush1.msra.mxu0 %v773
        %1040 = vmatprep.subr.mxu0 0.0
        %1041 = vmatpush1.msra.mxu0 %v774
        %1042 = vmatprep.subr.mxu0 0.0
        %1043 = vmatpush1.msra.mxu0 %v775
        %1044 = vmatprep.subr.mxu0 0.0
        %1045 = vmatpush1.msra.mxu0 %v776
        %1046 = vmatprep.subr.mxu0 0.0
        %1047 = vmatpush1.msra.mxu0 %v777
        %1048 = vmatprep.subr.mxu0 0.0
        %1049 = vmatpush1.msra.mxu0 %v778
        %1050 = vmatprep.subr.mxu0 0.0
        %1051 = vmatpush1.msra.mxu0 %v779
        %1052 = vmatprep.subr.mxu0 0.0
        %1053 = vmatpush1.msra.mxu0 %v780
        %1054 = vmatprep.subr.mxu0 0.0
        %1055 = vmatpush1.msra.mxu0 %v781
        %1056 = vmatprep.subr.mxu0 0.0
        %1057 = vmatpush1.msra.mxu0 0.0
        %1058 = vmatprep.subr.mxu0 0.0
        %1059 = vmatpush1.msra.mxu0 0.0
        %1060 = vmatprep.subr.mxu0 0.0
        %1061 = vmatpush1.msra.mxu0 0.0
        %1062 = vmatprep.subr.mxu0 0.0
        %1063 = vmatpush1.msra.mxu0 0.0
        %1064 = vmatprep.subr.mxu0 0.0
        %1065 = vmatpush1.msra.mxu0 0.0
        %1066 = vmatprep.subr.mxu0 0.0
        %1067 = vmatpush1.msra.mxu0 0.0
        %1068 = vmatprep.subr.mxu0 0.0
        %1069 = vmatpush1.msra.mxu0 0.0
        %1070 = vmatprep.subr.mxu0 0.0
        %1071 = vmatpush1.msra.mxu0 0.0
        %1072 = vmatprep.subr.mxu0 0.0
        %1073 = vmatpush1.msra.mxu0 0.0
        %1074 = vmatprep.subr.mxu0 0.0
        %1075 = vmatpush1.msra.mxu0 0.0
        %1076 = vmatprep.subr.mxu0 0.0
        %1077 = vmatpush1.msra.mxu0 0.0
        %1078 = vmatprep.subr.mxu0 0.0
        %1079 = vmatpush1.msra.mxu0 0.0
        %1080 = vmatprep.subr.mxu0 0.0
        %1081 = vmatpush1.msra.mxu0 0.0
        %1082 = vmatprep.subr.mxu0 0.0
        %1083 = vmatpush1.msra.mxu0 0.0
        %1084 = vmatprep.subr.mxu0 0.0
        %1085 = vmatpush1.msra.mxu0 0.0
        %1086 = vmatprep.subr.mxu0 0.0
        %1087 = vmatpush1.msra.mxu0 0.0
        %1088 = vmatprep.mubr.f32.mxu0 0.0
        %1089 = vmatmul.mubr.f32.gmra.mrb[0].mxu0 %v658
        %v1090 = vpop.f32.mrb[0].mxu0
        %v1091 = vadd.f32 %v866, %v1090
        %v1092 = vpop.f32.mrb[0].mxu0
        %1093 = vmatprep.mubr.f32.mxu0 0.0
        %1094 = vmatmul.mubr.f32.gmra.mrb[0].mxu0 %v659
        %v1095 = vpop.f32.mrb[0].mxu0
        %v1096 = vadd.f32 %v871, %v1095
        %v1097 = vpop.f32.mrb[0].mxu0
        %1098 = vmatprep.mubr.f32.mxu0 0.0
        %1099 = vmatmul.mubr.f32.gmra.mrb[0].mxu0 %v660
        %v1100 = vpop.f32.mrb[0].mxu0
        %v1101 = vadd.f32 %v876, %v1100
        %v1102 = vpop.f32.mrb[0].mxu0
        %1103 = vmatprep.mubr.f32.mxu0 0.0
        %1104 = vmatmul.mubr.f32.gmra.mrb[0].mxu0 %v661
        %v1105 = vpop.f32.mrb[0].mxu0
        %v1106 = vadd.f32 %v881, %v1105
        %v1107 = vpop.f32.mrb[0].mxu0
        %1108 = vmatprep.mubr.f32.mxu0 0.0
        %1109 = vmatmul.mubr.f32.gmra.mrb[0].mxu0 %v662
        %v1110 = vpop.f32.mrb[0].mxu0
        %v1111 = vadd.f32 %v886, %v1110
        %v1112 = vpop.f32.mrb[0].mxu0
        %1113 = vmatprep.mubr.f32.mxu0 0.0
        %1114 = vmatmul.mubr.f32.gmra.mrb[0].mxu0 %v663
        %v1115 = vpop.f32.mrb[0].mxu0
        %v1116 = vadd.f32 %v891, %v1115
        %v1117 = vpop.f32.mrb[0].mxu0
        %1118 = vmatprep.mubr.f32.mxu0 0.0
        %1119 = vmatmul.mubr.f32.gmra.mrb[0].mxu0 %v664
        %v1120 = vpop.f32.mrb[0].mxu0
        %v1121 = vadd.f32 %v896, %v1120
        %v1122 = vpop.f32.mrb[0].mxu0
        %1123 = vmatprep.mubr.f32.mxu0 0.0
        %1124 = vmatmul.mubr.f32.gmra.mrb[0].mxu0 %v665
        %v1125 = vpop.f32.mrb[0].mxu0
        %v1126 = vadd.f32 %v901, %v1125
        %v1127 = vpop.f32.mrb[0].mxu0
        %1128 = vmatprep.mubr.f32.mxu0 0.0
        %1129 = vmatmul.mubr.f32.gmra.mrb[0].mxu0 %v666
        %v1130 = vpop.f32.mrb[0].mxu0
        %v1131 = vadd.f32 %v906, %v1130
        %v1132 = vpop.f32.mrb[0].mxu0
        %1133 = vmatprep.mubr.f32.mxu0 0.0
        %1134 = vmatmul.mubr.f32.gmra.mrb[0].mxu0 %v667
        %v1135 = vpop.f32.mrb[0].mxu0
        %v1136 = vadd.f32 %v911, %v1135
        %v1137 = vpop.f32.mrb[0].mxu0
        %1138 = vmatprep.mubr.f32.mxu0 0.0
        %1139 = vmatmul.mubr.f32.gmra.mrb[0].mxu0 %v668
        %v1140 = vpop.f32.mrb[0].mxu0
        %v1141 = vadd.f32 %v916, %v1140
        %v1142 = vpop.f32.mrb[0].mxu0
        %1143 = vmatprep.mubr.f32.mxu0 0.0
        %1144 = vmatmul.mubr.f32.gmra.mrb[0].mxu0 %v669
        %v1145 = vpop.f32.mrb[0].mxu0
        %v1146 = vadd.f32 %v921, %v1145
        %v1147 = vpop.f32.mrb[0].mxu0
        %1148 = vmatprep.mubr.f32.mxu0 0.0
        %1149 = vmatmul.mubr.f32.gmra.mrb[0].mxu0 %v670
        %v1150 = vpop.f32.mrb[0].mxu0
        %v1151 = vadd.f32 %v926, %v1150
        %v1152 = vpop.f32.mrb[0].mxu0
        %1153 = vmatprep.mubr.f32.mxu0 0.0
        %1154 = vmatmul.mubr.f32.gmra.mrb[0].mxu0 %v671
        %v1155 = vpop.f32.mrb[0].mxu0
        %v1156 = vadd.f32 %v931, %v1155
        %v1157 = vpop.f32.mrb[0].mxu0
        %1158 = vmatprep.mubr.f32.mxu0 0.0
        %1159 = vmatmul.mubr.f32.gmra.mrb[0].mxu0 %v672
        %v1160 = vpop.f32.mrb[0].mxu0
        %v1161 = vadd.f32 %v936, %v1160
        %v1162 = vpop.f32.mrb[0].mxu0
        %1163 = vmatprep.mubr.f32.mxu0 0.0
        %1164 = vmatmul.mubr.f32.gmra.mrb[0].mxu0 %v673
        %v1165 = vpop.f32.mrb[0].mxu0
        %v1166 = vadd.f32 %v941, %v1165
        %v1167 = vpop.f32.mrb[0].mxu0
        %1168 = vmatprep.mubr.f32.mxu0 0.0
        %1169 = vmatmul.mubr.f32.gmra.mrb[0].mxu0 %v674
        %v1170 = vpop.f32.mrb[0].mxu0
        %v1171 = vadd.f32 %v946, %v1170
        %v1172 = vpop.f32.mrb[0].mxu0
        %1173 = vmatprep.mubr.f32.mxu0 0.0
        %1174 = vmatmul.mubr.f32.gmra.mrb[0].mxu0 %v675
        %v1175 = vpop.f32.mrb[0].mxu0
        %v1176 = vadd.f32 %v951, %v1175
        %v1177 = vpop.f32.mrb[0].mxu0
        %1178 = vmatprep.mubr.f32.mxu0 0.0
        %1179 = vmatmul.mubr.f32.gmra.mrb[0].mxu0 %v676
        %v1180 = vpop.f32.mrb[0].mxu0
        %v1181 = vadd.f32 %v956, %v1180
        %v1182 = vpop.f32.mrb[0].mxu0
        %1183 = vmatprep.mubr.f32.mxu0 0.0
        %1184 = vmatmul.mubr.f32.gmra.mrb[0].mxu0 %v677
        %v1185 = vpop.f32.mrb[0].mxu0
        %v1186 = vadd.f32 %v961, %v1185
        %v1187 = vpop.f32.mrb[0].mxu0
        %1188 = vmatprep.mubr.f32.mxu0 0.0
        %1189 = vmatmul.mubr.f32.gmra.mrb[0].mxu0 %v678
        %v1190 = vpop.f32.mrb[0].mxu0
        %v1191 = vadd.f32 %v966, %v1190
        %v1192 = vpop.f32.mrb[0].mxu0
        %1193 = vmatprep.mubr.f32.mxu0 0.0
        %1194 = vmatmul.mubr.f32.gmra.mrb[0].mxu0 %v679
        %v1195 = vpop.f32.mrb[0].mxu0
        %v1196 = vadd.f32 %v971, %v1195
        %v1197 = vpop.f32.mrb[0].mxu0
        %1198 = vmatprep.mubr.f32.mxu0 0.0
        %1199 = vmatmul.mubr.f32.gmra.mrb[0].mxu0 %v680
        %v1200 = vpop.f32.mrb[0].mxu0
        %v1201 = vadd.f32 %v976, %v1200
        %v1202 = vpop.f32.mrb[0].mxu0
        %1203 = vmatprep.mubr.f32.mxu0 0.0
        %1204 = vmatmul.mubr.f32.gmra.mrb[0].mxu0 %v681
        %v1205 = vpop.f32.mrb[0].mxu0
        %v1206 = vadd.f32 %v981, %v1205
        %v1207 = vpop.f32.mrb[0].mxu0
        %1208 = vmatprep.mubr.f32.mxu0 0.0
        %1209 = vmatmul.mubr.f32.gmra.mrb[0].mxu0 %v682
        %v1210 = vpop.f32.mrb[0].mxu0
        %v1211 = vadd.f32 %v986, %v1210
        %v1212 = vpop.f32.mrb[0].mxu0
        %1213 = vmatprep.mubr.f32.mxu0 0.0
        %1214 = vmatmul.mubr.f32.gmra.mrb[0].mxu0 %v683
        %v1215 = vpop.f32.mrb[0].mxu0
        %v1216 = vadd.f32 %v991, %v1215
        %v1217 = vpop.f32.mrb[0].mxu0
        %1218 = vmatprep.mubr.f32.mxu0 0.0
        %1219 = vmatmul.mubr.f32.gmra.mrb[0].mxu0 %v684
        %v1220 = vpop.f32.mrb[0].mxu0
        %v1221 = vadd.f32 %v996, %v1220
        %v1222 = vpop.f32.mrb[0].mxu0
        %1223 = vmatprep.mubr.f32.mxu0 0.0
        %1224 = vmatmul.mubr.f32.gmra.mrb[0].mxu0 %v685
        %v1225 = vpop.f32.mrb[0].mxu0
        %v1226 = vadd.f32 %v1001, %v1225
        %v1227 = vpop.f32.mrb[0].mxu0
        %1228 = vmatprep.mubr.f32.mxu0 0.0
        %1229 = vmatmul.mubr.f32.gmra.mrb[0].mxu0 %v686
        %v1230 = vpop.f32.mrb[0].mxu0
        %v1231 = vadd.f32 %v1006, %v1230
        %v1232 = vpop.f32.mrb[0].mxu0
        %1233 = vmatprep.mubr.f32.mxu0 0.0
        %1234 = vmatmul.mubr.f32.gmra.mrb[0].mxu0 %v687
        %v1235 = vpop.f32.mrb[0].mxu0
        %v1236 = vadd.f32 %v1011, %v1235
        %v1237 = vpop.f32.mrb[0].mxu0
        %1238 = vmatprep.mubr.f32.mxu0 0.0
        %1239 = vmatmul.mubr.f32.gmra.mrb[0].mxu0 %v688
        %v1240 = vpop.f32.mrb[0].mxu0
        %v1241 = vadd.f32 %v1016, %v1240
        %v1242 = vpop.f32.mrb[0].mxu0
        %1243 = vmatprep.mubr.f32.mxu0 0.0
        %1244 = vmatmul.mubr.f32.gmra.mrb[0].mxu0 %v689
        %v1245 = vpop.f32.mrb[0].mxu0
        %v1246 = vadd.f32 %v1021, %v1245
        %v1247 = vpop.f32.mrb[0].mxu0
        %1248 = vdwg.mxu0
        %s1249 = scalar_lea.vmem [#allocation12], 256
        %v1250 = vld [vmem:[%s1249] sm:$0xff]
        %v1251 = vld [vmem:[%s1249 + $0x8] sm:$0xff]
        %v1252 = vld [vmem:[%s1249 + $0x10] sm:$0xff]
        %v1253 = vld [vmem:[%s1249 + $0x18] sm:$0xff]
        %v1254 = vld [vmem:[%s1249 + $0x20] sm:$0xff]
        %v1255 = vld [vmem:[%s1249 + $0x28] sm:$0xff]
        %v1256 = vld [vmem:[%s1249 + $0x30] sm:$0xff]
        %v1257 = vld [vmem:[%s1249 + $0x38] sm:$0xff]
        %v1258 = vld [vmem:[%s1249 + $0x40] sm:$0xff]
        %v1259 = vld [vmem:[%s1249 + $0x48] sm:$0xff]
        %v1260 = vld [vmem:[%s1249 + $0x50] sm:$0xff]
        %v1261 = vld [vmem:[%s1249 + $0x58] sm:$0xff]
        %v1262 = vld [vmem:[%s1249 + $0x60] sm:$0xff]
        %v1263 = vld [vmem:[%s1249 + $0x68] sm:$0xff]
        %v1264 = vld [vmem:[%s1249 + $0x70] sm:$0xff]
        %v1265 = vld [vmem:[%s1249 + $0x78] sm:$0xff]
        %1266 = vmatprep.subr.mxu0 0.0
        %1267 = vmatpush1.msra.mxu0 %v1250
        %1268 = vmatprep.subr.mxu0 0.0
        %1269 = vmatpush1.msra.mxu0 %v1251
        %1270 = vmatprep.subr.mxu0 0.0
        %1271 = vmatpush1.msra.mxu0 %v1252
        %1272 = vmatprep.subr.mxu0 0.0
        %1273 = vmatpush1.msra.mxu0 %v1253
        %1274 = vmatprep.subr.mxu0 0.0
        %1275 = vmatpush1.msra.mxu0 %v1254
        %1276 = vmatprep.subr.mxu0 0.0
        %1277 = vmatpush1.msra.mxu0 %v1255
        %1278 = vmatprep.subr.mxu0 0.0
        %1279 = vmatpush1.msra.mxu0 %v1256
        %1280 = vmatprep.subr.mxu0 0.0
        %1281 = vmatpush1.msra.mxu0 %v1257
        %1282 = vmatprep.subr.mxu0 0.0
        %1283 = vmatpush1.msra.mxu0 %v1258
        %1284 = vmatprep.subr.mxu0 0.0
        %1285 = vmatpush1.msra.mxu0 %v1259
        %1286 = vmatprep.subr.mxu0 0.0
        %1287 = vmatpush1.msra.mxu0 %v1260
        %1288 = vmatprep.subr.mxu0 0.0
        %1289 = vmatpush1.msra.mxu0 %v1261
        %1290 = vmatprep.subr.mxu0 0.0
        %1291 = vmatpush1.msra.mxu0 %v1262
        %1292 = vmatprep.subr.mxu0 0.0
        %1293 = vmatpush1.msra.mxu0 %v1263
        %1294 = vmatprep.subr.mxu0 0.0
        %1295 = vmatpush1.msra.mxu0 %v1264
        %1296 = vmatprep.subr.mxu0 0.0
        %1297 = vmatpush1.msra.mxu0 %v1265
        %1298 = vmatprep.subr.mxu0 0.0
        %1299 = vmatpush1.msra.mxu0 0.0
        %1300 = vmatprep.subr.mxu0 0.0
        %1301 = vmatpush1.msra.mxu0 0.0
        %1302 = vmatprep.subr.mxu0 0.0
        %1303 = vmatpush1.msra.mxu0 0.0
        %1304 = vmatprep.subr.mxu0 0.0
        %1305 = vmatpush1.msra.mxu0 0.0
        %1306 = vmatprep.subr.mxu0 0.0
        %1307 = vmatpush1.msra.mxu0 0.0
        %1308 = vmatprep.subr.mxu0 0.0
        %1309 = vmatpush1.msra.mxu0 0.0
        %1310 = vmatprep.subr.mxu0 0.0
        %1311 = vmatpush1.msra.mxu0 0.0
        %1312 = vmatprep.subr.mxu0 0.0
        %1313 = vmatpush1.msra.mxu0 0.0
        %1314 = vmatprep.subr.mxu0 0.0
        %1315 = vmatpush1.msra.mxu0 0.0
        %1316 = vmatprep.subr.mxu0 0.0
        %1317 = vmatpush1.msra.mxu0 0.0
        %1318 = vmatprep.subr.mxu0 0.0
        %1319 = vmatpush1.msra.mxu0 0.0
        %1320 = vmatprep.subr.mxu0 0.0
        %1321 = vmatpush1.msra.mxu0 0.0
        %1322 = vmatprep.subr.mxu0 0.0
        %1323 = vmatpush1.msra.mxu0 0.0
        %1324 = vmatprep.subr.mxu0 0.0
        %1325 = vmatpush1.msra.mxu0 0.0
        %1326 = vmatprep.subr.mxu0 0.0
        %1327 = vmatpush1.msra.mxu0 0.0
        %1328 = vmatprep.subr.mxu0 0.0
        %1329 = vmatpush1.msra.mxu0 0.0
        %1330 = vmatprep.mubr.f32.mxu0 0.0
        %1331 = vmatmul.mubr.f32.gmra.mrb[0].mxu0 %v730
        %v1332 = vpop.f32.mrb[0].mxu0
        %v1333 = vadd.f32 0.0, %v1332
        %v1334 = vpop.f32.mrb[0].mxu0
        %1335 = vmatprep.mubr.f32.mxu0 0.0
        %1336 = vmatmul.mubr.f32.gmra.mrb[0].mxu0 %v731
        %v1337 = vpop.f32.mrb[0].mxu0
        %v1338 = vadd.f32 0.0, %v1337
        %v1339 = vpop.f32.mrb[0].mxu0
        %1340 = vmatprep.mubr.f32.mxu0 0.0
        %1341 = vmatmul.mubr.f32.gmra.mrb[0].mxu0 %v732
        %v1342 = vpop.f32.mrb[0].mxu0
        %v1343 = vadd.f32 0.0, %v1342
        %v1344 = vpop.f32.mrb[0].mxu0
        %1345 = vmatprep.mubr.f32.mxu0 0.0
        %1346 = vmatmul.mubr.f32.gmra.mrb[0].mxu0 %v733
        %v1347 = vpop.f32.mrb[0].mxu0
        %v1348 = vadd.f32 0.0, %v1347
        %v1349 = vpop.f32.mrb[0].mxu0
        %1350 = vmatprep.mubr.f32.mxu0 0.0
        %1351 = vmatmul.mubr.f32.gmra.mrb[0].mxu0 %v734
        %v1352 = vpop.f32.mrb[0].mxu0
        %v1353 = vadd.f32 0.0, %v1352
        %v1354 = vpop.f32.mrb[0].mxu0
        %1355 = vmatprep.mubr.f32.mxu0 0.0
        %1356 = vmatmul.mubr.f32.gmra.mrb[0].mxu0 %v735
        %v1357 = vpop.f32.mrb[0].mxu0
        %v1358 = vadd.f32 0.0, %v1357
        %v1359 = vpop.f32.mrb[0].mxu0
        %1360 = vmatprep.mubr.f32.mxu0 0.0
        %1361 = vmatmul.mubr.f32.gmra.mrb[0].mxu0 %v736
        %v1362 = vpop.f32.mrb[0].mxu0
        %v1363 = vadd.f32 0.0, %v1362
        %v1364 = vpop.f32.mrb[0].mxu0
        %1365 = vmatprep.mubr.f32.mxu0 0.0
        %1366 = vmatmul.mubr.f32.gmra.mrb[0].mxu0 %v737
        %v1367 = vpop.f32.mrb[0].mxu0
        %v1368 = vadd.f32 0.0, %v1367
        %v1369 = vpop.f32.mrb[0].mxu0
        %1370 = vmatprep.mubr.f32.mxu0 0.0
        %1371 = vmatmul.mubr.f32.gmra.mrb[0].mxu0 %v738
        %v1372 = vpop.f32.mrb[0].mxu0
        %v1373 = vadd.f32 0.0, %v1372
        %v1374 = vpop.f32.mrb[0].mxu0
        %1375 = vmatprep.mubr.f32.mxu0 0.0
        %1376 = vmatmul.mubr.f32.gmra.mrb[0].mxu0 %v739
        %v1377 = vpop.f32.mrb[0].mxu0
        %v1378 = vadd.f32 0.0, %v1377
        %v1379 = vpop.f32.mrb[0].mxu0
        %1380 = vmatprep.mubr.f32.mxu0 0.0
        %1381 = vmatmul.mubr.f32.gmra.mrb[0].mxu0 %v740
        %v1382 = vpop.f32.mrb[0].mxu0
        %v1383 = vadd.f32 0.0, %v1382
        %v1384 = vpop.f32.mrb[0].mxu0
        %1385 = vmatprep.mubr.f32.mxu0 0.0
        %1386 = vmatmul.mubr.f32.gmra.mrb[0].mxu0 %v741
        %v1387 = vpop.f32.mrb[0].mxu0
        %v1388 = vadd.f32 0.0, %v1387
        %v1389 = vpop.f32.mrb[0].mxu0
        %1390 = vmatprep.mubr.f32.mxu0 0.0
        %1391 = vmatmul.mubr.f32.gmra.mrb[0].mxu0 %v742
        %v1392 = vpop.f32.mrb[0].mxu0
        %v1393 = vadd.f32 0.0, %v1392
        %v1394 = vpop.f32.mrb[0].mxu0
        %1395 = vmatprep.mubr.f32.mxu0 0.0
        %1396 = vmatmul.mubr.f32.gmra.mrb[0].mxu0 %v743
        %v1397 = vpop.f32.mrb[0].mxu0
        %v1398 = vadd.f32 0.0, %v1397
        %v1399 = vpop.f32.mrb[0].mxu0
        %1400 = vmatprep.mubr.f32.mxu0 0.0
        %1401 = vmatmul.mubr.f32.gmra.mrb[0].mxu0 %v744
        %v1402 = vpop.f32.mrb[0].mxu0
        %v1403 = vadd.f32 0.0, %v1402
        %v1404 = vpop.f32.mrb[0].mxu0
        %1405 = vmatprep.mubr.f32.mxu0 0.0
        %1406 = vmatmul.mubr.f32.gmra.mrb[0].mxu0 %v745
        %v1407 = vpop.f32.mrb[0].mxu0
        %v1408 = vadd.f32 0.0, %v1407
        %v1409 = vpop.f32.mrb[0].mxu0
        %1410 = vmatprep.mubr.f32.mxu0 0.0
        %1411 = vmatmul.mubr.f32.gmra.mrb[0].mxu0 %v746
        %v1412 = vpop.f32.mrb[0].mxu0
        %v1413 = vadd.f32 0.0, %v1412
        %v1414 = vpop.f32.mrb[0].mxu0
        %1415 = vmatprep.mubr.f32.mxu0 0.0
        %1416 = vmatmul.mubr.f32.gmra.mrb[0].mxu0 %v747
        %v1417 = vpop.f32.mrb[0].mxu0
        %v1418 = vadd.f32 0.0, %v1417
        %v1419 = vpop.f32.mrb[0].mxu0
        %1420 = vmatprep.mubr.f32.mxu0 0.0
        %1421 = vmatmul.mubr.f32.gmra.mrb[0].mxu0 %v748
        %v1422 = vpop.f32.mrb[0].mxu0
        %v1423 = vadd.f32 0.0, %v1422
        %v1424 = vpop.f32.mrb[0].mxu0
        %1425 = vmatprep.mubr.f32.mxu0 0.0
        %1426 = vmatmul.mubr.f32.gmra.mrb[0].mxu0 %v749
        %v1427 = vpop.f32.mrb[0].mxu0
        %v1428 = vadd.f32 0.0, %v1427
        %v1429 = vpop.f32.mrb[0].mxu0
        %1430 = vmatprep.mubr.f32.mxu0 0.0
        %1431 = vmatmul.mubr.f32.gmra.mrb[0].mxu0 %v750
        %v1432 = vpop.f32.mrb[0].mxu0
        %v1433 = vadd.f32 0.0, %v1432
        %v1434 = vpop.f32.mrb[0].mxu0
        %1435 = vmatprep.mubr.f32.mxu0 0.0
        %1436 = vmatmul.mubr.f32.gmra.mrb[0].mxu0 %v751
        %v1437 = vpop.f32.mrb[0].mxu0
        %v1438 = vadd.f32 0.0, %v1437
        %v1439 = vpop.f32.mrb[0].mxu0
        %1440 = vmatprep.mubr.f32.mxu0 0.0
        %1441 = vmatmul.mubr.f32.gmra.mrb[0].mxu0 %v752
        %v1442 = vpop.f32.mrb[0].mxu0
        %v1443 = vadd.f32 0.0, %v1442
        %v1444 = vpop.f32.mrb[0].mxu0
        %1445 = vmatprep.mubr.f32.mxu0 0.0
        %1446 = vmatmul.mubr.f32.gmra.mrb[0].mxu0 %v753
        %v1447 = vpop.f32.mrb[0].mxu0
        %v1448 = vadd.f32 0.0, %v1447
        %v1449 = vpop.f32.mrb[0].mxu0
        %1450 = vmatprep.mubr.f32.mxu0 0.0
        %1451 = vmatmul.mubr.f32.gmra.mrb[0].mxu0 %v754
        %v1452 = vpop.f32.mrb[0].mxu0
        %v1453 = vadd.f32 0.0, %v1452
        %v1454 = vpop.f32.mrb[0].mxu0
        %1455 = vmatprep.mubr.f32.mxu0 0.0
        %1456 = vmatmul.mubr.f32.gmra.mrb[0].mxu0 %v755
        %v1457 = vpop.f32.mrb[0].mxu0
        %v1458 = vadd.f32 0.0, %v1457
        %v1459 = vpop.f32.mrb[0].mxu0
        %1460 = vmatprep.mubr.f32.mxu0 0.0
        %1461 = vmatmul.mubr.f32.gmra.mrb[0].mxu0 %v756
        %v1462 = vpop.f32.mrb[0].mxu0
        %v1463 = vadd.f32 0.0, %v1462
        %v1464 = vpop.f32.mrb[0].mxu0
        %1465 = vmatprep.mubr.f32.mxu0 0.0
        %1466 = vmatmul.mubr.f32.gmra.mrb[0].mxu0 %v757
        %v1467 = vpop.f32.mrb[0].mxu0
        %v1468 = vadd.f32 0.0, %v1467
        %v1469 = vpop.f32.mrb[0].mxu0
        %1470 = vmatprep.mubr.f32.mxu0 0.0
        %1471 = vmatmul.mubr.f32.gmra.mrb[0].mxu0 %v758
        %v1472 = vpop.f32.mrb[0].mxu0
        %v1473 = vadd.f32 0.0, %v1472
        %v1474 = vpop.f32.mrb[0].mxu0
        %1475 = vmatprep.mubr.f32.mxu0 0.0
        %1476 = vmatmul.mubr.f32.gmra.mrb[0].mxu0 %v759
        %v1477 = vpop.f32.mrb[0].mxu0
        %v1478 = vadd.f32 0.0, %v1477
        %v1479 = vpop.f32.mrb[0].mxu0
        %1480 = vmatprep.mubr.f32.mxu0 0.0
        %1481 = vmatmul.mubr.f32.gmra.mrb[0].mxu0 %v760
        %v1482 = vpop.f32.mrb[0].mxu0
        %v1483 = vadd.f32 0.0, %v1482
        %v1484 = vpop.f32.mrb[0].mxu0
        %1485 = vmatprep.mubr.f32.mxu0 0.0
        %1486 = vmatmul.mubr.f32.gmra.mrb[0].mxu0 %v761
        %v1487 = vpop.f32.mrb[0].mxu0
        %v1488 = vadd.f32 0.0, %v1487
        %v1489 = vpop.f32.mrb[0].mxu0
        %1490 = vdwg.mxu0
        %v1491 = vadd.f32 %v1091, %v1333
        %v1492 = vadd.f32 %v1096, %v1338
        %v1493 = vadd.f32 %v1101, %v1343
        %v1494 = vadd.f32 %v1106, %v1348
        %v1495 = vadd.f32 %v1111, %v1353
        %v1496 = vadd.f32 %v1116, %v1358
        %v1497 = vadd.f32 %v1121, %v1363
        %v1498 = vadd.f32 %v1126, %v1368
        %v1499 = vadd.f32 %v1131, %v1373
        %v1500 = vadd.f32 %v1136, %v1378
        %v1501 = vadd.f32 %v1141, %v1383
        %v1502 = vadd.f32 %v1146, %v1388
        %v1503 = vadd.f32 %v1151, %v1393
        %v1504 = vadd.f32 %v1156, %v1398
        %v1505 = vadd.f32 %v1161, %v1403
        %v1506 = vadd.f32 %v1166, %v1408
        %v1507 = vadd.f32 %v1171, %v1413
        %v1508 = vadd.f32 %v1176, %v1418
        %v1509 = vadd.f32 %v1181, %v1423
        %v1510 = vadd.f32 %v1186, %v1428
        %v1511 = vadd.f32 %v1191, %v1433
        %v1512 = vadd.f32 %v1196, %v1438
        %v1513 = vadd.f32 %v1201, %v1443
        %v1514 = vadd.f32 %v1206, %v1448
        %v1515 = vadd.f32 %v1211, %v1453
        %v1516 = vadd.f32 %v1216, %v1458
        %v1517 = vadd.f32 %v1221, %v1463
        %v1518 = vadd.f32 %v1226, %v1468
        %v1519 = vadd.f32 %v1231, %v1473
        %v1520 = vadd.f32 %v1236, %v1478
        %v1521 = vadd.f32 %v1241, %v1483
        %v1522 = vadd.f32 %v1246, %v1488
        %s1523 = scalar_lea.vmem [#allocation12], 384
        %v1524 = vld [vmem:[%s1523] sm:$0xff]
        %v1525 = vld [vmem:[%s1523 + $0x8] sm:$0xff]
        %v1526 = vld [vmem:[%s1523 + $0x10] sm:$0xff]
        %v1527 = vld [vmem:[%s1523 + $0x18] sm:$0xff]
        %v1528 = vld [vmem:[%s1523 + $0x20] sm:$0xff]
        %v1529 = vld [vmem:[%s1523 + $0x28] sm:$0xff]
        %v1530 = vld [vmem:[%s1523 + $0x30] sm:$0xff]
        %v1531 = vld [vmem:[%s1523 + $0x38] sm:$0xff]
        %v1532 = vld [vmem:[%s1523 + $0x40] sm:$0xff]
        %v1533 = vld [vmem:[%s1523 + $0x48] sm:$0xff]
        %v1534 = vld [vmem:[%s1523 + $0x50] sm:$0xff]
        %v1535 = vld [vmem:[%s1523 + $0x58] sm:$0xff]
        %v1536 = vld [vmem:[%s1523 + $0x60] sm:$0xff]
        %v1537 = vld [vmem:[%s1523 + $0x68] sm:$0xff]
        %v1538 = vld [vmem:[%s1523 + $0x70] sm:$0xff]
        %v1539 = vld [vmem:[%s1523 + $0x78] sm:$0xff]
        %1540 = vmatprep.subr.mxu0 0.0
        %1541 = vmatpush1.msra.mxu0 %v1524
        %1542 = vmatprep.subr.mxu0 0.0
        %1543 = vmatpush1.msra.mxu0 %v1525
        %1544 = vmatprep.subr.mxu0 0.0
        %1545 = vmatpush1.msra.mxu0 %v1526
        %1546 = vmatprep.subr.mxu0 0.0
        %1547 = vmatpush1.msra.mxu0 %v1527
        %1548 = vmatprep.subr.mxu0 0.0
        %1549 = vmatpush1.msra.mxu0 %v1528
        %1550 = vmatprep.subr.mxu0 0.0
        %1551 = vmatpush1.msra.mxu0 %v1529
        %1552 = vmatprep.subr.mxu0 0.0
        %1553 = vmatpush1.msra.mxu0 %v1530
        %1554 = vmatprep.subr.mxu0 0.0
        %1555 = vmatpush1.msra.mxu0 %v1531
        %1556 = vmatprep.subr.mxu0 0.0
        %1557 = vmatpush1.msra.mxu0 %v1532
        %1558 = vmatprep.subr.mxu0 0.0
        %1559 = vmatpush1.msra.mxu0 %v1533
        %1560 = vmatprep.subr.mxu0 0.0
        %1561 = vmatpush1.msra.mxu0 %v1534
        %1562 = vmatprep.subr.mxu0 0.0
        %1563 = vmatpush1.msra.mxu0 %v1535
        %1564 = vmatprep.subr.mxu0 0.0
        %1565 = vmatpush1.msra.mxu0 %v1536
        %1566 = vmatprep.subr.mxu0 0.0
        %1567 = vmatpush1.msra.mxu0 %v1537
        %1568 = vmatprep.subr.mxu0 0.0
        %1569 = vmatpush1.msra.mxu0 %v1538
        %1570 = vmatprep.subr.mxu0 0.0
        %1571 = vmatpush1.msra.mxu0 %v1539
        %1572 = vmatprep.subr.mxu0 0.0
        %1573 = vmatpush1.msra.mxu0 0.0
        %1574 = vmatprep.subr.mxu0 0.0
        %1575 = vmatpush1.msra.mxu0 0.0
        %1576 = vmatprep.subr.mxu0 0.0
        %1577 = vmatpush1.msra.mxu0 0.0
        %1578 = vmatprep.subr.mxu0 0.0
        %1579 = vmatpush1.msra.mxu0 0.0
        %1580 = vmatprep.subr.mxu0 0.0
        %1581 = vmatpush1.msra.mxu0 0.0
        %1582 = vmatprep.subr.mxu0 0.0
        %1583 = vmatpush1.msra.mxu0 0.0
        %1584 = vmatprep.subr.mxu0 0.0
        %1585 = vmatpush1.msra.mxu0 0.0
        %1586 = vmatprep.subr.mxu0 0.0
        %1587 = vmatpush1.msra.mxu0 0.0
        %1588 = vmatprep.subr.mxu0 0.0
        %1589 = vmatpush1.msra.mxu0 0.0
        %1590 = vmatprep.subr.mxu0 0.0
        %1591 = vmatpush1.msra.mxu0 0.0
        %1592 = vmatprep.subr.mxu0 0.0
        %1593 = vmatpush1.msra.mxu0 0.0
        %1594 = vmatprep.subr.mxu0 0.0
        %1595 = vmatpush1.msra.mxu0 0.0
        %1596 = vmatprep.subr.mxu0 0.0
        %1597 = vmatpush1.msra.mxu0 0.0
        %1598 = vmatprep.subr.mxu0 0.0
        %1599 = vmatpush1.msra.mxu0 0.0
        %1600 = vmatprep.subr.mxu0 0.0
        %1601 = vmatpush1.msra.mxu0 0.0
        %1602 = vmatprep.subr.mxu0 0.0
        %1603 = vmatpush1.msra.mxu0 0.0
        %1604 = vmatprep.mubr.f32.mxu0 0.0
        %1605 = vmatmul.mubr.f32.gmra.mrb[0].mxu0 %v660
        %v1606 = vpop.f32.mrb[0].mxu0
        %v1607 = vadd.f32 0.0, %v1606
        %v1608 = vpop.f32.mrb[0].mxu0
        %1609 = vmatprep.mubr.f32.mxu0 0.0
        %1610 = vmatmul.mubr.f32.gmra.mrb[0].mxu0 %v661
        %v1611 = vpop.f32.mrb[0].mxu0
        %v1612 = vadd.f32 0.0, %v1611
        %v1613 = vpop.f32.mrb[0].mxu0
        %1614 = vmatprep.mubr.f32.mxu0 0.0
        %1615 = vmatmul.mubr.f32.gmra.mrb[0].mxu0 %v662
        %v1616 = vpop.f32.mrb[0].mxu0
        %v1617 = vadd.f32 0.0, %v1616
        %v1618 = vpop.f32.mrb[0].mxu0
        %1619 = vmatprep.mubr.f32.mxu0 0.0
        %1620 = vmatmul.mubr.f32.gmra.mrb[0].mxu0 %v663
        %v1621 = vpop.f32.mrb[0].mxu0
        %v1622 = vadd.f32 0.0, %v1621
        %v1623 = vpop.f32.mrb[0].mxu0
        %1624 = vmatprep.mubr.f32.mxu0 0.0
        %1625 = vmatmul.mubr.f32.gmra.mrb[0].mxu0 %v664
        %v1626 = vpop.f32.mrb[0].mxu0
        %v1627 = vadd.f32 0.0, %v1626
        %v1628 = vpop.f32.mrb[0].mxu0
        %1629 = vmatprep.mubr.f32.mxu0 0.0
        %1630 = vmatmul.mubr.f32.gmra.mrb[0].mxu0 %v665
        %v1631 = vpop.f32.mrb[0].mxu0
        %v1632 = vadd.f32 0.0, %v1631
        %v1633 = vpop.f32.mrb[0].mxu0
        %1634 = vmatprep.mubr.f32.mxu0 0.0
        %1635 = vmatmul.mubr.f32.gmra.mrb[0].mxu0 %v666
        %v1636 = vpop.f32.mrb[0].mxu0
        %v1637 = vadd.f32 0.0, %v1636
        %v1638 = vpop.f32.mrb[0].mxu0
        %1639 = vmatprep.mubr.f32.mxu0 0.0
        %1640 = vmatmul.mubr.f32.gmra.mrb[0].mxu0 %v667
        %v1641 = vpop.f32.mrb[0].mxu0
        %v1642 = vadd.f32 0.0, %v1641
        %v1643 = vpop.f32.mrb[0].mxu0
        %1644 = vmatprep.mubr.f32.mxu0 0.0
        %1645 = vmatmul.mubr.f32.gmra.mrb[0].mxu0 %v668
        %v1646 = vpop.f32.mrb[0].mxu0
        %v1647 = vadd.f32 0.0, %v1646
        %v1648 = vpop.f32.mrb[0].mxu0
        %1649 = vmatprep.mubr.f32.mxu0 0.0
        %1650 = vmatmul.mubr.f32.gmra.mrb[0].mxu0 %v669
        %v1651 = vpop.f32.mrb[0].mxu0
        %v1652 = vadd.f32 0.0, %v1651
        %v1653 = vpop.f32.mrb[0].mxu0
        %1654 = vmatprep.mubr.f32.mxu0 0.0
        %1655 = vmatmul.mubr.f32.gmra.mrb[0].mxu0 %v670
        %v1656 = vpop.f32.mrb[0].mxu0
        %v1657 = vadd.f32 0.0, %v1656
        %v1658 = vpop.f32.mrb[0].mxu0
        %1659 = vmatprep.mubr.f32.mxu0 0.0
        %1660 = vmatmul.mubr.f32.gmra.mrb[0].mxu0 %v671
        %v1661 = vpop.f32.mrb[0].mxu0
        %v1662 = vadd.f32 0.0, %v1661
        %v1663 = vpop.f32.mrb[0].mxu0
        %1664 = vmatprep.mubr.f32.mxu0 0.0
        %1665 = vmatmul.mubr.f32.gmra.mrb[0].mxu0 %v672
        %v1666 = vpop.f32.mrb[0].mxu0
        %v1667 = vadd.f32 0.0, %v1666
        %v1668 = vpop.f32.mrb[0].mxu0
        %1669 = vmatprep.mubr.f32.mxu0 0.0
        %1670 = vmatmul.mubr.f32.gmra.mrb[0].mxu0 %v673
        %v1671 = vpop.f32.mrb[0].mxu0
        %v1672 = vadd.f32 0.0, %v1671
        %v1673 = vpop.f32.mrb[0].mxu0
        %1674 = vmatprep.mubr.f32.mxu0 0.0
        %1675 = vmatmul.mubr.f32.gmra.mrb[0].mxu0 %v674
        %v1676 = vpop.f32.mrb[0].mxu0
        %v1677 = vadd.f32 0.0, %v1676
        %v1678 = vpop.f32.mrb[0].mxu0
        %1679 = vmatprep.mubr.f32.mxu0 0.0
        %1680 = vmatmul.mubr.f32.gmra.mrb[0].mxu0 %v675
        %v1681 = vpop.f32.mrb[0].mxu0
        %v1682 = vadd.f32 0.0, %v1681
        %v1683 = vpop.f32.mrb[0].mxu0
        %1684 = vmatprep.mubr.f32.mxu0 0.0
        %1685 = vmatmul.mubr.f32.gmra.mrb[0].mxu0 %v676
        %v1686 = vpop.f32.mrb[0].mxu0
        %v1687 = vadd.f32 0.0, %v1686
        %v1688 = vpop.f32.mrb[0].mxu0
        %1689 = vmatprep.mubr.f32.mxu0 0.0
        %1690 = vmatmul.mubr.f32.gmra.mrb[0].mxu0 %v677
        %v1691 = vpop.f32.mrb[0].mxu0
        %v1692 = vadd.f32 0.0, %v1691
        %v1693 = vpop.f32.mrb[0].mxu0
        %1694 = vmatprep.mubr.f32.mxu0 0.0
        %1695 = vmatmul.mubr.f32.gmra.mrb[0].mxu0 %v678
        %v1696 = vpop.f32.mrb[0].mxu0
        %v1697 = vadd.f32 0.0, %v1696
        %v1698 = vpop.f32.mrb[0].mxu0
        %1699 = vmatprep.mubr.f32.mxu0 0.0
        %1700 = vmatmul.mubr.f32.gmra.mrb[0].mxu0 %v679
        %v1701 = vpop.f32.mrb[0].mxu0
        %v1702 = vadd.f32 0.0, %v1701
        %v1703 = vpop.f32.mrb[0].mxu0
        %1704 = vmatprep.mubr.f32.mxu0 0.0
        %1705 = vmatmul.mubr.f32.gmra.mrb[0].mxu0 %v680
        %v1706 = vpop.f32.mrb[0].mxu0
        %v1707 = vadd.f32 0.0, %v1706
        %v1708 = vpop.f32.mrb[0].mxu0
        %1709 = vmatprep.mubr.f32.mxu0 0.0
        %1710 = vmatmul.mubr.f32.gmra.mrb[0].mxu0 %v681
        %v1711 = vpop.f32.mrb[0].mxu0
        %v1712 = vadd.f32 0.0, %v1711
        %v1713 = vpop.f32.mrb[0].mxu0
        %1714 = vmatprep.mubr.f32.mxu0 0.0
        %1715 = vmatmul.mubr.f32.gmra.mrb[0].mxu0 %v682
        %v1716 = vpop.f32.mrb[0].mxu0
        %v1717 = vadd.f32 0.0, %v1716
        %v1718 = vpop.f32.mrb[0].mxu0
        %1719 = vmatprep.mubr.f32.mxu0 0.0
        %1720 = vmatmul.mubr.f32.gmra.mrb[0].mxu0 %v683
        %v1721 = vpop.f32.mrb[0].mxu0
        %v1722 = vadd.f32 0.0, %v1721
        %v1723 = vpop.f32.mrb[0].mxu0
        %1724 = vmatprep.mubr.f32.mxu0 0.0
        %1725 = vmatmul.mubr.f32.gmra.mrb[0].mxu0 %v684
        %v1726 = vpop.f32.mrb[0].mxu0
        %v1727 = vadd.f32 0.0, %v1726
        %v1728 = vpop.f32.mrb[0].mxu0
        %1729 = vmatprep.mubr.f32.mxu0 0.0
        %1730 = vmatmul.mubr.f32.gmra.mrb[0].mxu0 %v685
        %v1731 = vpop.f32.mrb[0].mxu0
        %v1732 = vadd.f32 0.0, %v1731
        %v1733 = vpop.f32.mrb[0].mxu0
        %1734 = vmatprep.mubr.f32.mxu0 0.0
        %1735 = vmatmul.mubr.f32.gmra.mrb[0].mxu0 %v686
        %v1736 = vpop.f32.mrb[0].mxu0
        %v1737 = vadd.f32 0.0, %v1736
        %v1738 = vpop.f32.mrb[0].mxu0
        %1739 = vmatprep.mubr.f32.mxu0 0.0
        %1740 = vmatmul.mubr.f32.gmra.mrb[0].mxu0 %v687
        %v1741 = vpop.f32.mrb[0].mxu0
        %v1742 = vadd.f32 0.0, %v1741
        %v1743 = vpop.f32.mrb[0].mxu0
        %1744 = vmatprep.mubr.f32.mxu0 0.0
        %1745 = vmatmul.mubr.f32.gmra.mrb[0].mxu0 %v688
        %v1746 = vpop.f32.mrb[0].mxu0
        %v1747 = vadd.f32 0.0, %v1746
        %v1748 = vpop.f32.mrb[0].mxu0
        %1749 = vmatprep.mubr.f32.mxu0 0.0
        %1750 = vmatmul.mubr.f32.gmra.mrb[0].mxu0 %v689
        %v1751 = vpop.f32.mrb[0].mxu0
        %v1752 = vadd.f32 0.0, %v1751
        %v1753 = vpop.f32.mrb[0].mxu0
        %1754 = vmatprep.mubr.f32.mxu0 0.0
        %1755 = vmatmul.mubr.f32.gmra.mrb[0].mxu0 %v690
        %v1756 = vpop.f32.mrb[0].mxu0
        %v1757 = vadd.f32 0.0, %v1756
        %v1758 = vpop.f32.mrb[0].mxu0
        %1759 = vmatprep.mubr.f32.mxu0 0.0
        %1760 = vmatmul.mubr.f32.gmra.mrb[0].mxu0 %v691
        %v1761 = vpop.f32.mrb[0].mxu0
        %v1762 = vadd.f32 0.0, %v1761
        %v1763 = vpop.f32.mrb[0].mxu0
        %1764 = vdwg.mxu0
        %v1765 = vadd.f32 %v1491, %v1607
        %v1766 = vadd.f32 %v1492, %v1612
        %v1767 = vadd.f32 %v1493, %v1617
        %v1768 = vadd.f32 %v1494, %v1622
        %v1769 = vadd.f32 %v1495, %v1627
        %v1770 = vadd.f32 %v1496, %v1632
        %v1771 = vadd.f32 %v1497, %v1637
        %v1772 = vadd.f32 %v1498, %v1642
        %v1773 = vadd.f32 %v1499, %v1647
        %v1774 = vadd.f32 %v1500, %v1652
        %v1775 = vadd.f32 %v1501, %v1657
        %v1776 = vadd.f32 %v1502, %v1662
        %v1777 = vadd.f32 %v1503, %v1667
        %v1778 = vadd.f32 %v1504, %v1672
        %v1779 = vadd.f32 %v1505, %v1677
        %v1780 = vadd.f32 %v1506, %v1682
        %v1781 = vadd.f32 %v1507, %v1687
        %v1782 = vadd.f32 %v1508, %v1692
        %v1783 = vadd.f32 %v1509, %v1697
        %v1784 = vadd.f32 %v1510, %v1702
        %v1785 = vadd.f32 %v1511, %v1707
        %v1786 = vadd.f32 %v1512, %v1712
        %v1787 = vadd.f32 %v1513, %v1717
        %v1788 = vadd.f32 %v1514, %v1722
        %v1789 = vadd.f32 %v1515, %v1727
        %v1790 = vadd.f32 %v1516, %v1732
        %v1791 = vadd.f32 %v1517, %v1737
        %v1792 = vadd.f32 %v1518, %v1742
        %v1793 = vadd.f32 %v1519, %v1747
        %v1794 = vadd.f32 %v1520, %v1752
        %v1795 = vadd.f32 %v1521, %v1757
        %v1796 = vadd.f32 %v1522, %v1762
        %s1797 = scalar_lea.vmem [#allocation12], 512
        %v1798 = vld [vmem:[%s1797] sm:$0xff]
        %v1799 = vld [vmem:[%s1797 + $0x8] sm:$0xff]
        %v1800 = vld [vmem:[%s1797 + $0x10] sm:$0xff]
        %v1801 = vld [vmem:[%s1797 + $0x18] sm:$0xff]
        %v1802 = vld [vmem:[%s1797 + $0x20] sm:$0xff]
        %v1803 = vld [vmem:[%s1797 + $0x28] sm:$0xff]
        %v1804 = vld [vmem:[%s1797 + $0x30] sm:$0xff]
        %v1805 = vld [vmem:[%s1797 + $0x38] sm:$0xff]
        %v1806 = vld [vmem:[%s1797 + $0x40] sm:$0xff]
        %v1807 = vld [vmem:[%s1797 + $0x48] sm:$0xff]
        %v1808 = vld [vmem:[%s1797 + $0x50] sm:$0xff]
        %v1809 = vld [vmem:[%s1797 + $0x58] sm:$0xff]
        %v1810 = vld [vmem:[%s1797 + $0x60] sm:$0xff]
        %v1811 = vld [vmem:[%s1797 + $0x68] sm:$0xff]
        %v1812 = vld [vmem:[%s1797 + $0x70] sm:$0xff]
        %v1813 = vld [vmem:[%s1797 + $0x78] sm:$0xff]
        %1814 = vmatprep.subr.mxu0 0.0
        %1815 = vmatpush1.msra.mxu0 %v1798
        %1816 = vmatprep.subr.mxu0 0.0
        %1817 = vmatpush1.msra.mxu0 %v1799
        %1818 = vmatprep.subr.mxu0 0.0
        %1819 = vmatpush1.msra.mxu0 %v1800
        %1820 = vmatprep.subr.mxu0 0.0
        %1821 = vmatpush1.msra.mxu0 %v1801
        %1822 = vmatprep.subr.mxu0 0.0
        %1823 = vmatpush1.msra.mxu0 %v1802
        %1824 = vmatprep.subr.mxu0 0.0
        %1825 = vmatpush1.msra.mxu0 %v1803
        %1826 = vmatprep.subr.mxu0 0.0
        %1827 = vmatpush1.msra.mxu0 %v1804
        %1828 = vmatprep.subr.mxu0 0.0
        %1829 = vmatpush1.msra.mxu0 %v1805
        %1830 = vmatprep.subr.mxu0 0.0
        %1831 = vmatpush1.msra.mxu0 %v1806
        %1832 = vmatprep.subr.mxu0 0.0
        %1833 = vmatpush1.msra.mxu0 %v1807
        %1834 = vmatprep.subr.mxu0 0.0
        %1835 = vmatpush1.msra.mxu0 %v1808
        %1836 = vmatprep.subr.mxu0 0.0
        %1837 = vmatpush1.msra.mxu0 %v1809
        %1838 = vmatprep.subr.mxu0 0.0
        %1839 = vmatpush1.msra.mxu0 %v1810
        %1840 = vmatprep.subr.mxu0 0.0
        %1841 = vmatpush1.msra.mxu0 %v1811
        %1842 = vmatprep.subr.mxu0 0.0
        %1843 = vmatpush1.msra.mxu0 %v1812
        %1844 = vmatprep.subr.mxu0 0.0
        %1845 = vmatpush1.msra.mxu0 %v1813
        %1846 = vmatprep.subr.mxu0 0.0
        %1847 = vmatpush1.msra.mxu0 0.0
        %1848 = vmatprep.subr.mxu0 0.0
        %1849 = vmatpush1.msra.mxu0 0.0
        %1850 = vmatprep.subr.mxu0 0.0
        %1851 = vmatpush1.msra.mxu0 0.0
        %1852 = vmatprep.subr.mxu0 0.0
        %1853 = vmatpush1.msra.mxu0 0.0
        %1854 = vmatprep.subr.mxu0 0.0
        %1855 = vmatpush1.msra.mxu0 0.0
        %1856 = vmatprep.subr.mxu0 0.0
        %1857 = vmatpush1.msra.mxu0 0.0
        %1858 = vmatprep.subr.mxu0 0.0
        %1859 = vmatpush1.msra.mxu0 0.0
        %1860 = vmatprep.subr.mxu0 0.0
        %1861 = vmatpush1.msra.mxu0 0.0
        %1862 = vmatprep.subr.mxu0 0.0
        %1863 = vmatpush1.msra.mxu0 0.0
        %1864 = vmatprep.subr.mxu0 0.0
        %1865 = vmatpush1.msra.mxu0 0.0
        %1866 = vmatprep.subr.mxu0 0.0
        %1867 = vmatpush1.msra.mxu0 0.0
        %1868 = vmatprep.subr.mxu0 0.0
        %1869 = vmatpush1.msra.mxu0 0.0
        %1870 = vmatprep.subr.mxu0 0.0
        %1871 = vmatpush1.msra.mxu0 0.0
        %1872 = vmatprep.subr.mxu0 0.0
        %1873 = vmatpush1.msra.mxu0 0.0
        %1874 = vmatprep.subr.mxu0 0.0
        %1875 = vmatpush1.msra.mxu0 0.0
        %1876 = vmatprep.subr.mxu0 0.0
        %1877 = vmatpush1.msra.mxu0 0.0
        %1878 = vmatprep.mubr.f32.mxu0 0.0
        %1879 = vmatmul.mubr.f32.gmra.mrb[0].mxu0 %v696
        %v1880 = vpop.f32.mrb[0].mxu0
        %v1881 = vadd.f32 0.0, %v1880
        %v1882 = vpop.f32.mrb[0].mxu0
        %1883 = vmatprep.mubr.f32.mxu0 0.0
        %1884 = vmatmul.mubr.f32.gmra.mrb[0].mxu0 %v697
        %v1885 = vpop.f32.mrb[0].mxu0
        %v1886 = vadd.f32 0.0, %v1885
        %v1887 = vpop.f32.mrb[0].mxu0
        %1888 = vmatprep.mubr.f32.mxu0 0.0
        %1889 = vmatmul.mubr.f32.gmra.mrb[0].mxu0 %v698
        %v1890 = vpop.f32.mrb[0].mxu0
        %v1891 = vadd.f32 0.0, %v1890
        %v1892 = vpop.f32.mrb[0].mxu0
        %1893 = vmatprep.mubr.f32.mxu0 0.0
        %1894 = vmatmul.mubr.f32.gmra.mrb[0].mxu0 %v699
        %v1895 = vpop.f32.mrb[0].mxu0
        %v1896 = vadd.f32 0.0, %v1895
        %v1897 = vpop.f32.mrb[0].mxu0
        %1898 = vmatprep.mubr.f32.mxu0 0.0
        %1899 = vmatmul.mubr.f32.gmra.mrb[0].mxu0 %v700
        %v1900 = vpop.f32.mrb[0].mxu0
        %v1901 = vadd.f32 0.0, %v1900
        %v1902 = vpop.f32.mrb[0].mxu0
        %1903 = vmatprep.mubr.f32.mxu0 0.0
        %1904 = vmatmul.mubr.f32.gmra.mrb[0].mxu0 %v701
        %v1905 = vpop.f32.mrb[0].mxu0
        %v1906 = vadd.f32 0.0, %v1905
        %v1907 = vpop.f32.mrb[0].mxu0
        %1908 = vmatprep.mubr.f32.mxu0 0.0
        %1909 = vmatmul.mubr.f32.gmra.mrb[0].mxu0 %v702
        %v1910 = vpop.f32.mrb[0].mxu0
        %v1911 = vadd.f32 0.0, %v1910
        %v1912 = vpop.f32.mrb[0].mxu0
        %1913 = vmatprep.mubr.f32.mxu0 0.0
        %1914 = vmatmul.mubr.f32.gmra.mrb[0].mxu0 %v703
        %v1915 = vpop.f32.mrb[0].mxu0
        %v1916 = vadd.f32 0.0, %v1915
        %v1917 = vpop.f32.mrb[0].mxu0
        %1918 = vmatprep.mubr.f32.mxu0 0.0
        %1919 = vmatmul.mubr.f32.gmra.mrb[0].mxu0 %v704
        %v1920 = vpop.f32.mrb[0].mxu0
        %v1921 = vadd.f32 0.0, %v1920
        %v1922 = vpop.f32.mrb[0].mxu0
        %1923 = vmatprep.mubr.f32.mxu0 0.0
        %1924 = vmatmul.mubr.f32.gmra.mrb[0].mxu0 %v705
        %v1925 = vpop.f32.mrb[0].mxu0
        %v1926 = vadd.f32 0.0, %v1925
        %v1927 = vpop.f32.mrb[0].mxu0
        %1928 = vmatprep.mubr.f32.mxu0 0.0
        %1929 = vmatmul.mubr.f32.gmra.mrb[0].mxu0 %v706
        %v1930 = vpop.f32.mrb[0].mxu0
        %v1931 = vadd.f32 0.0, %v1930
        %v1932 = vpop.f32.mrb[0].mxu0
        %1933 = vmatprep.mubr.f32.mxu0 0.0
        %1934 = vmatmul.mubr.f32.gmra.mrb[0].mxu0 %v707
        %v1935 = vpop.f32.mrb[0].mxu0
        %v1936 = vadd.f32 0.0, %v1935
        %v1937 = vpop.f32.mrb[0].mxu0
        %1938 = vmatprep.mubr.f32.mxu0 0.0
        %1939 = vmatmul.mubr.f32.gmra.mrb[0].mxu0 %v708
        %v1940 = vpop.f32.mrb[0].mxu0
        %v1941 = vadd.f32 0.0, %v1940
        %v1942 = vpop.f32.mrb[0].mxu0
        %1943 = vmatprep.mubr.f32.mxu0 0.0
        %1944 = vmatmul.mubr.f32.gmra.mrb[0].mxu0 %v709
        %v1945 = vpop.f32.mrb[0].mxu0
        %v1946 = vadd.f32 0.0, %v1945
        %v1947 = vpop.f32.mrb[0].mxu0
        %1948 = vmatprep.mubr.f32.mxu0 0.0
        %1949 = vmatmul.mubr.f32.gmra.mrb[0].mxu0 %v710
        %v1950 = vpop.f32.mrb[0].mxu0
        %v1951 = vadd.f32 0.0, %v1950
        %v1952 = vpop.f32.mrb[0].mxu0
        %1953 = vmatprep.mubr.f32.mxu0 0.0
        %1954 = vmatmul.mubr.f32.gmra.mrb[0].mxu0 %v711
        %v1955 = vpop.f32.mrb[0].mxu0
        %v1956 = vadd.f32 0.0, %v1955
        %v1957 = vpop.f32.mrb[0].mxu0
        %1958 = vmatprep.mubr.f32.mxu0 0.0
        %1959 = vmatmul.mubr.f32.gmra.mrb[0].mxu0 %v712
        %v1960 = vpop.f32.mrb[0].mxu0
        %v1961 = vadd.f32 0.0, %v1960
        %v1962 = vpop.f32.mrb[0].mxu0
        %1963 = vmatprep.mubr.f32.mxu0 0.0
        %1964 = vmatmul.mubr.f32.gmra.mrb[0].mxu0 %v713
        %v1965 = vpop.f32.mrb[0].mxu0
        %v1966 = vadd.f32 0.0, %v1965
        %v1967 = vpop.f32.mrb[0].mxu0
        %1968 = vmatprep.mubr.f32.mxu0 0.0
        %1969 = vmatmul.mubr.f32.gmra.mrb[0].mxu0 %v714
        %v1970 = vpop.f32.mrb[0].mxu0
        %v1971 = vadd.f32 0.0, %v1970
        %v1972 = vpop.f32.mrb[0].mxu0
        %1973 = vmatprep.mubr.f32.mxu0 0.0
        %1974 = vmatmul.mubr.f32.gmra.mrb[0].mxu0 %v715
        %v1975 = vpop.f32.mrb[0].mxu0
        %v1976 = vadd.f32 0.0, %v1975
        %v1977 = vpop.f32.mrb[0].mxu0
        %1978 = vmatprep.mubr.f32.mxu0 0.0
        %1979 = vmatmul.mubr.f32.gmra.mrb[0].mxu0 %v716
        %v1980 = vpop.f32.mrb[0].mxu0
        %v1981 = vadd.f32 0.0, %v1980
        %v1982 = vpop.f32.mrb[0].mxu0
        %1983 = vmatprep.mubr.f32.mxu0 0.0
        %1984 = vmatmul.mubr.f32.gmra.mrb[0].mxu0 %v717
        %v1985 = vpop.f32.mrb[0].mxu0
        %v1986 = vadd.f32 0.0, %v1985
        %v1987 = vpop.f32.mrb[0].mxu0
        %1988 = vmatprep.mubr.f32.mxu0 0.0
        %1989 = vmatmul.mubr.f32.gmra.mrb[0].mxu0 %v718
        %v1990 = vpop.f32.mrb[0].mxu0
        %v1991 = vadd.f32 0.0, %v1990
        %v1992 = vpop.f32.mrb[0].mxu0
        %1993 = vmatprep.mubr.f32.mxu0 0.0
        %1994 = vmatmul.mubr.f32.gmra.mrb[0].mxu0 %v719
        %v1995 = vpop.f32.mrb[0].mxu0
        %v1996 = vadd.f32 0.0, %v1995
        %v1997 = vpop.f32.mrb[0].mxu0
        %1998 = vmatprep.mubr.f32.mxu0 0.0
        %1999 = vmatmul.mubr.f32.gmra.mrb[0].mxu0 %v720
        %v2000 = vpop.f32.mrb[0].mxu0
        %v2001 = vadd.f32 0.0, %v2000
        %v2002 = vpop.f32.mrb[0].mxu0
        %2003 = vmatprep.mubr.f32.mxu0 0.0
        %2004 = vmatmul.mubr.f32.gmra.mrb[0].mxu0 %v721
        %v2005 = vpop.f32.mrb[0].mxu0
        %v2006 = vadd.f32 0.0, %v2005
        %v2007 = vpop.f32.mrb[0].mxu0
        %2008 = vmatprep.mubr.f32.mxu0 0.0
        %2009 = vmatmul.mubr.f32.gmra.mrb[0].mxu0 %v722
        %v2010 = vpop.f32.mrb[0].mxu0
        %v2011 = vadd.f32 0.0, %v2010
        %v2012 = vpop.f32.mrb[0].mxu0
        %2013 = vmatprep.mubr.f32.mxu0 0.0
        %2014 = vmatmul.mubr.f32.gmra.mrb[0].mxu0 %v723
        %v2015 = vpop.f32.mrb[0].mxu0
        %v2016 = vadd.f32 0.0, %v2015
        %v2017 = vpop.f32.mrb[0].mxu0
        %2018 = vmatprep.mubr.f32.mxu0 0.0
        %2019 = vmatmul.mubr.f32.gmra.mrb[0].mxu0 %v724
        %v2020 = vpop.f32.mrb[0].mxu0
        %v2021 = vadd.f32 0.0, %v2020
        %v2022 = vpop.f32.mrb[0].mxu0
        %2023 = vmatprep.mubr.f32.mxu0 0.0
        %2024 = vmatmul.mubr.f32.gmra.mrb[0].mxu0 %v725
        %v2025 = vpop.f32.mrb[0].mxu0
        %v2026 = vadd.f32 0.0, %v2025
        %v2027 = vpop.f32.mrb[0].mxu0
        %2028 = vmatprep.mubr.f32.mxu0 0.0
        %2029 = vmatmul.mubr.f32.gmra.mrb[0].mxu0 %v726
        %v2030 = vpop.f32.mrb[0].mxu0
        %v2031 = vadd.f32 0.0, %v2030
        %v2032 = vpop.f32.mrb[0].mxu0
        %2033 = vmatprep.mubr.f32.mxu0 0.0
        %2034 = vmatmul.mubr.f32.gmra.mrb[0].mxu0 %v727
        %v2035 = vpop.f32.mrb[0].mxu0
        %v2036 = vadd.f32 0.0, %v2035
        %v2037 = vpop.f32.mrb[0].mxu0
        %2038 = vdwg.mxu0
        %v2039 = vadd.f32 %v1765, %v1881
        %v2040 = vadd.f32 %v1766, %v1886
        %v2041 = vadd.f32 %v1767, %v1891
        %v2042 = vadd.f32 %v1768, %v1896
        %v2043 = vadd.f32 %v1769, %v1901
        %v2044 = vadd.f32 %v1770, %v1906
        %v2045 = vadd.f32 %v1771, %v1911
        %v2046 = vadd.f32 %v1772, %v1916
        %v2047 = vadd.f32 %v1773, %v1921
        %v2048 = vadd.f32 %v1774, %v1926
        %v2049 = vadd.f32 %v1775, %v1931
        %v2050 = vadd.f32 %v1776, %v1936
        %v2051 = vadd.f32 %v1777, %v1941
        %v2052 = vadd.f32 %v1778, %v1946
        %v2053 = vadd.f32 %v1779, %v1951
        %v2054 = vadd.f32 %v1780, %v1956
        %v2055 = vadd.f32 %v1781, %v1961
        %v2056 = vadd.f32 %v1782, %v1966
        %v2057 = vadd.f32 %v1783, %v1971
        %v2058 = vadd.f32 %v1784, %v1976
        %v2059 = vadd.f32 %v1785, %v1981
        %v2060 = vadd.f32 %v1786, %v1986
        %v2061 = vadd.f32 %v1787, %v1991
        %v2062 = vadd.f32 %v1788, %v1996
        %v2063 = vadd.f32 %v1789, %v2001
        %v2064 = vadd.f32 %v1790, %v2006
        %v2065 = vadd.f32 %v1791, %v2011
        %v2066 = vadd.f32 %v1792, %v2016
        %v2067 = vadd.f32 %v1793, %v2021
        %v2068 = vadd.f32 %v1794, %v2026
        %v2069 = vadd.f32 %v1795, %v2031
        %v2070 = vadd.f32 %v1796, %v2036
        %s2071 = scalar_lea.vmem [#allocation12], 640
        %v2072 = vld [vmem:[%s2071] sm:$0xff]
        %v2073 = vld [vmem:[%s2071 + $0x8] sm:$0xff]
        %v2074 = vld [vmem:[%s2071 + $0x10] sm:$0xff]
        %v2075 = vld [vmem:[%s2071 + $0x18] sm:$0xff]
        %v2076 = vld [vmem:[%s2071 + $0x20] sm:$0xff]
        %v2077 = vld [vmem:[%s2071 + $0x28] sm:$0xff]
        %v2078 = vld [vmem:[%s2071 + $0x30] sm:$0xff]
        %v2079 = vld [vmem:[%s2071 + $0x38] sm:$0xff]
        %v2080 = vld [vmem:[%s2071 + $0x40] sm:$0xff]
        %v2081 = vld [vmem:[%s2071 + $0x48] sm:$0xff]
        %v2082 = vld [vmem:[%s2071 + $0x50] sm:$0xff]
        %v2083 = vld [vmem:[%s2071 + $0x58] sm:$0xff]
        %v2084 = vld [vmem:[%s2071 + $0x60] sm:$0xff]
        %v2085 = vld [vmem:[%s2071 + $0x68] sm:$0xff]
        %v2086 = vld [vmem:[%s2071 + $0x70] sm:$0xff]
        %v2087 = vld [vmem:[%s2071 + $0x78] sm:$0xff]
        %2088 = vmatprep.subr.mxu0 0.0
        %2089 = vmatpush1.msra.mxu0 %v2072
        %2090 = vmatprep.subr.mxu0 0.0
        %2091 = vmatpush1.msra.mxu0 %v2073
        %2092 = vmatprep.subr.mxu0 0.0
        %2093 = vmatpush1.msra.mxu0 %v2074
        %2094 = vmatprep.subr.mxu0 0.0
        %2095 = vmatpush1.msra.mxu0 %v2075
        %2096 = vmatprep.subr.mxu0 0.0
        %2097 = vmatpush1.msra.mxu0 %v2076
        %2098 = vmatprep.subr.mxu0 0.0
        %2099 = vmatpush1.msra.mxu0 %v2077
        %2100 = vmatprep.subr.mxu0 0.0
        %2101 = vmatpush1.msra.mxu0 %v2078
        %2102 = vmatprep.subr.mxu0 0.0
        %2103 = vmatpush1.msra.mxu0 %v2079
        %2104 = vmatprep.subr.mxu0 0.0
        %2105 = vmatpush1.msra.mxu0 %v2080
        %2106 = vmatprep.subr.mxu0 0.0
        %2107 = vmatpush1.msra.mxu0 %v2081
        %2108 = vmatprep.subr.mxu0 0.0
        %2109 = vmatpush1.msra.mxu0 %v2082
        %2110 = vmatprep.subr.mxu0 0.0
        %2111 = vmatpush1.msra.mxu0 %v2083
        %2112 = vmatprep.subr.mxu0 0.0
        %2113 = vmatpush1.msra.mxu0 %v2084
        %2114 = vmatprep.subr.mxu0 0.0
        %2115 = vmatpush1.msra.mxu0 %v2085
        %2116 = vmatprep.subr.mxu0 0.0
        %2117 = vmatpush1.msra.mxu0 %v2086
        %2118 = vmatprep.subr.mxu0 0.0
        %2119 = vmatpush1.msra.mxu0 %v2087
        %2120 = vmatprep.subr.mxu0 0.0
        %2121 = vmatpush1.msra.mxu0 0.0
        %2122 = vmatprep.subr.mxu0 0.0
        %2123 = vmatpush1.msra.mxu0 0.0
        %2124 = vmatprep.subr.mxu0 0.0
        %2125 = vmatpush1.msra.mxu0 0.0
        %2126 = vmatprep.subr.mxu0 0.0
        %2127 = vmatpush1.msra.mxu0 0.0
        %2128 = vmatprep.subr.mxu0 0.0
        %2129 = vmatpush1.msra.mxu0 0.0
        %2130 = vmatprep.subr.mxu0 0.0
        %2131 = vmatpush1.msra.mxu0 0.0
        %2132 = vmatprep.subr.mxu0 0.0
        %2133 = vmatpush1.msra.mxu0 0.0
        %2134 = vmatprep.subr.mxu0 0.0
        %2135 = vmatpush1.msra.mxu0 0.0
        %2136 = vmatprep.subr.mxu0 0.0
        %2137 = vmatpush1.msra.mxu0 0.0
        %2138 = vmatprep.subr.mxu0 0.0
        %2139 = vmatpush1.msra.mxu0 0.0
        %2140 = vmatprep.subr.mxu0 0.0
        %2141 = vmatpush1.msra.mxu0 0.0
        %2142 = vmatprep.subr.mxu0 0.0
        %2143 = vmatpush1.msra.mxu0 0.0
        %2144 = vmatprep.subr.mxu0 0.0
        %2145 = vmatpush1.msra.mxu0 0.0
        %2146 = vmatprep.subr.mxu0 0.0
        %2147 = vmatpush1.msra.mxu0 0.0
        %2148 = vmatprep.subr.mxu0 0.0
        %2149 = vmatpush1.msra.mxu0 0.0
        %2150 = vmatprep.subr.mxu0 0.0
        %2151 = vmatpush1.msra.mxu0 0.0
        %2152 = vmatprep.mubr.f32.mxu0 0.0
        %2153 = vmatmul.mubr.f32.gmra.mrb[0].mxu0 %v732
        %v2154 = vpop.f32.mrb[0].mxu0
        %v2155 = vadd.f32 0.0, %v2154
        %v2156 = vpop.f32.mrb[0].mxu0
        %2157 = vmatprep.mubr.f32.mxu0 0.0
        %2158 = vmatmul.mubr.f32.gmra.mrb[0].mxu0 %v733
        %v2159 = vpop.f32.mrb[0].mxu0
        %v2160 = vadd.f32 0.0, %v2159
        %v2161 = vpop.f32.mrb[0].mxu0
        %2162 = vmatprep.mubr.f32.mxu0 0.0
        %2163 = vmatmul.mubr.f32.gmra.mrb[0].mxu0 %v734
        %v2164 = vpop.f32.mrb[0].mxu0
        %v2165 = vadd.f32 0.0, %v2164
        %v2166 = vpop.f32.mrb[0].mxu0
        %2167 = vmatprep.mubr.f32.mxu0 0.0
        %2168 = vmatmul.mubr.f32.gmra.mrb[0].mxu0 %v735
        %v2169 = vpop.f32.mrb[0].mxu0
        %v2170 = vadd.f32 0.0, %v2169
        %v2171 = vpop.f32.mrb[0].mxu0
        %2172 = vmatprep.mubr.f32.mxu0 0.0
        %2173 = vmatmul.mubr.f32.gmra.mrb[0].mxu0 %v736
        %v2174 = vpop.f32.mrb[0].mxu0
        %v2175 = vadd.f32 0.0, %v2174
        %v2176 = vpop.f32.mrb[0].mxu0
        %2177 = vmatprep.mubr.f32.mxu0 0.0
        %2178 = vmatmul.mubr.f32.gmra.mrb[0].mxu0 %v737
        %v2179 = vpop.f32.mrb[0].mxu0
        %v2180 = vadd.f32 0.0, %v2179
        %v2181 = vpop.f32.mrb[0].mxu0
        %2182 = vmatprep.mubr.f32.mxu0 0.0
        %2183 = vmatmul.mubr.f32.gmra.mrb[0].mxu0 %v738
        %v2184 = vpop.f32.mrb[0].mxu0
        %v2185 = vadd.f32 0.0, %v2184
        %v2186 = vpop.f32.mrb[0].mxu0
        %2187 = vmatprep.mubr.f32.mxu0 0.0
        %2188 = vmatmul.mubr.f32.gmra.mrb[0].mxu0 %v739
        %v2189 = vpop.f32.mrb[0].mxu0
        %v2190 = vadd.f32 0.0, %v2189
        %v2191 = vpop.f32.mrb[0].mxu0
        %2192 = vmatprep.mubr.f32.mxu0 0.0
        %2193 = vmatmul.mubr.f32.gmra.mrb[0].mxu0 %v740
        %v2194 = vpop.f32.mrb[0].mxu0
        %v2195 = vadd.f32 0.0, %v2194
        %v2196 = vpop.f32.mrb[0].mxu0
        %2197 = vmatprep.mubr.f32.mxu0 0.0
        %2198 = vmatmul.mubr.f32.gmra.mrb[0].mxu0 %v741
        %v2199 = vpop.f32.mrb[0].mxu0
        %v2200 = vadd.f32 0.0, %v2199
        %v2201 = vpop.f32.mrb[0].mxu0
        %2202 = vmatprep.mubr.f32.mxu0 0.0
        %2203 = vmatmul.mubr.f32.gmra.mrb[0].mxu0 %v742
        %v2204 = vpop.f32.mrb[0].mxu0
        %v2205 = vadd.f32 0.0, %v2204
        %v2206 = vpop.f32.mrb[0].mxu0
        %2207 = vmatprep.mubr.f32.mxu0 0.0
        %2208 = vmatmul.mubr.f32.gmra.mrb[0].mxu0 %v743
        %v2209 = vpop.f32.mrb[0].mxu0
        %v2210 = vadd.f32 0.0, %v2209
        %v2211 = vpop.f32.mrb[0].mxu0
        %2212 = vmatprep.mubr.f32.mxu0 0.0
        %2213 = vmatmul.mubr.f32.gmra.mrb[0].mxu0 %v744
        %v2214 = vpop.f32.mrb[0].mxu0
        %v2215 = vadd.f32 0.0, %v2214
        %v2216 = vpop.f32.mrb[0].mxu0
        %2217 = vmatprep.mubr.f32.mxu0 0.0
        %2218 = vmatmul.mubr.f32.gmra.mrb[0].mxu0 %v745
        %v2219 = vpop.f32.mrb[0].mxu0
        %v2220 = vadd.f32 0.0, %v2219
        %v2221 = vpop.f32.mrb[0].mxu0
        %2222 = vmatprep.mubr.f32.mxu0 0.0
        %2223 = vmatmul.mubr.f32.gmra.mrb[0].mxu0 %v746
        %v2224 = vpop.f32.mrb[0].mxu0
        %v2225 = vadd.f32 0.0, %v2224
        %v2226 = vpop.f32.mrb[0].mxu0
        %2227 = vmatprep.mubr.f32.mxu0 0.0
        %2228 = vmatmul.mubr.f32.gmra.mrb[0].mxu0 %v747
        %v2229 = vpop.f32.mrb[0].mxu0
        %v2230 = vadd.f32 0.0, %v2229
        %v2231 = vpop.f32.mrb[0].mxu0
        %2232 = vmatprep.mubr.f32.mxu0 0.0
        %2233 = vmatmul.mubr.f32.gmra.mrb[0].mxu0 %v748
        %v2234 = vpop.f32.mrb[0].mxu0
        %v2235 = vadd.f32 0.0, %v2234
        %v2236 = vpop.f32.mrb[0].mxu0
        %2237 = vmatprep.mubr.f32.mxu0 0.0
        %2238 = vmatmul.mubr.f32.gmra.mrb[0].mxu0 %v749
        %v2239 = vpop.f32.mrb[0].mxu0
        %v2240 = vadd.f32 0.0, %v2239
        %v2241 = vpop.f32.mrb[0].mxu0
        %2242 = vmatprep.mubr.f32.mxu0 0.0
        %2243 = vmatmul.mubr.f32.gmra.mrb[0].mxu0 %v750
        %v2244 = vpop.f32.mrb[0].mxu0
        %v2245 = vadd.f32 0.0, %v2244
        %v2246 = vpop.f32.mrb[0].mxu0
        %2247 = vmatprep.mubr.f32.mxu0 0.0
        %2248 = vmatmul.mubr.f32.gmra.mrb[0].mxu0 %v751
        %v2249 = vpop.f32.mrb[0].mxu0
        %v2250 = vadd.f32 0.0, %v2249
        %v2251 = vpop.f32.mrb[0].mxu0
        %2252 = vmatprep.mubr.f32.mxu0 0.0
        %2253 = vmatmul.mubr.f32.gmra.mrb[0].mxu0 %v752
        %v2254 = vpop.f32.mrb[0].mxu0
        %v2255 = vadd.f32 0.0, %v2254
        %v2256 = vpop.f32.mrb[0].mxu0
        %2257 = vmatprep.mubr.f32.mxu0 0.0
        %2258 = vmatmul.mubr.f32.gmra.mrb[0].mxu0 %v753
        %v2259 = vpop.f32.mrb[0].mxu0
        %v2260 = vadd.f32 0.0, %v2259
        %v2261 = vpop.f32.mrb[0].mxu0
        %2262 = vmatprep.mubr.f32.mxu0 0.0
        %2263 = vmatmul.mubr.f32.gmra.mrb[0].mxu0 %v754
        %v2264 = vpop.f32.mrb[0].mxu0
        %v2265 = vadd.f32 0.0, %v2264
        %v2266 = vpop.f32.mrb[0].mxu0
        %2267 = vmatprep.mubr.f32.mxu0 0.0
        %2268 = vmatmul.mubr.f32.gmra.mrb[0].mxu0 %v755
        %v2269 = vpop.f32.mrb[0].mxu0
        %v2270 = vadd.f32 0.0, %v2269
        %v2271 = vpop.f32.mrb[0].mxu0
        %2272 = vmatprep.mubr.f32.mxu0 0.0
        %2273 = vmatmul.mubr.f32.gmra.mrb[0].mxu0 %v756
        %v2274 = vpop.f32.mrb[0].mxu0
        %v2275 = vadd.f32 0.0, %v2274
        %v2276 = vpop.f32.mrb[0].mxu0
        %2277 = vmatprep.mubr.f32.mxu0 0.0
        %2278 = vmatmul.mubr.f32.gmra.mrb[0].mxu0 %v757
        %v2279 = vpop.f32.mrb[0].mxu0
        %v2280 = vadd.f32 0.0, %v2279
        %v2281 = vpop.f32.mrb[0].mxu0
        %2282 = vmatprep.mubr.f32.mxu0 0.0
        %2283 = vmatmul.mubr.f32.gmra.mrb[0].mxu0 %v758
        %v2284 = vpop.f32.mrb[0].mxu0
        %v2285 = vadd.f32 0.0, %v2284
        %v2286 = vpop.f32.mrb[0].mxu0
        %2287 = vmatprep.mubr.f32.mxu0 0.0
        %2288 = vmatmul.mubr.f32.gmra.mrb[0].mxu0 %v759
        %v2289 = vpop.f32.mrb[0].mxu0
        %v2290 = vadd.f32 0.0, %v2289
        %v2291 = vpop.f32.mrb[0].mxu0
        %2292 = vmatprep.mubr.f32.mxu0 0.0
        %2293 = vmatmul.mubr.f32.gmra.mrb[0].mxu0 %v760
        %v2294 = vpop.f32.mrb[0].mxu0
        %v2295 = vadd.f32 0.0, %v2294
        %v2296 = vpop.f32.mrb[0].mxu0
        %2297 = vmatprep.mubr.f32.mxu0 0.0
        %2298 = vmatmul.mubr.f32.gmra.mrb[0].mxu0 %v761
        %v2299 = vpop.f32.mrb[0].mxu0
        %v2300 = vadd.f32 0.0, %v2299
        %v2301 = vpop.f32.mrb[0].mxu0
        %2302 = vmatprep.mubr.f32.mxu0 0.0
        %2303 = vmatmul.mubr.f32.gmra.mrb[0].mxu0 %v762
        %v2304 = vpop.f32.mrb[0].mxu0
        %v2305 = vadd.f32 0.0, %v2304
        %v2306 = vpop.f32.mrb[0].mxu0
        %2307 = vmatprep.mubr.f32.mxu0 0.0
        %2308 = vmatmul.mubr.f32.gmra.mrb[0].mxu0 %v763
        %v2309 = vpop.f32.mrb[0].mxu0
        %v2310 = vadd.f32 0.0, %v2309
        %v2311 = vpop.f32.mrb[0].mxu0
        %2312 = vdwg.mxu0
        %v2313 = vadd.f32 %v2039, %v2155
        %v2314 = vadd.f32 %v2040, %v2160
        %v2315 = vadd.f32 %v2041, %v2165
        %v2316 = vadd.f32 %v2042, %v2170
        %v2317 = vadd.f32 %v2043, %v2175
        %v2318 = vadd.f32 %v2044, %v2180
        %v2319 = vadd.f32 %v2045, %v2185
        %v2320 = vadd.f32 %v2046, %v2190
        %v2321 = vadd.f32 %v2047, %v2195
        %v2322 = vadd.f32 %v2048, %v2200
        %v2323 = vadd.f32 %v2049, %v2205
        %v2324 = vadd.f32 %v2050, %v2210
        %v2325 = vadd.f32 %v2051, %v2215
        %v2326 = vadd.f32 %v2052, %v2220
        %v2327 = vadd.f32 %v2053, %v2225
        %v2328 = vadd.f32 %v2054, %v2230
        %v2329 = vadd.f32 %v2055, %v2235
        %v2330 = vadd.f32 %v2056, %v2240
        %v2331 = vadd.f32 %v2057, %v2245
        %v2332 = vadd.f32 %v2058, %v2250
        %v2333 = vadd.f32 %v2059, %v2255
        %v2334 = vadd.f32 %v2060, %v2260
        %v2335 = vadd.f32 %v2061, %v2265
        %v2336 = vadd.f32 %v2062, %v2270
        %v2337 = vadd.f32 %v2063, %v2275
        %v2338 = vadd.f32 %v2064, %v2280
        %v2339 = vadd.f32 %v2065, %v2285
        %v2340 = vadd.f32 %v2066, %v2290
        %v2341 = vadd.f32 %v2067, %v2295
        %v2342 = vadd.f32 %v2068, %v2300
        %v2343 = vadd.f32 %v2069, %v2305
        %v2344 = vadd.f32 %v2070, %v2310
        %s2345 = scalar_lea.vmem [#allocation12], 768
        %v2346 = vld [vmem:[%s2345] sm:$0xff]
        %v2347 = vld [vmem:[%s2345 + $0x8] sm:$0xff]
        %v2348 = vld [vmem:[%s2345 + $0x10] sm:$0xff]
        %v2349 = vld [vmem:[%s2345 + $0x18] sm:$0xff]
        %v2350 = vld [vmem:[%s2345 + $0x20] sm:$0xff]
        %v2351 = vld [vmem:[%s2345 + $0x28] sm:$0xff]
        %v2352 = vld [vmem:[%s2345 + $0x30] sm:$0xff]
        %v2353 = vld [vmem:[%s2345 + $0x38] sm:$0xff]
        %v2354 = vld [vmem:[%s2345 + $0x40] sm:$0xff]
        %v2355 = vld [vmem:[%s2345 + $0x48] sm:$0xff]
        %v2356 = vld [vmem:[%s2345 + $0x50] sm:$0xff]
        %v2357 = vld [vmem:[%s2345 + $0x58] sm:$0xff]
        %v2358 = vld [vmem:[%s2345 + $0x60] sm:$0xff]
        %v2359 = vld [vmem:[%s2345 + $0x68] sm:$0xff]
        %v2360 = vld [vmem:[%s2345 + $0x70] sm:$0xff]
        %v2361 = vld [vmem:[%s2345 + $0x78] sm:$0xff]
        %2362 = vmatprep.subr.mxu0 0.0
        %2363 = vmatpush1.msra.mxu0 %v2346
        %2364 = vmatprep.subr.mxu0 0.0
        %2365 = vmatpush1.msra.mxu0 %v2347
        %2366 = vmatprep.subr.mxu0 0.0
        %2367 = vmatpush1.msra.mxu0 %v2348
        %2368 = vmatprep.subr.mxu0 0.0
        %2369 = vmatpush1.msra.mxu0 %v2349
        %2370 = vmatprep.subr.mxu0 0.0
        %2371 = vmatpush1.msra.mxu0 %v2350
        %2372 = vmatprep.subr.mxu0 0.0
        %2373 = vmatpush1.msra.mxu0 %v2351
        %2374 = vmatprep.subr.mxu0 0.0
        %2375 = vmatpush1.msra.mxu0 %v2352
        %2376 = vmatprep.subr.mxu0 0.0
        %2377 = vmatpush1.msra.mxu0 %v2353
        %2378 = vmatprep.subr.mxu0 0.0
        %2379 = vmatpush1.msra.mxu0 %v2354
        %2380 = vmatprep.subr.mxu0 0.0
        %2381 = vmatpush1.msra.mxu0 %v2355
        %2382 = vmatprep.subr.mxu0 0.0
        %2383 = vmatpush1.msra.mxu0 %v2356
        %2384 = vmatprep.subr.mxu0 0.0
        %2385 = vmatpush1.msra.mxu0 %v2357
        %2386 = vmatprep.subr.mxu0 0.0
        %2387 = vmatpush1.msra.mxu0 %v2358
        %2388 = vmatprep.subr.mxu0 0.0
        %2389 = vmatpush1.msra.mxu0 %v2359
        %2390 = vmatprep.subr.mxu0 0.0
        %2391 = vmatpush1.msra.mxu0 %v2360
        %2392 = vmatprep.subr.mxu0 0.0
        %2393 = vmatpush1.msra.mxu0 %v2361
        %2394 = vmatprep.subr.mxu0 0.0
        %2395 = vmatpush1.msra.mxu0 0.0
        %2396 = vmatprep.subr.mxu0 0.0
        %2397 = vmatpush1.msra.mxu0 0.0
        %2398 = vmatprep.subr.mxu0 0.0
        %2399 = vmatpush1.msra.mxu0 0.0
        %2400 = vmatprep.subr.mxu0 0.0
        %2401 = vmatpush1.msra.mxu0 0.0
        %2402 = vmatprep.subr.mxu0 0.0
        %2403 = vmatpush1.msra.mxu0 0.0
        %2404 = vmatprep.subr.mxu0 0.0
        %2405 = vmatpush1.msra.mxu0 0.0
        %2406 = vmatprep.subr.mxu0 0.0
        %2407 = vmatpush1.msra.mxu0 0.0
        %2408 = vmatprep.subr.mxu0 0.0
        %2409 = vmatpush1.msra.mxu0 0.0
        %2410 = vmatprep.subr.mxu0 0.0
        %2411 = vmatpush1.msra.mxu0 0.0
        %2412 = vmatprep.subr.mxu0 0.0
        %2413 = vmatpush1.msra.mxu0 0.0
        %2414 = vmatprep.subr.mxu0 0.0
        %2415 = vmatpush1.msra.mxu0 0.0
        %2416 = vmatprep.subr.mxu0 0.0
        %2417 = vmatpush1.msra.mxu0 0.0
        %2418 = vmatprep.subr.mxu0 0.0
        %2419 = vmatpush1.msra.mxu0 0.0
        %2420 = vmatprep.subr.mxu0 0.0
        %2421 = vmatpush1.msra.mxu0 0.0
        %2422 = vmatprep.subr.mxu0 0.0
        %2423 = vmatpush1.msra.mxu0 0.0
        %2424 = vmatprep.subr.mxu0 0.0
        %2425 = vmatpush1.msra.mxu0 0.0
        %2426 = vmatprep.mubr.f32.mxu0 0.0
        %2427 = vmatmul.mubr.f32.gmra.mrb[0].mxu0 %v662
        %v2428 = vpop.f32.mrb[0].mxu0
        %v2429 = vadd.f32 0.0, %v2428
        %v2430 = vpop.f32.mrb[0].mxu0
        %2431 = vmatprep.mubr.f32.mxu0 0.0
        %2432 = vmatmul.mubr.f32.gmra.mrb[0].mxu0 %v663
        %v2433 = vpop.f32.mrb[0].mxu0
        %v2434 = vadd.f32 0.0, %v2433
        %v2435 = vpop.f32.mrb[0].mxu0
        %2436 = vmatprep.mubr.f32.mxu0 0.0
        %2437 = vmatmul.mubr.f32.gmra.mrb[0].mxu0 %v664
        %v2438 = vpop.f32.mrb[0].mxu0
        %v2439 = vadd.f32 0.0, %v2438
        %v2440 = vpop.f32.mrb[0].mxu0
        %2441 = vmatprep.mubr.f32.mxu0 0.0
        %2442 = vmatmul.mubr.f32.gmra.mrb[0].mxu0 %v665
        %v2443 = vpop.f32.mrb[0].mxu0
        %v2444 = vadd.f32 0.0, %v2443
        %v2445 = vpop.f32.mrb[0].mxu0
        %2446 = vmatprep.mubr.f32.mxu0 0.0
        %2447 = vmatmul.mubr.f32.gmra.mrb[0].mxu0 %v666
        %v2448 = vpop.f32.mrb[0].mxu0
        %v2449 = vadd.f32 0.0, %v2448
        %v2450 = vpop.f32.mrb[0].mxu0
        %2451 = vmatprep.mubr.f32.mxu0 0.0
        %2452 = vmatmul.mubr.f32.gmra.mrb[0].mxu0 %v667
        %v2453 = vpop.f32.mrb[0].mxu0
        %v2454 = vadd.f32 0.0, %v2453
        %v2455 = vpop.f32.mrb[0].mxu0
        %2456 = vmatprep.mubr.f32.mxu0 0.0
        %2457 = vmatmul.mubr.f32.gmra.mrb[0].mxu0 %v668
        %v2458 = vpop.f32.mrb[0].mxu0
        %v2459 = vadd.f32 0.0, %v2458
        %v2460 = vpop.f32.mrb[0].mxu0
        %2461 = vmatprep.mubr.f32.mxu0 0.0
        %2462 = vmatmul.mubr.f32.gmra.mrb[0].mxu0 %v669
        %v2463 = vpop.f32.mrb[0].mxu0
        %v2464 = vadd.f32 0.0, %v2463
        %v2465 = vpop.f32.mrb[0].mxu0
        %2466 = vmatprep.mubr.f32.mxu0 0.0
        %2467 = vmatmul.mubr.f32.gmra.mrb[0].mxu0 %v670
        %v2468 = vpop.f32.mrb[0].mxu0
        %v2469 = vadd.f32 0.0, %v2468
        %v2470 = vpop.f32.mrb[0].mxu0
        %2471 = vmatprep.mubr.f32.mxu0 0.0
        %2472 = vmatmul.mubr.f32.gmra.mrb[0].mxu0 %v671
        %v2473 = vpop.f32.mrb[0].mxu0
        %v2474 = vadd.f32 0.0, %v2473
        %v2475 = vpop.f32.mrb[0].mxu0
        %2476 = vmatprep.mubr.f32.mxu0 0.0
        %2477 = vmatmul.mubr.f32.gmra.mrb[0].mxu0 %v672
        %v2478 = vpop.f32.mrb[0].mxu0
        %v2479 = vadd.f32 0.0, %v2478
        %v2480 = vpop.f32.mrb[0].mxu0
        %2481 = vmatprep.mubr.f32.mxu0 0.0
        %2482 = vmatmul.mubr.f32.gmra.mrb[0].mxu0 %v673
        %v2483 = vpop.f32.mrb[0].mxu0
        %v2484 = vadd.f32 0.0, %v2483
        %v2485 = vpop.f32.mrb[0].mxu0
        %2486 = vmatprep.mubr.f32.mxu0 0.0
        %2487 = vmatmul.mubr.f32.gmra.mrb[0].mxu0 %v674
        %v2488 = vpop.f32.mrb[0].mxu0
        %v2489 = vadd.f32 0.0, %v2488
        %v2490 = vpop.f32.mrb[0].mxu0
        %2491 = vmatprep.mubr.f32.mxu0 0.0
        %2492 = vmatmul.mubr.f32.gmra.mrb[0].mxu0 %v675
        %v2493 = vpop.f32.mrb[0].mxu0
        %v2494 = vadd.f32 0.0, %v2493
        %v2495 = vpop.f32.mrb[0].mxu0
        %2496 = vmatprep.mubr.f32.mxu0 0.0
        %2497 = vmatmul.mubr.f32.gmra.mrb[0].mxu0 %v676
        %v2498 = vpop.f32.mrb[0].mxu0
        %v2499 = vadd.f32 0.0, %v2498
        %v2500 = vpop.f32.mrb[0].mxu0
        %2501 = vmatprep.mubr.f32.mxu0 0.0
        %2502 = vmatmul.mubr.f32.gmra.mrb[0].mxu0 %v677
        %v2503 = vpop.f32.mrb[0].mxu0
        %v2504 = vadd.f32 0.0, %v2503
        %v2505 = vpop.f32.mrb[0].mxu0
        %2506 = vmatprep.mubr.f32.mxu0 0.0
        %2507 = vmatmul.mubr.f32.gmra.mrb[0].mxu0 %v678
        %v2508 = vpop.f32.mrb[0].mxu0
        %v2509 = vadd.f32 0.0, %v2508
        %v2510 = vpop.f32.mrb[0].mxu0
        %2511 = vmatprep.mubr.f32.mxu0 0.0
        %2512 = vmatmul.mubr.f32.gmra.mrb[0].mxu0 %v679
        %v2513 = vpop.f32.mrb[0].mxu0
        %v2514 = vadd.f32 0.0, %v2513
        %v2515 = vpop.f32.mrb[0].mxu0
        %2516 = vmatprep.mubr.f32.mxu0 0.0
        %2517 = vmatmul.mubr.f32.gmra.mrb[0].mxu0 %v680
        %v2518 = vpop.f32.mrb[0].mxu0
        %v2519 = vadd.f32 0.0, %v2518
        %v2520 = vpop.f32.mrb[0].mxu0
        %2521 = vmatprep.mubr.f32.mxu0 0.0
        %2522 = vmatmul.mubr.f32.gmra.mrb[0].mxu0 %v681
        %v2523 = vpop.f32.mrb[0].mxu0
        %v2524 = vadd.f32 0.0, %v2523
        %v2525 = vpop.f32.mrb[0].mxu0
        %2526 = vmatprep.mubr.f32.mxu0 0.0
        %2527 = vmatmul.mubr.f32.gmra.mrb[0].mxu0 %v682
        %v2528 = vpop.f32.mrb[0].mxu0
        %v2529 = vadd.f32 0.0, %v2528
        %v2530 = vpop.f32.mrb[0].mxu0
        %2531 = vmatprep.mubr.f32.mxu0 0.0
        %2532 = vmatmul.mubr.f32.gmra.mrb[0].mxu0 %v683
        %v2533 = vpop.f32.mrb[0].mxu0
        %v2534 = vadd.f32 0.0, %v2533
        %v2535 = vpop.f32.mrb[0].mxu0
        %2536 = vmatprep.mubr.f32.mxu0 0.0
        %2537 = vmatmul.mubr.f32.gmra.mrb[0].mxu0 %v684
        %v2538 = vpop.f32.mrb[0].mxu0
        %v2539 = vadd.f32 0.0, %v2538
        %v2540 = vpop.f32.mrb[0].mxu0
        %2541 = vmatprep.mubr.f32.mxu0 0.0
        %2542 = vmatmul.mubr.f32.gmra.mrb[0].mxu0 %v685
        %v2543 = vpop.f32.mrb[0].mxu0
        %v2544 = vadd.f32 0.0, %v2543
        %v2545 = vpop.f32.mrb[0].mxu0
        %2546 = vmatprep.mubr.f32.mxu0 0.0
        %2547 = vmatmul.mubr.f32.gmra.mrb[0].mxu0 %v686
        %v2548 = vpop.f32.mrb[0].mxu0
        %v2549 = vadd.f32 0.0, %v2548
        %v2550 = vpop.f32.mrb[0].mxu0
        %2551 = vmatprep.mubr.f32.mxu0 0.0
        %2552 = vmatmul.mubr.f32.gmra.mrb[0].mxu0 %v687
        %v2553 = vpop.f32.mrb[0].mxu0
        %v2554 = vadd.f32 0.0, %v2553
        %v2555 = vpop.f32.mrb[0].mxu0
        %2556 = vmatprep.mubr.f32.mxu0 0.0
        %2557 = vmatmul.mubr.f32.gmra.mrb[0].mxu0 %v688
        %v2558 = vpop.f32.mrb[0].mxu0
        %v2559 = vadd.f32 0.0, %v2558
        %v2560 = vpop.f32.mrb[0].mxu0
        %2561 = vmatprep.mubr.f32.mxu0 0.0
        %2562 = vmatmul.mubr.f32.gmra.mrb[0].mxu0 %v689
        %v2563 = vpop.f32.mrb[0].mxu0
        %v2564 = vadd.f32 0.0, %v2563
        %v2565 = vpop.f32.mrb[0].mxu0
        %2566 = vmatprep.mubr.f32.mxu0 0.0
        %2567 = vmatmul.mubr.f32.gmra.mrb[0].mxu0 %v690
        %v2568 = vpop.f32.mrb[0].mxu0
        %v2569 = vadd.f32 0.0, %v2568
        %v2570 = vpop.f32.mrb[0].mxu0
        %2571 = vmatprep.mubr.f32.mxu0 0.0
        %2572 = vmatmul.mubr.f32.gmra.mrb[0].mxu0 %v691
        %v2573 = vpop.f32.mrb[0].mxu0
        %v2574 = vadd.f32 0.0, %v2573
        %v2575 = vpop.f32.mrb[0].mxu0
        %2576 = vmatprep.mubr.f32.mxu0 0.0
        %2577 = vmatmul.mubr.f32.gmra.mrb[0].mxu0 %v692
        %v2578 = vpop.f32.mrb[0].mxu0
        %v2579 = vadd.f32 0.0, %v2578
        %v2580 = vpop.f32.mrb[0].mxu0
        %2581 = vmatprep.mubr.f32.mxu0 0.0
        %2582 = vmatmul.mubr.f32.gmra.mrb[0].mxu0 %v693
        %v2583 = vpop.f32.mrb[0].mxu0
        %v2584 = vadd.f32 0.0, %v2583
        %v2585 = vpop.f32.mrb[0].mxu0
        %2586 = vdwg.mxu0
        %v2587 = vadd.f32 %v2313, %v2429
        %v2588 = vadd.f32 %v2314, %v2434
        %v2589 = vadd.f32 %v2315, %v2439
        %v2590 = vadd.f32 %v2316, %v2444
        %v2591 = vadd.f32 %v2317, %v2449
        %v2592 = vadd.f32 %v2318, %v2454
        %v2593 = vadd.f32 %v2319, %v2459
        %v2594 = vadd.f32 %v2320, %v2464
        %v2595 = vadd.f32 %v2321, %v2469
        %v2596 = vadd.f32 %v2322, %v2474
        %v2597 = vadd.f32 %v2323, %v2479
        %v2598 = vadd.f32 %v2324, %v2484
        %v2599 = vadd.f32 %v2325, %v2489
        %v2600 = vadd.f32 %v2326, %v2494
        %v2601 = vadd.f32 %v2327, %v2499
        %v2602 = vadd.f32 %v2328, %v2504
        %v2603 = vadd.f32 %v2329, %v2509
        %v2604 = vadd.f32 %v2330, %v2514
        %v2605 = vadd.f32 %v2331, %v2519
        %v2606 = vadd.f32 %v2332, %v2524
        %v2607 = vadd.f32 %v2333, %v2529
        %v2608 = vadd.f32 %v2334, %v2534
        %v2609 = vadd.f32 %v2335, %v2539
        %v2610 = vadd.f32 %v2336, %v2544
        %v2611 = vadd.f32 %v2337, %v2549
        %v2612 = vadd.f32 %v2338, %v2554
        %v2613 = vadd.f32 %v2339, %v2559
        %v2614 = vadd.f32 %v2340, %v2564
        %v2615 = vadd.f32 %v2341, %v2569
        %v2616 = vadd.f32 %v2342, %v2574
        %v2617 = vadd.f32 %v2343, %v2579
        %v2618 = vadd.f32 %v2344, %v2584
        %s2619 = scalar_lea.vmem [#allocation12], 896
        %v2620 = vld [vmem:[%s2619] sm:$0xff]
        %v2621 = vld [vmem:[%s2619 + $0x8] sm:$0xff]
        %v2622 = vld [vmem:[%s2619 + $0x10] sm:$0xff]
        %v2623 = vld [vmem:[%s2619 + $0x18] sm:$0xff]
        %v2624 = vld [vmem:[%s2619 + $0x20] sm:$0xff]
        %v2625 = vld [vmem:[%s2619 + $0x28] sm:$0xff]
        %v2626 = vld [vmem:[%s2619 + $0x30] sm:$0xff]
        %v2627 = vld [vmem:[%s2619 + $0x38] sm:$0xff]
        %v2628 = vld [vmem:[%s2619 + $0x40] sm:$0xff]
        %v2629 = vld [vmem:[%s2619 + $0x48] sm:$0xff]
        %v2630 = vld [vmem:[%s2619 + $0x50] sm:$0xff]
        %v2631 = vld [vmem:[%s2619 + $0x58] sm:$0xff]
        %v2632 = vld [vmem:[%s2619 + $0x60] sm:$0xff]
        %v2633 = vld [vmem:[%s2619 + $0x68] sm:$0xff]
        %v2634 = vld [vmem:[%s2619 + $0x70] sm:$0xff]
        %v2635 = vld [vmem:[%s2619 + $0x78] sm:$0xff]
        %2636 = vmatprep.subr.mxu0 0.0
        %2637 = vmatpush1.msra.mxu0 %v2620
        %2638 = vmatprep.subr.mxu0 0.0
        %2639 = vmatpush1.msra.mxu0 %v2621
        %2640 = vmatprep.subr.mxu0 0.0
        %2641 = vmatpush1.msra.mxu0 %v2622
        %2642 = vmatprep.subr.mxu0 0.0
        %2643 = vmatpush1.msra.mxu0 %v2623
        %2644 = vmatprep.subr.mxu0 0.0
        %2645 = vmatpush1.msra.mxu0 %v2624
        %2646 = vmatprep.subr.mxu0 0.0
        %2647 = vmatpush1.msra.mxu0 %v2625
        %2648 = vmatprep.subr.mxu0 0.0
        %2649 = vmatpush1.msra.mxu0 %v2626
        %2650 = vmatprep.subr.mxu0 0.0
        %2651 = vmatpush1.msra.mxu0 %v2627
        %2652 = vmatprep.subr.mxu0 0.0
        %2653 = vmatpush1.msra.mxu0 %v2628
        %2654 = vmatprep.subr.mxu0 0.0
        %2655 = vmatpush1.msra.mxu0 %v2629
        %2656 = vmatprep.subr.mxu0 0.0
        %2657 = vmatpush1.msra.mxu0 %v2630
        %2658 = vmatprep.subr.mxu0 0.0
        %2659 = vmatpush1.msra.mxu0 %v2631
        %2660 = vmatprep.subr.mxu0 0.0
        %2661 = vmatpush1.msra.mxu0 %v2632
        %2662 = vmatprep.subr.mxu0 0.0
        %2663 = vmatpush1.msra.mxu0 %v2633
        %2664 = vmatprep.subr.mxu0 0.0
        %2665 = vmatpush1.msra.mxu0 %v2634
        %2666 = vmatprep.subr.mxu0 0.0
        %2667 = vmatpush1.msra.mxu0 %v2635
        %2668 = vmatprep.subr.mxu0 0.0
        %2669 = vmatpush1.msra.mxu0 0.0
        %2670 = vmatprep.subr.mxu0 0.0
        %2671 = vmatpush1.msra.mxu0 0.0
        %2672 = vmatprep.subr.mxu0 0.0
        %2673 = vmatpush1.msra.mxu0 0.0
        %2674 = vmatprep.subr.mxu0 0.0
        %2675 = vmatpush1.msra.mxu0 0.0
        %2676 = vmatprep.subr.mxu0 0.0
        %2677 = vmatpush1.msra.mxu0 0.0
        %2678 = vmatprep.subr.mxu0 0.0
        %2679 = vmatpush1.msra.mxu0 0.0
        %2680 = vmatprep.subr.mxu0 0.0
        %2681 = vmatpush1.msra.mxu0 0.0
        %2682 = vmatprep.subr.mxu0 0.0
        %2683 = vmatpush1.msra.mxu0 0.0
        %2684 = vmatprep.subr.mxu0 0.0
        %2685 = vmatpush1.msra.mxu0 0.0
        %2686 = vmatprep.subr.mxu0 0.0
        %2687 = vmatpush1.msra.mxu0 0.0
        %2688 = vmatprep.subr.mxu0 0.0
        %2689 = vmatpush1.msra.mxu0 0.0
        %2690 = vmatprep.subr.mxu0 0.0
        %2691 = vmatpush1.msra.mxu0 0.0
        %2692 = vmatprep.subr.mxu0 0.0
        %2693 = vmatpush1.msra.mxu0 0.0
        %2694 = vmatprep.subr.mxu0 0.0
        %2695 = vmatpush1.msra.mxu0 0.0
        %2696 = vmatprep.subr.mxu0 0.0
        %2697 = vmatpush1.msra.mxu0 0.0
        %2698 = vmatprep.subr.mxu0 0.0
        %2699 = vmatpush1.msra.mxu0 0.0
        %2700 = vmatprep.mubr.f32.mxu0 0.0
        %2701 = vmatmul.mubr.f32.gmra.mrb[0].mxu0 %v698
        %v2702 = vpop.f32.mrb[0].mxu0
        %v2703 = vadd.f32 0.0, %v2702
        %v2704 = vpop.f32.mrb[0].mxu0
        %2705 = vmatprep.mubr.f32.mxu0 0.0
        %2706 = vmatmul.mubr.f32.gmra.mrb[0].mxu0 %v699
        %v2707 = vpop.f32.mrb[0].mxu0
        %v2708 = vadd.f32 0.0, %v2707
        %v2709 = vpop.f32.mrb[0].mxu0
        %2710 = vmatprep.mubr.f32.mxu0 0.0
        %2711 = vmatmul.mubr.f32.gmra.mrb[0].mxu0 %v700
        %v2712 = vpop.f32.mrb[0].mxu0
        %v2713 = vadd.f32 0.0, %v2712
        %v2714 = vpop.f32.mrb[0].mxu0
        %2715 = vmatprep.mubr.f32.mxu0 0.0
        %2716 = vmatmul.mubr.f32.gmra.mrb[0].mxu0 %v701
        %v2717 = vpop.f32.mrb[0].mxu0
        %v2718 = vadd.f32 0.0, %v2717
        %v2719 = vpop.f32.mrb[0].mxu0
        %2720 = vmatprep.mubr.f32.mxu0 0.0
        %2721 = vmatmul.mubr.f32.gmra.mrb[0].mxu0 %v702
        %v2722 = vpop.f32.mrb[0].mxu0
        %v2723 = vadd.f32 0.0, %v2722
        %v2724 = vpop.f32.mrb[0].mxu0
        %2725 = vmatprep.mubr.f32.mxu0 0.0
        %2726 = vmatmul.mubr.f32.gmra.mrb[0].mxu0 %v703
        %v2727 = vpop.f32.mrb[0].mxu0
        %v2728 = vadd.f32 0.0, %v2727
        %v2729 = vpop.f32.mrb[0].mxu0
        %2730 = vmatprep.mubr.f32.mxu0 0.0
        %2731 = vmatmul.mubr.f32.gmra.mrb[0].mxu0 %v704
        %v2732 = vpop.f32.mrb[0].mxu0
        %v2733 = vadd.f32 0.0, %v2732
        %v2734 = vpop.f32.mrb[0].mxu0
        %2735 = vmatprep.mubr.f32.mxu0 0.0
        %2736 = vmatmul.mubr.f32.gmra.mrb[0].mxu0 %v705
        %v2737 = vpop.f32.mrb[0].mxu0
        %v2738 = vadd.f32 0.0, %v2737
        %v2739 = vpop.f32.mrb[0].mxu0
        %2740 = vmatprep.mubr.f32.mxu0 0.0
        %2741 = vmatmul.mubr.f32.gmra.mrb[0].mxu0 %v706
        %v2742 = vpop.f32.mrb[0].mxu0
        %v2743 = vadd.f32 0.0, %v2742
        %v2744 = vpop.f32.mrb[0].mxu0
        %2745 = vmatprep.mubr.f32.mxu0 0.0
        %2746 = vmatmul.mubr.f32.gmra.mrb[0].mxu0 %v707
        %v2747 = vpop.f32.mrb[0].mxu0
        %v2748 = vadd.f32 0.0, %v2747
        %v2749 = vpop.f32.mrb[0].mxu0
        %2750 = vmatprep.mubr.f32.mxu0 0.0
        %2751 = vmatmul.mubr.f32.gmra.mrb[0].mxu0 %v708
        %v2752 = vpop.f32.mrb[0].mxu0
        %v2753 = vadd.f32 0.0, %v2752
        %v2754 = vpop.f32.mrb[0].mxu0
        %2755 = vmatprep.mubr.f32.mxu0 0.0
        %2756 = vmatmul.mubr.f32.gmra.mrb[0].mxu0 %v709
        %v2757 = vpop.f32.mrb[0].mxu0
        %v2758 = vadd.f32 0.0, %v2757
        %v2759 = vpop.f32.mrb[0].mxu0
        %2760 = vmatprep.mubr.f32.mxu0 0.0
        %2761 = vmatmul.mubr.f32.gmra.mrb[0].mxu0 %v710
        %v2762 = vpop.f32.mrb[0].mxu0
        %v2763 = vadd.f32 0.0, %v2762
        %v2764 = vpop.f32.mrb[0].mxu0
        %2765 = vmatprep.mubr.f32.mxu0 0.0
        %2766 = vmatmul.mubr.f32.gmra.mrb[0].mxu0 %v711
        %v2767 = vpop.f32.mrb[0].mxu0
        %v2768 = vadd.f32 0.0, %v2767
        %v2769 = vpop.f32.mrb[0].mxu0
        %2770 = vmatprep.mubr.f32.mxu0 0.0
        %2771 = vmatmul.mubr.f32.gmra.mrb[0].mxu0 %v712
        %v2772 = vpop.f32.mrb[0].mxu0
        %v2773 = vadd.f32 0.0, %v2772
        %v2774 = vpop.f32.mrb[0].mxu0
        %2775 = vmatprep.mubr.f32.mxu0 0.0
        %2776 = vmatmul.mubr.f32.gmra.mrb[0].mxu0 %v713
        %v2777 = vpop.f32.mrb[0].mxu0
        %v2778 = vadd.f32 0.0, %v2777
        %v2779 = vpop.f32.mrb[0].mxu0
        %2780 = vmatprep.mubr.f32.mxu0 0.0
        %2781 = vmatmul.mubr.f32.gmra.mrb[0].mxu0 %v714
        %v2782 = vpop.f32.mrb[0].mxu0
        %v2783 = vadd.f32 0.0, %v2782
        %v2784 = vpop.f32.mrb[0].mxu0
        %2785 = vmatprep.mubr.f32.mxu0 0.0
        %2786 = vmatmul.mubr.f32.gmra.mrb[0].mxu0 %v715
        %v2787 = vpop.f32.mrb[0].mxu0
        %v2788 = vadd.f32 0.0, %v2787
        %v2789 = vpop.f32.mrb[0].mxu0
        %2790 = vmatprep.mubr.f32.mxu0 0.0
        %2791 = vmatmul.mubr.f32.gmra.mrb[0].mxu0 %v716
        %v2792 = vpop.f32.mrb[0].mxu0
        %v2793 = vadd.f32 0.0, %v2792
        %v2794 = vpop.f32.mrb[0].mxu0
        %2795 = vmatprep.mubr.f32.mxu0 0.0
        %2796 = vmatmul.mubr.f32.gmra.mrb[0].mxu0 %v717
        %v2797 = vpop.f32.mrb[0].mxu0
        %v2798 = vadd.f32 0.0, %v2797
        %v2799 = vpop.f32.mrb[0].mxu0
        %2800 = vmatprep.mubr.f32.mxu0 0.0
        %2801 = vmatmul.mubr.f32.gmra.mrb[0].mxu0 %v718
        %v2802 = vpop.f32.mrb[0].mxu0
        %v2803 = vadd.f32 0.0, %v2802
        %v2804 = vpop.f32.mrb[0].mxu0
        %2805 = vmatprep.mubr.f32.mxu0 0.0
        %2806 = vmatmul.mubr.f32.gmra.mrb[0].mxu0 %v719
        %v2807 = vpop.f32.mrb[0].mxu0
        %v2808 = vadd.f32 0.0, %v2807
        %v2809 = vpop.f32.mrb[0].mxu0
        %2810 = vmatprep.mubr.f32.mxu0 0.0
        %2811 = vmatmul.mubr.f32.gmra.mrb[0].mxu0 %v720
        %v2812 = vpop.f32.mrb[0].mxu0
        %v2813 = vadd.f32 0.0, %v2812
        %v2814 = vpop.f32.mrb[0].mxu0
        %2815 = vmatprep.mubr.f32.mxu0 0.0
        %2816 = vmatmul.mubr.f32.gmra.mrb[0].mxu0 %v721
        %v2817 = vpop.f32.mrb[0].mxu0
        %v2818 = vadd.f32 0.0, %v2817
        %v2819 = vpop.f32.mrb[0].mxu0
        %2820 = vmatprep.mubr.f32.mxu0 0.0
        %2821 = vmatmul.mubr.f32.gmra.mrb[0].mxu0 %v722
        %v2822 = vpop.f32.mrb[0].mxu0
        %v2823 = vadd.f32 0.0, %v2822
        %v2824 = vpop.f32.mrb[0].mxu0
        %2825 = vmatprep.mubr.f32.mxu0 0.0
        %2826 = vmatmul.mubr.f32.gmra.mrb[0].mxu0 %v723
        %v2827 = vpop.f32.mrb[0].mxu0
        %v2828 = vadd.f32 0.0, %v2827
        %v2829 = vpop.f32.mrb[0].mxu0
        %2830 = vmatprep.mubr.f32.mxu0 0.0
        %2831 = vmatmul.mubr.f32.gmra.mrb[0].mxu0 %v724
        %v2832 = vpop.f32.mrb[0].mxu0
        %v2833 = vadd.f32 0.0, %v2832
        %v2834 = vpop.f32.mrb[0].mxu0
        %2835 = vmatprep.mubr.f32.mxu0 0.0
        %2836 = vmatmul.mubr.f32.gmra.mrb[0].mxu0 %v725
        %v2837 = vpop.f32.mrb[0].mxu0
        %v2838 = vadd.f32 0.0, %v2837
        %v2839 = vpop.f32.mrb[0].mxu0
        %2840 = vmatprep.mubr.f32.mxu0 0.0
        %2841 = vmatmul.mubr.f32.gmra.mrb[0].mxu0 %v726
        %v2842 = vpop.f32.mrb[0].mxu0
        %v2843 = vadd.f32 0.0, %v2842
        %v2844 = vpop.f32.mrb[0].mxu0
        %2845 = vmatprep.mubr.f32.mxu0 0.0
        %2846 = vmatmul.mubr.f32.gmra.mrb[0].mxu0 %v727
        %v2847 = vpop.f32.mrb[0].mxu0
        %v2848 = vadd.f32 0.0, %v2847
        %v2849 = vpop.f32.mrb[0].mxu0
        %2850 = vmatprep.mubr.f32.mxu0 0.0
        %2851 = vmatmul.mubr.f32.gmra.mrb[0].mxu0 %v728
        %v2852 = vpop.f32.mrb[0].mxu0
        %v2853 = vadd.f32 0.0, %v2852
        %v2854 = vpop.f32.mrb[0].mxu0
        %2855 = vmatprep.mubr.f32.mxu0 0.0
        %2856 = vmatmul.mubr.f32.gmra.mrb[0].mxu0 %v729
        %v2857 = vpop.f32.mrb[0].mxu0
        %v2858 = vadd.f32 0.0, %v2857
        %v2859 = vpop.f32.mrb[0].mxu0
        %2860 = vdwg.mxu0
        %v2861 = vadd.f32 %v2587, %v2703
        %v2862 = vadd.f32 %v2588, %v2708
        %v2863 = vadd.f32 %v2589, %v2713
        %v2864 = vadd.f32 %v2590, %v2718
        %v2865 = vadd.f32 %v2591, %v2723
        %v2866 = vadd.f32 %v2592, %v2728
        %v2867 = vadd.f32 %v2593, %v2733
        %v2868 = vadd.f32 %v2594, %v2738
        %v2869 = vadd.f32 %v2595, %v2743
        %v2870 = vadd.f32 %v2596, %v2748
        %v2871 = vadd.f32 %v2597, %v2753
        %v2872 = vadd.f32 %v2598, %v2758
        %v2873 = vadd.f32 %v2599, %v2763
        %v2874 = vadd.f32 %v2600, %v2768
        %v2875 = vadd.f32 %v2601, %v2773
        %v2876 = vadd.f32 %v2602, %v2778
        %v2877 = vadd.f32 %v2603, %v2783
        %v2878 = vadd.f32 %v2604, %v2788
        %v2879 = vadd.f32 %v2605, %v2793
        %v2880 = vadd.f32 %v2606, %v2798
        %v2881 = vadd.f32 %v2607, %v2803
        %v2882 = vadd.f32 %v2608, %v2808
        %v2883 = vadd.f32 %v2609, %v2813
        %v2884 = vadd.f32 %v2610, %v2818
        %v2885 = vadd.f32 %v2611, %v2823
        %v2886 = vadd.f32 %v2612, %v2828
        %v2887 = vadd.f32 %v2613, %v2833
        %v2888 = vadd.f32 %v2614, %v2838
        %v2889 = vadd.f32 %v2615, %v2843
        %v2890 = vadd.f32 %v2616, %v2848
        %v2891 = vadd.f32 %v2617, %v2853
        %v2892 = vadd.f32 %v2618, %v2858
        %s2893 = scalar_lea.vmem [#allocation12], 1024
        %v2894 = vld [vmem:[%s2893] sm:$0xff]
        %v2895 = vld [vmem:[%s2893 + $0x8] sm:$0xff]
        %v2896 = vld [vmem:[%s2893 + $0x10] sm:$0xff]
        %v2897 = vld [vmem:[%s2893 + $0x18] sm:$0xff]
        %v2898 = vld [vmem:[%s2893 + $0x20] sm:$0xff]
        %v2899 = vld [vmem:[%s2893 + $0x28] sm:$0xff]
        %v2900 = vld [vmem:[%s2893 + $0x30] sm:$0xff]
        %v2901 = vld [vmem:[%s2893 + $0x38] sm:$0xff]
        %v2902 = vld [vmem:[%s2893 + $0x40] sm:$0xff]
        %v2903 = vld [vmem:[%s2893 + $0x48] sm:$0xff]
        %v2904 = vld [vmem:[%s2893 + $0x50] sm:$0xff]
        %v2905 = vld [vmem:[%s2893 + $0x58] sm:$0xff]
        %v2906 = vld [vmem:[%s2893 + $0x60] sm:$0xff]
        %v2907 = vld [vmem:[%s2893 + $0x68] sm:$0xff]
        %v2908 = vld [vmem:[%s2893 + $0x70] sm:$0xff]
        %v2909 = vld [vmem:[%s2893 + $0x78] sm:$0xff]
        %2910 = vmatprep.subr.mxu0 0.0
        %2911 = vmatpush1.msra.mxu0 %v2894
        %2912 = vmatprep.subr.mxu0 0.0
        %2913 = vmatpush1.msra.mxu0 %v2895
        %2914 = vmatprep.subr.mxu0 0.0
        %2915 = vmatpush1.msra.mxu0 %v2896
        %2916 = vmatprep.subr.mxu0 0.0
        %2917 = vmatpush1.msra.mxu0 %v2897
        %2918 = vmatprep.subr.mxu0 0.0
        %2919 = vmatpush1.msra.mxu0 %v2898
        %2920 = vmatprep.subr.mxu0 0.0
        %2921 = vmatpush1.msra.mxu0 %v2899
        %2922 = vmatprep.subr.mxu0 0.0
        %2923 = vmatpush1.msra.mxu0 %v2900
        %2924 = vmatprep.subr.mxu0 0.0
        %2925 = vmatpush1.msra.mxu0 %v2901
        %2926 = vmatprep.subr.mxu0 0.0
        %2927 = vmatpush1.msra.mxu0 %v2902
        %2928 = vmatprep.subr.mxu0 0.0
        %2929 = vmatpush1.msra.mxu0 %v2903
        %2930 = vmatprep.subr.mxu0 0.0
        %2931 = vmatpush1.msra.mxu0 %v2904
        %2932 = vmatprep.subr.mxu0 0.0
        %2933 = vmatpush1.msra.mxu0 %v2905
        %2934 = vmatprep.subr.mxu0 0.0
        %2935 = vmatpush1.msra.mxu0 %v2906
        %2936 = vmatprep.subr.mxu0 0.0
        %2937 = vmatpush1.msra.mxu0 %v2907
        %2938 = vmatprep.subr.mxu0 0.0
        %2939 = vmatpush1.msra.mxu0 %v2908
        %2940 = vmatprep.subr.mxu0 0.0
        %2941 = vmatpush1.msra.mxu0 %v2909
        %2942 = vmatprep.subr.mxu0 0.0
        %2943 = vmatpush1.msra.mxu0 0.0
        %2944 = vmatprep.subr.mxu0 0.0
        %2945 = vmatpush1.msra.mxu0 0.0
        %2946 = vmatprep.subr.mxu0 0.0
        %2947 = vmatpush1.msra.mxu0 0.0
        %2948 = vmatprep.subr.mxu0 0.0
        %2949 = vmatpush1.msra.mxu0 0.0
        %2950 = vmatprep.subr.mxu0 0.0
        %2951 = vmatpush1.msra.mxu0 0.0
        %2952 = vmatprep.subr.mxu0 0.0
        %2953 = vmatpush1.msra.mxu0 0.0
        %2954 = vmatprep.subr.mxu0 0.0
        %2955 = vmatpush1.msra.mxu0 0.0
        %2956 = vmatprep.subr.mxu0 0.0
        %2957 = vmatpush1.msra.mxu0 0.0
        %2958 = vmatprep.subr.mxu0 0.0
        %2959 = vmatpush1.msra.mxu0 0.0
        %2960 = vmatprep.subr.mxu0 0.0
        %2961 = vmatpush1.msra.mxu0 0.0
        %2962 = vmatprep.subr.mxu0 0.0
        %2963 = vmatpush1.msra.mxu0 0.0
        %2964 = vmatprep.subr.mxu0 0.0
        %2965 = vmatpush1.msra.mxu0 0.0
        %2966 = vmatprep.subr.mxu0 0.0
        %2967 = vmatpush1.msra.mxu0 0.0
        %2968 = vmatprep.subr.mxu0 0.0
        %2969 = vmatpush1.msra.mxu0 0.0
        %2970 = vmatprep.subr.mxu0 0.0
        %2971 = vmatpush1.msra.mxu0 0.0
        %2972 = vmatprep.subr.mxu0 0.0
        %2973 = vmatpush1.msra.mxu0 0.0
        %2974 = vmatprep.mubr.f32.mxu0 0.0
        %2975 = vmatmul.mubr.f32.gmra.mrb[0].mxu0 %v734
        %v2976 = vpop.f32.mrb[0].mxu0
        %v2977 = vadd.f32 0.0, %v2976
        %v2978 = vpop.f32.mrb[0].mxu0
        %2979 = vmatprep.mubr.f32.mxu0 0.0
        %2980 = vmatmul.mubr.f32.gmra.mrb[0].mxu0 %v735
        %v2981 = vpop.f32.mrb[0].mxu0
        %v2982 = vadd.f32 0.0, %v2981
        %v2983 = vpop.f32.mrb[0].mxu0
        %2984 = vmatprep.mubr.f32.mxu0 0.0
        %2985 = vmatmul.mubr.f32.gmra.mrb[0].mxu0 %v736
        %v2986 = vpop.f32.mrb[0].mxu0
        %v2987 = vadd.f32 0.0, %v2986
        %v2988 = vpop.f32.mrb[0].mxu0
        %2989 = vmatprep.mubr.f32.mxu0 0.0
        %2990 = vmatmul.mubr.f32.gmra.mrb[0].mxu0 %v737
        %v2991 = vpop.f32.mrb[0].mxu0
        %v2992 = vadd.f32 0.0, %v2991
        %v2993 = vpop.f32.mrb[0].mxu0
        %2994 = vmatprep.mubr.f32.mxu0 0.0
        %2995 = vmatmul.mubr.f32.gmra.mrb[0].mxu0 %v738
        %v2996 = vpop.f32.mrb[0].mxu0
        %v2997 = vadd.f32 0.0, %v2996
        %v2998 = vpop.f32.mrb[0].mxu0
        %2999 = vmatprep.mubr.f32.mxu0 0.0
        %3000 = vmatmul.mubr.f32.gmra.mrb[0].mxu0 %v739
        %v3001 = vpop.f32.mrb[0].mxu0
        %v3002 = vadd.f32 0.0, %v3001
        %v3003 = vpop.f32.mrb[0].mxu0
        %3004 = vmatprep.mubr.f32.mxu0 0.0
        %3005 = vmatmul.mubr.f32.gmra.mrb[0].mxu0 %v740
        %v3006 = vpop.f32.mrb[0].mxu0
        %v3007 = vadd.f32 0.0, %v3006
        %v3008 = vpop.f32.mrb[0].mxu0
        %3009 = vmatprep.mubr.f32.mxu0 0.0
        %3010 = vmatmul.mubr.f32.gmra.mrb[0].mxu0 %v741
        %v3011 = vpop.f32.mrb[0].mxu0
        %v3012 = vadd.f32 0.0, %v3011
        %v3013 = vpop.f32.mrb[0].mxu0
        %3014 = vmatprep.mubr.f32.mxu0 0.0
        %3015 = vmatmul.mubr.f32.gmra.mrb[0].mxu0 %v742
        %v3016 = vpop.f32.mrb[0].mxu0
        %v3017 = vadd.f32 0.0, %v3016
        %v3018 = vpop.f32.mrb[0].mxu0
        %3019 = vmatprep.mubr.f32.mxu0 0.0
        %3020 = vmatmul.mubr.f32.gmra.mrb[0].mxu0 %v743
        %v3021 = vpop.f32.mrb[0].mxu0
        %v3022 = vadd.f32 0.0, %v3021
        %v3023 = vpop.f32.mrb[0].mxu0
        %3024 = vmatprep.mubr.f32.mxu0 0.0
        %3025 = vmatmul.mubr.f32.gmra.mrb[0].mxu0 %v744
        %v3026 = vpop.f32.mrb[0].mxu0
        %v3027 = vadd.f32 0.0, %v3026
        %v3028 = vpop.f32.mrb[0].mxu0
        %3029 = vmatprep.mubr.f32.mxu0 0.0
        %3030 = vmatmul.mubr.f32.gmra.mrb[0].mxu0 %v745
        %v3031 = vpop.f32.mrb[0].mxu0
        %v3032 = vadd.f32 0.0, %v3031
        %v3033 = vpop.f32.mrb[0].mxu0
        %3034 = vmatprep.mubr.f32.mxu0 0.0
        %3035 = vmatmul.mubr.f32.gmra.mrb[0].mxu0 %v746
        %v3036 = vpop.f32.mrb[0].mxu0
        %v3037 = vadd.f32 0.0, %v3036
        %v3038 = vpop.f32.mrb[0].mxu0
        %3039 = vmatprep.mubr.f32.mxu0 0.0
        %3040 = vmatmul.mubr.f32.gmra.mrb[0].mxu0 %v747
        %v3041 = vpop.f32.mrb[0].mxu0
        %v3042 = vadd.f32 0.0, %v3041
        %v3043 = vpop.f32.mrb[0].mxu0
        %3044 = vmatprep.mubr.f32.mxu0 0.0
        %3045 = vmatmul.mubr.f32.gmra.mrb[0].mxu0 %v748
        %v3046 = vpop.f32.mrb[0].mxu0
        %v3047 = vadd.f32 0.0, %v3046
        %v3048 = vpop.f32.mrb[0].mxu0
        %3049 = vmatprep.mubr.f32.mxu0 0.0
        %3050 = vmatmul.mubr.f32.gmra.mrb[0].mxu0 %v749
        %v3051 = vpop.f32.mrb[0].mxu0
        %v3052 = vadd.f32 0.0, %v3051
        %v3053 = vpop.f32.mrb[0].mxu0
        %3054 = vmatprep.mubr.f32.mxu0 0.0
        %3055 = vmatmul.mubr.f32.gmra.mrb[0].mxu0 %v750
        %v3056 = vpop.f32.mrb[0].mxu0
        %v3057 = vadd.f32 0.0, %v3056
        %v3058 = vpop.f32.mrb[0].mxu0
        %3059 = vmatprep.mubr.f32.mxu0 0.0
        %3060 = vmatmul.mubr.f32.gmra.mrb[0].mxu0 %v751
        %v3061 = vpop.f32.mrb[0].mxu0
        %v3062 = vadd.f32 0.0, %v3061
        %v3063 = vpop.f32.mrb[0].mxu0
        %3064 = vmatprep.mubr.f32.mxu0 0.0
        %3065 = vmatmul.mubr.f32.gmra.mrb[0].mxu0 %v752
        %v3066 = vpop.f32.mrb[0].mxu0
        %v3067 = vadd.f32 0.0, %v3066
        %v3068 = vpop.f32.mrb[0].mxu0
        %3069 = vmatprep.mubr.f32.mxu0 0.0
        %3070 = vmatmul.mubr.f32.gmra.mrb[0].mxu0 %v753
        %v3071 = vpop.f32.mrb[0].mxu0
        %v3072 = vadd.f32 0.0, %v3071
        %v3073 = vpop.f32.mrb[0].mxu0
        %3074 = vmatprep.mubr.f32.mxu0 0.0
        %3075 = vmatmul.mubr.f32.gmra.mrb[0].mxu0 %v754
        %v3076 = vpop.f32.mrb[0].mxu0
        %v3077 = vadd.f32 0.0, %v3076
        %v3078 = vpop.f32.mrb[0].mxu0
        %3079 = vmatprep.mubr.f32.mxu0 0.0
        %3080 = vmatmul.mubr.f32.gmra.mrb[0].mxu0 %v755
        %v3081 = vpop.f32.mrb[0].mxu0
        %v3082 = vadd.f32 0.0, %v3081
        %v3083 = vpop.f32.mrb[0].mxu0
        %3084 = vmatprep.mubr.f32.mxu0 0.0
        %3085 = vmatmul.mubr.f32.gmra.mrb[0].mxu0 %v756
        %v3086 = vpop.f32.mrb[0].mxu0
        %v3087 = vadd.f32 0.0, %v3086
        %v3088 = vpop.f32.mrb[0].mxu0
        %3089 = vmatprep.mubr.f32.mxu0 0.0
        %3090 = vmatmul.mubr.f32.gmra.mrb[0].mxu0 %v757
        %v3091 = vpop.f32.mrb[0].mxu0
        %v3092 = vadd.f32 0.0, %v3091
        %v3093 = vpop.f32.mrb[0].mxu0
        %3094 = vmatprep.mubr.f32.mxu0 0.0
        %3095 = vmatmul.mubr.f32.gmra.mrb[0].mxu0 %v758
        %v3096 = vpop.f32.mrb[0].mxu0
        %v3097 = vadd.f32 0.0, %v3096
        %v3098 = vpop.f32.mrb[0].mxu0
        %3099 = vmatprep.mubr.f32.mxu0 0.0
        %3100 = vmatmul.mubr.f32.gmra.mrb[0].mxu0 %v759
        %v3101 = vpop.f32.mrb[0].mxu0
        %v3102 = vadd.f32 0.0, %v3101
        %v3103 = vpop.f32.mrb[0].mxu0
        %3104 = vmatprep.mubr.f32.mxu0 0.0
        %3105 = vmatmul.mubr.f32.gmra.mrb[0].mxu0 %v760
        %v3106 = vpop.f32.mrb[0].mxu0
        %v3107 = vadd.f32 0.0, %v3106
        %v3108 = vpop.f32.mrb[0].mxu0
        %3109 = vmatprep.mubr.f32.mxu0 0.0
        %3110 = vmatmul.mubr.f32.gmra.mrb[0].mxu0 %v761
        %v3111 = vpop.f32.mrb[0].mxu0
        %v3112 = vadd.f32 0.0, %v3111
        %v3113 = vpop.f32.mrb[0].mxu0
        %3114 = vmatprep.mubr.f32.mxu0 0.0
        %3115 = vmatmul.mubr.f32.gmra.mrb[0].mxu0 %v762
        %v3116 = vpop.f32.mrb[0].mxu0
        %v3117 = vadd.f32 0.0, %v3116
        %v3118 = vpop.f32.mrb[0].mxu0
        %3119 = vmatprep.mubr.f32.mxu0 0.0
        %3120 = vmatmul.mubr.f32.gmra.mrb[0].mxu0 %v763
        %v3121 = vpop.f32.mrb[0].mxu0
        %v3122 = vadd.f32 0.0, %v3121
        %v3123 = vpop.f32.mrb[0].mxu0
        %3124 = vmatprep.mubr.f32.mxu0 0.0
        %3125 = vmatmul.mubr.f32.gmra.mrb[0].mxu0 %v764
        %v3126 = vpop.f32.mrb[0].mxu0
        %v3127 = vadd.f32 0.0, %v3126
        %v3128 = vpop.f32.mrb[0].mxu0
        %3129 = vmatprep.mubr.f32.mxu0 0.0
        %3130 = vmatmul.mubr.f32.gmra.mrb[0].mxu0 %v765
        %v3131 = vpop.f32.mrb[0].mxu0
        %v3132 = vadd.f32 0.0, %v3131
        %v3133 = vpop.f32.mrb[0].mxu0
        %3134 = vdwg.mxu0
        %v3135 = vadd.f32 %v2861, %v2977
        %v3136 = vadd.f32 %v2862, %v2982
        %v3137 = vadd.f32 %v2863, %v2987
        %v3138 = vadd.f32 %v2864, %v2992
        %v3139 = vadd.f32 %v2865, %v2997
        %v3140 = vadd.f32 %v2866, %v3002
        %v3141 = vadd.f32 %v2867, %v3007
        %v3142 = vadd.f32 %v2868, %v3012
        %v3143 = vadd.f32 %v2869, %v3017
        %v3144 = vadd.f32 %v2870, %v3022
        %v3145 = vadd.f32 %v2871, %v3027
        %v3146 = vadd.f32 %v2872, %v3032
        %v3147 = vadd.f32 %v2873, %v3037
        %v3148 = vadd.f32 %v2874, %v3042
        %v3149 = vadd.f32 %v2875, %v3047
        %v3150 = vadd.f32 %v2876, %v3052
        %v3151 = vadd.f32 %v2877, %v3057
        %v3152 = vadd.f32 %v2878, %v3062
        %v3153 = vadd.f32 %v2879, %v3067
        %v3154 = vadd.f32 %v2880, %v3072
        %v3155 = vadd.f32 %v2881, %v3077
        %v3156 = vadd.f32 %v2882, %v3082
        %v3157 = vadd.f32 %v2883, %v3087
        %v3158 = vadd.f32 %v2884, %v3092
        %v3159 = vadd.f32 %v2885, %v3097
        %v3160 = vadd.f32 %v2886, %v3102
        %v3161 = vadd.f32 %v2887, %v3107
        %v3162 = vadd.f32 %v2888, %v3112
        %v3163 = vadd.f32 %v2889, %v3117
        %v3164 = vadd.f32 %v2890, %v3122
        %v3165 = vadd.f32 %v2891, %v3127
        %v3166 = vadd.f32 %v2892, %v3132
        %3167 = vst [vmem:[%s396] sm:$0xff] %v3135
        %3168 = vst [vmem:[%s396 + $0x8] sm:$0xff] %v3136
        %3169 = vst [vmem:[%s396 + $0x10] sm:$0xff] %v3137
        %3170 = vst [vmem:[%s396 + $0x18] sm:$0xff] %v3138
        %3171 = vst [vmem:[%s396 + $0x20] sm:$0xff] %v3139
        %3172 = vst [vmem:[%s396 + $0x28] sm:$0xff] %v3140
        %3173 = vst [vmem:[%s396 + $0x30] sm:$0xff] %v3141
        %3174 = vst [vmem:[%s396 + $0x38] sm:$0xff] %v3142
        %3175 = vst [vmem:[%s396 + $0x40] sm:$0xff] %v3143
        %3176 = vst [vmem:[%s396 + $0x48] sm:$0xff] %v3144
        %3177 = vst [vmem:[%s396 + $0x50] sm:$0xff] %v3145
        %3178 = vst [vmem:[%s396 + $0x58] sm:$0xff] %v3146
        %3179 = vst [vmem:[%s396 + $0x60] sm:$0xff] %v3147
        %3180 = vst [vmem:[%s396 + $0x68] sm:$0xff] %v3148
        %3181 = vst [vmem:[%s396 + $0x70] sm:$0xff] %v3149
        %3182 = vst [vmem:[%s396 + $0x78] sm:$0xff] %v3150
        %3183 = vst [vmem:[%s396 + $0x80] sm:$0xff] %v3151
        %3184 = vst [vmem:[%s396 + $0x88] sm:$0xff] %v3152
        %3185 = vst [vmem:[%s396 + $0x90] sm:$0xff] %v3153
        %3186 = vst [vmem:[%s396 + $0x98] sm:$0xff] %v3154
        %3187 = vst [vmem:[%s396 + $0xa0] sm:$0xff] %v3155
        %3188 = vst [vmem:[%s396 + $0xa8] sm:$0xff] %v3156
        %3189 = vst [vmem:[%s396 + $0xb0] sm:$0xff] %v3157
        %3190 = vst [vmem:[%s396 + $0xb8] sm:$0xff] %v3158
        %3191 = vst [vmem:[%s396 + $0xc0] sm:$0xff] %v3159
        %3192 = vst [vmem:[%s396 + $0xc8] sm:$0xff] %v3160
        %3193 = vst [vmem:[%s396 + $0xd0] sm:$0xff] %v3161
        %3194 = vst [vmem:[%s396 + $0xd8] sm:$0xff] %v3162
        %3195 = vst [vmem:[%s396 + $0xe0] sm:$0xff] %v3163
        %3196 = vst [vmem:[%s396 + $0xe8] sm:$0xff] %v3164
        %3197 = vst [vmem:[%s396 + $0xf0] sm:$0xff] %v3165
        %3198 = vst [vmem:[%s396 + $0xf8] sm:$0xff] %v3166
        %v3199 = vadd.f32 %v3135, %v3136
        %v3200 = vadd.f32 %v3199, %v3137
        %v3201 = vadd.f32 %v3200, %v3138
        %v3202 = vadd.f32 %v3201, %v3139
        %v3203 = vadd.f32 %v3202, %v3140
        %v3204 = vadd.f32 %v3203, %v3141
        %v3205 = vadd.f32 %v3204, %v3142
        %v3206 = vadd.f32 %v3205, %v3143
        %v3207 = vadd.f32 %v3206, %v3144
        %v3208 = vadd.f32 %v3207, %v3145
        %v3209 = vadd.f32 %v3208, %v3146
        %v3210 = vadd.f32 %v3209, %v3147
        %v3211 = vadd.f32 %v3210, %v3148
        %v3212 = vadd.f32 %v3211, %v3149
        %v3213 = vadd.f32 %v3212, %v3150
        %v3214 = vadd.f32 %v3213, %v3151
        %v3215 = vadd.f32 %v3214, %v3152
        %v3216 = vadd.f32 %v3215, %v3153
        %v3217 = vadd.f32 %v3216, %v3154
        %v3218 = vadd.f32 %v3217, %v3155
        %v3219 = vadd.f32 %v3218, %v3156
        %v3220 = vadd.f32 %v3219, %v3157
        %v3221 = vadd.f32 %v3220, %v3158
        %v3222 = vadd.f32 %v3221, %v3159
        %v3223 = vadd.f32 %v3222, %v3160
        %v3224 = vadd.f32 %v3223, %v3161
        %v3225 = vadd.f32 %v3224, %v3162
        %v3226 = vadd.f32 %v3225, %v3163
        %v3227 = vadd.f32 %v3226, %v3164
        %v3228 = vadd.f32 %v3227, %v3165
        %v3229 = vadd.f32 %v3228, %v3166
        %v3230 = vrot.slane %v3229, 4
        %v3231 = vadd.f32 %v3229, %v3230
        %v3232 = vrot.slane %v3231, 2
        %v3233 = vadd.f32 %v3231, %v3232
        %v3234 = vrot.slane %v3233, 1
        %v3235 = vadd.f32 %v3233, %v3234
        %3236 = vst [vmem:[%s402] sm:$0x1] %v3235
        %v3237 = vmul.f32 %v3135, %v3135
        %v3238 = vmul.f32 %v3136, %v3136
        %v3239 = vmul.f32 %v3137, %v3137
        %v3240 = vmul.f32 %v3138, %v3138
        %v3241 = vmul.f32 %v3139, %v3139
        %v3242 = vmul.f32 %v3140, %v3140
        %v3243 = vmul.f32 %v3141, %v3141
        %v3244 = vmul.f32 %v3142, %v3142
        %v3245 = vmul.f32 %v3143, %v3143
        %v3246 = vmul.f32 %v3144, %v3144
        %v3247 = vmul.f32 %v3145, %v3145
        %v3248 = vmul.f32 %v3146, %v3146
        %v3249 = vmul.f32 %v3147, %v3147
        %v3250 = vmul.f32 %v3148, %v3148
        %v3251 = vmul.f32 %v3149, %v3149
        %v3252 = vmul.f32 %v3150, %v3150
        %v3253 = vmul.f32 %v3151, %v3151
        %v3254 = vmul.f32 %v3152, %v3152
        %v3255 = vmul.f32 %v3153, %v3153
        %v3256 = vmul.f32 %v3154, %v3154
        %v3257 = vmul.f32 %v3155, %v3155
        %v3258 = vmul.f32 %v3156, %v3156
        %v3259 = vmul.f32 %v3157, %v3157
        %v3260 = vmul.f32 %v3158, %v3158
        %v3261 = vmul.f32 %v3159, %v3159
        %v3262 = vmul.f32 %v3160, %v3160
        %v3263 = vmul.f32 %v3161, %v3161
        %v3264 = vmul.f32 %v3162, %v3162
        %v3265 = vmul.f32 %v3163, %v3163
        %v3266 = vmul.f32 %v3164, %v3164
        %v3267 = vmul.f32 %v3165, %v3165
        %v3268 = vmul.f32 %v3166, %v3166
        %v3269 = vadd.f32 %v3237, %v3238
        %v3270 = vadd.f32 %v3269, %v3239
        %v3271 = vadd.f32 %v3270, %v3240
        %v3272 = vadd.f32 %v3271, %v3241
        %v3273 = vadd.f32 %v3272, %v3242
        %v3274 = vadd.f32 %v3273, %v3243
        %v3275 = vadd.f32 %v3274, %v3244
        %v3276 = vadd.f32 %v3275, %v3245
        %v3277 = vadd.f32 %v3276, %v3246
        %v3278 = vadd.f32 %v3277, %v3247
        %v3279 = vadd.f32 %v3278, %v3248
        %v3280 = vadd.f32 %v3279, %v3249
        %v3281 = vadd.f32 %v3280, %v3250
        %v3282 = vadd.f32 %v3281, %v3251
        %v3283 = vadd.f32 %v3282, %v3252
        %v3284 = vadd.f32 %v3283, %v3253
        %v3285 = vadd.f32 %v3284, %v3254
        %v3286 = vadd.f32 %v3285, %v3255
        %v3287 = vadd.f32 %v3286, %v3256
        %v3288 = vadd.f32 %v3287, %v3257
        %v3289 = vadd.f32 %v3288, %v3258
        %v3290 = vadd.f32 %v3289, %v3259
        %v3291 = vadd.f32 %v3290, %v3260
        %v3292 = vadd.f32 %v3291, %v3261
        %v3293 = vadd.f32 %v3292, %v3262
        %v3294 = vadd.f32 %v3293, %v3263
        %v3295 = vadd.f32 %v3294, %v3264
        %v3296 = vadd.f32 %v3295, %v3265
        %v3297 = vadd.f32 %v3296, %v3266
        %v3298 = vadd.f32 %v3297, %v3267
        %v3299 = vadd.f32 %v3298, %v3268
        %v3300 = vrot.slane %v3299, 4
        %v3301 = vadd.f32 %v3299, %v3300
        %v3302 = vrot.slane %v3301, 2
        %v3303 = vadd.f32 %v3301, %v3302
        %v3304 = vrot.slane %v3303, 1
        %v3305 = vadd.f32 %v3303, %v3304
        %3306 = vst [vmem:[%s408] sm:$0x1] %v3305
        %s3307 = sand.u32 %s171, 1
        %s3308 = scalar_lea.sflag [#allocation5], %s3307
        %s3309 = sand.u32 %s171, 1
        %s3310 = smul.addr %s3309, 256
        %s3311 = scalar_lea.vmem [#allocation14], %s3310
        %s3312 = sand.u32 %s32, 1
        %s3313 = scalar_lea.sflag [#allocation16], %s3312
        %s3314 = sand.u32 %s197, 1
        %s3315 = scalar_lea.vmem [#allocation15], %s3314
        %s3316 = sand.u32 %s32, 1
        %s3317 = scalar_lea.sflag [#allocation16], %s3316
        %s3318 = sand.u32 %s223, 1
        %s3319 = scalar_lea.vmem [#allocation17], %s3318
        // Predicated region
        $region69: #{simple_residual_block.4} parent=43 // pred_check
          %p3320 = pneg %p181
        $region70: #{simple_residual_block.4} parent=43 // pred_check_branch
          %3322 = sbr.rel (%p3320) target = $region72
        $region71: #{simple_residual_block.4} parent=43 // pred_region
          %s3324 = ssub.s32 4096, 4096
          %3325 = vsyncadd %s3308, %s3324
          %s3326 = smul.addr %s32, 32
          %s3327 = smul.addr %s3326, 128
          %s3328 = scalar_lea.hbm %s6, %s3327
          %s3329 = sshll.u32 %s3311, 4
          %s3330 = int_to_ptr.vmem [resolvable:$true] %s3329
          %3335 = dma.vmem_to_hbm [thread:$0]  %s3330, 4096, %s3328, %s3308, 128, 128, 8
        $region72: #{simple_residual_block.4} parent=43 // pred_fallthru
          _
        // Predicated region
        $region73: #{simple_residual_block.4} parent=43 // pred_check
          %p3336 = pneg %p207
        $region74: #{simple_residual_block.4} parent=43 // pred_check_branch
          %3338 = sbr.rel (%p3336) target = $region76
        $region75: #{simple_residual_block.4} parent=43 // pred_region
          %s3340 = ssub.s32 16, 16
          %3341 = vsyncadd %s3313, %s3340
          %s3342 = smul.addr %s32, 16
          %s3343 = scalar_lea.hbm %s7, %s3342
          %s3345 = sshll.u32 %s3315, 4
          %s3346 = int_to_ptr.vmem [resolvable:$true] %s3345
          %3348 = dma.vmem_to_hbm [thread:$0]  %s3346, 16, %s3343, %s3313
        $region76: #{simple_residual_block.4} parent=43 // pred_fallthru
          _
        // Predicated region
        $region77: #{simple_residual_block.4} parent=43 // pred_check
          %p3349 = pneg %p233
        $region78: #{simple_residual_block.4} parent=43 // pred_check_branch
          %3351 = sbr.rel (%p3349) target = $region80
        $region79: #{simple_residual_block.4} parent=43 // pred_region
          %s3353 = ssub.s32 16, 16
          %3354 = vsyncadd %s3317, %s3353
          %s3355 = smul.addr %s32, 16
          %s3356 = scalar_lea.hbm %s8, %s3355
          %s3358 = sshll.u32 %s3319, 4
          %s3359 = int_to_ptr.vmem [resolvable:$true] %s3358
          %3361 = dma.vmem_to_hbm [thread:$0]  %s3359, 16, %s3356, %s3317
        $region80: #{simple_residual_block.4} parent=43 // pred_fallthru
          _
      $region44: #{simple_residual_block.4} parent=5 // pred_fallthru
        _
      %p3362 = scmp.le.s32.totalorder 2, %s27
      // Predicated region
      $region81: #{simple_residual_block.4} parent=5 // pred_check
        %p3363 = pneg %p3362
      $region82: #{simple_residual_block.4} parent=5 // pred_check_branch
        %3365 = sbr.rel (%p3363) target = $region84
      $region83: #{simple_residual_block.4} parent=5 // pred_region
        %s3366 = ssub.s32 %s27, 2
        // Predicated region
        $region85: #{simple_residual_block.4} parent=83 // pred_check
          %p3367 = pneg %p187
        $region86: #{simple_residual_block.4} parent=83 // pred_check_branch
          %3369 = sbr.rel (%p3367) target = $region88
        $region87: #{simple_residual_block.4} parent=83 // pred_region
          %s3370 = sand.u32 %s172, 1
          %s3371 = scalar_lea.sflag [#allocation5], %s3370
          %s3372 = sand.u32 %s172, 1
          %s3373 = smul.addr %s3372, 256
          %s3374 = scalar_lea.vmem [#allocation14], %s3373
          %3375 = dma.done %s3371, 4096
        $region88: #{simple_residual_block.4} parent=83 // pred_fallthru
          _
        // Predicated region
        $region89: #{simple_residual_block.4} parent=83 // pred_check
          %p3376 = pneg %p213
        $region90: #{simple_residual_block.4} parent=83 // pred_check_branch
          %3378 = sbr.rel (%p3376) target = $region92
        $region91: #{simple_residual_block.4} parent=83 // pred_region
          %s3379 = sand.u32 %s33, 1
          %s3380 = scalar_lea.sflag [#allocation16], %s3379
          %s3381 = sand.u32 %s198, 1
          %s3382 = scalar_lea.vmem [#allocation15], %s3381
          %3383 = dma.done %s3380, 16
        $region92: #{simple_residual_block.4} parent=83 // pred_fallthru
          _
        // Predicated region
        $region93: #{simple_residual_block.4} parent=83 // pred_check
          %p3384 = pneg %p239
        $region94: #{simple_residual_block.4} parent=83 // pred_check_branch
          %3386 = sbr.rel (%p3384) target = $region96
        $region95: #{simple_residual_block.4} parent=83 // pred_region
          %s3387 = sand.u32 %s33, 1
          %s3388 = scalar_lea.sflag [#allocation16], %s3387
          %s3389 = sand.u32 %s224, 1
          %s3390 = scalar_lea.vmem [#allocation17], %s3389
          %3391 = dma.done %s3388, 16
        $region96: #{simple_residual_block.4} parent=83 // pred_fallthru
          _
      $region84: #{simple_residual_block.4} parent=5 // pred_fallthru
        _
    $region6: #{simple_residual_block.4} parent=1 // loop_footer
      %s31 = sadd.s32 1, %s27
    $region7: #{simple_residual_block.4} parent=1 // loop_footer_branch
      %26 = sbr.rel target = $region3
    $region8: #{simple_residual_block.4} parent=1 // loop_exit
      _
    %3392 = vsyncpa [#allocation4], 1
    %s3393 = scalar_lea.sflag [#allocation4], 1
    %3394 = vsyncpa %s3393, 1
    %3395 = vsyncpa [#allocation7], 1
    %3396 = vsyncpa [#allocation10], 1
    %3397 = vsyncpa [#allocation13], 1
    %3398 = vsyncpa [#allocation5], 1
    %s3399 = scalar_lea.sflag [#allocation5], 1
    %3400 = vsyncpa %s3399, 1
    %3401 = vsyncpa [#allocation16], 1
    %s3402 = scalar_lea.sflag [#allocation16], 1
    %3403 = vsyncpa %s3402, 1

</llo_original>
